<compile_context>
chip_gen: v7x
topology: tpu7x:2x2x1
jax: 0.10.0
libtpu: 0.0.40
codegen_flags: <defaults>
</compile_context>

<pallas_src>
import jax
import jax.numpy as jnp
from jax.experimental import pallas as pl
from jax.experimental.pallas import tpu as pltpu

HIGHEST = jax.lax.Precision.HIGHEST

N_TILE = 512            # fc1 output tile width (lane-dense, contiguous slab)
N_PAD = 1024            # fc1 outputs padded 1000 -> 1024
NT = N_PAD // N_TILE    # 2 grid steps (one per TensorCore on v7x)


def _dot(a, b):
    # bf16 x bf16 -> f32 accumulation (single MXU pass, default precision).
    return jnp.dot(a, b, preferred_element_type=jnp.float32)


# ---------------------------------------------------------------------------
# Fused forward kernel (one grid step = one fc1/fc2 output tile)
# ---------------------------------------------------------------------------
def _dqn_kernel(p1_ref, c1w_ref, c1b_ref, c2w_ref, c2b_ref,
                w1_ref, b1_ref, w2_ref, o_ref):
    # ---- conv1 as one block-diagonal GEMM: (24,336)@(336,128) -> (24,128)
    #   x2[h, 6*w + ci] = relu(conv1)[ci, h, w]
    p1b = p1_ref[...].astype(jnp.bfloat16)
    x2 = jnp.maximum(_dot(p1b, c1w_ref[...]) + c1b_ref[...], 0.0)   # f32

    # ---- conv2 as 4 banded GEMMs: (18,128)@(128,512) -> (18,512)
    #   a2[i, 256*(j%2) + 24*(j//2) + co] = relu(conv2)[co, i, j]
    acc = _dot(x2[0:18, :].astype(jnp.bfloat16), c2w_ref[0])
    for kh in range(1, 4):
        acc = acc + _dot(x2[kh:kh + 18, :].astype(jnp.bfloat16), c2w_ref[kh])
    a2 = jnp.maximum(acc + c2b_ref[...], 0.0)                        # (18,512)

    # ---- 2x2 max-pool, W-direction: element-wise max of lane-aligned halves
    aw = jnp.maximum(a2[:, 0:256], a2[:, 256:512])                   # (18,256)
    # aw[i, 24*pw + co] = max over kw of conv2[co, i, 2*pw + kw]; cols 216..255 are 0

    # ---- fc1 tile n (H-pool folded into the 9 row-dots) + fc2 partial ----
    acc1 = b1_ref[...]                                               # (1, N_TILE) f32
    for ph in range(9):
        row = jnp.maximum(aw[2 * ph:2 * ph + 1, 0:216],
                          aw[2 * ph + 1:2 * ph + 2, 0:216])          # (1, 216)
        acc1 = acc1 + _dot(row.astype(jnp.bfloat16), w1_ref[ph])
    h1 = jnp.maximum(acc1, 0.0).astype(jnp.bfloat16)                 # (1, N_TILE)

    # fc2 partial sum for this tile; bias + relu + fc3 happen in the wrapper
    o_ref[0] = _dot(h1, w2_ref[...])                                 # (1, 256) f32


# ---------------------------------------------------------------------------
# One-time parameter repacking (PyTorch layout -> kernel layout)
# ---------------------------------------------------------------------------
def prepare_params(params):
    (w1, b1, w2, b2, fw1, fb1, fw2, fb2, fw3, fb3) = params

    # conv1 -> block-diagonal GEMM weight (336, 128), bf16:
    #   c1w[16*w + 4*kh + kw, 6*w' + ci] = w1[ci, 0, kh, kw] if w == w' else 0
    w1m = w1.reshape(6, 16).T                                        # (16, 6)
    eye21 = jnp.eye(21, dtype=jnp.float32)
    c1w = (eye21[:, None, :, None] * w1m[None, :, None, :]).reshape(336, 126)
    c1w = jnp.pad(c1w, ((0, 0), (0, 2))).astype(jnp.bfloat16)        # (336, 128)
    c1b = jnp.pad(jnp.tile(b1, 21), (0, 2))[None, :]                 # (1, 128) f32

    # conv2 -> 4 banded GEMM weights (4, 128, 512), bf16.  Output columns:
    #   colout(j, co) = 256*(j % 2) + 24*(j // 2) + co
    sel = (jnp.arange(21)[None, :, None] ==
           (jnp.arange(18)[None, None, :] + jnp.arange(4)[:, None, None])
           ).astype(jnp.float32)                                     # (kw, w, j)
    c = jnp.einsum('awj,oiha->hwijo', sel, w2)                       # (kh,w,ci,j,co)
    c = c.reshape(4, 21, 6, 9, 2, 24).transpose(0, 1, 2, 4, 3, 5)
    c = c.reshape(4, 126, 2, 216)
    c2w = jnp.pad(c, ((0, 0), (0, 2), (0, 0), (0, 40))).reshape(4, 128, 512)
    c2w = c2w.astype(jnp.bfloat16)
    c2b = jnp.tile(jnp.pad(jnp.tile(b2, 9), (0, 40)), 2)[None, :]    # (1, 512) f32

    # fc1: pre-transposed, permuted to the pooled (ph, 24*pw+co) flatten order,
    # TILE-MAJOR so each grid step reads one contiguous bf16 slab:
    #   w1k[t, ph, 24*pw + co, nl] = fw1[t*N_TILE + nl, 81*co + 9*ph + pw]
    w1k = fw1.reshape(1000, 24, 9, 9).transpose(2, 3, 1, 0).reshape(9, 216, 1000)
    w1k = jnp.pad(w1k, ((0, 0), (0, 0), (0, N_PAD - 1000)))          # (9, 216, 1024)
    w1k = w1k.reshape(9, 216, NT, N_TILE).transpose(2, 0, 1, 3)
    w1k = w1k.astype(jnp.bfloat16)                                   # (NT, 9, 216, N_TILE)
    b1k = jnp.pad(fb1, (0, N_PAD - 1000))[None, :]                   # (1, 1024) f32

    # fc2: pre-transposed to (in, out), zero-padded, bf16
    w2k = jnp.pad(fw2.T, ((0, N_PAD - 1000), (0, 0))).astype(jnp.bfloat16)  # (1024, 256)

    # fc2 bias / fc3: used in the tiny f32 wrapper epilogue (not streamed)
    b2k = fb2                                                        # (256,)
    w3k = fw3.T                                                      # (256, 4)
    b3k = fb3                                                        # (4,)

    return (c1w, c1b, c2w, c2b, w1k, b1k, w2k, b2k, w3k, b3k)


# ---------------------------------------------------------------------------
# Forward pass (single pallas_call + trivial f32 epilogue)
# ---------------------------------------------------------------------------
def dqn_forward(x_nchw, kparams):
    (c1w, c1b, c2w, c2b, w1k, b1k, w2k, b2k, w3k, b3k) = kparams
    img = x_nchw[0, 0]                                               # (84, 84)
    # conv1 patches packed per output row: p1[h, 16*w + 4*kh + kw]
    p1 = img.reshape(21, 4, 21, 4).transpose(0, 2, 1, 3).reshape(21, 336)
    p1 = jnp.pad(p1, ((0, 3), (0, 0)))                               # (24, 336) f32

    parts = pl.pallas_call(
        _dqn_kernel,
        out_shape=jax.ShapeDtypeStruct((NT, 1, 256), jnp.float32),
        grid_spec=pltpu.PrefetchScalarGridSpec(
            num_scalar_prefetch=0,
            grid=(NT,),
            in_specs=[
                pl.BlockSpec((24, 336), lambda n: (0, 0)),                 # p1
                pl.BlockSpec((336, 128), lambda n: (0, 0)),                # conv1 W (bf16)
                pl.BlockSpec((1, 128), lambda n: (0, 0)),                  # conv1 b
                pl.BlockSpec((4, 128, 512), lambda n: (0, 0, 0)),          # conv2 W (bf16)
                pl.BlockSpec((1, 512), lambda n: (0, 0)),                  # conv2 b
                pl.BlockSpec((None, 9, 216, N_TILE),
                             lambda n: (n, 0, 0, 0)),                      # fc1 W tile (bf16)
                pl.BlockSpec((1, N_TILE), lambda n: (0, n)),               # fc1 b tile
                pl.BlockSpec((N_TILE, 256), lambda n: (n, 0)),             # fc2 W tile (bf16)
            ],
            out_specs=pl.BlockSpec((1, 1, 256), lambda n: (n, 0, 0)),      # fc2 partials
        ),
        compiler_params=pltpu.CompilerParams(
            dimension_semantics=("parallel",),   # v7x: one fc1 tile per TensorCore
            vmem_limit_bytes=32 * 1024 * 1024,
        ),
    )(p1, c1w, c1b, c2w, c2b, w1k, b1k, w2k)

    # Tiny f32 epilogue: combine per-tile fc2 partials, bias + relu, fc3.
    h2 = jax.nn.relu(jnp.sum(parts[:, 0, :], axis=0) + b2k)          # (256,)
    q = jnp.dot(h2, w3k, precision=HIGHEST) + b3k                    # (4,)
    return q


# ---------------------------------------------------------------------------
# Pure-JAX reference (for correctness check only)
# ---------------------------------------------------------------------------
def reference_forward(x_nchw, params):
    (w1, b1, w2, b2, fw1, fb1, fw2, fb2, fw3, fb3) = params
    dn = ('NCHW', 'OIHW', 'NCHW')
    y = jax.lax.conv_general_dilated(x_nchw, w1, (4, 4), 'VALID',
                                     dimension_numbers=dn, precision=HIGHEST)
    y = jax.nn.relu(y + b1.reshape(1, -1, 1, 1))
    y = jax.lax.conv_general_dilated(y, w2, (1, 1), 'VALID',
                                     dimension_numbers=dn, precision=HIGHEST)
    y = jax.nn.relu(y + b2.reshape(1, -1, 1, 1))
    y = jax.lax.reduce_window(y, -jnp.inf, jax.lax.max,
                              (1, 1, 2, 2), (1, 1, 2, 2), 'VALID')
    y = y.reshape(-1)                                   # torch.flatten
    y = jax.nn.relu(jnp.dot(y, fw1.T, precision=HIGHEST) + fb1)
    y = jax.nn.relu(jnp.dot(y, fw2.T, precision=HIGHEST) + fb2)
    y = jnp.dot(y, fw3.T, precision=HIGHEST) + fb3
    return y


# ---------------------------------------------------------------------------
# Deterministic parameter init (PyTorch-style uniform(-1/sqrt(fan_in), ...))
# ---------------------------------------------------------------------------
def init_params(key):
    def u(k, shape, fan_in):
        bound = 1.0 / (fan_in ** 0.5)
        return jax.random.uniform(k, shape, jnp.float32, -bound, bound)

    ks = jax.random.split(key, 10)
    w1 = u(ks[0], (6, 1, 4, 4), 1 * 4 * 4)
    b1 = u(ks[1], (6,), 1 * 4 * 4)
    w2 = u(ks[2], (24, 6, 4, 4), 6 * 4 * 4)
    b2 = u(ks[3], (24,), 6 * 4 * 4)
    fw1 = u(ks[4], (1000, 1944), 1944)
    fb1 = u(ks[5], (1000,), 1944)
    fw2 = u(ks[6], (256, 1000), 1000)
    fb2 = u(ks[7], (256,), 1000)
    fw3 = u(ks[8], (4, 256), 256)
    fb3 = u(ks[9], (4,), 256)
    return (w1, b1, w2, b2, fw1, fb1, fw2, fb2, fw3, fb3)


if __name__ == "__main__":
    key = jax.random.PRNGKey(0)
    pkey, xkey = jax.random.split(key)
    params = init_params(pkey)
    kparams = prepare_params(params)          # one-time weight repacking (bf16)
    # Smallest shape consistent with the module: fc1 = Linear(9*9*24, ...)
    # forces an 84x84 single-channel frame and batch 1.
    x = jax.random.uniform(xkey, (1, 1, 84, 84), jnp.float32)

    fwd = jax.jit(dqn_forward)
    out = jax.block_until_ready(fwd(x, kparams))

    ref = reference_forward(x, params)
    assert out.shape == (4,), out.shape
    # bf16 weight streaming -> slightly looser tolerance vs the f32 reference.
    assert jnp.allclose(out, ref, rtol=3e-2, atol=3e-3), (out, ref)
    print("KERNEL_OK")
</pallas_src>

<mosaic_0001>
module attributes {stable_mosaic.version = 11 : i64} {
  func.func @_dqn_kernel(%arg0: i32, %arg1: memref<24x336xf32, #tpu.memory_space<vmem>>, %arg2: memref<336x128xbf16, #tpu.memory_space<vmem>>, %arg3: memref<1x128xf32, #tpu.memory_space<vmem>>, %arg4: memref<4x128x512xbf16, #tpu.memory_space<vmem>>, %arg5: memref<1x512xf32, #tpu.memory_space<vmem>>, %arg6: memref<1x9x216x512xbf16, #tpu.memory_space<vmem>>, %arg7: memref<1x512xf32, #tpu.memory_space<vmem>>, %arg8: memref<512x256xbf16, #tpu.memory_space<vmem>>, %arg9: memref<1x1x256xf32, #tpu.memory_space<vmem>>) attributes {dimension_semantics = [#tpu.dimension_semantics<parallel>], iteration_bounds = array<i64: 2>, scalar_prefetch = 0 : i64, scratch_operands = 0 : i64, tpu.core_type = #tpu.core_type<tc>, window_params = [{pipeline_mode = #tpu.pipeline_mode<synchronous>, transform_indices = @transform_0, window_bounds = array<i64: 24, 336>}, {pipeline_mode = #tpu.pipeline_mode<synchronous>, transform_indices = @transform_1, window_bounds = array<i64: 336, 128>}, {pipeline_mode = #tpu.pipeline_mode<synchronous>, transform_indices = @transform_2, window_bounds = array<i64: 1, 128>}, {pipeline_mode = #tpu.pipeline_mode<synchronous>, transform_indices = @transform_3, window_bounds = array<i64: 4, 128, 512>}, {pipeline_mode = #tpu.pipeline_mode<synchronous>, transform_indices = @transform_4, window_bounds = array<i64: 1, 512>}, {transform_indices = @transform_5, window_bounds = array<i64: 1, 9, 216, 512>}, {transform_indices = @transform_6, window_bounds = array<i64: 1, 512>}, {transform_indices = @transform_7, window_bounds = array<i64: 512, 256>}, {transform_indices = @transform_8, window_bounds = array<i64: 1, 1, 256>}]} {
    %c0 = arith.constant 0 : index
    %c0_0 = arith.constant 0 : index
    %0 = vector.load %arg1[%c0, %c0_0] : memref<24x336xf32, #tpu.memory_space<vmem>>, vector<24x336xf32>
    %1 = arith.truncf %0 : vector<24x336xf32> to vector<24x336xbf16>
    %c0_1 = arith.constant 0 : index
    %c0_2 = arith.constant 0 : index
    %2 = vector.load %arg2[%c0_1, %c0_2] : memref<336x128xbf16, #tpu.memory_space<vmem>>, vector<336x128xbf16>
    %cst = arith.constant dense<0.000000e+00> : vector<24x128xf32>
    %3 = tpu.matmul %1, %2, %cst {dimension_numbers = #tpu.dot_dimension_numbers<[1], [0], [0], [1], [0, 0, 1, 1], [], []>} : vector<24x336xbf16>, vector<336x128xbf16>, vector<24x128xf32> -> vector<24x128xf32>
    %c0_3 = arith.constant 0 : index
    %c0_4 = arith.constant 0 : index
    %4 = vector.load %arg3[%c0_3, %c0_4] : memref<1x128xf32, #tpu.memory_space<vmem>>, vector<1x128xf32>
    %5 = vector.broadcast %4 : vector<1x128xf32> to vector<24x128xf32>
    %6 = arith.addf %3, %5 : vector<24x128xf32>
    %cst_5 = arith.constant 0.000000e+00 : f32
    %7 = vector.broadcast %cst_5 : f32 to vector<24x128xf32>
    %8 = arith.maximumf %6, %7 : vector<24x128xf32>
    %9 = vector.extract_strided_slice %8 {offsets = [0, 0], sizes = [18, 128], strides = [1, 1]} : vector<24x128xf32> to vector<18x128xf32>
    %10 = arith.truncf %9 : vector<18x128xf32> to vector<18x128xbf16>
    %c0_6 = arith.constant 0 : index
    %c0_7 = arith.constant 0 : index
    %c0_8 = arith.constant 0 : index
    %11 = vector.load %arg4[%c0_6, %c0_7, %c0_8] : memref<4x128x512xbf16, #tpu.memory_space<vmem>>, vector<1x128x512xbf16>
    %12 = vector.shape_cast %11 : vector<1x128x512xbf16> to vector<128x512xbf16>
    %cst_9 = arith.constant dense<0.000000e+00> : vector<18x512xf32>
    %13 = tpu.matmul %10, %12, %cst_9 {dimension_numbers = #tpu.dot_dimension_numbers<[1], [0], [0], [1], [0, 0, 1, 1], [], []>} : vector<18x128xbf16>, vector<128x512xbf16>, vector<18x512xf32> -> vector<18x512xf32>
    %14 = vector.extract_strided_slice %8 {offsets = [1, 0], sizes = [18, 128], strides = [1, 1]} : vector<24x128xf32> to vector<18x128xf32>
    %15 = arith.truncf %14 : vector<18x128xf32> to vector<18x128xbf16>
    %c1 = arith.constant 1 : index
    %c0_10 = arith.constant 0 : index
    %c0_11 = arith.constant 0 : index
    %16 = vector.load %arg4[%c1, %c0_10, %c0_11] : memref<4x128x512xbf16, #tpu.memory_space<vmem>>, vector<1x128x512xbf16>
    %17 = vector.shape_cast %16 : vector<1x128x512xbf16> to vector<128x512xbf16>
    %cst_12 = arith.constant dense<0.000000e+00> : vector<18x512xf32>
    %18 = tpu.matmul %15, %17, %cst_12 {dimension_numbers = #tpu.dot_dimension_numbers<[1], [0], [0], [1], [0, 0, 1, 1], [], []>} : vector<18x128xbf16>, vector<128x512xbf16>, vector<18x512xf32> -> vector<18x512xf32>
    %19 = arith.addf %13, %18 : vector<18x512xf32>
    %20 = vector.extract_strided_slice %8 {offsets = [2, 0], sizes = [18, 128], strides = [1, 1]} : vector<24x128xf32> to vector<18x128xf32>
    %21 = arith.truncf %20 : vector<18x128xf32> to vector<18x128xbf16>
    %c2 = arith.constant 2 : index
    %c0_13 = arith.constant 0 : index
    %c0_14 = arith.constant 0 : index
    %22 = vector.load %arg4[%c2, %c0_13, %c0_14] : memref<4x128x512xbf16, #tpu.memory_space<vmem>>, vector<1x128x512xbf16>
    %23 = vector.shape_cast %22 : vector<1x128x512xbf16> to vector<128x512xbf16>
    %cst_15 = arith.constant dense<0.000000e+00> : vector<18x512xf32>
    %24 = tpu.matmul %21, %23, %cst_15 {dimension_numbers = #tpu.dot_dimension_numbers<[1], [0], [0], [1], [0, 0, 1, 1], [], []>} : vector<18x128xbf16>, vector<128x512xbf16>, vector<18x512xf32> -> vector<18x512xf32>
    %25 = arith.addf %19, %24 : vector<18x512xf32>
    %26 = vector.extract_strided_slice %8 {offsets = [3, 0], sizes = [18, 128], strides = [1, 1]} : vector<24x128xf32> to vector<18x128xf32>
    %27 = arith.truncf %26 : vector<18x128xf32> to vector<18x128xbf16>
    %c3 = arith.constant 3 : index
    %c0_16 = arith.constant 0 : index
    %c0_17 = arith.constant 0 : index
    %28 = vector.load %arg4[%c3, %c0_16, %c0_17] : memref<4x128x512xbf16, #tpu.memory_space<vmem>>, vector<1x128x512xbf16>
    %29 = vector.shape_cast %28 : vector<1x128x512xbf16> to vector<128x512xbf16>
    %cst_18 = arith.constant dense<0.000000e+00> : vector<18x512xf32>
    %30 = tpu.matmul %27, %29, %cst_18 {dimension_numbers = #tpu.dot_dimension_numbers<[1], [0], [0], [1], [0, 0, 1, 1], [], []>} : vector<18x128xbf16>, vector<128x512xbf16>, vector<18x512xf32> -> vector<18x512xf32>
    %31 = arith.addf %25, %30 : vector<18x512xf32>
    %c0_19 = arith.constant 0 : index
    %c0_20 = arith.constant 0 : index
    %32 = vector.load %arg5[%c0_19, %c0_20] : memref<1x512xf32, #tpu.memory_space<vmem>>, vector<1x512xf32>
    %33 = vector.broadcast %32 : vector<1x512xf32> to vector<18x512xf32>
    %34 = arith.addf %31, %33 : vector<18x512xf32>
    %cst_21 = arith.constant 0.000000e+00 : f32
    %35 = vector.broadcast %cst_21 : f32 to vector<18x512xf32>
    %36 = arith.maximumf %34, %35 : vector<18x512xf32>
    %37 = vector.extract_strided_slice %36 {offsets = [0, 0], sizes = [18, 256], strides = [1, 1]} : vector<18x512xf32> to vector<18x256xf32>
    %38 = vector.extract_strided_slice %36 {offsets = [0, 256], sizes = [18, 256], strides = [1, 1]} : vector<18x512xf32> to vector<18x256xf32>
    %39 = arith.maximumf %37, %38 : vector<18x256xf32>
    %c0_22 = arith.constant 0 : index
    %c0_23 = arith.constant 0 : index
    %40 = vector.load %arg7[%c0_22, %c0_23] : memref<1x512xf32, #tpu.memory_space<vmem>>, vector<1x512xf32>
    %41 = vector.extract_strided_slice %39 {offsets = [0, 0], sizes = [1, 216], strides = [1, 1]} : vector<18x256xf32> to vector<1x216xf32>
    %42 = vector.extract_strided_slice %39 {offsets = [1, 0], sizes = [1, 216], strides = [1, 1]} : vector<18x256xf32> to vector<1x216xf32>
    %43 = arith.maximumf %41, %42 : vector<1x216xf32>
    %44 = arith.truncf %43 : vector<1x216xf32> to vector<1x216xbf16>
    %c0_24 = arith.constant 0 : index
    %c0_25 = arith.constant 0 : index
    %c0_26 = arith.constant 0 : index
    %c0_27 = arith.constant 0 : index
    %45 = vector.load %arg6[%c0_24, %c0_25, %c0_26, %c0_27] : memref<1x9x216x512xbf16, #tpu.memory_space<vmem>>, vector<1x1x216x512xbf16>
    %46 = vector.shape_cast %45 : vector<1x1x216x512xbf16> to vector<216x512xbf16>
    %cst_28 = arith.constant dense<0.000000e+00> : vector<1x512xf32>
    %47 = tpu.matmul %44, %46, %cst_28 {dimension_numbers = #tpu.dot_dimension_numbers<[1], [0], [0], [1], [0, 0, 1, 1], [], []>} : vector<1x216xbf16>, vector<216x512xbf16>, vector<1x512xf32> -> vector<1x512xf32>
    %48 = arith.addf %40, %47 : vector<1x512xf32>
    %49 = vector.extract_strided_slice %39 {offsets = [2, 0], sizes = [1, 216], strides = [1, 1]} : vector<18x256xf32> to vector<1x216xf32>
    %50 = vector.extract_strided_slice %39 {offsets = [3, 0], sizes = [1, 216], strides = [1, 1]} : vector<18x256xf32> to vector<1x216xf32>
    %51 = arith.maximumf %49, %50 : vector<1x216xf32>
    %52 = arith.truncf %51 : vector<1x216xf32> to vector<1x216xbf16>
    %c0_29 = arith.constant 0 : index
    %c1_30 = arith.constant 1 : index
    %c0_31 = arith.constant 0 : index
    %c0_32 = arith.constant 0 : index
    %53 = vector.load %arg6[%c0_29, %c1_30, %c0_31, %c0_32] : memref<1x9x216x512xbf16, #tpu.memory_space<vmem>>, vector<1x1x216x512xbf16>
    %54 = vector.shape_cast %53 : vector<1x1x216x512xbf16> to vector<216x512xbf16>
    %cst_33 = arith.constant dense<0.000000e+00> : vector<1x512xf32>
    %55 = tpu.matmul %52, %54, %cst_33 {dimension_numbers = #tpu.dot_dimension_numbers<[1], [0], [0], [1], [0, 0, 1, 1], [], []>} : vector<1x216xbf16>, vector<216x512xbf16>, vector<1x512xf32> -> vector<1x512xf32>
    %56 = arith.addf %48, %55 : vector<1x512xf32>
    %57 = vector.extract_strided_slice %39 {offsets = [4, 0], sizes = [1, 216], strides = [1, 1]} : vector<18x256xf32> to vector<1x216xf32>
    %58 = vector.extract_strided_slice %39 {offsets = [5, 0], sizes = [1, 216], strides = [1, 1]} : vector<18x256xf32> to vector<1x216xf32>
    %59 = arith.maximumf %57, %58 : vector<1x216xf32>
    %60 = arith.truncf %59 : vector<1x216xf32> to vector<1x216xbf16>
    %c0_34 = arith.constant 0 : index
    %c2_35 = arith.constant 2 : index
    %c0_36 = arith.constant 0 : index
    %c0_37 = arith.constant 0 : index
    %61 = vector.load %arg6[%c0_34, %c2_35, %c0_36, %c0_37] : memref<1x9x216x512xbf16, #tpu.memory_space<vmem>>, vector<1x1x216x512xbf16>
    %62 = vector.shape_cast %61 : vector<1x1x216x512xbf16> to vector<216x512xbf16>
    %cst_38 = arith.constant dense<0.000000e+00> : vector<1x512xf32>
    %63 = tpu.matmul %60, %62, %cst_38 {dimension_numbers = #tpu.dot_dimension_numbers<[1], [0], [0], [1], [0, 0, 1, 1], [], []>} : vector<1x216xbf16>, vector<216x512xbf16>, vector<1x512xf32> -> vector<1x512xf32>
    %64 = arith.addf %56, %63 : vector<1x512xf32>
    %65 = vector.extract_strided_slice %39 {offsets = [6, 0], sizes = [1, 216], strides = [1, 1]} : vector<18x256xf32> to vector<1x216xf32>
    %66 = vector.extract_strided_slice %39 {offsets = [7, 0], sizes = [1, 216], strides = [1, 1]} : vector<18x256xf32> to vector<1x216xf32>
    %67 = arith.maximumf %65, %66 : vector<1x216xf32>
    %68 = arith.truncf %67 : vector<1x216xf32> to vector<1x216xbf16>
    %c0_39 = arith.constant 0 : index
    %c3_40 = arith.constant 3 : index
    %c0_41 = arith.constant 0 : index
    %c0_42 = arith.constant 0 : index
    %69 = vector.load %arg6[%c0_39, %c3_40, %c0_41, %c0_42] : memref<1x9x216x512xbf16, #tpu.memory_space<vmem>>, vector<1x1x216x512xbf16>
    %70 = vector.shape_cast %69 : vector<1x1x216x512xbf16> to vector<216x512xbf16>
    %cst_43 = arith.constant dense<0.000000e+00> : vector<1x512xf32>
    %71 = tpu.matmul %68, %70, %cst_43 {dimension_numbers = #tpu.dot_dimension_numbers<[1], [0], [0], [1], [0, 0, 1, 1], [], []>} : vector<1x216xbf16>, vector<216x512xbf16>, vector<1x512xf32> -> vector<1x512xf32>
    %72 = arith.addf %64, %71 : vector<1x512xf32>
    %73 = vector.extract_strided_slice %39 {offsets = [8, 0], sizes = [1, 216], strides = [1, 1]} : vector<18x256xf32> to vector<1x216xf32>
    %74 = vector.extract_strided_slice %39 {offsets = [9, 0], sizes = [1, 216], strides = [1, 1]} : vector<18x256xf32> to vector<1x216xf32>
    %75 = arith.maximumf %73, %74 : vector<1x216xf32>
    %76 = arith.truncf %75 : vector<1x216xf32> to vector<1x216xbf16>
    %c0_44 = arith.constant 0 : index
    %c4 = arith.constant 4 : index
    %c0_45 = arith.constant 0 : index
    %c0_46 = arith.constant 0 : index
    %77 = vector.load %arg6[%c0_44, %c4, %c0_45, %c0_46] : memref<1x9x216x512xbf16, #tpu.memory_space<vmem>>, vector<1x1x216x512xbf16>
    %78 = vector.shape_cast %77 : vector<1x1x216x512xbf16> to vector<216x512xbf16>
    %cst_47 = arith.constant dense<0.000000e+00> : vector<1x512xf32>
    %79 = tpu.matmul %76, %78, %cst_47 {dimension_numbers = #tpu.dot_dimension_numbers<[1], [0], [0], [1], [0, 0, 1, 1], [], []>} : vector<1x216xbf16>, vector<216x512xbf16>, vector<1x512xf32> -> vector<1x512xf32>
    %80 = arith.addf %72, %79 : vector<1x512xf32>
    %81 = vector.extract_strided_slice %39 {offsets = [10, 0], sizes = [1, 216], strides = [1, 1]} : vector<18x256xf32> to vector<1x216xf32>
    %82 = vector.extract_strided_slice %39 {offsets = [11, 0], sizes = [1, 216], strides = [1, 1]} : vector<18x256xf32> to vector<1x216xf32>
    %83 = arith.maximumf %81, %82 : vector<1x216xf32>
    %84 = arith.truncf %83 : vector<1x216xf32> to vector<1x216xbf16>
    %c0_48 = arith.constant 0 : index
    %c5 = arith.constant 5 : index
    %c0_49 = arith.constant 0 : index
    %c0_50 = arith.constant 0 : index
    %85 = vector.load %arg6[%c0_48, %c5, %c0_49, %c0_50] : memref<1x9x216x512xbf16, #tpu.memory_space<vmem>>, vector<1x1x216x512xbf16>
    %86 = vector.shape_cast %85 : vector<1x1x216x512xbf16> to vector<216x512xbf16>
    %cst_51 = arith.constant dense<0.000000e+00> : vector<1x512xf32>
    %87 = tpu.matmul %84, %86, %cst_51 {dimension_numbers = #tpu.dot_dimension_numbers<[1], [0], [0], [1], [0, 0, 1, 1], [], []>} : vector<1x216xbf16>, vector<216x512xbf16>, vector<1x512xf32> -> vector<1x512xf32>
    %88 = arith.addf %80, %87 : vector<1x512xf32>
    %89 = vector.extract_strided_slice %39 {offsets = [12, 0], sizes = [1, 216], strides = [1, 1]} : vector<18x256xf32> to vector<1x216xf32>
    %90 = vector.extract_strided_slice %39 {offsets = [13, 0], sizes = [1, 216], strides = [1, 1]} : vector<18x256xf32> to vector<1x216xf32>
    %91 = arith.maximumf %89, %90 : vector<1x216xf32>
    %92 = arith.truncf %91 : vector<1x216xf32> to vector<1x216xbf16>
    %c0_52 = arith.constant 0 : index
    %c6 = arith.constant 6 : index
    %c0_53 = arith.constant 0 : index
    %c0_54 = arith.constant 0 : index
    %93 = vector.load %arg6[%c0_52, %c6, %c0_53, %c0_54] : memref<1x9x216x512xbf16, #tpu.memory_space<vmem>>, vector<1x1x216x512xbf16>
    %94 = vector.shape_cast %93 : vector<1x1x216x512xbf16> to vector<216x512xbf16>
    %cst_55 = arith.constant dense<0.000000e+00> : vector<1x512xf32>
    %95 = tpu.matmul %92, %94, %cst_55 {dimension_numbers = #tpu.dot_dimension_numbers<[1], [0], [0], [1], [0, 0, 1, 1], [], []>} : vector<1x216xbf16>, vector<216x512xbf16>, vector<1x512xf32> -> vector<1x512xf32>
    %96 = arith.addf %88, %95 : vector<1x512xf32>
    %97 = vector.extract_strided_slice %39 {offsets = [14, 0], sizes = [1, 216], strides = [1, 1]} : vector<18x256xf32> to vector<1x216xf32>
    %98 = vector.extract_strided_slice %39 {offsets = [15, 0], sizes = [1, 216], strides = [1, 1]} : vector<18x256xf32> to vector<1x216xf32>
    %99 = arith.maximumf %97, %98 : vector<1x216xf32>
    %100 = arith.truncf %99 : vector<1x216xf32> to vector<1x216xbf16>
    %c0_56 = arith.constant 0 : index
    %c7 = arith.constant 7 : index
    %c0_57 = arith.constant 0 : index
    %c0_58 = arith.constant 0 : index
    %101 = vector.load %arg6[%c0_56, %c7, %c0_57, %c0_58] : memref<1x9x216x512xbf16, #tpu.memory_space<vmem>>, vector<1x1x216x512xbf16>
    %102 = vector.shape_cast %101 : vector<1x1x216x512xbf16> to vector<216x512xbf16>
    %cst_59 = arith.constant dense<0.000000e+00> : vector<1x512xf32>
    %103 = tpu.matmul %100, %102, %cst_59 {dimension_numbers = #tpu.dot_dimension_numbers<[1], [0], [0], [1], [0, 0, 1, 1], [], []>} : vector<1x216xbf16>, vector<216x512xbf16>, vector<1x512xf32> -> vector<1x512xf32>
    %104 = arith.addf %96, %103 : vector<1x512xf32>
    %105 = vector.extract_strided_slice %39 {offsets = [16, 0], sizes = [1, 216], strides = [1, 1]} : vector<18x256xf32> to vector<1x216xf32>
    %106 = vector.extract_strided_slice %39 {offsets = [17, 0], sizes = [1, 216], strides = [1, 1]} : vector<18x256xf32> to vector<1x216xf32>
    %107 = arith.maximumf %105, %106 : vector<1x216xf32>
    %108 = arith.truncf %107 : vector<1x216xf32> to vector<1x216xbf16>
    %c0_60 = arith.constant 0 : index
    %c8 = arith.constant 8 : index
    %c0_61 = arith.constant 0 : index
    %c0_62 = arith.constant 0 : index
    %109 = vector.load %arg6[%c0_60, %c8, %c0_61, %c0_62] : memref<1x9x216x512xbf16, #tpu.memory_space<vmem>>, vector<1x1x216x512xbf16>
    %110 = vector.shape_cast %109 : vector<1x1x216x512xbf16> to vector<216x512xbf16>
    %cst_63 = arith.constant dense<0.000000e+00> : vector<1x512xf32>
    %111 = tpu.matmul %108, %110, %cst_63 {dimension_numbers = #tpu.dot_dimension_numbers<[1], [0], [0], [1], [0, 0, 1, 1], [], []>} : vector<1x216xbf16>, vector<216x512xbf16>, vector<1x512xf32> -> vector<1x512xf32>
    %112 = arith.addf %104, %111 : vector<1x512xf32>
    %cst_64 = arith.constant 0.000000e+00 : f32
    %113 = vector.broadcast %cst_64 : f32 to vector<1x512xf32>
    %114 = arith.maximumf %112, %113 : vector<1x512xf32>
    %115 = arith.truncf %114 : vector<1x512xf32> to vector<1x512xbf16>
    %c0_65 = arith.constant 0 : index
    %c0_66 = arith.constant 0 : index
    %116 = vector.load %arg8[%c0_65, %c0_66] : memref<512x256xbf16, #tpu.memory_space<vmem>>, vector<512x256xbf16>
    %cst_67 = arith.constant dense<0.000000e+00> : vector<1x256xf32>
    %117 = tpu.matmul %115, %116, %cst_67 {dimension_numbers = #tpu.dot_dimension_numbers<[1], [0], [0], [1], [0, 0, 1, 1], [], []>} : vector<1x512xbf16>, vector<512x256xbf16>, vector<1x256xf32> -> vector<1x256xf32>
    %c0_68 = arith.constant 0 : index
    %c0_69 = arith.constant 0 : index
    %c0_70 = arith.constant 0 : index
    %118 = vector.load %arg9[%c0_68, %c0_69, %c0_70] : memref<1x1x256xf32, #tpu.memory_space<vmem>>, vector<1x1x256xf32>
    %119 = vector.shape_cast %118 : vector<1x1x256xf32> to vector<1x256xf32>
    %120 = vector.shape_cast %117 : vector<1x256xf32> to vector<1x1x256xf32>
    tpu.vector_store %arg9[%c0_68, %c0_69, %c0_70], %120 {strides = array<i32>} : memref<1x1x256xf32, #tpu.memory_space<vmem>>, vector<1x1x256xf32>,
    return
  }
  func.func @transform_0(%arg0: i32) -> (i32, i32) {
    %c0_i32 = arith.constant 0 : i32
    %c0_i32_0 = arith.constant 0 : i32
    %c0_i32_1 = arith.constant 0 : i32
    return %c0_i32, %c0_i32_0 : i32, i32
  }
  func.func @transform_1(%arg0: i32) -> (i32, i32) {
    %c0_i32 = arith.constant 0 : i32
    %c0_i32_0 = arith.constant 0 : i32
    %c0_i32_1 = arith.constant 0 : i32
    return %c0_i32, %c0_i32_0 : i32, i32
  }
  func.func @transform_2(%arg0: i32) -> (i32, i32) {
    %c0_i32 = arith.constant 0 : i32
    %c0_i32_0 = arith.constant 0 : i32
    %c0_i32_1 = arith.constant 0 : i32
    return %c0_i32, %c0_i32_0 : i32, i32
  }
  func.func @transform_3(%arg0: i32) -> (i32, i32, i32) {
    %c0_i32 = arith.constant 0 : i32
    %c0_i32_0 = arith.constant 0 : i32
    %c0_i32_1 = arith.constant 0 : i32
    %c0_i32_2 = arith.constant 0 : i32
    return %c0_i32, %c0_i32_0, %c0_i32_1 : i32, i32, i32
  }
  func.func @transform_4(%arg0: i32) -> (i32, i32) {
    %c0_i32 = arith.constant 0 : i32
    %c0_i32_0 = arith.constant 0 : i32
    %c0_i32_1 = arith.constant 0 : i32
    return %c0_i32, %c0_i32_0 : i32, i32
  }
  func.func @transform_5(%arg0: i32) -> (i32, i32, i32, i32) {
    %c0_i32 = arith.constant 0 : i32
    %c0_i32_0 = arith.constant 0 : i32
    %c0_i32_1 = arith.constant 0 : i32
    %c0_i32_2 = arith.constant 0 : i32
    return %arg0, %c0_i32, %c0_i32_0, %c0_i32_1 : i32, i32, i32, i32
  }
  func.func @transform_6(%arg0: i32) -> (i32, i32) {
    %c0_i32 = arith.constant 0 : i32
    %c0_i32_0 = arith.constant 0 : i32
    return %c0_i32, %arg0 : i32, i32
  }
  func.func @transform_7(%arg0: i32) -> (i32, i32) {
    %c0_i32 = arith.constant 0 : i32
    %c0_i32_0 = arith.constant 0 : i32
    return %arg0, %c0_i32 : i32, i32
  }
  func.func @transform_8(%arg0: i32) -> (i32, i32, i32) {
    %c0_i32 = arith.constant 0 : i32
    %c0_i32_0 = arith.constant 0 : i32
    %c0_i32_1 = arith.constant 0 : i32
    return %arg0, %c0_i32, %c0_i32_0 : i32, i32, i32
  }
}

</mosaic_0001>

<llo_original>
// kernel: squeeze.2
$region0: #{squeeze.2}
  %s0 = inlined_call_operand.vmem [shape: f32[84,84], index: 0, kind: input, shape index: {}]
  %s1 = inlined_call_operand.vmem [shape: f32[21,4,21,4], index: 1, kind: output, shape index: {}]
  %v2 = vld [vmem:[%s0] sm:$0xff]
  %vm3 = vcmask 31744
  %4 = vst.msk [vmem:[%s1] ss:$24 sm:$0xf] %vm3, %v2
  %5 = vst.msk [vmem:[%s1] ss:$24 sm:$0xf0] %vm3, %v2
  %s6 = scalar_lea.vmem %s0, 8
  %v7 = vld [vmem:[%s6] sm:$0xff]
  %vm8 = vcmask 31744
  %s9 = scalar_lea.vmem %s1, 192
  %10 = vst.msk [vmem:[%s9] ss:$24 sm:$0xf] %vm8, %v7
  %s11 = scalar_lea.vmem %s1, 192
  %12 = vst.msk [vmem:[%s11] ss:$24 sm:$0xf0] %vm8, %v7
  %s13 = scalar_lea.vmem %s0, 16
  %v14 = vld [vmem:[%s13] sm:$0xff]
  %vm15 = vcmask 31744
  %s16 = scalar_lea.vmem %s1, 384
  %17 = vst.msk [vmem:[%s16] ss:$24 sm:$0xf] %vm15, %v14
  %s18 = scalar_lea.vmem %s1, 384
  %19 = vst.msk [vmem:[%s18] ss:$24 sm:$0xf0] %vm15, %v14
  %s20 = scalar_lea.vmem %s0, 24
  %v21 = vld [vmem:[%s20] sm:$0xff]
  %vm22 = vcmask 31744
  %s23 = scalar_lea.vmem %s1, 576
  %24 = vst.msk [vmem:[%s23] ss:$24 sm:$0xf] %vm22, %v21
  %s25 = scalar_lea.vmem %s1, 576
  %26 = vst.msk [vmem:[%s25] ss:$24 sm:$0xf0] %vm22, %v21
  %s27 = scalar_lea.vmem %s0, 32
  %v28 = vld [vmem:[%s27] sm:$0xff]
  %vm29 = vcmask 31744
  %s30 = scalar_lea.vmem %s1, 768
  %31 = vst.msk [vmem:[%s30] ss:$24 sm:$0xf] %vm29, %v28
  %s32 = scalar_lea.vmem %s1, 768
  %33 = vst.msk [vmem:[%s32] ss:$24 sm:$0xf0] %vm29, %v28
  %s34 = scalar_lea.vmem %s0, 40
  %v35 = vld [vmem:[%s34] sm:$0xff]
  %vm36 = vcmask 31744
  %s37 = scalar_lea.vmem %s1, 960
  %38 = vst.msk [vmem:[%s37] ss:$24 sm:$0xf] %vm36, %v35
  %s39 = scalar_lea.vmem %s1, 960
  %40 = vst.msk [vmem:[%s39] ss:$24 sm:$0xf0] %vm36, %v35
  %s41 = scalar_lea.vmem %s0, 48
  %v42 = vld [vmem:[%s41] sm:$0xff]
  %vm43 = vcmask 31744
  %s44 = scalar_lea.vmem %s1, 1152
  %45 = vst.msk [vmem:[%s44] ss:$24 sm:$0xf] %vm43, %v42
  %s46 = scalar_lea.vmem %s1, 1152
  %47 = vst.msk [vmem:[%s46] ss:$24 sm:$0xf0] %vm43, %v42
  %s48 = scalar_lea.vmem %s0, 56
  %v49 = vld [vmem:[%s48] sm:$0xff]
  %vm50 = vcmask 31744
  %s51 = scalar_lea.vmem %s1, 1344
  %52 = vst.msk [vmem:[%s51] ss:$24 sm:$0xf] %vm50, %v49
  %s53 = scalar_lea.vmem %s1, 1344
  %54 = vst.msk [vmem:[%s53] ss:$24 sm:$0xf0] %vm50, %v49
  %s55 = scalar_lea.vmem %s0, 64
  %v56 = vld [vmem:[%s55] sm:$0xff]
  %vm57 = vcmask 31744
  %s58 = scalar_lea.vmem %s1, 1536
  %59 = vst.msk [vmem:[%s58] ss:$24 sm:$0xf] %vm57, %v56
  %s60 = scalar_lea.vmem %s1, 1536
  %61 = vst.msk [vmem:[%s60] ss:$24 sm:$0xf0] %vm57, %v56
  %s62 = scalar_lea.vmem %s0, 72
  %v63 = vld [vmem:[%s62] sm:$0xff]
  %vm64 = vcmask 31744
  %s65 = scalar_lea.vmem %s1, 1728
  %66 = vst.msk [vmem:[%s65] ss:$24 sm:$0xf] %vm64, %v63
  %s67 = scalar_lea.vmem %s1, 1728
  %68 = vst.msk [vmem:[%s67] ss:$24 sm:$0xf0] %vm64, %v63
  %s69 = scalar_lea.vmem %s0, 80
  %v70 = vld [vmem:[%s69] sm:$0xf]
  %vm71 = vcmask 31744
  %s72 = scalar_lea.vmem %s1, 1920
  %73 = vst.msk [vmem:[%s72] ss:$24 sm:$0xf] %vm71, %v70
  %v74 = vld.sshfl [vmem:[%s0] sm:$0xff pattern:$0x56741230]
  %75 = vrot.lane.b32.xlu0 %v74, 124
  %v76 = vpop.permute.xlu0 %75
  %vm77 = vcmask 31744
  %s78 = scalar_lea.vmem %s1, 1
  %79 = vst.msk [vmem:[%s78] ss:$72 sm:$0x3] %vm77, %v76
  %s80 = scalar_lea.vmem %s1, 97
  %81 = vst.msk [vmem:[%s80] ss:$-24 sm:$0xc] %vm77, %v76
  %s82 = scalar_lea.vmem %s1, 4294967105
  %83 = vst.msk [vmem:[%s82] ss:$72 sm:$0x30] %vm77, %v76
  %s84 = scalar_lea.vmem %s1, 289
  %85 = vst.msk [vmem:[%s84] ss:$-24 sm:$0xc0] %vm77, %v76
  %s86 = scalar_lea.vmem %s0, 8
  %v87 = vld.sshfl [vmem:[%s86] sm:$0xff pattern:$0x56741230]
  %88 = vrot.lane.b32.xlu0 %v87, 124
  %v89 = vpop.permute.xlu0 %88
  %vm90 = vcmask 31744
  %s91 = scalar_lea.vmem %s1, 193
  %92 = vst.msk [vmem:[%s91] ss:$72 sm:$0x3] %vm90, %v89
  %s93 = scalar_lea.vmem %s1, 289
  %94 = vst.msk [vmem:[%s93] ss:$-24 sm:$0xc] %vm90, %v89
  %s95 = scalar_lea.vmem %s1, 1
  %96 = vst.msk [vmem:[%s95] ss:$72 sm:$0x30] %vm90, %v89
  %s97 = scalar_lea.vmem %s1, 481
  %98 = vst.msk [vmem:[%s97] ss:$-24 sm:$0xc0] %vm90, %v89
  %s99 = scalar_lea.vmem %s0, 16
  %v100 = vld.sshfl [vmem:[%s99] sm:$0xff pattern:$0x56741230]
  %101 = vrot.lane.b32.xlu0 %v100, 124
  %v102 = vpop.permute.xlu0 %101
  %vm103 = vcmask 31744
  %s104 = scalar_lea.vmem %s1, 385
  %105 = vst.msk [vmem:[%s104] ss:$72 sm:$0x3] %vm103, %v102
  %s106 = scalar_lea.vmem %s1, 481
  %107 = vst.msk [vmem:[%s106] ss:$-24 sm:$0xc] %vm103, %v102
  %s108 = scalar_lea.vmem %s1, 193
  %109 = vst.msk [vmem:[%s108] ss:$72 sm:$0x30] %vm103, %v102
  %s110 = scalar_lea.vmem %s1, 673
  %111 = vst.msk [vmem:[%s110] ss:$-24 sm:$0xc0] %vm103, %v102
  %s112 = scalar_lea.vmem %s0, 24
  %v113 = vld.sshfl [vmem:[%s112] sm:$0xff pattern:$0x56741230]
  %114 = vrot.lane.b32.xlu0 %v113, 124
  %v115 = vpop.permute.xlu0 %114
  %vm116 = vcmask 31744
  %s117 = scalar_lea.vmem %s1, 577
  %118 = vst.msk [vmem:[%s117] ss:$72 sm:$0x3] %vm116, %v115
  %s119 = scalar_lea.vmem %s1, 673
  %120 = vst.msk [vmem:[%s119] ss:$-24 sm:$0xc] %vm116, %v115
  %s121 = scalar_lea.vmem %s1, 385
  %122 = vst.msk [vmem:[%s121] ss:$72 sm:$0x30] %vm116, %v115
  %s123 = scalar_lea.vmem %s1, 865
  %124 = vst.msk [vmem:[%s123] ss:$-24 sm:$0xc0] %vm116, %v115
  %s125 = scalar_lea.vmem %s0, 32
  %v126 = vld.sshfl [vmem:[%s125] sm:$0xff pattern:$0x56741230]
  %127 = vrot.lane.b32.xlu0 %v126, 124
  %v128 = vpop.permute.xlu0 %127
  %vm129 = vcmask 31744
  %s130 = scalar_lea.vmem %s1, 769
  %131 = vst.msk [vmem:[%s130] ss:$72 sm:$0x3] %vm129, %v128
  %s132 = scalar_lea.vmem %s1, 865
  %133 = vst.msk [vmem:[%s132] ss:$-24 sm:$0xc] %vm129, %v128
  %s134 = scalar_lea.vmem %s1, 577
  %135 = vst.msk [vmem:[%s134] ss:$72 sm:$0x30] %vm129, %v128
  %s136 = scalar_lea.vmem %s1, 1057
  %137 = vst.msk [vmem:[%s136] ss:$-24 sm:$0xc0] %vm129, %v128
  %s138 = scalar_lea.vmem %s0, 40
  %v139 = vld.sshfl [vmem:[%s138] sm:$0xff pattern:$0x56741230]
  %140 = vrot.lane.b32.xlu0 %v139, 124
  %v141 = vpop.permute.xlu0 %140
  %vm142 = vcmask 31744
  %s143 = scalar_lea.vmem %s1, 961
  %144 = vst.msk [vmem:[%s143] ss:$72 sm:$0x3] %vm142, %v141
  %s145 = scalar_lea.vmem %s1, 1057
  %146 = vst.msk [vmem:[%s145] ss:$-24 sm:$0xc] %vm142, %v141
  %s147 = scalar_lea.vmem %s1, 769
  %148 = vst.msk [vmem:[%s147] ss:$72 sm:$0x30] %vm142, %v141
  %s149 = scalar_lea.vmem %s1, 1249
  %150 = vst.msk [vmem:[%s149] ss:$-24 sm:$0xc0] %vm142, %v141
  %s151 = scalar_lea.vmem %s0, 48
  %v152 = vld.sshfl [vmem:[%s151] sm:$0xff pattern:$0x56741230]
  %153 = vrot.lane.b32.xlu0 %v152, 124
  %v154 = vpop.permute.xlu0 %153
  %vm155 = vcmask 31744
  %s156 = scalar_lea.vmem %s1, 1153
  %157 = vst.msk [vmem:[%s156] ss:$72 sm:$0x3] %vm155, %v154
  %s158 = scalar_lea.vmem %s1, 1249
  %159 = vst.msk [vmem:[%s158] ss:$-24 sm:$0xc] %vm155, %v154
  %s160 = scalar_lea.vmem %s1, 961
  %161 = vst.msk [vmem:[%s160] ss:$72 sm:$0x30] %vm155, %v154
  %s162 = scalar_lea.vmem %s1, 1441
  %163 = vst.msk [vmem:[%s162] ss:$-24 sm:$0xc0] %vm155, %v154
  %s164 = scalar_lea.vmem %s0, 56
  %v165 = vld.sshfl [vmem:[%s164] sm:$0xff pattern:$0x56741230]
  %166 = vrot.lane.b32.xlu0 %v165, 124
  %v167 = vpop.permute.xlu0 %166
  %vm168 = vcmask 31744
  %s169 = scalar_lea.vmem %s1, 1345
  %170 = vst.msk [vmem:[%s169] ss:$72 sm:$0x3] %vm168, %v167
  %s171 = scalar_lea.vmem %s1, 1441
  %172 = vst.msk [vmem:[%s171] ss:$-24 sm:$0xc] %vm168, %v167
  %s173 = scalar_lea.vmem %s1, 1153
  %174 = vst.msk [vmem:[%s173] ss:$72 sm:$0x30] %vm168, %v167
  %s175 = scalar_lea.vmem %s1, 1633
  %176 = vst.msk [vmem:[%s175] ss:$-24 sm:$0xc0] %vm168, %v167
  %s177 = scalar_lea.vmem %s0, 64
  %v178 = vld.sshfl [vmem:[%s177] sm:$0xff pattern:$0x56741230]
  %179 = vrot.lane.b32.xlu0 %v178, 124
  %v180 = vpop.permute.xlu0 %179
  %vm181 = vcmask 31744
  %s182 = scalar_lea.vmem %s1, 1537
  %183 = vst.msk [vmem:[%s182] ss:$72 sm:$0x3] %vm181, %v180
  %s184 = scalar_lea.vmem %s1, 1633
  %185 = vst.msk [vmem:[%s184] ss:$-24 sm:$0xc] %vm181, %v180
  %s186 = scalar_lea.vmem %s1, 1345
  %187 = vst.msk [vmem:[%s186] ss:$72 sm:$0x30] %vm181, %v180
  %s188 = scalar_lea.vmem %s1, 1825
  %189 = vst.msk [vmem:[%s188] ss:$-24 sm:$0xc0] %vm181, %v180
  %s190 = scalar_lea.vmem %s0, 72
  %v191 = vld.sshfl [vmem:[%s190] sm:$0xff pattern:$0x56741230]
  %192 = vrot.lane.b32.xlu0 %v191, 124
  %v193 = vpop.permute.xlu0 %192
  %vm194 = vcmask 31744
  %s195 = scalar_lea.vmem %s1, 1729
  %196 = vst.msk [vmem:[%s195] ss:$72 sm:$0x3] %vm194, %v193
  %s197 = scalar_lea.vmem %s1, 1825
  %198 = vst.msk [vmem:[%s197] ss:$-24 sm:$0xc] %vm194, %v193
  %s199 = scalar_lea.vmem %s1, 1537
  %200 = vst.msk [vmem:[%s199] ss:$72 sm:$0x30] %vm194, %v193
  %s201 = scalar_lea.vmem %s1, 2017
  %202 = vst.msk [vmem:[%s201] ss:$-24 sm:$0xc0] %vm194, %v193
  %s203 = scalar_lea.vmem %s0, 80
  %v204 = vld.sshfl [vmem:[%s203] sm:$0xff pattern:$0x11111230]
  %205 = vrot.lane.b32.xlu0 %v204, 124
  %v206 = vpop.permute.xlu0 %205
  %vm207 = vcmask 31744
  %s208 = scalar_lea.vmem %s1, 1921
  %209 = vst.msk [vmem:[%s208] ss:$72 sm:$0x3] %vm207, %v206
  %s210 = scalar_lea.vmem %s1, 2017
  %211 = vst.msk [vmem:[%s210] ss:$-24 sm:$0xc] %vm207, %v206
  %v212 = vld.sshfl [vmem:[%s0] sm:$0xff pattern:$0x56741230]
  %213 = vrot.lane.b32.xlu0 %v212, 120
  %v214 = vpop.permute.xlu0 %213
  %vm215 = vcmask 31744
  %s216 = scalar_lea.vmem %s1, 2
  %217 = vst.msk [vmem:[%s216] ss:$72 sm:$0x3] %vm215, %v214
  %s218 = scalar_lea.vmem %s1, 98
  %219 = vst.msk [vmem:[%s218] ss:$-24 sm:$0xc] %vm215, %v214
  %s220 = scalar_lea.vmem %s1, 4294967106
  %221 = vst.msk [vmem:[%s220] ss:$72 sm:$0x30] %vm215, %v214
  %s222 = scalar_lea.vmem %s1, 290
  %223 = vst.msk [vmem:[%s222] ss:$-24 sm:$0xc0] %vm215, %v214
  %s224 = scalar_lea.vmem %s0, 8
  %v225 = vld.sshfl [vmem:[%s224] sm:$0xff pattern:$0x56741230]
  %226 = vrot.lane.b32.xlu0 %v225, 120
  %v227 = vpop.permute.xlu0 %226
  %vm228 = vcmask 31744
  %s229 = scalar_lea.vmem %s1, 194
  %230 = vst.msk [vmem:[%s229] ss:$72 sm:$0x3] %vm228, %v227
  %s231 = scalar_lea.vmem %s1, 290
  %232 = vst.msk [vmem:[%s231] ss:$-24 sm:$0xc] %vm228, %v227
  %s233 = scalar_lea.vmem %s1, 2
  %234 = vst.msk [vmem:[%s233] ss:$72 sm:$0x30] %vm228, %v227
  %s235 = scalar_lea.vmem %s1, 482
  %236 = vst.msk [vmem:[%s235] ss:$-24 sm:$0xc0] %vm228, %v227
  %s237 = scalar_lea.vmem %s0, 16
  %v238 = vld.sshfl [vmem:[%s237] sm:$0xff pattern:$0x56741230]
  %239 = vrot.lane.b32.xlu0 %v238, 120
  %v240 = vpop.permute.xlu0 %239
  %vm241 = vcmask 31744
  %s242 = scalar_lea.vmem %s1, 386
  %243 = vst.msk [vmem:[%s242] ss:$72 sm:$0x3] %vm241, %v240
  %s244 = scalar_lea.vmem %s1, 482
  %245 = vst.msk [vmem:[%s244] ss:$-24 sm:$0xc] %vm241, %v240
  %s246 = scalar_lea.vmem %s1, 194
  %247 = vst.msk [vmem:[%s246] ss:$72 sm:$0x30] %vm241, %v240
  %s248 = scalar_lea.vmem %s1, 674
  %249 = vst.msk [vmem:[%s248] ss:$-24 sm:$0xc0] %vm241, %v240
  %s250 = scalar_lea.vmem %s0, 24
  %v251 = vld.sshfl [vmem:[%s250] sm:$0xff pattern:$0x56741230]
  %252 = vrot.lane.b32.xlu0 %v251, 120
  %v253 = vpop.permute.xlu0 %252
  %vm254 = vcmask 31744
  %s255 = scalar_lea.vmem %s1, 578
  %256 = vst.msk [vmem:[%s255] ss:$72 sm:$0x3] %vm254, %v253
  %s257 = scalar_lea.vmem %s1, 674
  %258 = vst.msk [vmem:[%s257] ss:$-24 sm:$0xc] %vm254, %v253
  %s259 = scalar_lea.vmem %s1, 386
  %260 = vst.msk [vmem:[%s259] ss:$72 sm:$0x30] %vm254, %v253
  %s261 = scalar_lea.vmem %s1, 866
  %262 = vst.msk [vmem:[%s261] ss:$-24 sm:$0xc0] %vm254, %v253
  %s263 = scalar_lea.vmem %s0, 32
  %v264 = vld.sshfl [vmem:[%s263] sm:$0xff pattern:$0x56741230]
  %265 = vrot.lane.b32.xlu0 %v264, 120
  %v266 = vpop.permute.xlu0 %265
  %vm267 = vcmask 31744
  %s268 = scalar_lea.vmem %s1, 770
  %269 = vst.msk [vmem:[%s268] ss:$72 sm:$0x3] %vm267, %v266
  %s270 = scalar_lea.vmem %s1, 866
  %271 = vst.msk [vmem:[%s270] ss:$-24 sm:$0xc] %vm267, %v266
  %s272 = scalar_lea.vmem %s1, 578
  %273 = vst.msk [vmem:[%s272] ss:$72 sm:$0x30] %vm267, %v266
  %s274 = scalar_lea.vmem %s1, 1058
  %275 = vst.msk [vmem:[%s274] ss:$-24 sm:$0xc0] %vm267, %v266
  %s276 = scalar_lea.vmem %s0, 40
  %v277 = vld.sshfl [vmem:[%s276] sm:$0xff pattern:$0x56741230]
  %278 = vrot.lane.b32.xlu0 %v277, 120
  %v279 = vpop.permute.xlu0 %278
  %vm280 = vcmask 31744
  %s281 = scalar_lea.vmem %s1, 962
  %282 = vst.msk [vmem:[%s281] ss:$72 sm:$0x3] %vm280, %v279
  %s283 = scalar_lea.vmem %s1, 1058
  %284 = vst.msk [vmem:[%s283] ss:$-24 sm:$0xc] %vm280, %v279
  %s285 = scalar_lea.vmem %s1, 770
  %286 = vst.msk [vmem:[%s285] ss:$72 sm:$0x30] %vm280, %v279
  %s287 = scalar_lea.vmem %s1, 1250
  %288 = vst.msk [vmem:[%s287] ss:$-24 sm:$0xc0] %vm280, %v279
  %s289 = scalar_lea.vmem %s0, 48
  %v290 = vld.sshfl [vmem:[%s289] sm:$0xff pattern:$0x56741230]
  %291 = vrot.lane.b32.xlu0 %v290, 120
  %v292 = vpop.permute.xlu0 %291
  %vm293 = vcmask 31744
  %s294 = scalar_lea.vmem %s1, 1154
  %295 = vst.msk [vmem:[%s294] ss:$72 sm:$0x3] %vm293, %v292
  %s296 = scalar_lea.vmem %s1, 1250
  %297 = vst.msk [vmem:[%s296] ss:$-24 sm:$0xc] %vm293, %v292
  %s298 = scalar_lea.vmem %s1, 962
  %299 = vst.msk [vmem:[%s298] ss:$72 sm:$0x30] %vm293, %v292
  %s300 = scalar_lea.vmem %s1, 1442
  %301 = vst.msk [vmem:[%s300] ss:$-24 sm:$0xc0] %vm293, %v292
  %s302 = scalar_lea.vmem %s0, 56
  %v303 = vld.sshfl [vmem:[%s302] sm:$0xff pattern:$0x56741230]
  %304 = vrot.lane.b32.xlu0 %v303, 120
  %v305 = vpop.permute.xlu0 %304
  %vm306 = vcmask 31744
  %s307 = scalar_lea.vmem %s1, 1346
  %308 = vst.msk [vmem:[%s307] ss:$72 sm:$0x3] %vm306, %v305
  %s309 = scalar_lea.vmem %s1, 1442
  %310 = vst.msk [vmem:[%s309] ss:$-24 sm:$0xc] %vm306, %v305
  %s311 = scalar_lea.vmem %s1, 1154
  %312 = vst.msk [vmem:[%s311] ss:$72 sm:$0x30] %vm306, %v305
  %s313 = scalar_lea.vmem %s1, 1634
  %314 = vst.msk [vmem:[%s313] ss:$-24 sm:$0xc0] %vm306, %v305
  %s315 = scalar_lea.vmem %s0, 64
  %v316 = vld.sshfl [vmem:[%s315] sm:$0xff pattern:$0x56741230]
  %317 = vrot.lane.b32.xlu0 %v316, 120
  %v318 = vpop.permute.xlu0 %317
  %vm319 = vcmask 31744
  %s320 = scalar_lea.vmem %s1, 1538
  %321 = vst.msk [vmem:[%s320] ss:$72 sm:$0x3] %vm319, %v318
  %s322 = scalar_lea.vmem %s1, 1634
  %323 = vst.msk [vmem:[%s322] ss:$-24 sm:$0xc] %vm319, %v318
  %s324 = scalar_lea.vmem %s1, 1346
  %325 = vst.msk [vmem:[%s324] ss:$72 sm:$0x30] %vm319, %v318
  %s326 = scalar_lea.vmem %s1, 1826
  %327 = vst.msk [vmem:[%s326] ss:$-24 sm:$0xc0] %vm319, %v318
  %s328 = scalar_lea.vmem %s0, 72
  %v329 = vld.sshfl [vmem:[%s328] sm:$0xff pattern:$0x56741230]
  %330 = vrot.lane.b32.xlu0 %v329, 120
  %v331 = vpop.permute.xlu0 %330
  %vm332 = vcmask 31744
  %s333 = scalar_lea.vmem %s1, 1730
  %334 = vst.msk [vmem:[%s333] ss:$72 sm:$0x3] %vm332, %v331
  %s335 = scalar_lea.vmem %s1, 1826
  %336 = vst.msk [vmem:[%s335] ss:$-24 sm:$0xc] %vm332, %v331
  %s337 = scalar_lea.vmem %s1, 1538
  %338 = vst.msk [vmem:[%s337] ss:$72 sm:$0x30] %vm332, %v331
  %s339 = scalar_lea.vmem %s1, 2018
  %340 = vst.msk [vmem:[%s339] ss:$-24 sm:$0xc0] %vm332, %v331
  %s341 = scalar_lea.vmem %s0, 80
  %v342 = vld.sshfl [vmem:[%s341] sm:$0xff pattern:$0x11111230]
  %343 = vrot.lane.b32.xlu0 %v342, 120
  %v344 = vpop.permute.xlu0 %343
  %vm345 = vcmask 31744
  %s346 = scalar_lea.vmem %s1, 1922
  %347 = vst.msk [vmem:[%s346] ss:$72 sm:$0x3] %vm345, %v344
  %s348 = scalar_lea.vmem %s1, 2018
  %349 = vst.msk [vmem:[%s348] ss:$-24 sm:$0xc] %vm345, %v344
  %v350 = vld.sshfl [vmem:[%s0] sm:$0xff pattern:$0x56741230]
  %351 = vrot.lane.b32.xlu0 %v350, 116
  %v352 = vpop.permute.xlu0 %351
  %vm353 = vcmask 31744
  %s354 = scalar_lea.vmem %s1, 3
  %355 = vst.msk [vmem:[%s354] ss:$72 sm:$0x3] %vm353, %v352
  %s356 = scalar_lea.vmem %s1, 99
  %357 = vst.msk [vmem:[%s356] ss:$-24 sm:$0xc] %vm353, %v352
  %s358 = scalar_lea.vmem %s1, 4294967107
  %359 = vst.msk [vmem:[%s358] ss:$72 sm:$0x30] %vm353, %v352
  %s360 = scalar_lea.vmem %s1, 291
  %361 = vst.msk [vmem:[%s360] ss:$-24 sm:$0xc0] %vm353, %v352
  %s362 = scalar_lea.vmem %s0, 8
  %v363 = vld.sshfl [vmem:[%s362] sm:$0xff pattern:$0x56741230]
  %364 = vrot.lane.b32.xlu0 %v363, 116
  %v365 = vpop.permute.xlu0 %364
  %vm366 = vcmask 31744
  %s367 = scalar_lea.vmem %s1, 195
  %368 = vst.msk [vmem:[%s367] ss:$72 sm:$0x3] %vm366, %v365
  %s369 = scalar_lea.vmem %s1, 291
  %370 = vst.msk [vmem:[%s369] ss:$-24 sm:$0xc] %vm366, %v365
  %s371 = scalar_lea.vmem %s1, 3
  %372 = vst.msk [vmem:[%s371] ss:$72 sm:$0x30] %vm366, %v365
  %s373 = scalar_lea.vmem %s1, 483
  %374 = vst.msk [vmem:[%s373] ss:$-24 sm:$0xc0] %vm366, %v365
  %s375 = scalar_lea.vmem %s0, 16
  %v376 = vld.sshfl [vmem:[%s375] sm:$0xff pattern:$0x56741230]
  %377 = vrot.lane.b32.xlu0 %v376, 116
  %v378 = vpop.permute.xlu0 %377
  %vm379 = vcmask 31744
  %s380 = scalar_lea.vmem %s1, 387
  %381 = vst.msk [vmem:[%s380] ss:$72 sm:$0x3] %vm379, %v378
  %s382 = scalar_lea.vmem %s1, 483
  %383 = vst.msk [vmem:[%s382] ss:$-24 sm:$0xc] %vm379, %v378
  %s384 = scalar_lea.vmem %s1, 195
  %385 = vst.msk [vmem:[%s384] ss:$72 sm:$0x30] %vm379, %v378
  %s386 = scalar_lea.vmem %s1, 675
  %387 = vst.msk [vmem:[%s386] ss:$-24 sm:$0xc0] %vm379, %v378
  %s388 = scalar_lea.vmem %s0, 24
  %v389 = vld.sshfl [vmem:[%s388] sm:$0xff pattern:$0x56741230]
  %390 = vrot.lane.b32.xlu0 %v389, 116
  %v391 = vpop.permute.xlu0 %390
  %vm392 = vcmask 31744
  %s393 = scalar_lea.vmem %s1, 579
  %394 = vst.msk [vmem:[%s393] ss:$72 sm:$0x3] %vm392, %v391
  %s395 = scalar_lea.vmem %s1, 675
  %396 = vst.msk [vmem:[%s395] ss:$-24 sm:$0xc] %vm392, %v391
  %s397 = scalar_lea.vmem %s1, 387
  %398 = vst.msk [vmem:[%s397] ss:$72 sm:$0x30] %vm392, %v391
  %s399 = scalar_lea.vmem %s1, 867
  %400 = vst.msk [vmem:[%s399] ss:$-24 sm:$0xc0] %vm392, %v391
  %s401 = scalar_lea.vmem %s0, 32
  %v402 = vld.sshfl [vmem:[%s401] sm:$0xff pattern:$0x56741230]
  %403 = vrot.lane.b32.xlu0 %v402, 116
  %v404 = vpop.permute.xlu0 %403
  %vm405 = vcmask 31744
  %s406 = scalar_lea.vmem %s1, 771
  %407 = vst.msk [vmem:[%s406] ss:$72 sm:$0x3] %vm405, %v404
  %s408 = scalar_lea.vmem %s1, 867
  %409 = vst.msk [vmem:[%s408] ss:$-24 sm:$0xc] %vm405, %v404
  %s410 = scalar_lea.vmem %s1, 579
  %411 = vst.msk [vmem:[%s410] ss:$72 sm:$0x30] %vm405, %v404
  %s412 = scalar_lea.vmem %s1, 1059
  %413 = vst.msk [vmem:[%s412] ss:$-24 sm:$0xc0] %vm405, %v404
  %s414 = scalar_lea.vmem %s0, 40
  %v415 = vld.sshfl [vmem:[%s414] sm:$0xff pattern:$0x56741230]
  %416 = vrot.lane.b32.xlu0 %v415, 116
  %v417 = vpop.permute.xlu0 %416
  %vm418 = vcmask 31744
  %s419 = scalar_lea.vmem %s1, 963
  %420 = vst.msk [vmem:[%s419] ss:$72 sm:$0x3] %vm418, %v417
  %s421 = scalar_lea.vmem %s1, 1059
  %422 = vst.msk [vmem:[%s421] ss:$-24 sm:$0xc] %vm418, %v417
  %s423 = scalar_lea.vmem %s1, 771
  %424 = vst.msk [vmem:[%s423] ss:$72 sm:$0x30] %vm418, %v417
  %s425 = scalar_lea.vmem %s1, 1251
  %426 = vst.msk [vmem:[%s425] ss:$-24 sm:$0xc0] %vm418, %v417
  %s427 = scalar_lea.vmem %s0, 48
  %v428 = vld.sshfl [vmem:[%s427] sm:$0xff pattern:$0x56741230]
  %429 = vrot.lane.b32.xlu0 %v428, 116
  %v430 = vpop.permute.xlu0 %429
  %vm431 = vcmask 31744
  %s432 = scalar_lea.vmem %s1, 1155
  %433 = vst.msk [vmem:[%s432] ss:$72 sm:$0x3] %vm431, %v430
  %s434 = scalar_lea.vmem %s1, 1251
  %435 = vst.msk [vmem:[%s434] ss:$-24 sm:$0xc] %vm431, %v430
  %s436 = scalar_lea.vmem %s1, 963
  %437 = vst.msk [vmem:[%s436] ss:$72 sm:$0x30] %vm431, %v430
  %s438 = scalar_lea.vmem %s1, 1443
  %439 = vst.msk [vmem:[%s438] ss:$-24 sm:$0xc0] %vm431, %v430
  %s440 = scalar_lea.vmem %s0, 56
  %v441 = vld.sshfl [vmem:[%s440] sm:$0xff pattern:$0x56741230]
  %442 = vrot.lane.b32.xlu0 %v441, 116
  %v443 = vpop.permute.xlu0 %442
  %vm444 = vcmask 31744
  %s445 = scalar_lea.vmem %s1, 1347
  %446 = vst.msk [vmem:[%s445] ss:$72 sm:$0x3] %vm444, %v443
  %s447 = scalar_lea.vmem %s1, 1443
  %448 = vst.msk [vmem:[%s447] ss:$-24 sm:$0xc] %vm444, %v443
  %s449 = scalar_lea.vmem %s1, 1155
  %450 = vst.msk [vmem:[%s449] ss:$72 sm:$0x30] %vm444, %v443
  %s451 = scalar_lea.vmem %s1, 1635
  %452 = vst.msk [vmem:[%s451] ss:$-24 sm:$0xc0] %vm444, %v443
  %s453 = scalar_lea.vmem %s0, 64
  %v454 = vld.sshfl [vmem:[%s453] sm:$0xff pattern:$0x56741230]
  %455 = vrot.lane.b32.xlu0 %v454, 116
  %v456 = vpop.permute.xlu0 %455
  %vm457 = vcmask 31744
  %s458 = scalar_lea.vmem %s1, 1539
  %459 = vst.msk [vmem:[%s458] ss:$72 sm:$0x3] %vm457, %v456
  %s460 = scalar_lea.vmem %s1, 1635
  %461 = vst.msk [vmem:[%s460] ss:$-24 sm:$0xc] %vm457, %v456
  %s462 = scalar_lea.vmem %s1, 1347
  %463 = vst.msk [vmem:[%s462] ss:$72 sm:$0x30] %vm457, %v456
  %s464 = scalar_lea.vmem %s1, 1827
  %465 = vst.msk [vmem:[%s464] ss:$-24 sm:$0xc0] %vm457, %v456
  %s466 = scalar_lea.vmem %s0, 72
  %v467 = vld.sshfl [vmem:[%s466] sm:$0xff pattern:$0x56741230]
  %468 = vrot.lane.b32.xlu0 %v467, 116
  %v469 = vpop.permute.xlu0 %468
  %vm470 = vcmask 31744
  %s471 = scalar_lea.vmem %s1, 1731
  %472 = vst.msk [vmem:[%s471] ss:$72 sm:$0x3] %vm470, %v469
  %s473 = scalar_lea.vmem %s1, 1827
  %474 = vst.msk [vmem:[%s473] ss:$-24 sm:$0xc] %vm470, %v469
  %s475 = scalar_lea.vmem %s1, 1539
  %476 = vst.msk [vmem:[%s475] ss:$72 sm:$0x30] %vm470, %v469
  %s477 = scalar_lea.vmem %s1, 2019
  %478 = vst.msk [vmem:[%s477] ss:$-24 sm:$0xc0] %vm470, %v469
  %s479 = scalar_lea.vmem %s0, 80
  %v480 = vld.sshfl [vmem:[%s479] sm:$0xff pattern:$0x11111230]
  %481 = vrot.lane.b32.xlu0 %v480, 116
  %v482 = vpop.permute.xlu0 %481
  %vm483 = vcmask 31744
  %s484 = scalar_lea.vmem %s1, 1923
  %485 = vst.msk [vmem:[%s484] ss:$72 sm:$0x3] %vm483, %v482
  %s486 = scalar_lea.vmem %s1, 2019
  %487 = vst.msk [vmem:[%s486] ss:$-24 sm:$0xc] %vm483, %v482
  %v488 = vld.sshfl [vmem:[%s0] sm:$0xff pattern:$0x56741230]
  %489 = vrot.lane.b32.xlu0 %v488, 112
  %v490 = vpop.permute.xlu0 %489
  %vm491 = vcmask 31744
  %s492 = scalar_lea.vmem %s1, 4
  %493 = vst.msk [vmem:[%s492] ss:$72 sm:$0x3] %vm491, %v490
  %s494 = scalar_lea.vmem %s1, 100
  %495 = vst.msk [vmem:[%s494] ss:$-24 sm:$0xc] %vm491, %v490
  %s496 = scalar_lea.vmem %s1, 4294967108
  %497 = vst.msk [vmem:[%s496] ss:$72 sm:$0x30] %vm491, %v490
  %s498 = scalar_lea.vmem %s1, 292
  %499 = vst.msk [vmem:[%s498] ss:$-24 sm:$0xc0] %vm491, %v490
  %s500 = scalar_lea.vmem %s0, 8
  %v501 = vld.sshfl [vmem:[%s500] sm:$0xff pattern:$0x56741230]
  %502 = vrot.lane.b32.xlu0 %v501, 112
  %v503 = vpop.permute.xlu0 %502
  %vm504 = vcmask 31744
  %s505 = scalar_lea.vmem %s1, 196
  %506 = vst.msk [vmem:[%s505] ss:$72 sm:$0x3] %vm504, %v503
  %s507 = scalar_lea.vmem %s1, 292
  %508 = vst.msk [vmem:[%s507] ss:$-24 sm:$0xc] %vm504, %v503
  %s509 = scalar_lea.vmem %s1, 4
  %510 = vst.msk [vmem:[%s509] ss:$72 sm:$0x30] %vm504, %v503
  %s511 = scalar_lea.vmem %s1, 484
  %512 = vst.msk [vmem:[%s511] ss:$-24 sm:$0xc0] %vm504, %v503
  %s513 = scalar_lea.vmem %s0, 16
  %v514 = vld.sshfl [vmem:[%s513] sm:$0xff pattern:$0x56741230]
  %515 = vrot.lane.b32.xlu0 %v514, 112
  %v516 = vpop.permute.xlu0 %515
  %vm517 = vcmask 31744
  %s518 = scalar_lea.vmem %s1, 388
  %519 = vst.msk [vmem:[%s518] ss:$72 sm:$0x3] %vm517, %v516
  %s520 = scalar_lea.vmem %s1, 484
  %521 = vst.msk [vmem:[%s520] ss:$-24 sm:$0xc] %vm517, %v516
  %s522 = scalar_lea.vmem %s1, 196
  %523 = vst.msk [vmem:[%s522] ss:$72 sm:$0x30] %vm517, %v516
  %s524 = scalar_lea.vmem %s1, 676
  %525 = vst.msk [vmem:[%s524] ss:$-24 sm:$0xc0] %vm517, %v516
  %s526 = scalar_lea.vmem %s0, 24
  %v527 = vld.sshfl [vmem:[%s526] sm:$0xff pattern:$0x56741230]
  %528 = vrot.lane.b32.xlu0 %v527, 112
  %v529 = vpop.permute.xlu0 %528
  %vm530 = vcmask 31744
  %s531 = scalar_lea.vmem %s1, 580
  %532 = vst.msk [vmem:[%s531] ss:$72 sm:$0x3] %vm530, %v529
  %s533 = scalar_lea.vmem %s1, 676
  %534 = vst.msk [vmem:[%s533] ss:$-24 sm:$0xc] %vm530, %v529
  %s535 = scalar_lea.vmem %s1, 388
  %536 = vst.msk [vmem:[%s535] ss:$72 sm:$0x30] %vm530, %v529
  %s537 = scalar_lea.vmem %s1, 868
  %538 = vst.msk [vmem:[%s537] ss:$-24 sm:$0xc0] %vm530, %v529
  %s539 = scalar_lea.vmem %s0, 32
  %v540 = vld.sshfl [vmem:[%s539] sm:$0xff pattern:$0x56741230]
  %541 = vrot.lane.b32.xlu0 %v540, 112
  %v542 = vpop.permute.xlu0 %541
  %vm543 = vcmask 31744
  %s544 = scalar_lea.vmem %s1, 772
  %545 = vst.msk [vmem:[%s544] ss:$72 sm:$0x3] %vm543, %v542
  %s546 = scalar_lea.vmem %s1, 868
  %547 = vst.msk [vmem:[%s546] ss:$-24 sm:$0xc] %vm543, %v542
  %s548 = scalar_lea.vmem %s1, 580
  %549 = vst.msk [vmem:[%s548] ss:$72 sm:$0x30] %vm543, %v542
  %s550 = scalar_lea.vmem %s1, 1060
  %551 = vst.msk [vmem:[%s550] ss:$-24 sm:$0xc0] %vm543, %v542
  %s552 = scalar_lea.vmem %s0, 40
  %v553 = vld.sshfl [vmem:[%s552] sm:$0xff pattern:$0x56741230]
  %554 = vrot.lane.b32.xlu0 %v553, 112
  %v555 = vpop.permute.xlu0 %554
  %vm556 = vcmask 31744
  %s557 = scalar_lea.vmem %s1, 964
  %558 = vst.msk [vmem:[%s557] ss:$72 sm:$0x3] %vm556, %v555
  %s559 = scalar_lea.vmem %s1, 1060
  %560 = vst.msk [vmem:[%s559] ss:$-24 sm:$0xc] %vm556, %v555
  %s561 = scalar_lea.vmem %s1, 772
  %562 = vst.msk [vmem:[%s561] ss:$72 sm:$0x30] %vm556, %v555
  %s563 = scalar_lea.vmem %s1, 1252
  %564 = vst.msk [vmem:[%s563] ss:$-24 sm:$0xc0] %vm556, %v555
  %s565 = scalar_lea.vmem %s0, 48
  %v566 = vld.sshfl [vmem:[%s565] sm:$0xff pattern:$0x56741230]
  %567 = vrot.lane.b32.xlu0 %v566, 112
  %v568 = vpop.permute.xlu0 %567
  %vm569 = vcmask 31744
  %s570 = scalar_lea.vmem %s1, 1156
  %571 = vst.msk [vmem:[%s570] ss:$72 sm:$0x3] %vm569, %v568
  %s572 = scalar_lea.vmem %s1, 1252
  %573 = vst.msk [vmem:[%s572] ss:$-24 sm:$0xc] %vm569, %v568
  %s574 = scalar_lea.vmem %s1, 964
  %575 = vst.msk [vmem:[%s574] ss:$72 sm:$0x30] %vm569, %v568
  %s576 = scalar_lea.vmem %s1, 1444
  %577 = vst.msk [vmem:[%s576] ss:$-24 sm:$0xc0] %vm569, %v568
  %s578 = scalar_lea.vmem %s0, 56
  %v579 = vld.sshfl [vmem:[%s578] sm:$0xff pattern:$0x56741230]
  %580 = vrot.lane.b32.xlu0 %v579, 112
  %v581 = vpop.permute.xlu0 %580
  %vm582 = vcmask 31744
  %s583 = scalar_lea.vmem %s1, 1348
  %584 = vst.msk [vmem:[%s583] ss:$72 sm:$0x3] %vm582, %v581
  %s585 = scalar_lea.vmem %s1, 1444
  %586 = vst.msk [vmem:[%s585] ss:$-24 sm:$0xc] %vm582, %v581
  %s587 = scalar_lea.vmem %s1, 1156
  %588 = vst.msk [vmem:[%s587] ss:$72 sm:$0x30] %vm582, %v581
  %s589 = scalar_lea.vmem %s1, 1636
  %590 = vst.msk [vmem:[%s589] ss:$-24 sm:$0xc0] %vm582, %v581
  %s591 = scalar_lea.vmem %s0, 64
  %v592 = vld.sshfl [vmem:[%s591] sm:$0xff pattern:$0x56741230]
  %593 = vrot.lane.b32.xlu0 %v592, 112
  %v594 = vpop.permute.xlu0 %593
  %vm595 = vcmask 31744
  %s596 = scalar_lea.vmem %s1, 1540
  %597 = vst.msk [vmem:[%s596] ss:$72 sm:$0x3] %vm595, %v594
  %s598 = scalar_lea.vmem %s1, 1636
  %599 = vst.msk [vmem:[%s598] ss:$-24 sm:$0xc] %vm595, %v594
  %s600 = scalar_lea.vmem %s1, 1348
  %601 = vst.msk [vmem:[%s600] ss:$72 sm:$0x30] %vm595, %v594
  %s602 = scalar_lea.vmem %s1, 1828
  %603 = vst.msk [vmem:[%s602] ss:$-24 sm:$0xc0] %vm595, %v594
  %s604 = scalar_lea.vmem %s0, 72
  %v605 = vld.sshfl [vmem:[%s604] sm:$0xff pattern:$0x56741230]
  %606 = vrot.lane.b32.xlu0 %v605, 112
  %v607 = vpop.permute.xlu0 %606
  %vm608 = vcmask 31744
  %s609 = scalar_lea.vmem %s1, 1732
  %610 = vst.msk [vmem:[%s609] ss:$72 sm:$0x3] %vm608, %v607
  %s611 = scalar_lea.vmem %s1, 1828
  %612 = vst.msk [vmem:[%s611] ss:$-24 sm:$0xc] %vm608, %v607
  %s613 = scalar_lea.vmem %s1, 1540
  %614 = vst.msk [vmem:[%s613] ss:$72 sm:$0x30] %vm608, %v607
  %s615 = scalar_lea.vmem %s1, 2020
  %616 = vst.msk [vmem:[%s615] ss:$-24 sm:$0xc0] %vm608, %v607
  %s617 = scalar_lea.vmem %s0, 80
  %v618 = vld.sshfl [vmem:[%s617] sm:$0xff pattern:$0x11111230]
  %619 = vrot.lane.b32.xlu0 %v618, 112
  %v620 = vpop.permute.xlu0 %619
  %vm621 = vcmask 31744
  %s622 = scalar_lea.vmem %s1, 1924
  %623 = vst.msk [vmem:[%s622] ss:$72 sm:$0x3] %vm621, %v620
  %s624 = scalar_lea.vmem %s1, 2020
  %625 = vst.msk [vmem:[%s624] ss:$-24 sm:$0xc] %vm621, %v620
  %v626 = vld.sshfl [vmem:[%s0] sm:$0xff pattern:$0x56741230]
  %627 = vrot.lane.b32.xlu0 %v626, 108
  %v628 = vpop.permute.xlu0 %627
  %vm629 = vcmask 31744
  %s630 = scalar_lea.vmem %s1, 5
  %631 = vst.msk [vmem:[%s630] ss:$72 sm:$0x3] %vm629, %v628
  %s632 = scalar_lea.vmem %s1, 101
  %633 = vst.msk [vmem:[%s632] ss:$-24 sm:$0xc] %vm629, %v628
  %s634 = scalar_lea.vmem %s1, 4294967109
  %635 = vst.msk [vmem:[%s634] ss:$72 sm:$0x30] %vm629, %v628
  %s636 = scalar_lea.vmem %s1, 293
  %637 = vst.msk [vmem:[%s636] ss:$-24 sm:$0xc0] %vm629, %v628
  %s638 = scalar_lea.vmem %s0, 8
  %v639 = vld.sshfl [vmem:[%s638] sm:$0xff pattern:$0x56741230]
  %640 = vrot.lane.b32.xlu0 %v639, 108
  %v641 = vpop.permute.xlu0 %640
  %vm642 = vcmask 31744
  %s643 = scalar_lea.vmem %s1, 197
  %644 = vst.msk [vmem:[%s643] ss:$72 sm:$0x3] %vm642, %v641
  %s645 = scalar_lea.vmem %s1, 293
  %646 = vst.msk [vmem:[%s645] ss:$-24 sm:$0xc] %vm642, %v641
  %s647 = scalar_lea.vmem %s1, 5
  %648 = vst.msk [vmem:[%s647] ss:$72 sm:$0x30] %vm642, %v641
  %s649 = scalar_lea.vmem %s1, 485
  %650 = vst.msk [vmem:[%s649] ss:$-24 sm:$0xc0] %vm642, %v641
  %s651 = scalar_lea.vmem %s0, 16
  %v652 = vld.sshfl [vmem:[%s651] sm:$0xff pattern:$0x56741230]
  %653 = vrot.lane.b32.xlu0 %v652, 108
  %v654 = vpop.permute.xlu0 %653
  %vm655 = vcmask 31744
  %s656 = scalar_lea.vmem %s1, 389
  %657 = vst.msk [vmem:[%s656] ss:$72 sm:$0x3] %vm655, %v654
  %s658 = scalar_lea.vmem %s1, 485
  %659 = vst.msk [vmem:[%s658] ss:$-24 sm:$0xc] %vm655, %v654
  %s660 = scalar_lea.vmem %s1, 197
  %661 = vst.msk [vmem:[%s660] ss:$72 sm:$0x30] %vm655, %v654
  %s662 = scalar_lea.vmem %s1, 677
  %663 = vst.msk [vmem:[%s662] ss:$-24 sm:$0xc0] %vm655, %v654
  %s664 = scalar_lea.vmem %s0, 24
  %v665 = vld.sshfl [vmem:[%s664] sm:$0xff pattern:$0x56741230]
  %666 = vrot.lane.b32.xlu0 %v665, 108
  %v667 = vpop.permute.xlu0 %666
  %vm668 = vcmask 31744
  %s669 = scalar_lea.vmem %s1, 581
  %670 = vst.msk [vmem:[%s669] ss:$72 sm:$0x3] %vm668, %v667
  %s671 = scalar_lea.vmem %s1, 677
  %672 = vst.msk [vmem:[%s671] ss:$-24 sm:$0xc] %vm668, %v667
  %s673 = scalar_lea.vmem %s1, 389
  %674 = vst.msk [vmem:[%s673] ss:$72 sm:$0x30] %vm668, %v667
  %s675 = scalar_lea.vmem %s1, 869
  %676 = vst.msk [vmem:[%s675] ss:$-24 sm:$0xc0] %vm668, %v667
  %s677 = scalar_lea.vmem %s0, 32
  %v678 = vld.sshfl [vmem:[%s677] sm:$0xff pattern:$0x56741230]
  %679 = vrot.lane.b32.xlu0 %v678, 108
  %v680 = vpop.permute.xlu0 %679
  %vm681 = vcmask 31744
  %s682 = scalar_lea.vmem %s1, 773
  %683 = vst.msk [vmem:[%s682] ss:$72 sm:$0x3] %vm681, %v680
  %s684 = scalar_lea.vmem %s1, 869
  %685 = vst.msk [vmem:[%s684] ss:$-24 sm:$0xc] %vm681, %v680
  %s686 = scalar_lea.vmem %s1, 581
  %687 = vst.msk [vmem:[%s686] ss:$72 sm:$0x30] %vm681, %v680
  %s688 = scalar_lea.vmem %s1, 1061
  %689 = vst.msk [vmem:[%s688] ss:$-24 sm:$0xc0] %vm681, %v680
  %s690 = scalar_lea.vmem %s0, 40
  %v691 = vld.sshfl [vmem:[%s690] sm:$0xff pattern:$0x56741230]
  %692 = vrot.lane.b32.xlu0 %v691, 108
  %v693 = vpop.permute.xlu0 %692
  %vm694 = vcmask 31744
  %s695 = scalar_lea.vmem %s1, 965
  %696 = vst.msk [vmem:[%s695] ss:$72 sm:$0x3] %vm694, %v693
  %s697 = scalar_lea.vmem %s1, 1061
  %698 = vst.msk [vmem:[%s697] ss:$-24 sm:$0xc] %vm694, %v693
  %s699 = scalar_lea.vmem %s1, 773
  %700 = vst.msk [vmem:[%s699] ss:$72 sm:$0x30] %vm694, %v693
  %s701 = scalar_lea.vmem %s1, 1253
  %702 = vst.msk [vmem:[%s701] ss:$-24 sm:$0xc0] %vm694, %v693
  %s703 = scalar_lea.vmem %s0, 48
  %v704 = vld.sshfl [vmem:[%s703] sm:$0xff pattern:$0x56741230]
  %705 = vrot.lane.b32.xlu0 %v704, 108
  %v706 = vpop.permute.xlu0 %705
  %vm707 = vcmask 31744
  %s708 = scalar_lea.vmem %s1, 1157
  %709 = vst.msk [vmem:[%s708] ss:$72 sm:$0x3] %vm707, %v706
  %s710 = scalar_lea.vmem %s1, 1253
  %711 = vst.msk [vmem:[%s710] ss:$-24 sm:$0xc] %vm707, %v706
  %s712 = scalar_lea.vmem %s1, 965
  %713 = vst.msk [vmem:[%s712] ss:$72 sm:$0x30] %vm707, %v706
  %s714 = scalar_lea.vmem %s1, 1445
  %715 = vst.msk [vmem:[%s714] ss:$-24 sm:$0xc0] %vm707, %v706
  %s716 = scalar_lea.vmem %s0, 56
  %v717 = vld.sshfl [vmem:[%s716] sm:$0xff pattern:$0x56741230]
  %718 = vrot.lane.b32.xlu0 %v717, 108
  %v719 = vpop.permute.xlu0 %718
  %vm720 = vcmask 31744
  %s721 = scalar_lea.vmem %s1, 1349
  %722 = vst.msk [vmem:[%s721] ss:$72 sm:$0x3] %vm720, %v719
  %s723 = scalar_lea.vmem %s1, 1445
  %724 = vst.msk [vmem:[%s723] ss:$-24 sm:$0xc] %vm720, %v719
  %s725 = scalar_lea.vmem %s1, 1157
  %726 = vst.msk [vmem:[%s725] ss:$72 sm:$0x30] %vm720, %v719
  %s727 = scalar_lea.vmem %s1, 1637
  %728 = vst.msk [vmem:[%s727] ss:$-24 sm:$0xc0] %vm720, %v719
  %s729 = scalar_lea.vmem %s0, 64
  %v730 = vld.sshfl [vmem:[%s729] sm:$0xff pattern:$0x56741230]
  %731 = vrot.lane.b32.xlu0 %v730, 108
  %v732 = vpop.permute.xlu0 %731
  %vm733 = vcmask 31744
  %s734 = scalar_lea.vmem %s1, 1541
  %735 = vst.msk [vmem:[%s734] ss:$72 sm:$0x3] %vm733, %v732
  %s736 = scalar_lea.vmem %s1, 1637
  %737 = vst.msk [vmem:[%s736] ss:$-24 sm:$0xc] %vm733, %v732
  %s738 = scalar_lea.vmem %s1, 1349
  %739 = vst.msk [vmem:[%s738] ss:$72 sm:$0x30] %vm733, %v732
  %s740 = scalar_lea.vmem %s1, 1829
  %741 = vst.msk [vmem:[%s740] ss:$-24 sm:$0xc0] %vm733, %v732
  %s742 = scalar_lea.vmem %s0, 72
  %v743 = vld.sshfl [vmem:[%s742] sm:$0xff pattern:$0x56741230]
  %744 = vrot.lane.b32.xlu0 %v743, 108
  %v745 = vpop.permute.xlu0 %744
  %vm746 = vcmask 31744
  %s747 = scalar_lea.vmem %s1, 1733
  %748 = vst.msk [vmem:[%s747] ss:$72 sm:$0x3] %vm746, %v745
  %s749 = scalar_lea.vmem %s1, 1829
  %750 = vst.msk [vmem:[%s749] ss:$-24 sm:$0xc] %vm746, %v745
  %s751 = scalar_lea.vmem %s1, 1541
  %752 = vst.msk [vmem:[%s751] ss:$72 sm:$0x30] %vm746, %v745
  %s753 = scalar_lea.vmem %s1, 2021
  %754 = vst.msk [vmem:[%s753] ss:$-24 sm:$0xc0] %vm746, %v745
  %s755 = scalar_lea.vmem %s0, 80
  %v756 = vld.sshfl [vmem:[%s755] sm:$0xff pattern:$0x11111230]
  %757 = vrot.lane.b32.xlu0 %v756, 108
  %v758 = vpop.permute.xlu0 %757
  %vm759 = vcmask 31744
  %s760 = scalar_lea.vmem %s1, 1925
  %761 = vst.msk [vmem:[%s760] ss:$72 sm:$0x3] %vm759, %v758
  %s762 = scalar_lea.vmem %s1, 2021
  %763 = vst.msk [vmem:[%s762] ss:$-24 sm:$0xc] %vm759, %v758
  %v764 = vld.sshfl [vmem:[%s0] sm:$0xff pattern:$0x56741230]
  %765 = vrot.lane.b32.xlu0 %v764, 104
  %v766 = vpop.permute.xlu0 %765
  %vm767 = vcmask 31744
  %s768 = scalar_lea.vmem %s1, 6
  %769 = vst.msk [vmem:[%s768] ss:$72 sm:$0x3] %vm767, %v766
  %s770 = scalar_lea.vmem %s1, 102
  %771 = vst.msk [vmem:[%s770] ss:$-24 sm:$0xc] %vm767, %v766
  %s772 = scalar_lea.vmem %s1, 4294967110
  %773 = vst.msk [vmem:[%s772] ss:$72 sm:$0x30] %vm767, %v766
  %s774 = scalar_lea.vmem %s1, 294
  %775 = vst.msk [vmem:[%s774] ss:$-24 sm:$0xc0] %vm767, %v766
  %s776 = scalar_lea.vmem %s0, 8
  %v777 = vld.sshfl [vmem:[%s776] sm:$0xff pattern:$0x56741230]
  %778 = vrot.lane.b32.xlu0 %v777, 104
  %v779 = vpop.permute.xlu0 %778
  %vm780 = vcmask 31744
  %s781 = scalar_lea.vmem %s1, 198
  %782 = vst.msk [vmem:[%s781] ss:$72 sm:$0x3] %vm780, %v779
  %s783 = scalar_lea.vmem %s1, 294
  %784 = vst.msk [vmem:[%s783] ss:$-24 sm:$0xc] %vm780, %v779
  %s785 = scalar_lea.vmem %s1, 6
  %786 = vst.msk [vmem:[%s785] ss:$72 sm:$0x30] %vm780, %v779
  %s787 = scalar_lea.vmem %s1, 486
  %788 = vst.msk [vmem:[%s787] ss:$-24 sm:$0xc0] %vm780, %v779
  %s789 = scalar_lea.vmem %s0, 16
  %v790 = vld.sshfl [vmem:[%s789] sm:$0xff pattern:$0x56741230]
  %791 = vrot.lane.b32.xlu0 %v790, 104
  %v792 = vpop.permute.xlu0 %791
  %vm793 = vcmask 31744
  %s794 = scalar_lea.vmem %s1, 390
  %795 = vst.msk [vmem:[%s794] ss:$72 sm:$0x3] %vm793, %v792
  %s796 = scalar_lea.vmem %s1, 486
  %797 = vst.msk [vmem:[%s796] ss:$-24 sm:$0xc] %vm793, %v792
  %s798 = scalar_lea.vmem %s1, 198
  %799 = vst.msk [vmem:[%s798] ss:$72 sm:$0x30] %vm793, %v792
  %s800 = scalar_lea.vmem %s1, 678
  %801 = vst.msk [vmem:[%s800] ss:$-24 sm:$0xc0] %vm793, %v792
  %s802 = scalar_lea.vmem %s0, 24
  %v803 = vld.sshfl [vmem:[%s802] sm:$0xff pattern:$0x56741230]
  %804 = vrot.lane.b32.xlu0 %v803, 104
  %v805 = vpop.permute.xlu0 %804
  %vm806 = vcmask 31744
  %s807 = scalar_lea.vmem %s1, 582
  %808 = vst.msk [vmem:[%s807] ss:$72 sm:$0x3] %vm806, %v805
  %s809 = scalar_lea.vmem %s1, 678
  %810 = vst.msk [vmem:[%s809] ss:$-24 sm:$0xc] %vm806, %v805
  %s811 = scalar_lea.vmem %s1, 390
  %812 = vst.msk [vmem:[%s811] ss:$72 sm:$0x30] %vm806, %v805
  %s813 = scalar_lea.vmem %s1, 870
  %814 = vst.msk [vmem:[%s813] ss:$-24 sm:$0xc0] %vm806, %v805
  %s815 = scalar_lea.vmem %s0, 32
  %v816 = vld.sshfl [vmem:[%s815] sm:$0xff pattern:$0x56741230]
  %817 = vrot.lane.b32.xlu0 %v816, 104
  %v818 = vpop.permute.xlu0 %817
  %vm819 = vcmask 31744
  %s820 = scalar_lea.vmem %s1, 774
  %821 = vst.msk [vmem:[%s820] ss:$72 sm:$0x3] %vm819, %v818
  %s822 = scalar_lea.vmem %s1, 870
  %823 = vst.msk [vmem:[%s822] ss:$-24 sm:$0xc] %vm819, %v818
  %s824 = scalar_lea.vmem %s1, 582
  %825 = vst.msk [vmem:[%s824] ss:$72 sm:$0x30] %vm819, %v818
  %s826 = scalar_lea.vmem %s1, 1062
  %827 = vst.msk [vmem:[%s826] ss:$-24 sm:$0xc0] %vm819, %v818
  %s828 = scalar_lea.vmem %s0, 40
  %v829 = vld.sshfl [vmem:[%s828] sm:$0xff pattern:$0x56741230]
  %830 = vrot.lane.b32.xlu0 %v829, 104
  %v831 = vpop.permute.xlu0 %830
  %vm832 = vcmask 31744
  %s833 = scalar_lea.vmem %s1, 966
  %834 = vst.msk [vmem:[%s833] ss:$72 sm:$0x3] %vm832, %v831
  %s835 = scalar_lea.vmem %s1, 1062
  %836 = vst.msk [vmem:[%s835] ss:$-24 sm:$0xc] %vm832, %v831
  %s837 = scalar_lea.vmem %s1, 774
  %838 = vst.msk [vmem:[%s837] ss:$72 sm:$0x30] %vm832, %v831
  %s839 = scalar_lea.vmem %s1, 1254
  %840 = vst.msk [vmem:[%s839] ss:$-24 sm:$0xc0] %vm832, %v831
  %s841 = scalar_lea.vmem %s0, 48
  %v842 = vld.sshfl [vmem:[%s841] sm:$0xff pattern:$0x56741230]
  %843 = vrot.lane.b32.xlu0 %v842, 104
  %v844 = vpop.permute.xlu0 %843
  %vm845 = vcmask 31744
  %s846 = scalar_lea.vmem %s1, 1158
  %847 = vst.msk [vmem:[%s846] ss:$72 sm:$0x3] %vm845, %v844
  %s848 = scalar_lea.vmem %s1, 1254
  %849 = vst.msk [vmem:[%s848] ss:$-24 sm:$0xc] %vm845, %v844
  %s850 = scalar_lea.vmem %s1, 966
  %851 = vst.msk [vmem:[%s850] ss:$72 sm:$0x30] %vm845, %v844
  %s852 = scalar_lea.vmem %s1, 1446
  %853 = vst.msk [vmem:[%s852] ss:$-24 sm:$0xc0] %vm845, %v844
  %s854 = scalar_lea.vmem %s0, 56
  %v855 = vld.sshfl [vmem:[%s854] sm:$0xff pattern:$0x56741230]
  %856 = vrot.lane.b32.xlu0 %v855, 104
  %v857 = vpop.permute.xlu0 %856
  %vm858 = vcmask 31744
  %s859 = scalar_lea.vmem %s1, 1350
  %860 = vst.msk [vmem:[%s859] ss:$72 sm:$0x3] %vm858, %v857
  %s861 = scalar_lea.vmem %s1, 1446
  %862 = vst.msk [vmem:[%s861] ss:$-24 sm:$0xc] %vm858, %v857
  %s863 = scalar_lea.vmem %s1, 1158
  %864 = vst.msk [vmem:[%s863] ss:$72 sm:$0x30] %vm858, %v857
  %s865 = scalar_lea.vmem %s1, 1638
  %866 = vst.msk [vmem:[%s865] ss:$-24 sm:$0xc0] %vm858, %v857
  %s867 = scalar_lea.vmem %s0, 64
  %v868 = vld.sshfl [vmem:[%s867] sm:$0xff pattern:$0x56741230]
  %869 = vrot.lane.b32.xlu0 %v868, 104
  %v870 = vpop.permute.xlu0 %869
  %vm871 = vcmask 31744
  %s872 = scalar_lea.vmem %s1, 1542
  %873 = vst.msk [vmem:[%s872] ss:$72 sm:$0x3] %vm871, %v870
  %s874 = scalar_lea.vmem %s1, 1638
  %875 = vst.msk [vmem:[%s874] ss:$-24 sm:$0xc] %vm871, %v870
  %s876 = scalar_lea.vmem %s1, 1350
  %877 = vst.msk [vmem:[%s876] ss:$72 sm:$0x30] %vm871, %v870
  %s878 = scalar_lea.vmem %s1, 1830
  %879 = vst.msk [vmem:[%s878] ss:$-24 sm:$0xc0] %vm871, %v870
  %s880 = scalar_lea.vmem %s0, 72
  %v881 = vld.sshfl [vmem:[%s880] sm:$0xff pattern:$0x56741230]
  %882 = vrot.lane.b32.xlu0 %v881, 104
  %v883 = vpop.permute.xlu0 %882
  %vm884 = vcmask 31744
  %s885 = scalar_lea.vmem %s1, 1734
  %886 = vst.msk [vmem:[%s885] ss:$72 sm:$0x3] %vm884, %v883
  %s887 = scalar_lea.vmem %s1, 1830
  %888 = vst.msk [vmem:[%s887] ss:$-24 sm:$0xc] %vm884, %v883
  %s889 = scalar_lea.vmem %s1, 1542
  %890 = vst.msk [vmem:[%s889] ss:$72 sm:$0x30] %vm884, %v883
  %s891 = scalar_lea.vmem %s1, 2022
  %892 = vst.msk [vmem:[%s891] ss:$-24 sm:$0xc0] %vm884, %v883
  %s893 = scalar_lea.vmem %s0, 80
  %v894 = vld.sshfl [vmem:[%s893] sm:$0xff pattern:$0x11111230]
  %895 = vrot.lane.b32.xlu0 %v894, 104
  %v896 = vpop.permute.xlu0 %895
  %vm897 = vcmask 31744
  %s898 = scalar_lea.vmem %s1, 1926
  %899 = vst.msk [vmem:[%s898] ss:$72 sm:$0x3] %vm897, %v896
  %s900 = scalar_lea.vmem %s1, 2022
  %901 = vst.msk [vmem:[%s900] ss:$-24 sm:$0xc] %vm897, %v896
  %v902 = vld.sshfl [vmem:[%s0] sm:$0xff pattern:$0x56741230]
  %903 = vrot.lane.b32.xlu0 %v902, 100
  %v904 = vpop.permute.xlu0 %903
  %vm905 = vcmask 31744
  %s906 = scalar_lea.vmem %s1, 7
  %907 = vst.msk [vmem:[%s906] ss:$72 sm:$0x3] %vm905, %v904
  %s908 = scalar_lea.vmem %s1, 103
  %909 = vst.msk [vmem:[%s908] ss:$-24 sm:$0xc] %vm905, %v904
  %s910 = scalar_lea.vmem %s1, 4294967111
  %911 = vst.msk [vmem:[%s910] ss:$72 sm:$0x30] %vm905, %v904
  %s912 = scalar_lea.vmem %s1, 295
  %913 = vst.msk [vmem:[%s912] ss:$-24 sm:$0xc0] %vm905, %v904
  %s914 = scalar_lea.vmem %s0, 8
  %v915 = vld.sshfl [vmem:[%s914] sm:$0xff pattern:$0x56741230]
  %916 = vrot.lane.b32.xlu0 %v915, 100
  %v917 = vpop.permute.xlu0 %916
  %vm918 = vcmask 31744
  %s919 = scalar_lea.vmem %s1, 199
  %920 = vst.msk [vmem:[%s919] ss:$72 sm:$0x3] %vm918, %v917
  %s921 = scalar_lea.vmem %s1, 295
  %922 = vst.msk [vmem:[%s921] ss:$-24 sm:$0xc] %vm918, %v917
  %s923 = scalar_lea.vmem %s1, 7
  %924 = vst.msk [vmem:[%s923] ss:$72 sm:$0x30] %vm918, %v917
  %s925 = scalar_lea.vmem %s1, 487
  %926 = vst.msk [vmem:[%s925] ss:$-24 sm:$0xc0] %vm918, %v917
  %s927 = scalar_lea.vmem %s0, 16
  %v928 = vld.sshfl [vmem:[%s927] sm:$0xff pattern:$0x56741230]
  %929 = vrot.lane.b32.xlu0 %v928, 100
  %v930 = vpop.permute.xlu0 %929
  %vm931 = vcmask 31744
  %s932 = scalar_lea.vmem %s1, 391
  %933 = vst.msk [vmem:[%s932] ss:$72 sm:$0x3] %vm931, %v930
  %s934 = scalar_lea.vmem %s1, 487
  %935 = vst.msk [vmem:[%s934] ss:$-24 sm:$0xc] %vm931, %v930
  %s936 = scalar_lea.vmem %s1, 199
  %937 = vst.msk [vmem:[%s936] ss:$72 sm:$0x30] %vm931, %v930
  %s938 = scalar_lea.vmem %s1, 679
  %939 = vst.msk [vmem:[%s938] ss:$-24 sm:$0xc0] %vm931, %v930
  %s940 = scalar_lea.vmem %s0, 24
  %v941 = vld.sshfl [vmem:[%s940] sm:$0xff pattern:$0x56741230]
  %942 = vrot.lane.b32.xlu0 %v941, 100
  %v943 = vpop.permute.xlu0 %942
  %vm944 = vcmask 31744
  %s945 = scalar_lea.vmem %s1, 583
  %946 = vst.msk [vmem:[%s945] ss:$72 sm:$0x3] %vm944, %v943
  %s947 = scalar_lea.vmem %s1, 679
  %948 = vst.msk [vmem:[%s947] ss:$-24 sm:$0xc] %vm944, %v943
  %s949 = scalar_lea.vmem %s1, 391
  %950 = vst.msk [vmem:[%s949] ss:$72 sm:$0x30] %vm944, %v943
  %s951 = scalar_lea.vmem %s1, 871
  %952 = vst.msk [vmem:[%s951] ss:$-24 sm:$0xc0] %vm944, %v943
  %s953 = scalar_lea.vmem %s0, 32
  %v954 = vld.sshfl [vmem:[%s953] sm:$0xff pattern:$0x56741230]
  %955 = vrot.lane.b32.xlu0 %v954, 100
  %v956 = vpop.permute.xlu0 %955
  %vm957 = vcmask 31744
  %s958 = scalar_lea.vmem %s1, 775
  %959 = vst.msk [vmem:[%s958] ss:$72 sm:$0x3] %vm957, %v956
  %s960 = scalar_lea.vmem %s1, 871
  %961 = vst.msk [vmem:[%s960] ss:$-24 sm:$0xc] %vm957, %v956
  %s962 = scalar_lea.vmem %s1, 583
  %963 = vst.msk [vmem:[%s962] ss:$72 sm:$0x30] %vm957, %v956
  %s964 = scalar_lea.vmem %s1, 1063
  %965 = vst.msk [vmem:[%s964] ss:$-24 sm:$0xc0] %vm957, %v956
  %s966 = scalar_lea.vmem %s0, 40
  %v967 = vld.sshfl [vmem:[%s966] sm:$0xff pattern:$0x56741230]
  %968 = vrot.lane.b32.xlu0 %v967, 100
  %v969 = vpop.permute.xlu0 %968
  %vm970 = vcmask 31744
  %s971 = scalar_lea.vmem %s1, 967
  %972 = vst.msk [vmem:[%s971] ss:$72 sm:$0x3] %vm970, %v969
  %s973 = scalar_lea.vmem %s1, 1063
  %974 = vst.msk [vmem:[%s973] ss:$-24 sm:$0xc] %vm970, %v969
  %s975 = scalar_lea.vmem %s1, 775
  %976 = vst.msk [vmem:[%s975] ss:$72 sm:$0x30] %vm970, %v969
  %s977 = scalar_lea.vmem %s1, 1255
  %978 = vst.msk [vmem:[%s977] ss:$-24 sm:$0xc0] %vm970, %v969
  %s979 = scalar_lea.vmem %s0, 48
  %v980 = vld.sshfl [vmem:[%s979] sm:$0xff pattern:$0x56741230]
  %981 = vrot.lane.b32.xlu0 %v980, 100
  %v982 = vpop.permute.xlu0 %981
  %vm983 = vcmask 31744
  %s984 = scalar_lea.vmem %s1, 1159
  %985 = vst.msk [vmem:[%s984] ss:$72 sm:$0x3] %vm983, %v982
  %s986 = scalar_lea.vmem %s1, 1255
  %987 = vst.msk [vmem:[%s986] ss:$-24 sm:$0xc] %vm983, %v982
  %s988 = scalar_lea.vmem %s1, 967
  %989 = vst.msk [vmem:[%s988] ss:$72 sm:$0x30] %vm983, %v982
  %s990 = scalar_lea.vmem %s1, 1447
  %991 = vst.msk [vmem:[%s990] ss:$-24 sm:$0xc0] %vm983, %v982
  %s992 = scalar_lea.vmem %s0, 56
  %v993 = vld.sshfl [vmem:[%s992] sm:$0xff pattern:$0x56741230]
  %994 = vrot.lane.b32.xlu0 %v993, 100
  %v995 = vpop.permute.xlu0 %994
  %vm996 = vcmask 31744
  %s997 = scalar_lea.vmem %s1, 1351
  %998 = vst.msk [vmem:[%s997] ss:$72 sm:$0x3] %vm996, %v995
  %s999 = scalar_lea.vmem %s1, 1447
  %1000 = vst.msk [vmem:[%s999] ss:$-24 sm:$0xc] %vm996, %v995
  %s1001 = scalar_lea.vmem %s1, 1159
  %1002 = vst.msk [vmem:[%s1001] ss:$72 sm:$0x30] %vm996, %v995
  %s1003 = scalar_lea.vmem %s1, 1639
  %1004 = vst.msk [vmem:[%s1003] ss:$-24 sm:$0xc0] %vm996, %v995
  %s1005 = scalar_lea.vmem %s0, 64
  %v1006 = vld.sshfl [vmem:[%s1005] sm:$0xff pattern:$0x56741230]
  %1007 = vrot.lane.b32.xlu0 %v1006, 100
  %v1008 = vpop.permute.xlu0 %1007
  %vm1009 = vcmask 31744
  %s1010 = scalar_lea.vmem %s1, 1543
  %1011 = vst.msk [vmem:[%s1010] ss:$72 sm:$0x3] %vm1009, %v1008
  %s1012 = scalar_lea.vmem %s1, 1639
  %1013 = vst.msk [vmem:[%s1012] ss:$-24 sm:$0xc] %vm1009, %v1008
  %s1014 = scalar_lea.vmem %s1, 1351
  %1015 = vst.msk [vmem:[%s1014] ss:$72 sm:$0x30] %vm1009, %v1008
  %s1016 = scalar_lea.vmem %s1, 1831
  %1017 = vst.msk [vmem:[%s1016] ss:$-24 sm:$0xc0] %vm1009, %v1008
  %s1018 = scalar_lea.vmem %s0, 72
  %v1019 = vld.sshfl [vmem:[%s1018] sm:$0xff pattern:$0x56741230]
  %1020 = vrot.lane.b32.xlu0 %v1019, 100
  %v1021 = vpop.permute.xlu0 %1020
  %vm1022 = vcmask 31744
  %s1023 = scalar_lea.vmem %s1, 1735
  %1024 = vst.msk [vmem:[%s1023] ss:$72 sm:$0x3] %vm1022, %v1021
  %s1025 = scalar_lea.vmem %s1, 1831
  %1026 = vst.msk [vmem:[%s1025] ss:$-24 sm:$0xc] %vm1022, %v1021
  %s1027 = scalar_lea.vmem %s1, 1543
  %1028 = vst.msk [vmem:[%s1027] ss:$72 sm:$0x30] %vm1022, %v1021
  %s1029 = scalar_lea.vmem %s1, 2023
  %1030 = vst.msk [vmem:[%s1029] ss:$-24 sm:$0xc0] %vm1022, %v1021
  %s1031 = scalar_lea.vmem %s0, 80
  %v1032 = vld.sshfl [vmem:[%s1031] sm:$0xff pattern:$0x11111230]
  %1033 = vrot.lane.b32.xlu0 %v1032, 100
  %v1034 = vpop.permute.xlu0 %1033
  %vm1035 = vcmask 31744
  %s1036 = scalar_lea.vmem %s1, 1927
  %1037 = vst.msk [vmem:[%s1036] ss:$72 sm:$0x3] %vm1035, %v1034
  %s1038 = scalar_lea.vmem %s1, 2023
  %1039 = vst.msk [vmem:[%s1038] ss:$-24 sm:$0xc] %vm1035, %v1034
  %v1040 = vld.sshfl [vmem:[%s0] sm:$0xff pattern:$0x67452301]
  %1041 = vrot.lane.b32.xlu0 %v1040, 96
  %v1042 = vpop.permute.xlu0 %1041
  %vm1043 = vcmask 31744
  %s1044 = scalar_lea.vmem %s1, 32
  %1045 = vst.msk [vmem:[%s1044] ss:$-24 sm:$0x3] %vm1043, %v1042
  %s1046 = scalar_lea.vmem %s1, 128
  %1047 = vst.msk [vmem:[%s1046] ss:$-24 sm:$0xc] %vm1043, %v1042
  %s1048 = scalar_lea.vmem %s1, 224
  %1049 = vst.msk [vmem:[%s1048] ss:$-24 sm:$0x30] %vm1043, %v1042
  %s1050 = scalar_lea.vmem %s1, 320
  %1051 = vst.msk [vmem:[%s1050] ss:$-24 sm:$0xc0] %vm1043, %v1042
  %s1052 = scalar_lea.vmem %s0, 8
  %v1053 = vld.sshfl [vmem:[%s1052] sm:$0xff pattern:$0x67452301]
  %1054 = vrot.lane.b32.xlu0 %v1053, 96
  %v1055 = vpop.permute.xlu0 %1054
  %vm1056 = vcmask 31744
  %s1057 = scalar_lea.vmem %s1, 224
  %1058 = vst.msk [vmem:[%s1057] ss:$-24 sm:$0x3] %vm1056, %v1055
  %s1059 = scalar_lea.vmem %s1, 320
  %1060 = vst.msk [vmem:[%s1059] ss:$-24 sm:$0xc] %vm1056, %v1055
  %s1061 = scalar_lea.vmem %s1, 416
  %1062 = vst.msk [vmem:[%s1061] ss:$-24 sm:$0x30] %vm1056, %v1055
  %s1063 = scalar_lea.vmem %s1, 512
  %1064 = vst.msk [vmem:[%s1063] ss:$-24 sm:$0xc0] %vm1056, %v1055
  %s1065 = scalar_lea.vmem %s0, 16
  %v1066 = vld.sshfl [vmem:[%s1065] sm:$0xff pattern:$0x67452301]
  %1067 = vrot.lane.b32.xlu0 %v1066, 96
  %v1068 = vpop.permute.xlu0 %1067
  %vm1069 = vcmask 31744
  %s1070 = scalar_lea.vmem %s1, 416
  %1071 = vst.msk [vmem:[%s1070] ss:$-24 sm:$0x3] %vm1069, %v1068
  %s1072 = scalar_lea.vmem %s1, 512
  %1073 = vst.msk [vmem:[%s1072] ss:$-24 sm:$0xc] %vm1069, %v1068
  %s1074 = scalar_lea.vmem %s1, 608
  %1075 = vst.msk [vmem:[%s1074] ss:$-24 sm:$0x30] %vm1069, %v1068
  %s1076 = scalar_lea.vmem %s1, 704
  %1077 = vst.msk [vmem:[%s1076] ss:$-24 sm:$0xc0] %vm1069, %v1068
  %s1078 = scalar_lea.vmem %s0, 24
  %v1079 = vld.sshfl [vmem:[%s1078] sm:$0xff pattern:$0x67452301]
  %1080 = vrot.lane.b32.xlu0 %v1079, 96
  %v1081 = vpop.permute.xlu0 %1080
  %vm1082 = vcmask 31744
  %s1083 = scalar_lea.vmem %s1, 608
  %1084 = vst.msk [vmem:[%s1083] ss:$-24 sm:$0x3] %vm1082, %v1081
  %s1085 = scalar_lea.vmem %s1, 704
  %1086 = vst.msk [vmem:[%s1085] ss:$-24 sm:$0xc] %vm1082, %v1081
  %s1087 = scalar_lea.vmem %s1, 800
  %1088 = vst.msk [vmem:[%s1087] ss:$-24 sm:$0x30] %vm1082, %v1081
  %s1089 = scalar_lea.vmem %s1, 896
  %1090 = vst.msk [vmem:[%s1089] ss:$-24 sm:$0xc0] %vm1082, %v1081
  %s1091 = scalar_lea.vmem %s0, 32
  %v1092 = vld.sshfl [vmem:[%s1091] sm:$0xff pattern:$0x67452301]
  %1093 = vrot.lane.b32.xlu0 %v1092, 96
  %v1094 = vpop.permute.xlu0 %1093
  %vm1095 = vcmask 31744
  %s1096 = scalar_lea.vmem %s1, 800
  %1097 = vst.msk [vmem:[%s1096] ss:$-24 sm:$0x3] %vm1095, %v1094
  %s1098 = scalar_lea.vmem %s1, 896
  %1099 = vst.msk [vmem:[%s1098] ss:$-24 sm:$0xc] %vm1095, %v1094
  %s1100 = scalar_lea.vmem %s1, 992
  %1101 = vst.msk [vmem:[%s1100] ss:$-24 sm:$0x30] %vm1095, %v1094
  %s1102 = scalar_lea.vmem %s1, 1088
  %1103 = vst.msk [vmem:[%s1102] ss:$-24 sm:$0xc0] %vm1095, %v1094
  %s1104 = scalar_lea.vmem %s0, 40
  %v1105 = vld.sshfl [vmem:[%s1104] sm:$0xff pattern:$0x67452301]
  %1106 = vrot.lane.b32.xlu0 %v1105, 96
  %v1107 = vpop.permute.xlu0 %1106
  %vm1108 = vcmask 31744
  %s1109 = scalar_lea.vmem %s1, 992
  %1110 = vst.msk [vmem:[%s1109] ss:$-24 sm:$0x3] %vm1108, %v1107
  %s1111 = scalar_lea.vmem %s1, 1088
  %1112 = vst.msk [vmem:[%s1111] ss:$-24 sm:$0xc] %vm1108, %v1107
  %s1113 = scalar_lea.vmem %s1, 1184
  %1114 = vst.msk [vmem:[%s1113] ss:$-24 sm:$0x30] %vm1108, %v1107
  %s1115 = scalar_lea.vmem %s1, 1280
  %1116 = vst.msk [vmem:[%s1115] ss:$-24 sm:$0xc0] %vm1108, %v1107
  %s1117 = scalar_lea.vmem %s0, 48
  %v1118 = vld.sshfl [vmem:[%s1117] sm:$0xff pattern:$0x67452301]
  %1119 = vrot.lane.b32.xlu0 %v1118, 96
  %v1120 = vpop.permute.xlu0 %1119
  %vm1121 = vcmask 31744
  %s1122 = scalar_lea.vmem %s1, 1184
  %1123 = vst.msk [vmem:[%s1122] ss:$-24 sm:$0x3] %vm1121, %v1120
  %s1124 = scalar_lea.vmem %s1, 1280
  %1125 = vst.msk [vmem:[%s1124] ss:$-24 sm:$0xc] %vm1121, %v1120
  %s1126 = scalar_lea.vmem %s1, 1376
  %1127 = vst.msk [vmem:[%s1126] ss:$-24 sm:$0x30] %vm1121, %v1120
  %s1128 = scalar_lea.vmem %s1, 1472
  %1129 = vst.msk [vmem:[%s1128] ss:$-24 sm:$0xc0] %vm1121, %v1120
  %s1130 = scalar_lea.vmem %s0, 56
  %v1131 = vld.sshfl [vmem:[%s1130] sm:$0xff pattern:$0x67452301]
  %1132 = vrot.lane.b32.xlu0 %v1131, 96
  %v1133 = vpop.permute.xlu0 %1132
  %vm1134 = vcmask 31744
  %s1135 = scalar_lea.vmem %s1, 1376
  %1136 = vst.msk [vmem:[%s1135] ss:$-24 sm:$0x3] %vm1134, %v1133
  %s1137 = scalar_lea.vmem %s1, 1472
  %1138 = vst.msk [vmem:[%s1137] ss:$-24 sm:$0xc] %vm1134, %v1133
  %s1139 = scalar_lea.vmem %s1, 1568
  %1140 = vst.msk [vmem:[%s1139] ss:$-24 sm:$0x30] %vm1134, %v1133
  %s1141 = scalar_lea.vmem %s1, 1664
  %1142 = vst.msk [vmem:[%s1141] ss:$-24 sm:$0xc0] %vm1134, %v1133
  %s1143 = scalar_lea.vmem %s0, 64
  %v1144 = vld.sshfl [vmem:[%s1143] sm:$0xff pattern:$0x67452301]
  %1145 = vrot.lane.b32.xlu0 %v1144, 96
  %v1146 = vpop.permute.xlu0 %1145
  %vm1147 = vcmask 31744
  %s1148 = scalar_lea.vmem %s1, 1568
  %1149 = vst.msk [vmem:[%s1148] ss:$-24 sm:$0x3] %vm1147, %v1146
  %s1150 = scalar_lea.vmem %s1, 1664
  %1151 = vst.msk [vmem:[%s1150] ss:$-24 sm:$0xc] %vm1147, %v1146
  %s1152 = scalar_lea.vmem %s1, 1760
  %1153 = vst.msk [vmem:[%s1152] ss:$-24 sm:$0x30] %vm1147, %v1146
  %s1154 = scalar_lea.vmem %s1, 1856
  %1155 = vst.msk [vmem:[%s1154] ss:$-24 sm:$0xc0] %vm1147, %v1146
  %s1156 = scalar_lea.vmem %s0, 72
  %v1157 = vld.sshfl [vmem:[%s1156] sm:$0xff pattern:$0x67452301]
  %1158 = vrot.lane.b32.xlu0 %v1157, 96
  %v1159 = vpop.permute.xlu0 %1158
  %vm1160 = vcmask 31744
  %s1161 = scalar_lea.vmem %s1, 1760
  %1162 = vst.msk [vmem:[%s1161] ss:$-24 sm:$0x3] %vm1160, %v1159
  %s1163 = scalar_lea.vmem %s1, 1856
  %1164 = vst.msk [vmem:[%s1163] ss:$-24 sm:$0xc] %vm1160, %v1159
  %s1165 = scalar_lea.vmem %s1, 1952
  %1166 = vst.msk [vmem:[%s1165] ss:$-24 sm:$0x30] %vm1160, %v1159
  %s1167 = scalar_lea.vmem %s1, 2048
  %1168 = vst.msk [vmem:[%s1167] ss:$-24 sm:$0xc0] %vm1160, %v1159
  %s1169 = scalar_lea.vmem %s0, 80
  %v1170 = vld.sshfl [vmem:[%s1169] sm:$0xff pattern:$0x22222301]
  %1171 = vrot.lane.b32.xlu0 %v1170, 96
  %v1172 = vpop.permute.xlu0 %1171
  %vm1173 = vcmask 31744
  %s1174 = scalar_lea.vmem %s1, 1952
  %1175 = vst.msk [vmem:[%s1174] ss:$-24 sm:$0x3] %vm1173, %v1172
  %s1176 = scalar_lea.vmem %s1, 2048
  %1177 = vst.msk [vmem:[%s1176] ss:$-24 sm:$0xc] %vm1173, %v1172
  %v1178 = vld.sshfl [vmem:[%s0] sm:$0xff pattern:$0x67452301]
  %1179 = vrot.lane.b32.xlu0 %v1178, 92
  %v1180 = vpop.permute.xlu0 %1179
  %vm1181 = vcmask 31744
  %s1182 = scalar_lea.vmem %s1, 33
  %1183 = vst.msk [vmem:[%s1182] ss:$-24 sm:$0x3] %vm1181, %v1180
  %s1184 = scalar_lea.vmem %s1, 129
  %1185 = vst.msk [vmem:[%s1184] ss:$-24 sm:$0xc] %vm1181, %v1180
  %s1186 = scalar_lea.vmem %s1, 225
  %1187 = vst.msk [vmem:[%s1186] ss:$-24 sm:$0x30] %vm1181, %v1180
  %s1188 = scalar_lea.vmem %s1, 321
  %1189 = vst.msk [vmem:[%s1188] ss:$-24 sm:$0xc0] %vm1181, %v1180
  %s1190 = scalar_lea.vmem %s0, 8
  %v1191 = vld.sshfl [vmem:[%s1190] sm:$0xff pattern:$0x67452301]
  %1192 = vrot.lane.b32.xlu0 %v1191, 92
  %v1193 = vpop.permute.xlu0 %1192
  %vm1194 = vcmask 31744
  %s1195 = scalar_lea.vmem %s1, 225
  %1196 = vst.msk [vmem:[%s1195] ss:$-24 sm:$0x3] %vm1194, %v1193
  %s1197 = scalar_lea.vmem %s1, 321
  %1198 = vst.msk [vmem:[%s1197] ss:$-24 sm:$0xc] %vm1194, %v1193
  %s1199 = scalar_lea.vmem %s1, 417
  %1200 = vst.msk [vmem:[%s1199] ss:$-24 sm:$0x30] %vm1194, %v1193
  %s1201 = scalar_lea.vmem %s1, 513
  %1202 = vst.msk [vmem:[%s1201] ss:$-24 sm:$0xc0] %vm1194, %v1193
  %s1203 = scalar_lea.vmem %s0, 16
  %v1204 = vld.sshfl [vmem:[%s1203] sm:$0xff pattern:$0x67452301]
  %1205 = vrot.lane.b32.xlu0 %v1204, 92
  %v1206 = vpop.permute.xlu0 %1205
  %vm1207 = vcmask 31744
  %s1208 = scalar_lea.vmem %s1, 417
  %1209 = vst.msk [vmem:[%s1208] ss:$-24 sm:$0x3] %vm1207, %v1206
  %s1210 = scalar_lea.vmem %s1, 513
  %1211 = vst.msk [vmem:[%s1210] ss:$-24 sm:$0xc] %vm1207, %v1206
  %s1212 = scalar_lea.vmem %s1, 609
  %1213 = vst.msk [vmem:[%s1212] ss:$-24 sm:$0x30] %vm1207, %v1206
  %s1214 = scalar_lea.vmem %s1, 705
  %1215 = vst.msk [vmem:[%s1214] ss:$-24 sm:$0xc0] %vm1207, %v1206
  %s1216 = scalar_lea.vmem %s0, 24
  %v1217 = vld.sshfl [vmem:[%s1216] sm:$0xff pattern:$0x67452301]
  %1218 = vrot.lane.b32.xlu0 %v1217, 92
  %v1219 = vpop.permute.xlu0 %1218
  %vm1220 = vcmask 31744
  %s1221 = scalar_lea.vmem %s1, 609
  %1222 = vst.msk [vmem:[%s1221] ss:$-24 sm:$0x3] %vm1220, %v1219
  %s1223 = scalar_lea.vmem %s1, 705
  %1224 = vst.msk [vmem:[%s1223] ss:$-24 sm:$0xc] %vm1220, %v1219
  %s1225 = scalar_lea.vmem %s1, 801
  %1226 = vst.msk [vmem:[%s1225] ss:$-24 sm:$0x30] %vm1220, %v1219
  %s1227 = scalar_lea.vmem %s1, 897
  %1228 = vst.msk [vmem:[%s1227] ss:$-24 sm:$0xc0] %vm1220, %v1219
  %s1229 = scalar_lea.vmem %s0, 32
  %v1230 = vld.sshfl [vmem:[%s1229] sm:$0xff pattern:$0x67452301]
  %1231 = vrot.lane.b32.xlu0 %v1230, 92
  %v1232 = vpop.permute.xlu0 %1231
  %vm1233 = vcmask 31744
  %s1234 = scalar_lea.vmem %s1, 801
  %1235 = vst.msk [vmem:[%s1234] ss:$-24 sm:$0x3] %vm1233, %v1232
  %s1236 = scalar_lea.vmem %s1, 897
  %1237 = vst.msk [vmem:[%s1236] ss:$-24 sm:$0xc] %vm1233, %v1232
  %s1238 = scalar_lea.vmem %s1, 993
  %1239 = vst.msk [vmem:[%s1238] ss:$-24 sm:$0x30] %vm1233, %v1232
  %s1240 = scalar_lea.vmem %s1, 1089
  %1241 = vst.msk [vmem:[%s1240] ss:$-24 sm:$0xc0] %vm1233, %v1232
  %s1242 = scalar_lea.vmem %s0, 40
  %v1243 = vld.sshfl [vmem:[%s1242] sm:$0xff pattern:$0x67452301]
  %1244 = vrot.lane.b32.xlu0 %v1243, 92
  %v1245 = vpop.permute.xlu0 %1244
  %vm1246 = vcmask 31744
  %s1247 = scalar_lea.vmem %s1, 993
  %1248 = vst.msk [vmem:[%s1247] ss:$-24 sm:$0x3] %vm1246, %v1245
  %s1249 = scalar_lea.vmem %s1, 1089
  %1250 = vst.msk [vmem:[%s1249] ss:$-24 sm:$0xc] %vm1246, %v1245
  %s1251 = scalar_lea.vmem %s1, 1185
  %1252 = vst.msk [vmem:[%s1251] ss:$-24 sm:$0x30] %vm1246, %v1245
  %s1253 = scalar_lea.vmem %s1, 1281
  %1254 = vst.msk [vmem:[%s1253] ss:$-24 sm:$0xc0] %vm1246, %v1245
  %s1255 = scalar_lea.vmem %s0, 48
  %v1256 = vld.sshfl [vmem:[%s1255] sm:$0xff pattern:$0x67452301]
  %1257 = vrot.lane.b32.xlu0 %v1256, 92
  %v1258 = vpop.permute.xlu0 %1257
  %vm1259 = vcmask 31744
  %s1260 = scalar_lea.vmem %s1, 1185
  %1261 = vst.msk [vmem:[%s1260] ss:$-24 sm:$0x3] %vm1259, %v1258
  %s1262 = scalar_lea.vmem %s1, 1281
  %1263 = vst.msk [vmem:[%s1262] ss:$-24 sm:$0xc] %vm1259, %v1258
  %s1264 = scalar_lea.vmem %s1, 1377
  %1265 = vst.msk [vmem:[%s1264] ss:$-24 sm:$0x30] %vm1259, %v1258
  %s1266 = scalar_lea.vmem %s1, 1473
  %1267 = vst.msk [vmem:[%s1266] ss:$-24 sm:$0xc0] %vm1259, %v1258
  %s1268 = scalar_lea.vmem %s0, 56
  %v1269 = vld.sshfl [vmem:[%s1268] sm:$0xff pattern:$0x67452301]
  %1270 = vrot.lane.b32.xlu0 %v1269, 92
  %v1271 = vpop.permute.xlu0 %1270
  %vm1272 = vcmask 31744
  %s1273 = scalar_lea.vmem %s1, 1377
  %1274 = vst.msk [vmem:[%s1273] ss:$-24 sm:$0x3] %vm1272, %v1271
  %s1275 = scalar_lea.vmem %s1, 1473
  %1276 = vst.msk [vmem:[%s1275] ss:$-24 sm:$0xc] %vm1272, %v1271
  %s1277 = scalar_lea.vmem %s1, 1569
  %1278 = vst.msk [vmem:[%s1277] ss:$-24 sm:$0x30] %vm1272, %v1271
  %s1279 = scalar_lea.vmem %s1, 1665
  %1280 = vst.msk [vmem:[%s1279] ss:$-24 sm:$0xc0] %vm1272, %v1271
  %s1281 = scalar_lea.vmem %s0, 64
  %v1282 = vld.sshfl [vmem:[%s1281] sm:$0xff pattern:$0x67452301]
  %1283 = vrot.lane.b32.xlu0 %v1282, 92
  %v1284 = vpop.permute.xlu0 %1283
  %vm1285 = vcmask 31744
  %s1286 = scalar_lea.vmem %s1, 1569
  %1287 = vst.msk [vmem:[%s1286] ss:$-24 sm:$0x3] %vm1285, %v1284
  %s1288 = scalar_lea.vmem %s1, 1665
  %1289 = vst.msk [vmem:[%s1288] ss:$-24 sm:$0xc] %vm1285, %v1284
  %s1290 = scalar_lea.vmem %s1, 1761
  %1291 = vst.msk [vmem:[%s1290] ss:$-24 sm:$0x30] %vm1285, %v1284
  %s1292 = scalar_lea.vmem %s1, 1857
  %1293 = vst.msk [vmem:[%s1292] ss:$-24 sm:$0xc0] %vm1285, %v1284
  %s1294 = scalar_lea.vmem %s0, 72
  %v1295 = vld.sshfl [vmem:[%s1294] sm:$0xff pattern:$0x67452301]
  %1296 = vrot.lane.b32.xlu0 %v1295, 92
  %v1297 = vpop.permute.xlu0 %1296
  %vm1298 = vcmask 31744
  %s1299 = scalar_lea.vmem %s1, 1761
  %1300 = vst.msk [vmem:[%s1299] ss:$-24 sm:$0x3] %vm1298, %v1297
  %s1301 = scalar_lea.vmem %s1, 1857
  %1302 = vst.msk [vmem:[%s1301] ss:$-24 sm:$0xc] %vm1298, %v1297
  %s1303 = scalar_lea.vmem %s1, 1953
  %1304 = vst.msk [vmem:[%s1303] ss:$-24 sm:$0x30] %vm1298, %v1297
  %s1305 = scalar_lea.vmem %s1, 2049
  %1306 = vst.msk [vmem:[%s1305] ss:$-24 sm:$0xc0] %vm1298, %v1297
  %s1307 = scalar_lea.vmem %s0, 80
  %v1308 = vld.sshfl [vmem:[%s1307] sm:$0xff pattern:$0x22222301]
  %1309 = vrot.lane.b32.xlu0 %v1308, 92
  %v1310 = vpop.permute.xlu0 %1309
  %vm1311 = vcmask 31744
  %s1312 = scalar_lea.vmem %s1, 1953
  %1313 = vst.msk [vmem:[%s1312] ss:$-24 sm:$0x3] %vm1311, %v1310
  %s1314 = scalar_lea.vmem %s1, 2049
  %1315 = vst.msk [vmem:[%s1314] ss:$-24 sm:$0xc] %vm1311, %v1310
  %v1316 = vld.sshfl [vmem:[%s0] sm:$0xff pattern:$0x67452301]
  %1317 = vrot.lane.b32.xlu0 %v1316, 88
  %v1318 = vpop.permute.xlu0 %1317
  %vm1319 = vcmask 31744
  %s1320 = scalar_lea.vmem %s1, 34
  %1321 = vst.msk [vmem:[%s1320] ss:$-24 sm:$0x3] %vm1319, %v1318
  %s1322 = scalar_lea.vmem %s1, 130
  %1323 = vst.msk [vmem:[%s1322] ss:$-24 sm:$0xc] %vm1319, %v1318
  %s1324 = scalar_lea.vmem %s1, 226
  %1325 = vst.msk [vmem:[%s1324] ss:$-24 sm:$0x30] %vm1319, %v1318
  %s1326 = scalar_lea.vmem %s1, 322
  %1327 = vst.msk [vmem:[%s1326] ss:$-24 sm:$0xc0] %vm1319, %v1318
  %s1328 = scalar_lea.vmem %s0, 8
  %v1329 = vld.sshfl [vmem:[%s1328] sm:$0xff pattern:$0x67452301]
  %1330 = vrot.lane.b32.xlu0 %v1329, 88
  %v1331 = vpop.permute.xlu0 %1330
  %vm1332 = vcmask 31744
  %s1333 = scalar_lea.vmem %s1, 226
  %1334 = vst.msk [vmem:[%s1333] ss:$-24 sm:$0x3] %vm1332, %v1331
  %s1335 = scalar_lea.vmem %s1, 322
  %1336 = vst.msk [vmem:[%s1335] ss:$-24 sm:$0xc] %vm1332, %v1331
  %s1337 = scalar_lea.vmem %s1, 418
  %1338 = vst.msk [vmem:[%s1337] ss:$-24 sm:$0x30] %vm1332, %v1331
  %s1339 = scalar_lea.vmem %s1, 514
  %1340 = vst.msk [vmem:[%s1339] ss:$-24 sm:$0xc0] %vm1332, %v1331
  %s1341 = scalar_lea.vmem %s0, 16
  %v1342 = vld.sshfl [vmem:[%s1341] sm:$0xff pattern:$0x67452301]
  %1343 = vrot.lane.b32.xlu0 %v1342, 88
  %v1344 = vpop.permute.xlu0 %1343
  %vm1345 = vcmask 31744
  %s1346 = scalar_lea.vmem %s1, 418
  %1347 = vst.msk [vmem:[%s1346] ss:$-24 sm:$0x3] %vm1345, %v1344
  %s1348 = scalar_lea.vmem %s1, 514
  %1349 = vst.msk [vmem:[%s1348] ss:$-24 sm:$0xc] %vm1345, %v1344
  %s1350 = scalar_lea.vmem %s1, 610
  %1351 = vst.msk [vmem:[%s1350] ss:$-24 sm:$0x30] %vm1345, %v1344
  %s1352 = scalar_lea.vmem %s1, 706
  %1353 = vst.msk [vmem:[%s1352] ss:$-24 sm:$0xc0] %vm1345, %v1344
  %s1354 = scalar_lea.vmem %s0, 24
  %v1355 = vld.sshfl [vmem:[%s1354] sm:$0xff pattern:$0x67452301]
  %1356 = vrot.lane.b32.xlu0 %v1355, 88
  %v1357 = vpop.permute.xlu0 %1356
  %vm1358 = vcmask 31744
  %s1359 = scalar_lea.vmem %s1, 610
  %1360 = vst.msk [vmem:[%s1359] ss:$-24 sm:$0x3] %vm1358, %v1357
  %s1361 = scalar_lea.vmem %s1, 706
  %1362 = vst.msk [vmem:[%s1361] ss:$-24 sm:$0xc] %vm1358, %v1357
  %s1363 = scalar_lea.vmem %s1, 802
  %1364 = vst.msk [vmem:[%s1363] ss:$-24 sm:$0x30] %vm1358, %v1357
  %s1365 = scalar_lea.vmem %s1, 898
  %1366 = vst.msk [vmem:[%s1365] ss:$-24 sm:$0xc0] %vm1358, %v1357
  %s1367 = scalar_lea.vmem %s0, 32
  %v1368 = vld.sshfl [vmem:[%s1367] sm:$0xff pattern:$0x67452301]
  %1369 = vrot.lane.b32.xlu0 %v1368, 88
  %v1370 = vpop.permute.xlu0 %1369
  %vm1371 = vcmask 31744
  %s1372 = scalar_lea.vmem %s1, 802
  %1373 = vst.msk [vmem:[%s1372] ss:$-24 sm:$0x3] %vm1371, %v1370
  %s1374 = scalar_lea.vmem %s1, 898
  %1375 = vst.msk [vmem:[%s1374] ss:$-24 sm:$0xc] %vm1371, %v1370
  %s1376 = scalar_lea.vmem %s1, 994
  %1377 = vst.msk [vmem:[%s1376] ss:$-24 sm:$0x30] %vm1371, %v1370
  %s1378 = scalar_lea.vmem %s1, 1090
  %1379 = vst.msk [vmem:[%s1378] ss:$-24 sm:$0xc0] %vm1371, %v1370
  %s1380 = scalar_lea.vmem %s0, 40
  %v1381 = vld.sshfl [vmem:[%s1380] sm:$0xff pattern:$0x67452301]
  %1382 = vrot.lane.b32.xlu0 %v1381, 88
  %v1383 = vpop.permute.xlu0 %1382
  %vm1384 = vcmask 31744
  %s1385 = scalar_lea.vmem %s1, 994
  %1386 = vst.msk [vmem:[%s1385] ss:$-24 sm:$0x3] %vm1384, %v1383
  %s1387 = scalar_lea.vmem %s1, 1090
  %1388 = vst.msk [vmem:[%s1387] ss:$-24 sm:$0xc] %vm1384, %v1383
  %s1389 = scalar_lea.vmem %s1, 1186
  %1390 = vst.msk [vmem:[%s1389] ss:$-24 sm:$0x30] %vm1384, %v1383
  %s1391 = scalar_lea.vmem %s1, 1282
  %1392 = vst.msk [vmem:[%s1391] ss:$-24 sm:$0xc0] %vm1384, %v1383
  %s1393 = scalar_lea.vmem %s0, 48
  %v1394 = vld.sshfl [vmem:[%s1393] sm:$0xff pattern:$0x67452301]
  %1395 = vrot.lane.b32.xlu0 %v1394, 88
  %v1396 = vpop.permute.xlu0 %1395
  %vm1397 = vcmask 31744
  %s1398 = scalar_lea.vmem %s1, 1186
  %1399 = vst.msk [vmem:[%s1398] ss:$-24 sm:$0x3] %vm1397, %v1396
  %s1400 = scalar_lea.vmem %s1, 1282
  %1401 = vst.msk [vmem:[%s1400] ss:$-24 sm:$0xc] %vm1397, %v1396
  %s1402 = scalar_lea.vmem %s1, 1378
  %1403 = vst.msk [vmem:[%s1402] ss:$-24 sm:$0x30] %vm1397, %v1396
  %s1404 = scalar_lea.vmem %s1, 1474
  %1405 = vst.msk [vmem:[%s1404] ss:$-24 sm:$0xc0] %vm1397, %v1396
  %s1406 = scalar_lea.vmem %s0, 56
  %v1407 = vld.sshfl [vmem:[%s1406] sm:$0xff pattern:$0x67452301]
  %1408 = vrot.lane.b32.xlu0 %v1407, 88
  %v1409 = vpop.permute.xlu0 %1408
  %vm1410 = vcmask 31744
  %s1411 = scalar_lea.vmem %s1, 1378
  %1412 = vst.msk [vmem:[%s1411] ss:$-24 sm:$0x3] %vm1410, %v1409
  %s1413 = scalar_lea.vmem %s1, 1474
  %1414 = vst.msk [vmem:[%s1413] ss:$-24 sm:$0xc] %vm1410, %v1409
  %s1415 = scalar_lea.vmem %s1, 1570
  %1416 = vst.msk [vmem:[%s1415] ss:$-24 sm:$0x30] %vm1410, %v1409
  %s1417 = scalar_lea.vmem %s1, 1666
  %1418 = vst.msk [vmem:[%s1417] ss:$-24 sm:$0xc0] %vm1410, %v1409
  %s1419 = scalar_lea.vmem %s0, 64
  %v1420 = vld.sshfl [vmem:[%s1419] sm:$0xff pattern:$0x67452301]
  %1421 = vrot.lane.b32.xlu0 %v1420, 88
  %v1422 = vpop.permute.xlu0 %1421
  %vm1423 = vcmask 31744
  %s1424 = scalar_lea.vmem %s1, 1570
  %1425 = vst.msk [vmem:[%s1424] ss:$-24 sm:$0x3] %vm1423, %v1422
  %s1426 = scalar_lea.vmem %s1, 1666
  %1427 = vst.msk [vmem:[%s1426] ss:$-24 sm:$0xc] %vm1423, %v1422
  %s1428 = scalar_lea.vmem %s1, 1762
  %1429 = vst.msk [vmem:[%s1428] ss:$-24 sm:$0x30] %vm1423, %v1422
  %s1430 = scalar_lea.vmem %s1, 1858
  %1431 = vst.msk [vmem:[%s1430] ss:$-24 sm:$0xc0] %vm1423, %v1422
  %s1432 = scalar_lea.vmem %s0, 72
  %v1433 = vld.sshfl [vmem:[%s1432] sm:$0xff pattern:$0x67452301]
  %1434 = vrot.lane.b32.xlu0 %v1433, 88
  %v1435 = vpop.permute.xlu0 %1434
  %vm1436 = vcmask 31744
  %s1437 = scalar_lea.vmem %s1, 1762
  %1438 = vst.msk [vmem:[%s1437] ss:$-24 sm:$0x3] %vm1436, %v1435
  %s1439 = scalar_lea.vmem %s1, 1858
  %1440 = vst.msk [vmem:[%s1439] ss:$-24 sm:$0xc] %vm1436, %v1435
  %s1441 = scalar_lea.vmem %s1, 1954
  %1442 = vst.msk [vmem:[%s1441] ss:$-24 sm:$0x30] %vm1436, %v1435
  %s1443 = scalar_lea.vmem %s1, 2050
  %1444 = vst.msk [vmem:[%s1443] ss:$-24 sm:$0xc0] %vm1436, %v1435
  %s1445 = scalar_lea.vmem %s0, 80
  %v1446 = vld.sshfl [vmem:[%s1445] sm:$0xff pattern:$0x22222301]
  %1447 = vrot.lane.b32.xlu0 %v1446, 88
  %v1448 = vpop.permute.xlu0 %1447
  %vm1449 = vcmask 31744
  %s1450 = scalar_lea.vmem %s1, 1954
  %1451 = vst.msk [vmem:[%s1450] ss:$-24 sm:$0x3] %vm1449, %v1448
  %s1452 = scalar_lea.vmem %s1, 2050
  %1453 = vst.msk [vmem:[%s1452] ss:$-24 sm:$0xc] %vm1449, %v1448
  %v1454 = vld.sshfl [vmem:[%s0] sm:$0xff pattern:$0x67452301]
  %1455 = vrot.lane.b32.xlu0 %v1454, 84
  %v1456 = vpop.permute.xlu0 %1455
  %vm1457 = vcmask 31744
  %s1458 = scalar_lea.vmem %s1, 35
  %1459 = vst.msk [vmem:[%s1458] ss:$-24 sm:$0x3] %vm1457, %v1456
  %s1460 = scalar_lea.vmem %s1, 131
  %1461 = vst.msk [vmem:[%s1460] ss:$-24 sm:$0xc] %vm1457, %v1456
  %s1462 = scalar_lea.vmem %s1, 227
  %1463 = vst.msk [vmem:[%s1462] ss:$-24 sm:$0x30] %vm1457, %v1456
  %s1464 = scalar_lea.vmem %s1, 323
  %1465 = vst.msk [vmem:[%s1464] ss:$-24 sm:$0xc0] %vm1457, %v1456
  %s1466 = scalar_lea.vmem %s0, 8
  %v1467 = vld.sshfl [vmem:[%s1466] sm:$0xff pattern:$0x67452301]
  %1468 = vrot.lane.b32.xlu0 %v1467, 84
  %v1469 = vpop.permute.xlu0 %1468
  %vm1470 = vcmask 31744
  %s1471 = scalar_lea.vmem %s1, 227
  %1472 = vst.msk [vmem:[%s1471] ss:$-24 sm:$0x3] %vm1470, %v1469
  %s1473 = scalar_lea.vmem %s1, 323
  %1474 = vst.msk [vmem:[%s1473] ss:$-24 sm:$0xc] %vm1470, %v1469
  %s1475 = scalar_lea.vmem %s1, 419
  %1476 = vst.msk [vmem:[%s1475] ss:$-24 sm:$0x30] %vm1470, %v1469
  %s1477 = scalar_lea.vmem %s1, 515
  %1478 = vst.msk [vmem:[%s1477] ss:$-24 sm:$0xc0] %vm1470, %v1469
  %s1479 = scalar_lea.vmem %s0, 16
  %v1480 = vld.sshfl [vmem:[%s1479] sm:$0xff pattern:$0x67452301]
  %1481 = vrot.lane.b32.xlu0 %v1480, 84
  %v1482 = vpop.permute.xlu0 %1481
  %vm1483 = vcmask 31744
  %s1484 = scalar_lea.vmem %s1, 419
  %1485 = vst.msk [vmem:[%s1484] ss:$-24 sm:$0x3] %vm1483, %v1482
  %s1486 = scalar_lea.vmem %s1, 515
  %1487 = vst.msk [vmem:[%s1486] ss:$-24 sm:$0xc] %vm1483, %v1482
  %s1488 = scalar_lea.vmem %s1, 611
  %1489 = vst.msk [vmem:[%s1488] ss:$-24 sm:$0x30] %vm1483, %v1482
  %s1490 = scalar_lea.vmem %s1, 707
  %1491 = vst.msk [vmem:[%s1490] ss:$-24 sm:$0xc0] %vm1483, %v1482
  %s1492 = scalar_lea.vmem %s0, 24
  %v1493 = vld.sshfl [vmem:[%s1492] sm:$0xff pattern:$0x67452301]
  %1494 = vrot.lane.b32.xlu0 %v1493, 84
  %v1495 = vpop.permute.xlu0 %1494
  %vm1496 = vcmask 31744
  %s1497 = scalar_lea.vmem %s1, 611
  %1498 = vst.msk [vmem:[%s1497] ss:$-24 sm:$0x3] %vm1496, %v1495
  %s1499 = scalar_lea.vmem %s1, 707
  %1500 = vst.msk [vmem:[%s1499] ss:$-24 sm:$0xc] %vm1496, %v1495
  %s1501 = scalar_lea.vmem %s1, 803
  %1502 = vst.msk [vmem:[%s1501] ss:$-24 sm:$0x30] %vm1496, %v1495
  %s1503 = scalar_lea.vmem %s1, 899
  %1504 = vst.msk [vmem:[%s1503] ss:$-24 sm:$0xc0] %vm1496, %v1495
  %s1505 = scalar_lea.vmem %s0, 32
  %v1506 = vld.sshfl [vmem:[%s1505] sm:$0xff pattern:$0x67452301]
  %1507 = vrot.lane.b32.xlu0 %v1506, 84
  %v1508 = vpop.permute.xlu0 %1507
  %vm1509 = vcmask 31744
  %s1510 = scalar_lea.vmem %s1, 803
  %1511 = vst.msk [vmem:[%s1510] ss:$-24 sm:$0x3] %vm1509, %v1508
  %s1512 = scalar_lea.vmem %s1, 899
  %1513 = vst.msk [vmem:[%s1512] ss:$-24 sm:$0xc] %vm1509, %v1508
  %s1514 = scalar_lea.vmem %s1, 995
  %1515 = vst.msk [vmem:[%s1514] ss:$-24 sm:$0x30] %vm1509, %v1508
  %s1516 = scalar_lea.vmem %s1, 1091
  %1517 = vst.msk [vmem:[%s1516] ss:$-24 sm:$0xc0] %vm1509, %v1508
  %s1518 = scalar_lea.vmem %s0, 40
  %v1519 = vld.sshfl [vmem:[%s1518] sm:$0xff pattern:$0x67452301]
  %1520 = vrot.lane.b32.xlu0 %v1519, 84
  %v1521 = vpop.permute.xlu0 %1520
  %vm1522 = vcmask 31744
  %s1523 = scalar_lea.vmem %s1, 995
  %1524 = vst.msk [vmem:[%s1523] ss:$-24 sm:$0x3] %vm1522, %v1521
  %s1525 = scalar_lea.vmem %s1, 1091
  %1526 = vst.msk [vmem:[%s1525] ss:$-24 sm:$0xc] %vm1522, %v1521
  %s1527 = scalar_lea.vmem %s1, 1187
  %1528 = vst.msk [vmem:[%s1527] ss:$-24 sm:$0x30] %vm1522, %v1521
  %s1529 = scalar_lea.vmem %s1, 1283
  %1530 = vst.msk [vmem:[%s1529] ss:$-24 sm:$0xc0] %vm1522, %v1521
  %s1531 = scalar_lea.vmem %s0, 48
  %v1532 = vld.sshfl [vmem:[%s1531] sm:$0xff pattern:$0x67452301]
  %1533 = vrot.lane.b32.xlu0 %v1532, 84
  %v1534 = vpop.permute.xlu0 %1533
  %vm1535 = vcmask 31744
  %s1536 = scalar_lea.vmem %s1, 1187
  %1537 = vst.msk [vmem:[%s1536] ss:$-24 sm:$0x3] %vm1535, %v1534
  %s1538 = scalar_lea.vmem %s1, 1283
  %1539 = vst.msk [vmem:[%s1538] ss:$-24 sm:$0xc] %vm1535, %v1534
  %s1540 = scalar_lea.vmem %s1, 1379
  %1541 = vst.msk [vmem:[%s1540] ss:$-24 sm:$0x30] %vm1535, %v1534
  %s1542 = scalar_lea.vmem %s1, 1475
  %1543 = vst.msk [vmem:[%s1542] ss:$-24 sm:$0xc0] %vm1535, %v1534
  %s1544 = scalar_lea.vmem %s0, 56
  %v1545 = vld.sshfl [vmem:[%s1544] sm:$0xff pattern:$0x67452301]
  %1546 = vrot.lane.b32.xlu0 %v1545, 84
  %v1547 = vpop.permute.xlu0 %1546
  %vm1548 = vcmask 31744
  %s1549 = scalar_lea.vmem %s1, 1379
  %1550 = vst.msk [vmem:[%s1549] ss:$-24 sm:$0x3] %vm1548, %v1547
  %s1551 = scalar_lea.vmem %s1, 1475
  %1552 = vst.msk [vmem:[%s1551] ss:$-24 sm:$0xc] %vm1548, %v1547
  %s1553 = scalar_lea.vmem %s1, 1571
  %1554 = vst.msk [vmem:[%s1553] ss:$-24 sm:$0x30] %vm1548, %v1547
  %s1555 = scalar_lea.vmem %s1, 1667
  %1556 = vst.msk [vmem:[%s1555] ss:$-24 sm:$0xc0] %vm1548, %v1547
  %s1557 = scalar_lea.vmem %s0, 64
  %v1558 = vld.sshfl [vmem:[%s1557] sm:$0xff pattern:$0x67452301]
  %1559 = vrot.lane.b32.xlu0 %v1558, 84
  %v1560 = vpop.permute.xlu0 %1559
  %vm1561 = vcmask 31744
  %s1562 = scalar_lea.vmem %s1, 1571
  %1563 = vst.msk [vmem:[%s1562] ss:$-24 sm:$0x3] %vm1561, %v1560
  %s1564 = scalar_lea.vmem %s1, 1667
  %1565 = vst.msk [vmem:[%s1564] ss:$-24 sm:$0xc] %vm1561, %v1560
  %s1566 = scalar_lea.vmem %s1, 1763
  %1567 = vst.msk [vmem:[%s1566] ss:$-24 sm:$0x30] %vm1561, %v1560
  %s1568 = scalar_lea.vmem %s1, 1859
  %1569 = vst.msk [vmem:[%s1568] ss:$-24 sm:$0xc0] %vm1561, %v1560
  %s1570 = scalar_lea.vmem %s0, 72
  %v1571 = vld.sshfl [vmem:[%s1570] sm:$0xff pattern:$0x67452301]
  %1572 = vrot.lane.b32.xlu0 %v1571, 84
  %v1573 = vpop.permute.xlu0 %1572
  %vm1574 = vcmask 31744
  %s1575 = scalar_lea.vmem %s1, 1763
  %1576 = vst.msk [vmem:[%s1575] ss:$-24 sm:$0x3] %vm1574, %v1573
  %s1577 = scalar_lea.vmem %s1, 1859
  %1578 = vst.msk [vmem:[%s1577] ss:$-24 sm:$0xc] %vm1574, %v1573
  %s1579 = scalar_lea.vmem %s1, 1955
  %1580 = vst.msk [vmem:[%s1579] ss:$-24 sm:$0x30] %vm1574, %v1573
  %s1581 = scalar_lea.vmem %s1, 2051
  %1582 = vst.msk [vmem:[%s1581] ss:$-24 sm:$0xc0] %vm1574, %v1573
  %s1583 = scalar_lea.vmem %s0, 80
  %v1584 = vld.sshfl [vmem:[%s1583] sm:$0xff pattern:$0x22222301]
  %1585 = vrot.lane.b32.xlu0 %v1584, 84
  %v1586 = vpop.permute.xlu0 %1585
  %vm1587 = vcmask 31744
  %s1588 = scalar_lea.vmem %s1, 1955
  %1589 = vst.msk [vmem:[%s1588] ss:$-24 sm:$0x3] %vm1587, %v1586
  %s1590 = scalar_lea.vmem %s1, 2051
  %1591 = vst.msk [vmem:[%s1590] ss:$-24 sm:$0xc] %vm1587, %v1586
  %v1592 = vld.sshfl [vmem:[%s0] sm:$0xff pattern:$0x67452301]
  %1593 = vrot.lane.b32.xlu0 %v1592, 80
  %v1594 = vpop.permute.xlu0 %1593
  %vm1595 = vcmask 31744
  %s1596 = scalar_lea.vmem %s1, 36
  %1597 = vst.msk [vmem:[%s1596] ss:$-24 sm:$0x3] %vm1595, %v1594
  %s1598 = scalar_lea.vmem %s1, 132
  %1599 = vst.msk [vmem:[%s1598] ss:$-24 sm:$0xc] %vm1595, %v1594
  %s1600 = scalar_lea.vmem %s1, 228
  %1601 = vst.msk [vmem:[%s1600] ss:$-24 sm:$0x30] %vm1595, %v1594
  %s1602 = scalar_lea.vmem %s1, 324
  %1603 = vst.msk [vmem:[%s1602] ss:$-24 sm:$0xc0] %vm1595, %v1594
  %s1604 = scalar_lea.vmem %s0, 8
  %v1605 = vld.sshfl [vmem:[%s1604] sm:$0xff pattern:$0x67452301]
  %1606 = vrot.lane.b32.xlu0 %v1605, 80
  %v1607 = vpop.permute.xlu0 %1606
  %vm1608 = vcmask 31744
  %s1609 = scalar_lea.vmem %s1, 228
  %1610 = vst.msk [vmem:[%s1609] ss:$-24 sm:$0x3] %vm1608, %v1607
  %s1611 = scalar_lea.vmem %s1, 324
  %1612 = vst.msk [vmem:[%s1611] ss:$-24 sm:$0xc] %vm1608, %v1607
  %s1613 = scalar_lea.vmem %s1, 420
  %1614 = vst.msk [vmem:[%s1613] ss:$-24 sm:$0x30] %vm1608, %v1607
  %s1615 = scalar_lea.vmem %s1, 516
  %1616 = vst.msk [vmem:[%s1615] ss:$-24 sm:$0xc0] %vm1608, %v1607
  %s1617 = scalar_lea.vmem %s0, 16
  %v1618 = vld.sshfl [vmem:[%s1617] sm:$0xff pattern:$0x67452301]
  %1619 = vrot.lane.b32.xlu0 %v1618, 80
  %v1620 = vpop.permute.xlu0 %1619
  %vm1621 = vcmask 31744
  %s1622 = scalar_lea.vmem %s1, 420
  %1623 = vst.msk [vmem:[%s1622] ss:$-24 sm:$0x3] %vm1621, %v1620
  %s1624 = scalar_lea.vmem %s1, 516
  %1625 = vst.msk [vmem:[%s1624] ss:$-24 sm:$0xc] %vm1621, %v1620
  %s1626 = scalar_lea.vmem %s1, 612
  %1627 = vst.msk [vmem:[%s1626] ss:$-24 sm:$0x30] %vm1621, %v1620
  %s1628 = scalar_lea.vmem %s1, 708
  %1629 = vst.msk [vmem:[%s1628] ss:$-24 sm:$0xc0] %vm1621, %v1620
  %s1630 = scalar_lea.vmem %s0, 24
  %v1631 = vld.sshfl [vmem:[%s1630] sm:$0xff pattern:$0x67452301]
  %1632 = vrot.lane.b32.xlu0 %v1631, 80
  %v1633 = vpop.permute.xlu0 %1632
  %vm1634 = vcmask 31744
  %s1635 = scalar_lea.vmem %s1, 612
  %1636 = vst.msk [vmem:[%s1635] ss:$-24 sm:$0x3] %vm1634, %v1633
  %s1637 = scalar_lea.vmem %s1, 708
  %1638 = vst.msk [vmem:[%s1637] ss:$-24 sm:$0xc] %vm1634, %v1633
  %s1639 = scalar_lea.vmem %s1, 804
  %1640 = vst.msk [vmem:[%s1639] ss:$-24 sm:$0x30] %vm1634, %v1633
  %s1641 = scalar_lea.vmem %s1, 900
  %1642 = vst.msk [vmem:[%s1641] ss:$-24 sm:$0xc0] %vm1634, %v1633
  %s1643 = scalar_lea.vmem %s0, 32
  %v1644 = vld.sshfl [vmem:[%s1643] sm:$0xff pattern:$0x67452301]
  %1645 = vrot.lane.b32.xlu0 %v1644, 80
  %v1646 = vpop.permute.xlu0 %1645
  %vm1647 = vcmask 31744
  %s1648 = scalar_lea.vmem %s1, 804
  %1649 = vst.msk [vmem:[%s1648] ss:$-24 sm:$0x3] %vm1647, %v1646
  %s1650 = scalar_lea.vmem %s1, 900
  %1651 = vst.msk [vmem:[%s1650] ss:$-24 sm:$0xc] %vm1647, %v1646
  %s1652 = scalar_lea.vmem %s1, 996
  %1653 = vst.msk [vmem:[%s1652] ss:$-24 sm:$0x30] %vm1647, %v1646
  %s1654 = scalar_lea.vmem %s1, 1092
  %1655 = vst.msk [vmem:[%s1654] ss:$-24 sm:$0xc0] %vm1647, %v1646
  %s1656 = scalar_lea.vmem %s0, 40
  %v1657 = vld.sshfl [vmem:[%s1656] sm:$0xff pattern:$0x67452301]
  %1658 = vrot.lane.b32.xlu0 %v1657, 80
  %v1659 = vpop.permute.xlu0 %1658
  %vm1660 = vcmask 31744
  %s1661 = scalar_lea.vmem %s1, 996
  %1662 = vst.msk [vmem:[%s1661] ss:$-24 sm:$0x3] %vm1660, %v1659
  %s1663 = scalar_lea.vmem %s1, 1092
  %1664 = vst.msk [vmem:[%s1663] ss:$-24 sm:$0xc] %vm1660, %v1659
  %s1665 = scalar_lea.vmem %s1, 1188
  %1666 = vst.msk [vmem:[%s1665] ss:$-24 sm:$0x30] %vm1660, %v1659
  %s1667 = scalar_lea.vmem %s1, 1284
  %1668 = vst.msk [vmem:[%s1667] ss:$-24 sm:$0xc0] %vm1660, %v1659
  %s1669 = scalar_lea.vmem %s0, 48
  %v1670 = vld.sshfl [vmem:[%s1669] sm:$0xff pattern:$0x67452301]
  %1671 = vrot.lane.b32.xlu0 %v1670, 80
  %v1672 = vpop.permute.xlu0 %1671
  %vm1673 = vcmask 31744
  %s1674 = scalar_lea.vmem %s1, 1188
  %1675 = vst.msk [vmem:[%s1674] ss:$-24 sm:$0x3] %vm1673, %v1672
  %s1676 = scalar_lea.vmem %s1, 1284
  %1677 = vst.msk [vmem:[%s1676] ss:$-24 sm:$0xc] %vm1673, %v1672
  %s1678 = scalar_lea.vmem %s1, 1380
  %1679 = vst.msk [vmem:[%s1678] ss:$-24 sm:$0x30] %vm1673, %v1672
  %s1680 = scalar_lea.vmem %s1, 1476
  %1681 = vst.msk [vmem:[%s1680] ss:$-24 sm:$0xc0] %vm1673, %v1672
  %s1682 = scalar_lea.vmem %s0, 56
  %v1683 = vld.sshfl [vmem:[%s1682] sm:$0xff pattern:$0x67452301]
  %1684 = vrot.lane.b32.xlu0 %v1683, 80
  %v1685 = vpop.permute.xlu0 %1684
  %vm1686 = vcmask 31744
  %s1687 = scalar_lea.vmem %s1, 1380
  %1688 = vst.msk [vmem:[%s1687] ss:$-24 sm:$0x3] %vm1686, %v1685
  %s1689 = scalar_lea.vmem %s1, 1476
  %1690 = vst.msk [vmem:[%s1689] ss:$-24 sm:$0xc] %vm1686, %v1685
  %s1691 = scalar_lea.vmem %s1, 1572
  %1692 = vst.msk [vmem:[%s1691] ss:$-24 sm:$0x30] %vm1686, %v1685
  %s1693 = scalar_lea.vmem %s1, 1668
  %1694 = vst.msk [vmem:[%s1693] ss:$-24 sm:$0xc0] %vm1686, %v1685
  %s1695 = scalar_lea.vmem %s0, 64
  %v1696 = vld.sshfl [vmem:[%s1695] sm:$0xff pattern:$0x67452301]
  %1697 = vrot.lane.b32.xlu0 %v1696, 80
  %v1698 = vpop.permute.xlu0 %1697
  %vm1699 = vcmask 31744
  %s1700 = scalar_lea.vmem %s1, 1572
  %1701 = vst.msk [vmem:[%s1700] ss:$-24 sm:$0x3] %vm1699, %v1698
  %s1702 = scalar_lea.vmem %s1, 1668
  %1703 = vst.msk [vmem:[%s1702] ss:$-24 sm:$0xc] %vm1699, %v1698
  %s1704 = scalar_lea.vmem %s1, 1764
  %1705 = vst.msk [vmem:[%s1704] ss:$-24 sm:$0x30] %vm1699, %v1698
  %s1706 = scalar_lea.vmem %s1, 1860
  %1707 = vst.msk [vmem:[%s1706] ss:$-24 sm:$0xc0] %vm1699, %v1698
  %s1708 = scalar_lea.vmem %s0, 72
  %v1709 = vld.sshfl [vmem:[%s1708] sm:$0xff pattern:$0x67452301]
  %1710 = vrot.lane.b32.xlu0 %v1709, 80
  %v1711 = vpop.permute.xlu0 %1710
  %vm1712 = vcmask 31744
  %s1713 = scalar_lea.vmem %s1, 1764
  %1714 = vst.msk [vmem:[%s1713] ss:$-24 sm:$0x3] %vm1712, %v1711
  %s1715 = scalar_lea.vmem %s1, 1860
  %1716 = vst.msk [vmem:[%s1715] ss:$-24 sm:$0xc] %vm1712, %v1711
  %s1717 = scalar_lea.vmem %s1, 1956
  %1718 = vst.msk [vmem:[%s1717] ss:$-24 sm:$0x30] %vm1712, %v1711
  %s1719 = scalar_lea.vmem %s1, 2052
  %1720 = vst.msk [vmem:[%s1719] ss:$-24 sm:$0xc0] %vm1712, %v1711
  %s1721 = scalar_lea.vmem %s0, 80
  %v1722 = vld.sshfl [vmem:[%s1721] sm:$0xff pattern:$0x22222301]
  %1723 = vrot.lane.b32.xlu0 %v1722, 80
  %v1724 = vpop.permute.xlu0 %1723
  %vm1725 = vcmask 31744
  %s1726 = scalar_lea.vmem %s1, 1956
  %1727 = vst.msk [vmem:[%s1726] ss:$-24 sm:$0x3] %vm1725, %v1724
  %s1728 = scalar_lea.vmem %s1, 2052
  %1729 = vst.msk [vmem:[%s1728] ss:$-24 sm:$0xc] %vm1725, %v1724
  %v1730 = vld.sshfl [vmem:[%s0] sm:$0xff pattern:$0x67452301]
  %1731 = vrot.lane.b32.xlu0 %v1730, 76
  %v1732 = vpop.permute.xlu0 %1731
  %vm1733 = vcmask 31744
  %s1734 = scalar_lea.vmem %s1, 37
  %1735 = vst.msk [vmem:[%s1734] ss:$-24 sm:$0x3] %vm1733, %v1732
  %s1736 = scalar_lea.vmem %s1, 133
  %1737 = vst.msk [vmem:[%s1736] ss:$-24 sm:$0xc] %vm1733, %v1732
  %s1738 = scalar_lea.vmem %s1, 229
  %1739 = vst.msk [vmem:[%s1738] ss:$-24 sm:$0x30] %vm1733, %v1732
  %s1740 = scalar_lea.vmem %s1, 325
  %1741 = vst.msk [vmem:[%s1740] ss:$-24 sm:$0xc0] %vm1733, %v1732
  %s1742 = scalar_lea.vmem %s0, 8
  %v1743 = vld.sshfl [vmem:[%s1742] sm:$0xff pattern:$0x67452301]
  %1744 = vrot.lane.b32.xlu0 %v1743, 76
  %v1745 = vpop.permute.xlu0 %1744
  %vm1746 = vcmask 31744
  %s1747 = scalar_lea.vmem %s1, 229
  %1748 = vst.msk [vmem:[%s1747] ss:$-24 sm:$0x3] %vm1746, %v1745
  %s1749 = scalar_lea.vmem %s1, 325
  %1750 = vst.msk [vmem:[%s1749] ss:$-24 sm:$0xc] %vm1746, %v1745
  %s1751 = scalar_lea.vmem %s1, 421
  %1752 = vst.msk [vmem:[%s1751] ss:$-24 sm:$0x30] %vm1746, %v1745
  %s1753 = scalar_lea.vmem %s1, 517
  %1754 = vst.msk [vmem:[%s1753] ss:$-24 sm:$0xc0] %vm1746, %v1745
  %s1755 = scalar_lea.vmem %s0, 16
  %v1756 = vld.sshfl [vmem:[%s1755] sm:$0xff pattern:$0x67452301]
  %1757 = vrot.lane.b32.xlu0 %v1756, 76
  %v1758 = vpop.permute.xlu0 %1757
  %vm1759 = vcmask 31744
  %s1760 = scalar_lea.vmem %s1, 421
  %1761 = vst.msk [vmem:[%s1760] ss:$-24 sm:$0x3] %vm1759, %v1758
  %s1762 = scalar_lea.vmem %s1, 517
  %1763 = vst.msk [vmem:[%s1762] ss:$-24 sm:$0xc] %vm1759, %v1758
  %s1764 = scalar_lea.vmem %s1, 613
  %1765 = vst.msk [vmem:[%s1764] ss:$-24 sm:$0x30] %vm1759, %v1758
  %s1766 = scalar_lea.vmem %s1, 709
  %1767 = vst.msk [vmem:[%s1766] ss:$-24 sm:$0xc0] %vm1759, %v1758
  %s1768 = scalar_lea.vmem %s0, 24
  %v1769 = vld.sshfl [vmem:[%s1768] sm:$0xff pattern:$0x67452301]
  %1770 = vrot.lane.b32.xlu0 %v1769, 76
  %v1771 = vpop.permute.xlu0 %1770
  %vm1772 = vcmask 31744
  %s1773 = scalar_lea.vmem %s1, 613
  %1774 = vst.msk [vmem:[%s1773] ss:$-24 sm:$0x3] %vm1772, %v1771
  %s1775 = scalar_lea.vmem %s1, 709
  %1776 = vst.msk [vmem:[%s1775] ss:$-24 sm:$0xc] %vm1772, %v1771
  %s1777 = scalar_lea.vmem %s1, 805
  %1778 = vst.msk [vmem:[%s1777] ss:$-24 sm:$0x30] %vm1772, %v1771
  %s1779 = scalar_lea.vmem %s1, 901
  %1780 = vst.msk [vmem:[%s1779] ss:$-24 sm:$0xc0] %vm1772, %v1771
  %s1781 = scalar_lea.vmem %s0, 32
  %v1782 = vld.sshfl [vmem:[%s1781] sm:$0xff pattern:$0x67452301]
  %1783 = vrot.lane.b32.xlu0 %v1782, 76
  %v1784 = vpop.permute.xlu0 %1783
  %vm1785 = vcmask 31744
  %s1786 = scalar_lea.vmem %s1, 805
  %1787 = vst.msk [vmem:[%s1786] ss:$-24 sm:$0x3] %vm1785, %v1784
  %s1788 = scalar_lea.vmem %s1, 901
  %1789 = vst.msk [vmem:[%s1788] ss:$-24 sm:$0xc] %vm1785, %v1784
  %s1790 = scalar_lea.vmem %s1, 997
  %1791 = vst.msk [vmem:[%s1790] ss:$-24 sm:$0x30] %vm1785, %v1784
  %s1792 = scalar_lea.vmem %s1, 1093
  %1793 = vst.msk [vmem:[%s1792] ss:$-24 sm:$0xc0] %vm1785, %v1784
  %s1794 = scalar_lea.vmem %s0, 40
  %v1795 = vld.sshfl [vmem:[%s1794] sm:$0xff pattern:$0x67452301]
  %1796 = vrot.lane.b32.xlu0 %v1795, 76
  %v1797 = vpop.permute.xlu0 %1796
  %vm1798 = vcmask 31744
  %s1799 = scalar_lea.vmem %s1, 997
  %1800 = vst.msk [vmem:[%s1799] ss:$-24 sm:$0x3] %vm1798, %v1797
  %s1801 = scalar_lea.vmem %s1, 1093
  %1802 = vst.msk [vmem:[%s1801] ss:$-24 sm:$0xc] %vm1798, %v1797
  %s1803 = scalar_lea.vmem %s1, 1189
  %1804 = vst.msk [vmem:[%s1803] ss:$-24 sm:$0x30] %vm1798, %v1797
  %s1805 = scalar_lea.vmem %s1, 1285
  %1806 = vst.msk [vmem:[%s1805] ss:$-24 sm:$0xc0] %vm1798, %v1797
  %s1807 = scalar_lea.vmem %s0, 48
  %v1808 = vld.sshfl [vmem:[%s1807] sm:$0xff pattern:$0x67452301]
  %1809 = vrot.lane.b32.xlu0 %v1808, 76
  %v1810 = vpop.permute.xlu0 %1809
  %vm1811 = vcmask 31744
  %s1812 = scalar_lea.vmem %s1, 1189
  %1813 = vst.msk [vmem:[%s1812] ss:$-24 sm:$0x3] %vm1811, %v1810
  %s1814 = scalar_lea.vmem %s1, 1285
  %1815 = vst.msk [vmem:[%s1814] ss:$-24 sm:$0xc] %vm1811, %v1810
  %s1816 = scalar_lea.vmem %s1, 1381
  %1817 = vst.msk [vmem:[%s1816] ss:$-24 sm:$0x30] %vm1811, %v1810
  %s1818 = scalar_lea.vmem %s1, 1477
  %1819 = vst.msk [vmem:[%s1818] ss:$-24 sm:$0xc0] %vm1811, %v1810
  %s1820 = scalar_lea.vmem %s0, 56
  %v1821 = vld.sshfl [vmem:[%s1820] sm:$0xff pattern:$0x67452301]
  %1822 = vrot.lane.b32.xlu0 %v1821, 76
  %v1823 = vpop.permute.xlu0 %1822
  %vm1824 = vcmask 31744
  %s1825 = scalar_lea.vmem %s1, 1381
  %1826 = vst.msk [vmem:[%s1825] ss:$-24 sm:$0x3] %vm1824, %v1823
  %s1827 = scalar_lea.vmem %s1, 1477
  %1828 = vst.msk [vmem:[%s1827] ss:$-24 sm:$0xc] %vm1824, %v1823
  %s1829 = scalar_lea.vmem %s1, 1573
  %1830 = vst.msk [vmem:[%s1829] ss:$-24 sm:$0x30] %vm1824, %v1823
  %s1831 = scalar_lea.vmem %s1, 1669
  %1832 = vst.msk [vmem:[%s1831] ss:$-24 sm:$0xc0] %vm1824, %v1823
  %s1833 = scalar_lea.vmem %s0, 64
  %v1834 = vld.sshfl [vmem:[%s1833] sm:$0xff pattern:$0x67452301]
  %1835 = vrot.lane.b32.xlu0 %v1834, 76
  %v1836 = vpop.permute.xlu0 %1835
  %vm1837 = vcmask 31744
  %s1838 = scalar_lea.vmem %s1, 1573
  %1839 = vst.msk [vmem:[%s1838] ss:$-24 sm:$0x3] %vm1837, %v1836
  %s1840 = scalar_lea.vmem %s1, 1669
  %1841 = vst.msk [vmem:[%s1840] ss:$-24 sm:$0xc] %vm1837, %v1836
  %s1842 = scalar_lea.vmem %s1, 1765
  %1843 = vst.msk [vmem:[%s1842] ss:$-24 sm:$0x30] %vm1837, %v1836
  %s1844 = scalar_lea.vmem %s1, 1861
  %1845 = vst.msk [vmem:[%s1844] ss:$-24 sm:$0xc0] %vm1837, %v1836
  %s1846 = scalar_lea.vmem %s0, 72
  %v1847 = vld.sshfl [vmem:[%s1846] sm:$0xff pattern:$0x67452301]
  %1848 = vrot.lane.b32.xlu0 %v1847, 76
  %v1849 = vpop.permute.xlu0 %1848
  %vm1850 = vcmask 31744
  %s1851 = scalar_lea.vmem %s1, 1765
  %1852 = vst.msk [vmem:[%s1851] ss:$-24 sm:$0x3] %vm1850, %v1849
  %s1853 = scalar_lea.vmem %s1, 1861
  %1854 = vst.msk [vmem:[%s1853] ss:$-24 sm:$0xc] %vm1850, %v1849
  %s1855 = scalar_lea.vmem %s1, 1957
  %1856 = vst.msk [vmem:[%s1855] ss:$-24 sm:$0x30] %vm1850, %v1849
  %s1857 = scalar_lea.vmem %s1, 2053
  %1858 = vst.msk [vmem:[%s1857] ss:$-24 sm:$0xc0] %vm1850, %v1849
  %s1859 = scalar_lea.vmem %s0, 80
  %v1860 = vld.sshfl [vmem:[%s1859] sm:$0xff pattern:$0x22222301]
  %1861 = vrot.lane.b32.xlu0 %v1860, 76
  %v1862 = vpop.permute.xlu0 %1861
  %vm1863 = vcmask 31744
  %s1864 = scalar_lea.vmem %s1, 1957
  %1865 = vst.msk [vmem:[%s1864] ss:$-24 sm:$0x3] %vm1863, %v1862
  %s1866 = scalar_lea.vmem %s1, 2053
  %1867 = vst.msk [vmem:[%s1866] ss:$-24 sm:$0xc] %vm1863, %v1862
  %v1868 = vld.sshfl [vmem:[%s0] sm:$0xff pattern:$0x67452301]
  %1869 = vrot.lane.b32.xlu0 %v1868, 72
  %v1870 = vpop.permute.xlu0 %1869
  %vm1871 = vcmask 31744
  %s1872 = scalar_lea.vmem %s1, 38
  %1873 = vst.msk [vmem:[%s1872] ss:$-24 sm:$0x3] %vm1871, %v1870
  %s1874 = scalar_lea.vmem %s1, 134
  %1875 = vst.msk [vmem:[%s1874] ss:$-24 sm:$0xc] %vm1871, %v1870
  %s1876 = scalar_lea.vmem %s1, 230
  %1877 = vst.msk [vmem:[%s1876] ss:$-24 sm:$0x30] %vm1871, %v1870
  %s1878 = scalar_lea.vmem %s1, 326
  %1879 = vst.msk [vmem:[%s1878] ss:$-24 sm:$0xc0] %vm1871, %v1870
  %s1880 = scalar_lea.vmem %s0, 8
  %v1881 = vld.sshfl [vmem:[%s1880] sm:$0xff pattern:$0x67452301]
  %1882 = vrot.lane.b32.xlu0 %v1881, 72
  %v1883 = vpop.permute.xlu0 %1882
  %vm1884 = vcmask 31744
  %s1885 = scalar_lea.vmem %s1, 230
  %1886 = vst.msk [vmem:[%s1885] ss:$-24 sm:$0x3] %vm1884, %v1883
  %s1887 = scalar_lea.vmem %s1, 326
  %1888 = vst.msk [vmem:[%s1887] ss:$-24 sm:$0xc] %vm1884, %v1883
  %s1889 = scalar_lea.vmem %s1, 422
  %1890 = vst.msk [vmem:[%s1889] ss:$-24 sm:$0x30] %vm1884, %v1883
  %s1891 = scalar_lea.vmem %s1, 518
  %1892 = vst.msk [vmem:[%s1891] ss:$-24 sm:$0xc0] %vm1884, %v1883
  %s1893 = scalar_lea.vmem %s0, 16
  %v1894 = vld.sshfl [vmem:[%s1893] sm:$0xff pattern:$0x67452301]
  %1895 = vrot.lane.b32.xlu0 %v1894, 72
  %v1896 = vpop.permute.xlu0 %1895
  %vm1897 = vcmask 31744
  %s1898 = scalar_lea.vmem %s1, 422
  %1899 = vst.msk [vmem:[%s1898] ss:$-24 sm:$0x3] %vm1897, %v1896
  %s1900 = scalar_lea.vmem %s1, 518
  %1901 = vst.msk [vmem:[%s1900] ss:$-24 sm:$0xc] %vm1897, %v1896
  %s1902 = scalar_lea.vmem %s1, 614
  %1903 = vst.msk [vmem:[%s1902] ss:$-24 sm:$0x30] %vm1897, %v1896
  %s1904 = scalar_lea.vmem %s1, 710
  %1905 = vst.msk [vmem:[%s1904] ss:$-24 sm:$0xc0] %vm1897, %v1896
  %s1906 = scalar_lea.vmem %s0, 24
  %v1907 = vld.sshfl [vmem:[%s1906] sm:$0xff pattern:$0x67452301]
  %1908 = vrot.lane.b32.xlu0 %v1907, 72
  %v1909 = vpop.permute.xlu0 %1908
  %vm1910 = vcmask 31744
  %s1911 = scalar_lea.vmem %s1, 614
  %1912 = vst.msk [vmem:[%s1911] ss:$-24 sm:$0x3] %vm1910, %v1909
  %s1913 = scalar_lea.vmem %s1, 710
  %1914 = vst.msk [vmem:[%s1913] ss:$-24 sm:$0xc] %vm1910, %v1909
  %s1915 = scalar_lea.vmem %s1, 806
  %1916 = vst.msk [vmem:[%s1915] ss:$-24 sm:$0x30] %vm1910, %v1909
  %s1917 = scalar_lea.vmem %s1, 902
  %1918 = vst.msk [vmem:[%s1917] ss:$-24 sm:$0xc0] %vm1910, %v1909
  %s1919 = scalar_lea.vmem %s0, 32
  %v1920 = vld.sshfl [vmem:[%s1919] sm:$0xff pattern:$0x67452301]
  %1921 = vrot.lane.b32.xlu0 %v1920, 72
  %v1922 = vpop.permute.xlu0 %1921
  %vm1923 = vcmask 31744
  %s1924 = scalar_lea.vmem %s1, 806
  %1925 = vst.msk [vmem:[%s1924] ss:$-24 sm:$0x3] %vm1923, %v1922
  %s1926 = scalar_lea.vmem %s1, 902
  %1927 = vst.msk [vmem:[%s1926] ss:$-24 sm:$0xc] %vm1923, %v1922
  %s1928 = scalar_lea.vmem %s1, 998
  %1929 = vst.msk [vmem:[%s1928] ss:$-24 sm:$0x30] %vm1923, %v1922
  %s1930 = scalar_lea.vmem %s1, 1094
  %1931 = vst.msk [vmem:[%s1930] ss:$-24 sm:$0xc0] %vm1923, %v1922
  %s1932 = scalar_lea.vmem %s0, 40
  %v1933 = vld.sshfl [vmem:[%s1932] sm:$0xff pattern:$0x67452301]
  %1934 = vrot.lane.b32.xlu0 %v1933, 72
  %v1935 = vpop.permute.xlu0 %1934
  %vm1936 = vcmask 31744
  %s1937 = scalar_lea.vmem %s1, 998
  %1938 = vst.msk [vmem:[%s1937] ss:$-24 sm:$0x3] %vm1936, %v1935
  %s1939 = scalar_lea.vmem %s1, 1094
  %1940 = vst.msk [vmem:[%s1939] ss:$-24 sm:$0xc] %vm1936, %v1935
  %s1941 = scalar_lea.vmem %s1, 1190
  %1942 = vst.msk [vmem:[%s1941] ss:$-24 sm:$0x30] %vm1936, %v1935
  %s1943 = scalar_lea.vmem %s1, 1286
  %1944 = vst.msk [vmem:[%s1943] ss:$-24 sm:$0xc0] %vm1936, %v1935
  %s1945 = scalar_lea.vmem %s0, 48
  %v1946 = vld.sshfl [vmem:[%s1945] sm:$0xff pattern:$0x67452301]
  %1947 = vrot.lane.b32.xlu0 %v1946, 72
  %v1948 = vpop.permute.xlu0 %1947
  %vm1949 = vcmask 31744
  %s1950 = scalar_lea.vmem %s1, 1190
  %1951 = vst.msk [vmem:[%s1950] ss:$-24 sm:$0x3] %vm1949, %v1948
  %s1952 = scalar_lea.vmem %s1, 1286
  %1953 = vst.msk [vmem:[%s1952] ss:$-24 sm:$0xc] %vm1949, %v1948
  %s1954 = scalar_lea.vmem %s1, 1382
  %1955 = vst.msk [vmem:[%s1954] ss:$-24 sm:$0x30] %vm1949, %v1948
  %s1956 = scalar_lea.vmem %s1, 1478
  %1957 = vst.msk [vmem:[%s1956] ss:$-24 sm:$0xc0] %vm1949, %v1948
  %s1958 = scalar_lea.vmem %s0, 56
  %v1959 = vld.sshfl [vmem:[%s1958] sm:$0xff pattern:$0x67452301]
  %1960 = vrot.lane.b32.xlu0 %v1959, 72
  %v1961 = vpop.permute.xlu0 %1960
  %vm1962 = vcmask 31744
  %s1963 = scalar_lea.vmem %s1, 1382
  %1964 = vst.msk [vmem:[%s1963] ss:$-24 sm:$0x3] %vm1962, %v1961
  %s1965 = scalar_lea.vmem %s1, 1478
  %1966 = vst.msk [vmem:[%s1965] ss:$-24 sm:$0xc] %vm1962, %v1961
  %s1967 = scalar_lea.vmem %s1, 1574
  %1968 = vst.msk [vmem:[%s1967] ss:$-24 sm:$0x30] %vm1962, %v1961
  %s1969 = scalar_lea.vmem %s1, 1670
  %1970 = vst.msk [vmem:[%s1969] ss:$-24 sm:$0xc0] %vm1962, %v1961
  %s1971 = scalar_lea.vmem %s0, 64
  %v1972 = vld.sshfl [vmem:[%s1971] sm:$0xff pattern:$0x67452301]
  %1973 = vrot.lane.b32.xlu0 %v1972, 72
  %v1974 = vpop.permute.xlu0 %1973
  %vm1975 = vcmask 31744
  %s1976 = scalar_lea.vmem %s1, 1574
  %1977 = vst.msk [vmem:[%s1976] ss:$-24 sm:$0x3] %vm1975, %v1974
  %s1978 = scalar_lea.vmem %s1, 1670
  %1979 = vst.msk [vmem:[%s1978] ss:$-24 sm:$0xc] %vm1975, %v1974
  %s1980 = scalar_lea.vmem %s1, 1766
  %1981 = vst.msk [vmem:[%s1980] ss:$-24 sm:$0x30] %vm1975, %v1974
  %s1982 = scalar_lea.vmem %s1, 1862
  %1983 = vst.msk [vmem:[%s1982] ss:$-24 sm:$0xc0] %vm1975, %v1974
  %s1984 = scalar_lea.vmem %s0, 72
  %v1985 = vld.sshfl [vmem:[%s1984] sm:$0xff pattern:$0x67452301]
  %1986 = vrot.lane.b32.xlu0 %v1985, 72
  %v1987 = vpop.permute.xlu0 %1986
  %vm1988 = vcmask 31744
  %s1989 = scalar_lea.vmem %s1, 1766
  %1990 = vst.msk [vmem:[%s1989] ss:$-24 sm:$0x3] %vm1988, %v1987
  %s1991 = scalar_lea.vmem %s1, 1862
  %1992 = vst.msk [vmem:[%s1991] ss:$-24 sm:$0xc] %vm1988, %v1987
  %s1993 = scalar_lea.vmem %s1, 1958
  %1994 = vst.msk [vmem:[%s1993] ss:$-24 sm:$0x30] %vm1988, %v1987
  %s1995 = scalar_lea.vmem %s1, 2054
  %1996 = vst.msk [vmem:[%s1995] ss:$-24 sm:$0xc0] %vm1988, %v1987
  %s1997 = scalar_lea.vmem %s0, 80
  %v1998 = vld.sshfl [vmem:[%s1997] sm:$0xff pattern:$0x22222301]
  %1999 = vrot.lane.b32.xlu0 %v1998, 72
  %v2000 = vpop.permute.xlu0 %1999
  %vm2001 = vcmask 31744
  %s2002 = scalar_lea.vmem %s1, 1958
  %2003 = vst.msk [vmem:[%s2002] ss:$-24 sm:$0x3] %vm2001, %v2000
  %s2004 = scalar_lea.vmem %s1, 2054
  %2005 = vst.msk [vmem:[%s2004] ss:$-24 sm:$0xc] %vm2001, %v2000
  %v2006 = vld.sshfl [vmem:[%s0] sm:$0xff pattern:$0x67452301]
  %2007 = vrot.lane.b32.xlu0 %v2006, 68
  %v2008 = vpop.permute.xlu0 %2007
  %vm2009 = vcmask 31744
  %s2010 = scalar_lea.vmem %s1, 39
  %2011 = vst.msk [vmem:[%s2010] ss:$-24 sm:$0x3] %vm2009, %v2008
  %s2012 = scalar_lea.vmem %s1, 135
  %2013 = vst.msk [vmem:[%s2012] ss:$-24 sm:$0xc] %vm2009, %v2008
  %s2014 = scalar_lea.vmem %s1, 231
  %2015 = vst.msk [vmem:[%s2014] ss:$-24 sm:$0x30] %vm2009, %v2008
  %s2016 = scalar_lea.vmem %s1, 327
  %2017 = vst.msk [vmem:[%s2016] ss:$-24 sm:$0xc0] %vm2009, %v2008
  %s2018 = scalar_lea.vmem %s0, 8
  %v2019 = vld.sshfl [vmem:[%s2018] sm:$0xff pattern:$0x67452301]
  %2020 = vrot.lane.b32.xlu0 %v2019, 68
  %v2021 = vpop.permute.xlu0 %2020
  %vm2022 = vcmask 31744
  %s2023 = scalar_lea.vmem %s1, 231
  %2024 = vst.msk [vmem:[%s2023] ss:$-24 sm:$0x3] %vm2022, %v2021
  %s2025 = scalar_lea.vmem %s1, 327
  %2026 = vst.msk [vmem:[%s2025] ss:$-24 sm:$0xc] %vm2022, %v2021
  %s2027 = scalar_lea.vmem %s1, 423
  %2028 = vst.msk [vmem:[%s2027] ss:$-24 sm:$0x30] %vm2022, %v2021
  %s2029 = scalar_lea.vmem %s1, 519
  %2030 = vst.msk [vmem:[%s2029] ss:$-24 sm:$0xc0] %vm2022, %v2021
  %s2031 = scalar_lea.vmem %s0, 16
  %v2032 = vld.sshfl [vmem:[%s2031] sm:$0xff pattern:$0x67452301]
  %2033 = vrot.lane.b32.xlu0 %v2032, 68
  %v2034 = vpop.permute.xlu0 %2033
  %vm2035 = vcmask 31744
  %s2036 = scalar_lea.vmem %s1, 423
  %2037 = vst.msk [vmem:[%s2036] ss:$-24 sm:$0x3] %vm2035, %v2034
  %s2038 = scalar_lea.vmem %s1, 519
  %2039 = vst.msk [vmem:[%s2038] ss:$-24 sm:$0xc] %vm2035, %v2034
  %s2040 = scalar_lea.vmem %s1, 615
  %2041 = vst.msk [vmem:[%s2040] ss:$-24 sm:$0x30] %vm2035, %v2034
  %s2042 = scalar_lea.vmem %s1, 711
  %2043 = vst.msk [vmem:[%s2042] ss:$-24 sm:$0xc0] %vm2035, %v2034
  %s2044 = scalar_lea.vmem %s0, 24
  %v2045 = vld.sshfl [vmem:[%s2044] sm:$0xff pattern:$0x67452301]
  %2046 = vrot.lane.b32.xlu0 %v2045, 68
  %v2047 = vpop.permute.xlu0 %2046
  %vm2048 = vcmask 31744
  %s2049 = scalar_lea.vmem %s1, 615
  %2050 = vst.msk [vmem:[%s2049] ss:$-24 sm:$0x3] %vm2048, %v2047
  %s2051 = scalar_lea.vmem %s1, 711
  %2052 = vst.msk [vmem:[%s2051] ss:$-24 sm:$0xc] %vm2048, %v2047
  %s2053 = scalar_lea.vmem %s1, 807
  %2054 = vst.msk [vmem:[%s2053] ss:$-24 sm:$0x30] %vm2048, %v2047
  %s2055 = scalar_lea.vmem %s1, 903
  %2056 = vst.msk [vmem:[%s2055] ss:$-24 sm:$0xc0] %vm2048, %v2047
  %s2057 = scalar_lea.vmem %s0, 32
  %v2058 = vld.sshfl [vmem:[%s2057] sm:$0xff pattern:$0x67452301]
  %2059 = vrot.lane.b32.xlu0 %v2058, 68
  %v2060 = vpop.permute.xlu0 %2059
  %vm2061 = vcmask 31744
  %s2062 = scalar_lea.vmem %s1, 807
  %2063 = vst.msk [vmem:[%s2062] ss:$-24 sm:$0x3] %vm2061, %v2060
  %s2064 = scalar_lea.vmem %s1, 903
  %2065 = vst.msk [vmem:[%s2064] ss:$-24 sm:$0xc] %vm2061, %v2060
  %s2066 = scalar_lea.vmem %s1, 999
  %2067 = vst.msk [vmem:[%s2066] ss:$-24 sm:$0x30] %vm2061, %v2060
  %s2068 = scalar_lea.vmem %s1, 1095
  %2069 = vst.msk [vmem:[%s2068] ss:$-24 sm:$0xc0] %vm2061, %v2060
  %s2070 = scalar_lea.vmem %s0, 40
  %v2071 = vld.sshfl [vmem:[%s2070] sm:$0xff pattern:$0x67452301]
  %2072 = vrot.lane.b32.xlu0 %v2071, 68
  %v2073 = vpop.permute.xlu0 %2072
  %vm2074 = vcmask 31744
  %s2075 = scalar_lea.vmem %s1, 999
  %2076 = vst.msk [vmem:[%s2075] ss:$-24 sm:$0x3] %vm2074, %v2073
  %s2077 = scalar_lea.vmem %s1, 1095
  %2078 = vst.msk [vmem:[%s2077] ss:$-24 sm:$0xc] %vm2074, %v2073
  %s2079 = scalar_lea.vmem %s1, 1191
  %2080 = vst.msk [vmem:[%s2079] ss:$-24 sm:$0x30] %vm2074, %v2073
  %s2081 = scalar_lea.vmem %s1, 1287
  %2082 = vst.msk [vmem:[%s2081] ss:$-24 sm:$0xc0] %vm2074, %v2073
  %s2083 = scalar_lea.vmem %s0, 48
  %v2084 = vld.sshfl [vmem:[%s2083] sm:$0xff pattern:$0x67452301]
  %2085 = vrot.lane.b32.xlu0 %v2084, 68
  %v2086 = vpop.permute.xlu0 %2085
  %vm2087 = vcmask 31744
  %s2088 = scalar_lea.vmem %s1, 1191
  %2089 = vst.msk [vmem:[%s2088] ss:$-24 sm:$0x3] %vm2087, %v2086
  %s2090 = scalar_lea.vmem %s1, 1287
  %2091 = vst.msk [vmem:[%s2090] ss:$-24 sm:$0xc] %vm2087, %v2086
  %s2092 = scalar_lea.vmem %s1, 1383
  %2093 = vst.msk [vmem:[%s2092] ss:$-24 sm:$0x30] %vm2087, %v2086
  %s2094 = scalar_lea.vmem %s1, 1479
  %2095 = vst.msk [vmem:[%s2094] ss:$-24 sm:$0xc0] %vm2087, %v2086
  %s2096 = scalar_lea.vmem %s0, 56
  %v2097 = vld.sshfl [vmem:[%s2096] sm:$0xff pattern:$0x67452301]
  %2098 = vrot.lane.b32.xlu0 %v2097, 68
  %v2099 = vpop.permute.xlu0 %2098
  %vm2100 = vcmask 31744
  %s2101 = scalar_lea.vmem %s1, 1383
  %2102 = vst.msk [vmem:[%s2101] ss:$-24 sm:$0x3] %vm2100, %v2099
  %s2103 = scalar_lea.vmem %s1, 1479
  %2104 = vst.msk [vmem:[%s2103] ss:$-24 sm:$0xc] %vm2100, %v2099
  %s2105 = scalar_lea.vmem %s1, 1575
  %2106 = vst.msk [vmem:[%s2105] ss:$-24 sm:$0x30] %vm2100, %v2099
  %s2107 = scalar_lea.vmem %s1, 1671
  %2108 = vst.msk [vmem:[%s2107] ss:$-24 sm:$0xc0] %vm2100, %v2099
  %s2109 = scalar_lea.vmem %s0, 64
  %v2110 = vld.sshfl [vmem:[%s2109] sm:$0xff pattern:$0x67452301]
  %2111 = vrot.lane.b32.xlu0 %v2110, 68
  %v2112 = vpop.permute.xlu0 %2111
  %vm2113 = vcmask 31744
  %s2114 = scalar_lea.vmem %s1, 1575
  %2115 = vst.msk [vmem:[%s2114] ss:$-24 sm:$0x3] %vm2113, %v2112
  %s2116 = scalar_lea.vmem %s1, 1671
  %2117 = vst.msk [vmem:[%s2116] ss:$-24 sm:$0xc] %vm2113, %v2112
  %s2118 = scalar_lea.vmem %s1, 1767
  %2119 = vst.msk [vmem:[%s2118] ss:$-24 sm:$0x30] %vm2113, %v2112
  %s2120 = scalar_lea.vmem %s1, 1863
  %2121 = vst.msk [vmem:[%s2120] ss:$-24 sm:$0xc0] %vm2113, %v2112
  %s2122 = scalar_lea.vmem %s0, 72
  %v2123 = vld.sshfl [vmem:[%s2122] sm:$0xff pattern:$0x67452301]
  %2124 = vrot.lane.b32.xlu0 %v2123, 68
  %v2125 = vpop.permute.xlu0 %2124
  %vm2126 = vcmask 31744
  %s2127 = scalar_lea.vmem %s1, 1767
  %2128 = vst.msk [vmem:[%s2127] ss:$-24 sm:$0x3] %vm2126, %v2125
  %s2129 = scalar_lea.vmem %s1, 1863
  %2130 = vst.msk [vmem:[%s2129] ss:$-24 sm:$0xc] %vm2126, %v2125
  %s2131 = scalar_lea.vmem %s1, 1959
  %2132 = vst.msk [vmem:[%s2131] ss:$-24 sm:$0x30] %vm2126, %v2125
  %s2133 = scalar_lea.vmem %s1, 2055
  %2134 = vst.msk [vmem:[%s2133] ss:$-24 sm:$0xc0] %vm2126, %v2125
  %s2135 = scalar_lea.vmem %s0, 80
  %v2136 = vld.sshfl [vmem:[%s2135] sm:$0xff pattern:$0x22222301]
  %2137 = vrot.lane.b32.xlu0 %v2136, 68
  %v2138 = vpop.permute.xlu0 %2137
  %vm2139 = vcmask 31744
  %s2140 = scalar_lea.vmem %s1, 1959
  %2141 = vst.msk [vmem:[%s2140] ss:$-24 sm:$0x3] %vm2139, %v2138
  %s2142 = scalar_lea.vmem %s1, 2055
  %2143 = vst.msk [vmem:[%s2142] ss:$-24 sm:$0xc] %vm2139, %v2138
  %v2144 = vld.sshfl [vmem:[%s0] sm:$0xff pattern:$0x74563012]
  %2145 = vrot.lane.b32.xlu0 %v2144, 64
  %v2146 = vpop.permute.xlu0 %2145
  %vm2147 = vcmask 31744
  %s2148 = scalar_lea.vmem %s1, 64
  %2149 = vst.msk [vmem:[%s2148] ss:$-24 sm:$0x7] %vm2147, %v2146
  %s2150 = scalar_lea.vmem %s1, 4294967168
  %2151 = vst.msk [vmem:[%s2150] ss:$72 sm:$0x18] %vm2147, %v2146
  %s2152 = scalar_lea.vmem %s1, 256
  %2153 = vst.msk [vmem:[%s2152] ss:$-24 sm:$0x60] %vm2147, %v2146
  %s2154 = scalar_lea.vmem %s1, 177
  %2155 = vst.msk [vmem:[%s2154] sm:$0x80] %vm2147, %v2146
  %s2156 = scalar_lea.vmem %s0, 8
  %v2157 = vld.sshfl [vmem:[%s2156] sm:$0xff pattern:$0x74563012]
  %2158 = vrot.lane.b32.xlu0 %v2157, 64
  %v2159 = vpop.permute.xlu0 %2158
  %vm2160 = vcmask 31744
  %s2161 = scalar_lea.vmem %s1, 256
  %2162 = vst.msk [vmem:[%s2161] ss:$-24 sm:$0x7] %vm2160, %v2159
  %s2163 = scalar_lea.vmem %s1, 64
  %2164 = vst.msk [vmem:[%s2163] ss:$72 sm:$0x18] %vm2160, %v2159
  %s2165 = scalar_lea.vmem %s1, 448
  %2166 = vst.msk [vmem:[%s2165] ss:$-24 sm:$0x60] %vm2160, %v2159
  %s2167 = scalar_lea.vmem %s1, 369
  %2168 = vst.msk [vmem:[%s2167] sm:$0x80] %vm2160, %v2159
  %s2169 = scalar_lea.vmem %s0, 16
  %v2170 = vld.sshfl [vmem:[%s2169] sm:$0xff pattern:$0x74563012]
  %2171 = vrot.lane.b32.xlu0 %v2170, 64
  %v2172 = vpop.permute.xlu0 %2171
  %vm2173 = vcmask 31744
  %s2174 = scalar_lea.vmem %s1, 448
  %2175 = vst.msk [vmem:[%s2174] ss:$-24 sm:$0x7] %vm2173, %v2172
  %s2176 = scalar_lea.vmem %s1, 256
  %2177 = vst.msk [vmem:[%s2176] ss:$72 sm:$0x18] %vm2173, %v2172
  %s2178 = scalar_lea.vmem %s1, 640
  %2179 = vst.msk [vmem:[%s2178] ss:$-24 sm:$0x60] %vm2173, %v2172
  %s2180 = scalar_lea.vmem %s1, 561
  %2181 = vst.msk [vmem:[%s2180] sm:$0x80] %vm2173, %v2172
  %s2182 = scalar_lea.vmem %s0, 24
  %v2183 = vld.sshfl [vmem:[%s2182] sm:$0xff pattern:$0x74563012]
  %2184 = vrot.lane.b32.xlu0 %v2183, 64
  %v2185 = vpop.permute.xlu0 %2184
  %vm2186 = vcmask 31744
  %s2187 = scalar_lea.vmem %s1, 640
  %2188 = vst.msk [vmem:[%s2187] ss:$-24 sm:$0x7] %vm2186, %v2185
  %s2189 = scalar_lea.vmem %s1, 448
  %2190 = vst.msk [vmem:[%s2189] ss:$72 sm:$0x18] %vm2186, %v2185
  %s2191 = scalar_lea.vmem %s1, 832
  %2192 = vst.msk [vmem:[%s2191] ss:$-24 sm:$0x60] %vm2186, %v2185
  %s2193 = scalar_lea.vmem %s1, 753
  %2194 = vst.msk [vmem:[%s2193] sm:$0x80] %vm2186, %v2185
  %s2195 = scalar_lea.vmem %s0, 32
  %v2196 = vld.sshfl [vmem:[%s2195] sm:$0xff pattern:$0x74563012]
  %2197 = vrot.lane.b32.xlu0 %v2196, 64
  %v2198 = vpop.permute.xlu0 %2197
  %vm2199 = vcmask 31744
  %s2200 = scalar_lea.vmem %s1, 832
  %2201 = vst.msk [vmem:[%s2200] ss:$-24 sm:$0x7] %vm2199, %v2198
  %s2202 = scalar_lea.vmem %s1, 640
  %2203 = vst.msk [vmem:[%s2202] ss:$72 sm:$0x18] %vm2199, %v2198
  %s2204 = scalar_lea.vmem %s1, 1024
  %2205 = vst.msk [vmem:[%s2204] ss:$-24 sm:$0x60] %vm2199, %v2198
  %s2206 = scalar_lea.vmem %s1, 945
  %2207 = vst.msk [vmem:[%s2206] sm:$0x80] %vm2199, %v2198
  %s2208 = scalar_lea.vmem %s0, 40
  %v2209 = vld.sshfl [vmem:[%s2208] sm:$0xff pattern:$0x74563012]
  %2210 = vrot.lane.b32.xlu0 %v2209, 64
  %v2211 = vpop.permute.xlu0 %2210
  %vm2212 = vcmask 31744
  %s2213 = scalar_lea.vmem %s1, 1024
  %2214 = vst.msk [vmem:[%s2213] ss:$-24 sm:$0x7] %vm2212, %v2211
  %s2215 = scalar_lea.vmem %s1, 832
  %2216 = vst.msk [vmem:[%s2215] ss:$72 sm:$0x18] %vm2212, %v2211
  %s2217 = scalar_lea.vmem %s1, 1216
  %2218 = vst.msk [vmem:[%s2217] ss:$-24 sm:$0x60] %vm2212, %v2211
  %s2219 = scalar_lea.vmem %s1, 1137
  %2220 = vst.msk [vmem:[%s2219] sm:$0x80] %vm2212, %v2211
  %s2221 = scalar_lea.vmem %s0, 48
  %v2222 = vld.sshfl [vmem:[%s2221] sm:$0xff pattern:$0x74563012]
  %2223 = vrot.lane.b32.xlu0 %v2222, 64
  %v2224 = vpop.permute.xlu0 %2223
  %vm2225 = vcmask 31744
  %s2226 = scalar_lea.vmem %s1, 1216
  %2227 = vst.msk [vmem:[%s2226] ss:$-24 sm:$0x7] %vm2225, %v2224
  %s2228 = scalar_lea.vmem %s1, 1024
  %2229 = vst.msk [vmem:[%s2228] ss:$72 sm:$0x18] %vm2225, %v2224
  %s2230 = scalar_lea.vmem %s1, 1408
  %2231 = vst.msk [vmem:[%s2230] ss:$-24 sm:$0x60] %vm2225, %v2224
  %s2232 = scalar_lea.vmem %s1, 1329
  %2233 = vst.msk [vmem:[%s2232] sm:$0x80] %vm2225, %v2224
  %s2234 = scalar_lea.vmem %s0, 56
  %v2235 = vld.sshfl [vmem:[%s2234] sm:$0xff pattern:$0x74563012]
  %2236 = vrot.lane.b32.xlu0 %v2235, 64
  %v2237 = vpop.permute.xlu0 %2236
  %vm2238 = vcmask 31744
  %s2239 = scalar_lea.vmem %s1, 1408
  %2240 = vst.msk [vmem:[%s2239] ss:$-24 sm:$0x7] %vm2238, %v2237
  %s2241 = scalar_lea.vmem %s1, 1216
  %2242 = vst.msk [vmem:[%s2241] ss:$72 sm:$0x18] %vm2238, %v2237
  %s2243 = scalar_lea.vmem %s1, 1600
  %2244 = vst.msk [vmem:[%s2243] ss:$-24 sm:$0x60] %vm2238, %v2237
  %s2245 = scalar_lea.vmem %s1, 1521
  %2246 = vst.msk [vmem:[%s2245] sm:$0x80] %vm2238, %v2237
  %s2247 = scalar_lea.vmem %s0, 64
  %v2248 = vld.sshfl [vmem:[%s2247] sm:$0xff pattern:$0x74563012]
  %2249 = vrot.lane.b32.xlu0 %v2248, 64
  %v2250 = vpop.permute.xlu0 %2249
  %vm2251 = vcmask 31744
  %s2252 = scalar_lea.vmem %s1, 1600
  %2253 = vst.msk [vmem:[%s2252] ss:$-24 sm:$0x7] %vm2251, %v2250
  %s2254 = scalar_lea.vmem %s1, 1408
  %2255 = vst.msk [vmem:[%s2254] ss:$72 sm:$0x18] %vm2251, %v2250
  %s2256 = scalar_lea.vmem %s1, 1792
  %2257 = vst.msk [vmem:[%s2256] ss:$-24 sm:$0x60] %vm2251, %v2250
  %s2258 = scalar_lea.vmem %s1, 1713
  %2259 = vst.msk [vmem:[%s2258] sm:$0x80] %vm2251, %v2250
  %s2260 = scalar_lea.vmem %s0, 72
  %v2261 = vld.sshfl [vmem:[%s2260] sm:$0xff pattern:$0x74563012]
  %2262 = vrot.lane.b32.xlu0 %v2261, 64
  %v2263 = vpop.permute.xlu0 %2262
  %vm2264 = vcmask 31744
  %s2265 = scalar_lea.vmem %s1, 1792
  %2266 = vst.msk [vmem:[%s2265] ss:$-24 sm:$0x7] %vm2264, %v2263
  %s2267 = scalar_lea.vmem %s1, 1600
  %2268 = vst.msk [vmem:[%s2267] ss:$72 sm:$0x18] %vm2264, %v2263
  %s2269 = scalar_lea.vmem %s1, 1984
  %2270 = vst.msk [vmem:[%s2269] ss:$-24 sm:$0x60] %vm2264, %v2263
  %s2271 = scalar_lea.vmem %s1, 1905
  %2272 = vst.msk [vmem:[%s2271] sm:$0x80] %vm2264, %v2263
  %s2273 = scalar_lea.vmem %s0, 80
  %v2274 = vld.sshfl [vmem:[%s2273] sm:$0xff pattern:$0x33333012]
  %2275 = vrot.lane.b32.xlu0 %v2274, 64
  %v2276 = vpop.permute.xlu0 %2275
  %vm2277 = vcmask 31744
  %s2278 = scalar_lea.vmem %s1, 1984
  %2279 = vst.msk [vmem:[%s2278] ss:$-24 sm:$0x7] %vm2277, %v2276
  %s2280 = scalar_lea.vmem %s1, 2005
  %2281 = vst.msk [vmem:[%s2280] sm:$0x8] %vm2277, %v2276
  %v2282 = vld.sshfl [vmem:[%s0] sm:$0xff pattern:$0x74563012]
  %2283 = vrot.lane.b32.xlu0 %v2282, 60
  %v2284 = vpop.permute.xlu0 %2283
  %vm2285 = vcmask 31744
  %s2286 = scalar_lea.vmem %s1, 65
  %2287 = vst.msk [vmem:[%s2286] ss:$-24 sm:$0x7] %vm2285, %v2284
  %s2288 = scalar_lea.vmem %s1, 4294967169
  %2289 = vst.msk [vmem:[%s2288] ss:$72 sm:$0x18] %vm2285, %v2284
  %s2290 = scalar_lea.vmem %s1, 257
  %2291 = vst.msk [vmem:[%s2290] ss:$-24 sm:$0x60] %vm2285, %v2284
  %s2292 = scalar_lea.vmem %s1, 178
  %2293 = vst.msk [vmem:[%s2292] sm:$0x80] %vm2285, %v2284
  %s2294 = scalar_lea.vmem %s0, 8
  %v2295 = vld.sshfl [vmem:[%s2294] sm:$0xff pattern:$0x74563012]
  %2296 = vrot.lane.b32.xlu0 %v2295, 60
  %v2297 = vpop.permute.xlu0 %2296
  %vm2298 = vcmask 31744
  %s2299 = scalar_lea.vmem %s1, 257
  %2300 = vst.msk [vmem:[%s2299] ss:$-24 sm:$0x7] %vm2298, %v2297
  %s2301 = scalar_lea.vmem %s1, 65
  %2302 = vst.msk [vmem:[%s2301] ss:$72 sm:$0x18] %vm2298, %v2297
  %s2303 = scalar_lea.vmem %s1, 449
  %2304 = vst.msk [vmem:[%s2303] ss:$-24 sm:$0x60] %vm2298, %v2297
  %s2305 = scalar_lea.vmem %s1, 370
  %2306 = vst.msk [vmem:[%s2305] sm:$0x80] %vm2298, %v2297
  %s2307 = scalar_lea.vmem %s0, 16
  %v2308 = vld.sshfl [vmem:[%s2307] sm:$0xff pattern:$0x74563012]
  %2309 = vrot.lane.b32.xlu0 %v2308, 60
  %v2310 = vpop.permute.xlu0 %2309
  %vm2311 = vcmask 31744
  %s2312 = scalar_lea.vmem %s1, 449
  %2313 = vst.msk [vmem:[%s2312] ss:$-24 sm:$0x7] %vm2311, %v2310
  %s2314 = scalar_lea.vmem %s1, 257
  %2315 = vst.msk [vmem:[%s2314] ss:$72 sm:$0x18] %vm2311, %v2310
  %s2316 = scalar_lea.vmem %s1, 641
  %2317 = vst.msk [vmem:[%s2316] ss:$-24 sm:$0x60] %vm2311, %v2310
  %s2318 = scalar_lea.vmem %s1, 562
  %2319 = vst.msk [vmem:[%s2318] sm:$0x80] %vm2311, %v2310
  %s2320 = scalar_lea.vmem %s0, 24
  %v2321 = vld.sshfl [vmem:[%s2320] sm:$0xff pattern:$0x74563012]
  %2322 = vrot.lane.b32.xlu0 %v2321, 60
  %v2323 = vpop.permute.xlu0 %2322
  %vm2324 = vcmask 31744
  %s2325 = scalar_lea.vmem %s1, 641
  %2326 = vst.msk [vmem:[%s2325] ss:$-24 sm:$0x7] %vm2324, %v2323
  %s2327 = scalar_lea.vmem %s1, 449
  %2328 = vst.msk [vmem:[%s2327] ss:$72 sm:$0x18] %vm2324, %v2323
  %s2329 = scalar_lea.vmem %s1, 833
  %2330 = vst.msk [vmem:[%s2329] ss:$-24 sm:$0x60] %vm2324, %v2323
  %s2331 = scalar_lea.vmem %s1, 754
  %2332 = vst.msk [vmem:[%s2331] sm:$0x80] %vm2324, %v2323
  %s2333 = scalar_lea.vmem %s0, 32
  %v2334 = vld.sshfl [vmem:[%s2333] sm:$0xff pattern:$0x74563012]
  %2335 = vrot.lane.b32.xlu0 %v2334, 60
  %v2336 = vpop.permute.xlu0 %2335
  %vm2337 = vcmask 31744
  %s2338 = scalar_lea.vmem %s1, 833
  %2339 = vst.msk [vmem:[%s2338] ss:$-24 sm:$0x7] %vm2337, %v2336
  %s2340 = scalar_lea.vmem %s1, 641
  %2341 = vst.msk [vmem:[%s2340] ss:$72 sm:$0x18] %vm2337, %v2336
  %s2342 = scalar_lea.vmem %s1, 1025
  %2343 = vst.msk [vmem:[%s2342] ss:$-24 sm:$0x60] %vm2337, %v2336
  %s2344 = scalar_lea.vmem %s1, 946
  %2345 = vst.msk [vmem:[%s2344] sm:$0x80] %vm2337, %v2336
  %s2346 = scalar_lea.vmem %s0, 40
  %v2347 = vld.sshfl [vmem:[%s2346] sm:$0xff pattern:$0x74563012]
  %2348 = vrot.lane.b32.xlu0 %v2347, 60
  %v2349 = vpop.permute.xlu0 %2348
  %vm2350 = vcmask 31744
  %s2351 = scalar_lea.vmem %s1, 1025
  %2352 = vst.msk [vmem:[%s2351] ss:$-24 sm:$0x7] %vm2350, %v2349
  %s2353 = scalar_lea.vmem %s1, 833
  %2354 = vst.msk [vmem:[%s2353] ss:$72 sm:$0x18] %vm2350, %v2349
  %s2355 = scalar_lea.vmem %s1, 1217
  %2356 = vst.msk [vmem:[%s2355] ss:$-24 sm:$0x60] %vm2350, %v2349
  %s2357 = scalar_lea.vmem %s1, 1138
  %2358 = vst.msk [vmem:[%s2357] sm:$0x80] %vm2350, %v2349
  %s2359 = scalar_lea.vmem %s0, 48
  %v2360 = vld.sshfl [vmem:[%s2359] sm:$0xff pattern:$0x74563012]
  %2361 = vrot.lane.b32.xlu0 %v2360, 60
  %v2362 = vpop.permute.xlu0 %2361
  %vm2363 = vcmask 31744
  %s2364 = scalar_lea.vmem %s1, 1217
  %2365 = vst.msk [vmem:[%s2364] ss:$-24 sm:$0x7] %vm2363, %v2362
  %s2366 = scalar_lea.vmem %s1, 1025
  %2367 = vst.msk [vmem:[%s2366] ss:$72 sm:$0x18] %vm2363, %v2362
  %s2368 = scalar_lea.vmem %s1, 1409
  %2369 = vst.msk [vmem:[%s2368] ss:$-24 sm:$0x60] %vm2363, %v2362
  %s2370 = scalar_lea.vmem %s1, 1330
  %2371 = vst.msk [vmem:[%s2370] sm:$0x80] %vm2363, %v2362
  %s2372 = scalar_lea.vmem %s0, 56
  %v2373 = vld.sshfl [vmem:[%s2372] sm:$0xff pattern:$0x74563012]
  %2374 = vrot.lane.b32.xlu0 %v2373, 60
  %v2375 = vpop.permute.xlu0 %2374
  %vm2376 = vcmask 31744
  %s2377 = scalar_lea.vmem %s1, 1409
  %2378 = vst.msk [vmem:[%s2377] ss:$-24 sm:$0x7] %vm2376, %v2375
  %s2379 = scalar_lea.vmem %s1, 1217
  %2380 = vst.msk [vmem:[%s2379] ss:$72 sm:$0x18] %vm2376, %v2375
  %s2381 = scalar_lea.vmem %s1, 1601
  %2382 = vst.msk [vmem:[%s2381] ss:$-24 sm:$0x60] %vm2376, %v2375
  %s2383 = scalar_lea.vmem %s1, 1522
  %2384 = vst.msk [vmem:[%s2383] sm:$0x80] %vm2376, %v2375
  %s2385 = scalar_lea.vmem %s0, 64
  %v2386 = vld.sshfl [vmem:[%s2385] sm:$0xff pattern:$0x74563012]
  %2387 = vrot.lane.b32.xlu0 %v2386, 60
  %v2388 = vpop.permute.xlu0 %2387
  %vm2389 = vcmask 31744
  %s2390 = scalar_lea.vmem %s1, 1601
  %2391 = vst.msk [vmem:[%s2390] ss:$-24 sm:$0x7] %vm2389, %v2388
  %s2392 = scalar_lea.vmem %s1, 1409
  %2393 = vst.msk [vmem:[%s2392] ss:$72 sm:$0x18] %vm2389, %v2388
  %s2394 = scalar_lea.vmem %s1, 1793
  %2395 = vst.msk [vmem:[%s2394] ss:$-24 sm:$0x60] %vm2389, %v2388
  %s2396 = scalar_lea.vmem %s1, 1714
  %2397 = vst.msk [vmem:[%s2396] sm:$0x80] %vm2389, %v2388
  %s2398 = scalar_lea.vmem %s0, 72
  %v2399 = vld.sshfl [vmem:[%s2398] sm:$0xff pattern:$0x74563012]
  %2400 = vrot.lane.b32.xlu0 %v2399, 60
  %v2401 = vpop.permute.xlu0 %2400
  %vm2402 = vcmask 31744
  %s2403 = scalar_lea.vmem %s1, 1793
  %2404 = vst.msk [vmem:[%s2403] ss:$-24 sm:$0x7] %vm2402, %v2401
  %s2405 = scalar_lea.vmem %s1, 1601
  %2406 = vst.msk [vmem:[%s2405] ss:$72 sm:$0x18] %vm2402, %v2401
  %s2407 = scalar_lea.vmem %s1, 1985
  %2408 = vst.msk [vmem:[%s2407] ss:$-24 sm:$0x60] %vm2402, %v2401
  %s2409 = scalar_lea.vmem %s1, 1906
  %2410 = vst.msk [vmem:[%s2409] sm:$0x80] %vm2402, %v2401
  %s2411 = scalar_lea.vmem %s0, 80
  %v2412 = vld.sshfl [vmem:[%s2411] sm:$0xff pattern:$0x33333012]
  %2413 = vrot.lane.b32.xlu0 %v2412, 60
  %v2414 = vpop.permute.xlu0 %2413
  %vm2415 = vcmask 31744
  %s2416 = scalar_lea.vmem %s1, 1985
  %2417 = vst.msk [vmem:[%s2416] ss:$-24 sm:$0x7] %vm2415, %v2414
  %s2418 = scalar_lea.vmem %s1, 2006
  %2419 = vst.msk [vmem:[%s2418] sm:$0x8] %vm2415, %v2414
  %v2420 = vld.sshfl [vmem:[%s0] sm:$0xff pattern:$0x74563012]
  %2421 = vrot.lane.b32.xlu0 %v2420, 56
  %v2422 = vpop.permute.xlu0 %2421
  %vm2423 = vcmask 31744
  %s2424 = scalar_lea.vmem %s1, 66
  %2425 = vst.msk [vmem:[%s2424] ss:$-24 sm:$0x7] %vm2423, %v2422
  %s2426 = scalar_lea.vmem %s1, 4294967170
  %2427 = vst.msk [vmem:[%s2426] ss:$72 sm:$0x18] %vm2423, %v2422
  %s2428 = scalar_lea.vmem %s1, 258
  %2429 = vst.msk [vmem:[%s2428] ss:$-24 sm:$0x60] %vm2423, %v2422
  %s2430 = scalar_lea.vmem %s1, 179
  %2431 = vst.msk [vmem:[%s2430] sm:$0x80] %vm2423, %v2422
  %s2432 = scalar_lea.vmem %s0, 8
  %v2433 = vld.sshfl [vmem:[%s2432] sm:$0xff pattern:$0x74563012]
  %2434 = vrot.lane.b32.xlu0 %v2433, 56
  %v2435 = vpop.permute.xlu0 %2434
  %vm2436 = vcmask 31744
  %s2437 = scalar_lea.vmem %s1, 258
  %2438 = vst.msk [vmem:[%s2437] ss:$-24 sm:$0x7] %vm2436, %v2435
  %s2439 = scalar_lea.vmem %s1, 66
  %2440 = vst.msk [vmem:[%s2439] ss:$72 sm:$0x18] %vm2436, %v2435
  %s2441 = scalar_lea.vmem %s1, 450
  %2442 = vst.msk [vmem:[%s2441] ss:$-24 sm:$0x60] %vm2436, %v2435
  %s2443 = scalar_lea.vmem %s1, 371
  %2444 = vst.msk [vmem:[%s2443] sm:$0x80] %vm2436, %v2435
  %s2445 = scalar_lea.vmem %s0, 16
  %v2446 = vld.sshfl [vmem:[%s2445] sm:$0xff pattern:$0x74563012]
  %2447 = vrot.lane.b32.xlu0 %v2446, 56
  %v2448 = vpop.permute.xlu0 %2447
  %vm2449 = vcmask 31744
  %s2450 = scalar_lea.vmem %s1, 450
  %2451 = vst.msk [vmem:[%s2450] ss:$-24 sm:$0x7] %vm2449, %v2448
  %s2452 = scalar_lea.vmem %s1, 258
  %2453 = vst.msk [vmem:[%s2452] ss:$72 sm:$0x18] %vm2449, %v2448
  %s2454 = scalar_lea.vmem %s1, 642
  %2455 = vst.msk [vmem:[%s2454] ss:$-24 sm:$0x60] %vm2449, %v2448
  %s2456 = scalar_lea.vmem %s1, 563
  %2457 = vst.msk [vmem:[%s2456] sm:$0x80] %vm2449, %v2448
  %s2458 = scalar_lea.vmem %s0, 24
  %v2459 = vld.sshfl [vmem:[%s2458] sm:$0xff pattern:$0x74563012]
  %2460 = vrot.lane.b32.xlu0 %v2459, 56
  %v2461 = vpop.permute.xlu0 %2460
  %vm2462 = vcmask 31744
  %s2463 = scalar_lea.vmem %s1, 642
  %2464 = vst.msk [vmem:[%s2463] ss:$-24 sm:$0x7] %vm2462, %v2461
  %s2465 = scalar_lea.vmem %s1, 450
  %2466 = vst.msk [vmem:[%s2465] ss:$72 sm:$0x18] %vm2462, %v2461
  %s2467 = scalar_lea.vmem %s1, 834
  %2468 = vst.msk [vmem:[%s2467] ss:$-24 sm:$0x60] %vm2462, %v2461
  %s2469 = scalar_lea.vmem %s1, 755
  %2470 = vst.msk [vmem:[%s2469] sm:$0x80] %vm2462, %v2461
  %s2471 = scalar_lea.vmem %s0, 32
  %v2472 = vld.sshfl [vmem:[%s2471] sm:$0xff pattern:$0x74563012]
  %2473 = vrot.lane.b32.xlu0 %v2472, 56
  %v2474 = vpop.permute.xlu0 %2473
  %vm2475 = vcmask 31744
  %s2476 = scalar_lea.vmem %s1, 834
  %2477 = vst.msk [vmem:[%s2476] ss:$-24 sm:$0x7] %vm2475, %v2474
  %s2478 = scalar_lea.vmem %s1, 642
  %2479 = vst.msk [vmem:[%s2478] ss:$72 sm:$0x18] %vm2475, %v2474
  %s2480 = scalar_lea.vmem %s1, 1026
  %2481 = vst.msk [vmem:[%s2480] ss:$-24 sm:$0x60] %vm2475, %v2474
  %s2482 = scalar_lea.vmem %s1, 947
  %2483 = vst.msk [vmem:[%s2482] sm:$0x80] %vm2475, %v2474
  %s2484 = scalar_lea.vmem %s0, 40
  %v2485 = vld.sshfl [vmem:[%s2484] sm:$0xff pattern:$0x74563012]
  %2486 = vrot.lane.b32.xlu0 %v2485, 56
  %v2487 = vpop.permute.xlu0 %2486
  %vm2488 = vcmask 31744
  %s2489 = scalar_lea.vmem %s1, 1026
  %2490 = vst.msk [vmem:[%s2489] ss:$-24 sm:$0x7] %vm2488, %v2487
  %s2491 = scalar_lea.vmem %s1, 834
  %2492 = vst.msk [vmem:[%s2491] ss:$72 sm:$0x18] %vm2488, %v2487
  %s2493 = scalar_lea.vmem %s1, 1218
  %2494 = vst.msk [vmem:[%s2493] ss:$-24 sm:$0x60] %vm2488, %v2487
  %s2495 = scalar_lea.vmem %s1, 1139
  %2496 = vst.msk [vmem:[%s2495] sm:$0x80] %vm2488, %v2487
  %s2497 = scalar_lea.vmem %s0, 48
  %v2498 = vld.sshfl [vmem:[%s2497] sm:$0xff pattern:$0x74563012]
  %2499 = vrot.lane.b32.xlu0 %v2498, 56
  %v2500 = vpop.permute.xlu0 %2499
  %vm2501 = vcmask 31744
  %s2502 = scalar_lea.vmem %s1, 1218
  %2503 = vst.msk [vmem:[%s2502] ss:$-24 sm:$0x7] %vm2501, %v2500
  %s2504 = scalar_lea.vmem %s1, 1026
  %2505 = vst.msk [vmem:[%s2504] ss:$72 sm:$0x18] %vm2501, %v2500
  %s2506 = scalar_lea.vmem %s1, 1410
  %2507 = vst.msk [vmem:[%s2506] ss:$-24 sm:$0x60] %vm2501, %v2500
  %s2508 = scalar_lea.vmem %s1, 1331
  %2509 = vst.msk [vmem:[%s2508] sm:$0x80] %vm2501, %v2500
  %s2510 = scalar_lea.vmem %s0, 56
  %v2511 = vld.sshfl [vmem:[%s2510] sm:$0xff pattern:$0x74563012]
  %2512 = vrot.lane.b32.xlu0 %v2511, 56
  %v2513 = vpop.permute.xlu0 %2512
  %vm2514 = vcmask 31744
  %s2515 = scalar_lea.vmem %s1, 1410
  %2516 = vst.msk [vmem:[%s2515] ss:$-24 sm:$0x7] %vm2514, %v2513
  %s2517 = scalar_lea.vmem %s1, 1218
  %2518 = vst.msk [vmem:[%s2517] ss:$72 sm:$0x18] %vm2514, %v2513
  %s2519 = scalar_lea.vmem %s1, 1602
  %2520 = vst.msk [vmem:[%s2519] ss:$-24 sm:$0x60] %vm2514, %v2513
  %s2521 = scalar_lea.vmem %s1, 1523
  %2522 = vst.msk [vmem:[%s2521] sm:$0x80] %vm2514, %v2513
  %s2523 = scalar_lea.vmem %s0, 64
  %v2524 = vld.sshfl [vmem:[%s2523] sm:$0xff pattern:$0x74563012]
  %2525 = vrot.lane.b32.xlu0 %v2524, 56
  %v2526 = vpop.permute.xlu0 %2525
  %vm2527 = vcmask 31744
  %s2528 = scalar_lea.vmem %s1, 1602
  %2529 = vst.msk [vmem:[%s2528] ss:$-24 sm:$0x7] %vm2527, %v2526
  %s2530 = scalar_lea.vmem %s1, 1410
  %2531 = vst.msk [vmem:[%s2530] ss:$72 sm:$0x18] %vm2527, %v2526
  %s2532 = scalar_lea.vmem %s1, 1794
  %2533 = vst.msk [vmem:[%s2532] ss:$-24 sm:$0x60] %vm2527, %v2526
  %s2534 = scalar_lea.vmem %s1, 1715
  %2535 = vst.msk [vmem:[%s2534] sm:$0x80] %vm2527, %v2526
  %s2536 = scalar_lea.vmem %s0, 72
  %v2537 = vld.sshfl [vmem:[%s2536] sm:$0xff pattern:$0x74563012]
  %2538 = vrot.lane.b32.xlu0 %v2537, 56
  %v2539 = vpop.permute.xlu0 %2538
  %vm2540 = vcmask 31744
  %s2541 = scalar_lea.vmem %s1, 1794
  %2542 = vst.msk [vmem:[%s2541] ss:$-24 sm:$0x7] %vm2540, %v2539
  %s2543 = scalar_lea.vmem %s1, 1602
  %2544 = vst.msk [vmem:[%s2543] ss:$72 sm:$0x18] %vm2540, %v2539
  %s2545 = scalar_lea.vmem %s1, 1986
  %2546 = vst.msk [vmem:[%s2545] ss:$-24 sm:$0x60] %vm2540, %v2539
  %s2547 = scalar_lea.vmem %s1, 1907
  %2548 = vst.msk [vmem:[%s2547] sm:$0x80] %vm2540, %v2539
  %s2549 = scalar_lea.vmem %s0, 80
  %v2550 = vld.sshfl [vmem:[%s2549] sm:$0xff pattern:$0x33333012]
  %2551 = vrot.lane.b32.xlu0 %v2550, 56
  %v2552 = vpop.permute.xlu0 %2551
  %vm2553 = vcmask 31744
  %s2554 = scalar_lea.vmem %s1, 1986
  %2555 = vst.msk [vmem:[%s2554] ss:$-24 sm:$0x7] %vm2553, %v2552
  %s2556 = scalar_lea.vmem %s1, 2007
  %2557 = vst.msk [vmem:[%s2556] sm:$0x8] %vm2553, %v2552
  %v2558 = vld.sshfl [vmem:[%s0] sm:$0xff pattern:$0x74563012]
  %2559 = vrot.lane.b32.xlu0 %v2558, 52
  %v2560 = vpop.permute.xlu0 %2559
  %vm2561 = vcmask 31744
  %s2562 = scalar_lea.vmem %s1, 67
  %2563 = vst.msk [vmem:[%s2562] ss:$-24 sm:$0x7] %vm2561, %v2560
  %s2564 = scalar_lea.vmem %s1, 4294967171
  %2565 = vst.msk [vmem:[%s2564] ss:$72 sm:$0x18] %vm2561, %v2560
  %s2566 = scalar_lea.vmem %s1, 259
  %2567 = vst.msk [vmem:[%s2566] ss:$-24 sm:$0x60] %vm2561, %v2560
  %s2568 = scalar_lea.vmem %s1, 180
  %2569 = vst.msk [vmem:[%s2568] sm:$0x80] %vm2561, %v2560
  %s2570 = scalar_lea.vmem %s0, 8
  %v2571 = vld.sshfl [vmem:[%s2570] sm:$0xff pattern:$0x74563012]
  %2572 = vrot.lane.b32.xlu0 %v2571, 52
  %v2573 = vpop.permute.xlu0 %2572
  %vm2574 = vcmask 31744
  %s2575 = scalar_lea.vmem %s1, 259
  %2576 = vst.msk [vmem:[%s2575] ss:$-24 sm:$0x7] %vm2574, %v2573
  %s2577 = scalar_lea.vmem %s1, 67
  %2578 = vst.msk [vmem:[%s2577] ss:$72 sm:$0x18] %vm2574, %v2573
  %s2579 = scalar_lea.vmem %s1, 451
  %2580 = vst.msk [vmem:[%s2579] ss:$-24 sm:$0x60] %vm2574, %v2573
  %s2581 = scalar_lea.vmem %s1, 372
  %2582 = vst.msk [vmem:[%s2581] sm:$0x80] %vm2574, %v2573
  %s2583 = scalar_lea.vmem %s0, 16
  %v2584 = vld.sshfl [vmem:[%s2583] sm:$0xff pattern:$0x74563012]
  %2585 = vrot.lane.b32.xlu0 %v2584, 52
  %v2586 = vpop.permute.xlu0 %2585
  %vm2587 = vcmask 31744
  %s2588 = scalar_lea.vmem %s1, 451
  %2589 = vst.msk [vmem:[%s2588] ss:$-24 sm:$0x7] %vm2587, %v2586
  %s2590 = scalar_lea.vmem %s1, 259
  %2591 = vst.msk [vmem:[%s2590] ss:$72 sm:$0x18] %vm2587, %v2586
  %s2592 = scalar_lea.vmem %s1, 643
  %2593 = vst.msk [vmem:[%s2592] ss:$-24 sm:$0x60] %vm2587, %v2586
  %s2594 = scalar_lea.vmem %s1, 564
  %2595 = vst.msk [vmem:[%s2594] sm:$0x80] %vm2587, %v2586
  %s2596 = scalar_lea.vmem %s0, 24
  %v2597 = vld.sshfl [vmem:[%s2596] sm:$0xff pattern:$0x74563012]
  %2598 = vrot.lane.b32.xlu0 %v2597, 52
  %v2599 = vpop.permute.xlu0 %2598
  %vm2600 = vcmask 31744
  %s2601 = scalar_lea.vmem %s1, 643
  %2602 = vst.msk [vmem:[%s2601] ss:$-24 sm:$0x7] %vm2600, %v2599
  %s2603 = scalar_lea.vmem %s1, 451
  %2604 = vst.msk [vmem:[%s2603] ss:$72 sm:$0x18] %vm2600, %v2599
  %s2605 = scalar_lea.vmem %s1, 835
  %2606 = vst.msk [vmem:[%s2605] ss:$-24 sm:$0x60] %vm2600, %v2599
  %s2607 = scalar_lea.vmem %s1, 756
  %2608 = vst.msk [vmem:[%s2607] sm:$0x80] %vm2600, %v2599
  %s2609 = scalar_lea.vmem %s0, 32
  %v2610 = vld.sshfl [vmem:[%s2609] sm:$0xff pattern:$0x74563012]
  %2611 = vrot.lane.b32.xlu0 %v2610, 52
  %v2612 = vpop.permute.xlu0 %2611
  %vm2613 = vcmask 31744
  %s2614 = scalar_lea.vmem %s1, 835
  %2615 = vst.msk [vmem:[%s2614] ss:$-24 sm:$0x7] %vm2613, %v2612
  %s2616 = scalar_lea.vmem %s1, 643
  %2617 = vst.msk [vmem:[%s2616] ss:$72 sm:$0x18] %vm2613, %v2612
  %s2618 = scalar_lea.vmem %s1, 1027
  %2619 = vst.msk [vmem:[%s2618] ss:$-24 sm:$0x60] %vm2613, %v2612
  %s2620 = scalar_lea.vmem %s1, 948
  %2621 = vst.msk [vmem:[%s2620] sm:$0x80] %vm2613, %v2612
  %s2622 = scalar_lea.vmem %s0, 40
  %v2623 = vld.sshfl [vmem:[%s2622] sm:$0xff pattern:$0x74563012]
  %2624 = vrot.lane.b32.xlu0 %v2623, 52
  %v2625 = vpop.permute.xlu0 %2624
  %vm2626 = vcmask 31744
  %s2627 = scalar_lea.vmem %s1, 1027
  %2628 = vst.msk [vmem:[%s2627] ss:$-24 sm:$0x7] %vm2626, %v2625
  %s2629 = scalar_lea.vmem %s1, 835
  %2630 = vst.msk [vmem:[%s2629] ss:$72 sm:$0x18] %vm2626, %v2625
  %s2631 = scalar_lea.vmem %s1, 1219
  %2632 = vst.msk [vmem:[%s2631] ss:$-24 sm:$0x60] %vm2626, %v2625
  %s2633 = scalar_lea.vmem %s1, 1140
  %2634 = vst.msk [vmem:[%s2633] sm:$0x80] %vm2626, %v2625
  %s2635 = scalar_lea.vmem %s0, 48
  %v2636 = vld.sshfl [vmem:[%s2635] sm:$0xff pattern:$0x74563012]
  %2637 = vrot.lane.b32.xlu0 %v2636, 52
  %v2638 = vpop.permute.xlu0 %2637
  %vm2639 = vcmask 31744
  %s2640 = scalar_lea.vmem %s1, 1219
  %2641 = vst.msk [vmem:[%s2640] ss:$-24 sm:$0x7] %vm2639, %v2638
  %s2642 = scalar_lea.vmem %s1, 1027
  %2643 = vst.msk [vmem:[%s2642] ss:$72 sm:$0x18] %vm2639, %v2638
  %s2644 = scalar_lea.vmem %s1, 1411
  %2645 = vst.msk [vmem:[%s2644] ss:$-24 sm:$0x60] %vm2639, %v2638
  %s2646 = scalar_lea.vmem %s1, 1332
  %2647 = vst.msk [vmem:[%s2646] sm:$0x80] %vm2639, %v2638
  %s2648 = scalar_lea.vmem %s0, 56
  %v2649 = vld.sshfl [vmem:[%s2648] sm:$0xff pattern:$0x74563012]
  %2650 = vrot.lane.b32.xlu0 %v2649, 52
  %v2651 = vpop.permute.xlu0 %2650
  %vm2652 = vcmask 31744
  %s2653 = scalar_lea.vmem %s1, 1411
  %2654 = vst.msk [vmem:[%s2653] ss:$-24 sm:$0x7] %vm2652, %v2651
  %s2655 = scalar_lea.vmem %s1, 1219
  %2656 = vst.msk [vmem:[%s2655] ss:$72 sm:$0x18] %vm2652, %v2651
  %s2657 = scalar_lea.vmem %s1, 1603
  %2658 = vst.msk [vmem:[%s2657] ss:$-24 sm:$0x60] %vm2652, %v2651
  %s2659 = scalar_lea.vmem %s1, 1524
  %2660 = vst.msk [vmem:[%s2659] sm:$0x80] %vm2652, %v2651
  %s2661 = scalar_lea.vmem %s0, 64
  %v2662 = vld.sshfl [vmem:[%s2661] sm:$0xff pattern:$0x74563012]
  %2663 = vrot.lane.b32.xlu0 %v2662, 52
  %v2664 = vpop.permute.xlu0 %2663
  %vm2665 = vcmask 31744
  %s2666 = scalar_lea.vmem %s1, 1603
  %2667 = vst.msk [vmem:[%s2666] ss:$-24 sm:$0x7] %vm2665, %v2664
  %s2668 = scalar_lea.vmem %s1, 1411
  %2669 = vst.msk [vmem:[%s2668] ss:$72 sm:$0x18] %vm2665, %v2664
  %s2670 = scalar_lea.vmem %s1, 1795
  %2671 = vst.msk [vmem:[%s2670] ss:$-24 sm:$0x60] %vm2665, %v2664
  %s2672 = scalar_lea.vmem %s1, 1716
  %2673 = vst.msk [vmem:[%s2672] sm:$0x80] %vm2665, %v2664
  %s2674 = scalar_lea.vmem %s0, 72
  %v2675 = vld.sshfl [vmem:[%s2674] sm:$0xff pattern:$0x74563012]
  %2676 = vrot.lane.b32.xlu0 %v2675, 52
  %v2677 = vpop.permute.xlu0 %2676
  %vm2678 = vcmask 31744
  %s2679 = scalar_lea.vmem %s1, 1795
  %2680 = vst.msk [vmem:[%s2679] ss:$-24 sm:$0x7] %vm2678, %v2677
  %s2681 = scalar_lea.vmem %s1, 1603
  %2682 = vst.msk [vmem:[%s2681] ss:$72 sm:$0x18] %vm2678, %v2677
  %s2683 = scalar_lea.vmem %s1, 1987
  %2684 = vst.msk [vmem:[%s2683] ss:$-24 sm:$0x60] %vm2678, %v2677
  %s2685 = scalar_lea.vmem %s1, 1908
  %2686 = vst.msk [vmem:[%s2685] sm:$0x80] %vm2678, %v2677
  %s2687 = scalar_lea.vmem %s0, 80
  %v2688 = vld.sshfl [vmem:[%s2687] sm:$0xff pattern:$0x33333012]
  %2689 = vrot.lane.b32.xlu0 %v2688, 52
  %v2690 = vpop.permute.xlu0 %2689
  %vm2691 = vcmask 31744
  %s2692 = scalar_lea.vmem %s1, 1987
  %2693 = vst.msk [vmem:[%s2692] ss:$-24 sm:$0x7] %vm2691, %v2690
  %s2694 = scalar_lea.vmem %s1, 2008
  %2695 = vst.msk [vmem:[%s2694] sm:$0x8] %vm2691, %v2690
  %v2696 = vld.sshfl [vmem:[%s0] sm:$0xff pattern:$0x74563012]
  %2697 = vrot.lane.b32.xlu0 %v2696, 48
  %v2698 = vpop.permute.xlu0 %2697
  %vm2699 = vcmask 31744
  %s2700 = scalar_lea.vmem %s1, 68
  %2701 = vst.msk [vmem:[%s2700] ss:$-24 sm:$0x7] %vm2699, %v2698
  %s2702 = scalar_lea.vmem %s1, 4294967172
  %2703 = vst.msk [vmem:[%s2702] ss:$72 sm:$0x18] %vm2699, %v2698
  %s2704 = scalar_lea.vmem %s1, 260
  %2705 = vst.msk [vmem:[%s2704] ss:$-24 sm:$0x60] %vm2699, %v2698
  %s2706 = scalar_lea.vmem %s1, 181
  %2707 = vst.msk [vmem:[%s2706] sm:$0x80] %vm2699, %v2698
  %s2708 = scalar_lea.vmem %s0, 8
  %v2709 = vld.sshfl [vmem:[%s2708] sm:$0xff pattern:$0x74563012]
  %2710 = vrot.lane.b32.xlu0 %v2709, 48
  %v2711 = vpop.permute.xlu0 %2710
  %vm2712 = vcmask 31744
  %s2713 = scalar_lea.vmem %s1, 260
  %2714 = vst.msk [vmem:[%s2713] ss:$-24 sm:$0x7] %vm2712, %v2711
  %s2715 = scalar_lea.vmem %s1, 68
  %2716 = vst.msk [vmem:[%s2715] ss:$72 sm:$0x18] %vm2712, %v2711
  %s2717 = scalar_lea.vmem %s1, 452
  %2718 = vst.msk [vmem:[%s2717] ss:$-24 sm:$0x60] %vm2712, %v2711
  %s2719 = scalar_lea.vmem %s1, 373
  %2720 = vst.msk [vmem:[%s2719] sm:$0x80] %vm2712, %v2711
  %s2721 = scalar_lea.vmem %s0, 16
  %v2722 = vld.sshfl [vmem:[%s2721] sm:$0xff pattern:$0x74563012]
  %2723 = vrot.lane.b32.xlu0 %v2722, 48
  %v2724 = vpop.permute.xlu0 %2723
  %vm2725 = vcmask 31744
  %s2726 = scalar_lea.vmem %s1, 452
  %2727 = vst.msk [vmem:[%s2726] ss:$-24 sm:$0x7] %vm2725, %v2724
  %s2728 = scalar_lea.vmem %s1, 260
  %2729 = vst.msk [vmem:[%s2728] ss:$72 sm:$0x18] %vm2725, %v2724
  %s2730 = scalar_lea.vmem %s1, 644
  %2731 = vst.msk [vmem:[%s2730] ss:$-24 sm:$0x60] %vm2725, %v2724
  %s2732 = scalar_lea.vmem %s1, 565
  %2733 = vst.msk [vmem:[%s2732] sm:$0x80] %vm2725, %v2724
  %s2734 = scalar_lea.vmem %s0, 24
  %v2735 = vld.sshfl [vmem:[%s2734] sm:$0xff pattern:$0x74563012]
  %2736 = vrot.lane.b32.xlu0 %v2735, 48
  %v2737 = vpop.permute.xlu0 %2736
  %vm2738 = vcmask 31744
  %s2739 = scalar_lea.vmem %s1, 644
  %2740 = vst.msk [vmem:[%s2739] ss:$-24 sm:$0x7] %vm2738, %v2737
  %s2741 = scalar_lea.vmem %s1, 452
  %2742 = vst.msk [vmem:[%s2741] ss:$72 sm:$0x18] %vm2738, %v2737
  %s2743 = scalar_lea.vmem %s1, 836
  %2744 = vst.msk [vmem:[%s2743] ss:$-24 sm:$0x60] %vm2738, %v2737
  %s2745 = scalar_lea.vmem %s1, 757
  %2746 = vst.msk [vmem:[%s2745] sm:$0x80] %vm2738, %v2737
  %s2747 = scalar_lea.vmem %s0, 32
  %v2748 = vld.sshfl [vmem:[%s2747] sm:$0xff pattern:$0x74563012]
  %2749 = vrot.lane.b32.xlu0 %v2748, 48
  %v2750 = vpop.permute.xlu0 %2749
  %vm2751 = vcmask 31744
  %s2752 = scalar_lea.vmem %s1, 836
  %2753 = vst.msk [vmem:[%s2752] ss:$-24 sm:$0x7] %vm2751, %v2750
  %s2754 = scalar_lea.vmem %s1, 644
  %2755 = vst.msk [vmem:[%s2754] ss:$72 sm:$0x18] %vm2751, %v2750
  %s2756 = scalar_lea.vmem %s1, 1028
  %2757 = vst.msk [vmem:[%s2756] ss:$-24 sm:$0x60] %vm2751, %v2750
  %s2758 = scalar_lea.vmem %s1, 949
  %2759 = vst.msk [vmem:[%s2758] sm:$0x80] %vm2751, %v2750
  %s2760 = scalar_lea.vmem %s0, 40
  %v2761 = vld.sshfl [vmem:[%s2760] sm:$0xff pattern:$0x74563012]
  %2762 = vrot.lane.b32.xlu0 %v2761, 48
  %v2763 = vpop.permute.xlu0 %2762
  %vm2764 = vcmask 31744
  %s2765 = scalar_lea.vmem %s1, 1028
  %2766 = vst.msk [vmem:[%s2765] ss:$-24 sm:$0x7] %vm2764, %v2763
  %s2767 = scalar_lea.vmem %s1, 836
  %2768 = vst.msk [vmem:[%s2767] ss:$72 sm:$0x18] %vm2764, %v2763
  %s2769 = scalar_lea.vmem %s1, 1220
  %2770 = vst.msk [vmem:[%s2769] ss:$-24 sm:$0x60] %vm2764, %v2763
  %s2771 = scalar_lea.vmem %s1, 1141
  %2772 = vst.msk [vmem:[%s2771] sm:$0x80] %vm2764, %v2763
  %s2773 = scalar_lea.vmem %s0, 48
  %v2774 = vld.sshfl [vmem:[%s2773] sm:$0xff pattern:$0x74563012]
  %2775 = vrot.lane.b32.xlu0 %v2774, 48
  %v2776 = vpop.permute.xlu0 %2775
  %vm2777 = vcmask 31744
  %s2778 = scalar_lea.vmem %s1, 1220
  %2779 = vst.msk [vmem:[%s2778] ss:$-24 sm:$0x7] %vm2777, %v2776
  %s2780 = scalar_lea.vmem %s1, 1028
  %2781 = vst.msk [vmem:[%s2780] ss:$72 sm:$0x18] %vm2777, %v2776
  %s2782 = scalar_lea.vmem %s1, 1412
  %2783 = vst.msk [vmem:[%s2782] ss:$-24 sm:$0x60] %vm2777, %v2776
  %s2784 = scalar_lea.vmem %s1, 1333
  %2785 = vst.msk [vmem:[%s2784] sm:$0x80] %vm2777, %v2776
  %s2786 = scalar_lea.vmem %s0, 56
  %v2787 = vld.sshfl [vmem:[%s2786] sm:$0xff pattern:$0x74563012]
  %2788 = vrot.lane.b32.xlu0 %v2787, 48
  %v2789 = vpop.permute.xlu0 %2788
  %vm2790 = vcmask 31744
  %s2791 = scalar_lea.vmem %s1, 1412
  %2792 = vst.msk [vmem:[%s2791] ss:$-24 sm:$0x7] %vm2790, %v2789
  %s2793 = scalar_lea.vmem %s1, 1220
  %2794 = vst.msk [vmem:[%s2793] ss:$72 sm:$0x18] %vm2790, %v2789
  %s2795 = scalar_lea.vmem %s1, 1604
  %2796 = vst.msk [vmem:[%s2795] ss:$-24 sm:$0x60] %vm2790, %v2789
  %s2797 = scalar_lea.vmem %s1, 1525
  %2798 = vst.msk [vmem:[%s2797] sm:$0x80] %vm2790, %v2789
  %s2799 = scalar_lea.vmem %s0, 64
  %v2800 = vld.sshfl [vmem:[%s2799] sm:$0xff pattern:$0x74563012]
  %2801 = vrot.lane.b32.xlu0 %v2800, 48
  %v2802 = vpop.permute.xlu0 %2801
  %vm2803 = vcmask 31744
  %s2804 = scalar_lea.vmem %s1, 1604
  %2805 = vst.msk [vmem:[%s2804] ss:$-24 sm:$0x7] %vm2803, %v2802
  %s2806 = scalar_lea.vmem %s1, 1412
  %2807 = vst.msk [vmem:[%s2806] ss:$72 sm:$0x18] %vm2803, %v2802
  %s2808 = scalar_lea.vmem %s1, 1796
  %2809 = vst.msk [vmem:[%s2808] ss:$-24 sm:$0x60] %vm2803, %v2802
  %s2810 = scalar_lea.vmem %s1, 1717
  %2811 = vst.msk [vmem:[%s2810] sm:$0x80] %vm2803, %v2802
  %s2812 = scalar_lea.vmem %s0, 72
  %v2813 = vld.sshfl [vmem:[%s2812] sm:$0xff pattern:$0x74563012]
  %2814 = vrot.lane.b32.xlu0 %v2813, 48
  %v2815 = vpop.permute.xlu0 %2814
  %vm2816 = vcmask 31744
  %s2817 = scalar_lea.vmem %s1, 1796
  %2818 = vst.msk [vmem:[%s2817] ss:$-24 sm:$0x7] %vm2816, %v2815
  %s2819 = scalar_lea.vmem %s1, 1604
  %2820 = vst.msk [vmem:[%s2819] ss:$72 sm:$0x18] %vm2816, %v2815
  %s2821 = scalar_lea.vmem %s1, 1988
  %2822 = vst.msk [vmem:[%s2821] ss:$-24 sm:$0x60] %vm2816, %v2815
  %s2823 = scalar_lea.vmem %s1, 1909
  %2824 = vst.msk [vmem:[%s2823] sm:$0x80] %vm2816, %v2815
  %s2825 = scalar_lea.vmem %s0, 80
  %v2826 = vld.sshfl [vmem:[%s2825] sm:$0xff pattern:$0x33333012]
  %2827 = vrot.lane.b32.xlu0 %v2826, 48
  %v2828 = vpop.permute.xlu0 %2827
  %vm2829 = vcmask 31744
  %s2830 = scalar_lea.vmem %s1, 1988
  %2831 = vst.msk [vmem:[%s2830] ss:$-24 sm:$0x7] %vm2829, %v2828
  %s2832 = scalar_lea.vmem %s1, 2009
  %2833 = vst.msk [vmem:[%s2832] sm:$0x8] %vm2829, %v2828

// kernel: dqn_forward.1
$region0: #{dqn_forward.1}
  #allocation0 [shape = 'u32[]', space=smem, size = 0x4, offset = 0x4, fixed_abs, tag = 'smem constant byte address 0x4 - core index']
  #allocation1 [shape = 'u32[144,128]{1,0:T(1,128)}', space=vmem, size = 0x12000, scoped, tag = 'internal scratch']
  %s0 = inlined_call_operand.vmem [shape: f32[24,336], index: 0, kind: input, shape index: {}]
  %s1 = inlined_call_operand.hbm [shape: bf16[336,128], index: 1, kind: input, shape index: {}]
  %s2 = inlined_call_operand.hbm [shape: f32[1,128], index: 2, kind: input, shape index: {}]
  %s3 = inlined_call_operand.hbm [shape: bf16[4,128,512], index: 3, kind: input, shape index: {}]
  %s4 = inlined_call_operand.hbm [shape: f32[1,512], index: 4, kind: input, shape index: {}]
  %s5 = inlined_call_operand.hbm [shape: bf16[2,9,216,512], index: 5, kind: input, shape index: {}]
  %s6 = inlined_call_operand.hbm [shape: f32[1,1024], index: 6, kind: input, shape index: {}]
  %s7 = inlined_call_operand.hbm [shape: bf16[1024,256], index: 7, kind: input, shape index: {}]
  %s8 = inlined_call_operand.vmem [shape: f32[2,1,256], index: 8, kind: output, shape index: {}]
  %s9 = sld [smem:[#allocation0]]
  $region93: #{dqn_forward.1} parent=0
    _
  %s11 = ssub.s32 1, %s9
  %s12 = scalar_select 0, %s11, %s9
  $region1: #{dqn_forward.1} parent=0
    #allocation2 [shape = 'u8[86016]{0}', space=vmem, size = 0x15000, scoped, tag = 'input window, operand 1, single buffered']
    #allocation3 [shape = 's32[2]{0}', space=sflag, size = 0x8, scoped, tag = 'scoped memory for dqn_forward.1']
    #allocation4 [shape = 'u8[512]{0}', space=vmem, size = 0x400, scoped, tag = 'input window, operand 2, single buffered']
    #allocation5 [shape = 's32[1]{0}', space=sflag, size = 0x4, scoped, tag = 'scoped memory for dqn_forward.1']
    #allocation6 [shape = 'u8[524288]{0}', space=vmem, size = 0x80000, scoped, tag = 'input window, operand 3, single buffered']
    #allocation7 [shape = 'u8[2048]{0}', space=vmem, size = 0x800, scoped, tag = 'input window, operand 4, single buffered']
    #allocation8 [shape = 's32[1]{0}', space=sflag, size = 0x4, scoped, tag = 'scoped memory for dqn_forward.1']
    #allocation9 [shape = 'u8[3981312]{0}', space=vmem, size = 0x3cc000, scoped, tag = 'input window, operand 5']
    #allocation10 [shape = 'u8[4096]{0}', space=vmem, size = 0x1000, scoped, tag = 'input window, operand 6']
    #allocation11 [shape = 'u8[524288]{0}', space=vmem, size = 0x80000, scoped, tag = 'input window, operand 7']
    %13 = vsyncpa [#allocation3], 0
    %14 = vsyncpa [#allocation5], 0
    %15 = vsyncpa [#allocation8], 0
    loop: start=0, step=1, limit=4
    $region2: #{dqn_forward.1} parent=1 // loop_pre_header
      _
    $region3: #{dqn_forward.1} parent=1 // loop_header
      %s17 = sphi 0, %s21
      %p18 = scmp.ge.s32.totalorder %s17, 4
      %s25 = sphi 0, %s25
      %s27 = sphi 0, %s25
      %s28 = sphi 0, %s27
      %s42 = sphi 0, %s28
      %s46 = sphi 0, %s46
      %s48 = sphi 0, %s46
      %s49 = sphi 0, %s48
      %s63 = sphi 0, %s49
      %s67 = sphi 0, %s67
      %s69 = sphi 0, %s67
      %s70 = sphi 0, %s69
      %s84 = sphi 0, %s70
      %s88 = sphi 0, %s88
      %s90 = sphi 0, %s88
      %s91 = sphi 0, %s90
      %s105 = sphi 0, %s91
      %s109 = sphi 0, %s109
      %s111 = sphi 0, %s109
      %s112 = sphi 0, %s111
      %s126 = sphi 0, %s112
      %s132 = sphi 0, %s134
      %s135 = sphi 0, %s132
      %s136 = sphi 0, %s135
      %s152 = sphi 0, %s136
      %s158 = sphi 0, %s160
      %s161 = sphi 0, %s158
      %s162 = sphi 0, %s161
      %s178 = sphi 0, %s162
      %s184 = sphi 0, %s186
      %s187 = sphi 0, %s184
      %s188 = sphi 0, %s187
      %s204 = sphi 0, %s188
      %s210 = sphi 0, %s212
      %s213 = sphi 0, %s210
      %s214 = sphi 0, %s213
      %s230 = sphi 0, %s214
    $region4: #{dqn_forward.1} parent=1 // loop_header_branch
      %20 = sbr.rel (%p18) target = $region8
    $region5: #{dqn_forward.1} parent=1 // loop_body
      %s22 = ssub.s32 %s17, 1
      %s23 = ssub.s32 %s17, 2
      %s24 = sadd.s32 %s17, 1
      %s26 = sadd.s32 %s25, 1
      %p29 = scmp.eq.s32.totalorder %s17, 1
      %p30 = scmp.ne.s32.totalorder %s25, %s27
      %p31 = scmp.eq.s32.totalorder %s17, 0
      %p32 = por %p30, %p31
      %p33 = scmp.ne.s32.totalorder %s25, %s27
      %p34 = scmp.eq.s32.totalorder %s22, 1
      %p35 = por %p33, %p34
      %p36 = scmp.ne.s32.totalorder %s27, %s28
      %p37 = scmp.eq.s32.totalorder %s22, 0
      %p38 = por %p36, %p37
      %p39 = scmp.ne.s32.totalorder %s27, %s28
      %p40 = scmp.eq.s32.totalorder %s23, 1
      %p41 = por %p39, %p40
      %p43 = scmp.ne.s32.totalorder %s28, %s42
      %p44 = scmp.eq.s32.totalorder %s23, 0
      %p45 = por %p43, %p44
      %s47 = sadd.s32 %s46, 1
      %p50 = scmp.eq.s32.totalorder %s17, 1
      %p51 = scmp.ne.s32.totalorder %s46, %s48
      %p52 = scmp.eq.s32.totalorder %s17, 0
      %p53 = por %p51, %p52
      %p54 = scmp.ne.s32.totalorder %s46, %s48
      %p55 = scmp.eq.s32.totalorder %s22, 1
      %p56 = por %p54, %p55
      %p57 = scmp.ne.s32.totalorder %s48, %s49
      %p58 = scmp.eq.s32.totalorder %s22, 0
      %p59 = por %p57, %p58
      %p60 = scmp.ne.s32.totalorder %s48, %s49
      %p61 = scmp.eq.s32.totalorder %s23, 1
      %p62 = por %p60, %p61
      %p64 = scmp.ne.s32.totalorder %s49, %s63
      %p65 = scmp.eq.s32.totalorder %s23, 0
      %p66 = por %p64, %p65
      %s68 = sadd.s32 %s67, 1
      %p71 = scmp.eq.s32.totalorder %s17, 1
      %p72 = scmp.ne.s32.totalorder %s67, %s69
      %p73 = scmp.eq.s32.totalorder %s17, 0
      %p74 = por %p72, %p73
      %p75 = scmp.ne.s32.totalorder %s67, %s69
      %p76 = scmp.eq.s32.totalorder %s22, 1
      %p77 = por %p75, %p76
      %p78 = scmp.ne.s32.totalorder %s69, %s70
      %p79 = scmp.eq.s32.totalorder %s22, 0
      %p80 = por %p78, %p79
      %p81 = scmp.ne.s32.totalorder %s69, %s70
      %p82 = scmp.eq.s32.totalorder %s23, 1
      %p83 = por %p81, %p82
      %p85 = scmp.ne.s32.totalorder %s70, %s84
      %p86 = scmp.eq.s32.totalorder %s23, 0
      %p87 = por %p85, %p86
      %s89 = sadd.s32 %s88, 1
      %p92 = scmp.eq.s32.totalorder %s17, 1
      %p93 = scmp.ne.s32.totalorder %s88, %s90
      %p94 = scmp.eq.s32.totalorder %s17, 0
      %p95 = por %p93, %p94
      %p96 = scmp.ne.s32.totalorder %s88, %s90
      %p97 = scmp.eq.s32.totalorder %s22, 1
      %p98 = por %p96, %p97
      %p99 = scmp.ne.s32.totalorder %s90, %s91
      %p100 = scmp.eq.s32.totalorder %s22, 0
      %p101 = por %p99, %p100
      %p102 = scmp.ne.s32.totalorder %s90, %s91
      %p103 = scmp.eq.s32.totalorder %s23, 1
      %p104 = por %p102, %p103
      %p106 = scmp.ne.s32.totalorder %s91, %s105
      %p107 = scmp.eq.s32.totalorder %s23, 0
      %p108 = por %p106, %p107
      %s110 = sadd.s32 %s109, 1
      %p113 = scmp.eq.s32.totalorder %s17, 1
      %p114 = scmp.ne.s32.totalorder %s109, %s111
      %p115 = scmp.eq.s32.totalorder %s17, 0
      %p116 = por %p114, %p115
      %p117 = scmp.ne.s32.totalorder %s109, %s111
      %p118 = scmp.eq.s32.totalorder %s22, 1
      %p119 = por %p117, %p118
      %p120 = scmp.ne.s32.totalorder %s111, %s112
      %p121 = scmp.eq.s32.totalorder %s22, 0
      %p122 = por %p120, %p121
      %p123 = scmp.ne.s32.totalorder %s111, %s112
      %p124 = scmp.eq.s32.totalorder %s23, 1
      %p125 = por %p123, %p124
      %p127 = scmp.ne.s32.totalorder %s112, %s126
      %p128 = scmp.eq.s32.totalorder %s23, 0
      %p129 = por %p127, %p128
      %s130 = ssub.s32 %s17, %s24
      %p131 = scmp.eq.s32.totalorder %s130, 0
      %s133 = sadd.s32 %s132, 1
      %s134 = scalar_select %p131, %s132, %s133
      %p137 = pneg %p131
      %p138 = scmp.eq.s32.totalorder %s17, 1
      %p139 = por %p137, %p138
      %p140 = scmp.ne.s32.totalorder %s132, %s135
      %p141 = scmp.eq.s32.totalorder %s17, 0
      %p142 = por %p140, %p141
      %p143 = scmp.ne.s32.totalorder %s132, %s135
      %p144 = scmp.eq.s32.totalorder %s22, 1
      %p145 = por %p143, %p144
      %p146 = scmp.ne.s32.totalorder %s135, %s136
      %p147 = scmp.eq.s32.totalorder %s22, 0
      %p148 = por %p146, %p147
      %p149 = scmp.ne.s32.totalorder %s135, %s136
      %p150 = scmp.eq.s32.totalorder %s23, 1
      %p151 = por %p149, %p150
      %p153 = scmp.ne.s32.totalorder %s136, %s152
      %p154 = scmp.eq.s32.totalorder %s23, 0
      %p155 = por %p153, %p154
      %s156 = ssub.s32 %s17, %s24
      %p157 = scmp.eq.s32.totalorder %s156, 0
      %s159 = sadd.s32 %s158, 1
      %s160 = scalar_select %p157, %s158, %s159
      %p163 = pneg %p157
      %p164 = scmp.eq.s32.totalorder %s17, 1
      %p165 = por %p163, %p164
      %p166 = scmp.ne.s32.totalorder %s158, %s161
      %p167 = scmp.eq.s32.totalorder %s17, 0
      %p168 = por %p166, %p167
      %p169 = scmp.ne.s32.totalorder %s158, %s161
      %p170 = scmp.eq.s32.totalorder %s22, 1
      %p171 = por %p169, %p170
      %p172 = scmp.ne.s32.totalorder %s161, %s162
      %p173 = scmp.eq.s32.totalorder %s22, 0
      %p174 = por %p172, %p173
      %p175 = scmp.ne.s32.totalorder %s161, %s162
      %p176 = scmp.eq.s32.totalorder %s23, 1
      %p177 = por %p175, %p176
      %p179 = scmp.ne.s32.totalorder %s162, %s178
      %p180 = scmp.eq.s32.totalorder %s23, 0
      %p181 = por %p179, %p180
      %s182 = ssub.s32 %s17, %s24
      %p183 = scmp.eq.s32.totalorder %s182, 0
      %s185 = sadd.s32 %s184, 1
      %s186 = scalar_select %p183, %s184, %s185
      %p189 = pneg %p183
      %p190 = scmp.eq.s32.totalorder %s17, 1
      %p191 = por %p189, %p190
      %p192 = scmp.ne.s32.totalorder %s184, %s187
      %p193 = scmp.eq.s32.totalorder %s17, 0
      %p194 = por %p192, %p193
      %p195 = scmp.ne.s32.totalorder %s184, %s187
      %p196 = scmp.eq.s32.totalorder %s22, 1
      %p197 = por %p195, %p196
      %p198 = scmp.ne.s32.totalorder %s187, %s188
      %p199 = scmp.eq.s32.totalorder %s22, 0
      %p200 = por %p198, %p199
      %p201 = scmp.ne.s32.totalorder %s187, %s188
      %p202 = scmp.eq.s32.totalorder %s23, 1
      %p203 = por %p201, %p202
      %p205 = scmp.ne.s32.totalorder %s188, %s204
      %p206 = scmp.eq.s32.totalorder %s23, 0
      %p207 = por %p205, %p206
      %s208 = ssub.s32 %s17, %s24
      %p209 = scmp.eq.s32.totalorder %s208, 0
      %s211 = sadd.s32 %s210, 1
      %s212 = scalar_select %p209, %s210, %s211
      %p215 = pneg %p209
      %p216 = scmp.eq.s32.totalorder %s17, 1
      %p217 = por %p215, %p216
      %p218 = scmp.ne.s32.totalorder %s210, %s213
      %p219 = scmp.eq.s32.totalorder %s17, 0
      %p220 = por %p218, %p219
      %p221 = scmp.ne.s32.totalorder %s210, %s213
      %p222 = scmp.eq.s32.totalorder %s22, 1
      %p223 = por %p221, %p222
      %p224 = scmp.ne.s32.totalorder %s213, %s214
      %p225 = scmp.eq.s32.totalorder %s22, 0
      %p226 = por %p224, %p225
      %p227 = scmp.ne.s32.totalorder %s213, %s214
      %p228 = scmp.eq.s32.totalorder %s23, 1
      %p229 = por %p227, %p228
      %p231 = scmp.ne.s32.totalorder %s214, %s230
      %p232 = scmp.eq.s32.totalorder %s23, 0
      %p233 = por %p231, %p232
      %p234 = scmp.le.s32.totalorder 1, %s17
      %p235 = scmp.lt.s32.totalorder %s17, 3
      %p236 = pnand %p234, %p235
      %p237 = pneg %p236
      // Predicated region
      $region9: #{dqn_forward.1} parent=5 // pred_check
        _
      $region10: #{dqn_forward.1} parent=5 // pred_check_branch
        %239 = sbr.rel (%p236) target = $region12
      $region11: #{dqn_forward.1} parent=5 // pred_region
        %s240 = ssub.s32 %s17, 1
        // Predicated region
        $region13: #{dqn_forward.1} parent=11 // pred_check
          %p241 = pneg %p38
        $region14: #{dqn_forward.1} parent=11 // pred_check_branch
          %243 = sbr.rel (%p241) target = $region16
        $region15: #{dqn_forward.1} parent=11 // pred_region
          _
        $region16: #{dqn_forward.1} parent=11 // pred_fallthru
          _
        // Predicated region
        $region17: #{dqn_forward.1} parent=11 // pred_check
          %p244 = pneg %p59
        $region18: #{dqn_forward.1} parent=11 // pred_check_branch
          %246 = sbr.rel (%p244) target = $region20
        $region19: #{dqn_forward.1} parent=11 // pred_region
          %s248 = ssub.s32 2688, 2688
          %249 = vsyncadd [#allocation3], %s248
          %s250 = sshll.u32 [#allocation2], 4
          %s251 = int_to_ptr.vmem [resolvable:$true] %s250
          %256 = dma.hbm_to_vmem [thread:$0]  %s1, 2688, %s251, [#allocation3], 64, 64, 4
        $region20: #{dqn_forward.1} parent=11 // pred_fallthru
          _
        // Predicated region
        $region21: #{dqn_forward.1} parent=11 // pred_check
          %p257 = pneg %p80
        $region22: #{dqn_forward.1} parent=11 // pred_check_branch
          %259 = sbr.rel (%p257) target = $region24
        $region23: #{dqn_forward.1} parent=11 // pred_region
          %s261 = ssub.s32 16, 16
          %262 = vsyncadd [#allocation5], %s261
          %s264 = sshll.u32 [#allocation4], 4
          %s265 = int_to_ptr.vmem [resolvable:$true] %s264
          %267 = dma.hbm_to_vmem [thread:$0]  %s2, 16, %s265, [#allocation5]
        $region24: #{dqn_forward.1} parent=11 // pred_fallthru
          _
        // Predicated region
        $region25: #{dqn_forward.1} parent=11 // pred_check
          %p268 = pneg %p101
        $region26: #{dqn_forward.1} parent=11 // pred_check_branch
          %270 = sbr.rel (%p268) target = $region28
        $region27: #{dqn_forward.1} parent=11 // pred_region
          %s272 = ssub.s32 16384, 16384
          %273 = vsyncadd [#allocation5], %s272
          %s274 = sshll.u32 [#allocation6], 4
          %s275 = int_to_ptr.vmem [resolvable:$true] %s274
          %280 = dma.hbm_to_vmem [thread:$0]  %s3, 16384, %s275, [#allocation5], 256, 256, 16
        $region28: #{dqn_forward.1} parent=11 // pred_fallthru
          _
        // Predicated region
        $region29: #{dqn_forward.1} parent=11 // pred_check
          %p281 = pneg %p122
        $region30: #{dqn_forward.1} parent=11 // pred_check_branch
          %283 = sbr.rel (%p281) target = $region32
        $region31: #{dqn_forward.1} parent=11 // pred_region
          %s285 = ssub.s32 64, 64
          %286 = vsyncadd [#allocation8], %s285
          %s288 = sshll.u32 [#allocation7], 4
          %s289 = int_to_ptr.vmem [resolvable:$true] %s288
          %291 = dma.hbm_to_vmem [thread:$0]  %s4, 64, %s289, [#allocation8]
        $region32: #{dqn_forward.1} parent=11 // pred_fallthru
          _
      $region12: #{dqn_forward.1} parent=5 // pred_fallthru
        _
      %p292 = scmp.lt.s32.totalorder %s17, 2
      // Predicated region
      $region33: #{dqn_forward.1} parent=5 // pred_check
        %p293 = pneg %p292
      $region34: #{dqn_forward.1} parent=5 // pred_check_branch
        %295 = sbr.rel (%p293) target = $region36
      $region35: #{dqn_forward.1} parent=5 // pred_region
        // Predicated region
        $region37: #{dqn_forward.1} parent=35 // pred_check
          %p296 = pneg %p142
        $region38: #{dqn_forward.1} parent=35 // pred_check_branch
          %298 = sbr.rel (%p296) target = $region40
        $region39: #{dqn_forward.1} parent=35 // pred_region
          %s299 = sand.u32 %s17, 1
          %s300 = scalar_lea.sflag [#allocation3], %s299
          %s301 = sand.u32 %s132, 1
          %s302 = smul.addr %s301, 3888
          %s303 = scalar_lea.vmem [#allocation9], %s302
          %s305 = ssub.s32 62208, 62208
          %306 = vsyncadd %s300, %s305
          %s307 = smul.addr %s17, 972
          %s308 = smul.addr %s307, 64
          %s309 = scalar_lea.hbm %s5, %s308
          %s310 = sshll.u32 %s303, 4
          %s311 = int_to_ptr.vmem [resolvable:$true] %s310
          %316 = dma.hbm_to_vmem [thread:$0]  %s309, 62208, %s311, %s300, 256, 256, 16
        $region40: #{dqn_forward.1} parent=35 // pred_fallthru
          _
        // Predicated region
        $region41: #{dqn_forward.1} parent=35 // pred_check
          %p317 = pneg %p168
        $region42: #{dqn_forward.1} parent=35 // pred_check_branch
          %319 = sbr.rel (%p317) target = $region44
        $region43: #{dqn_forward.1} parent=35 // pred_region
          %s320 = sand.u32 %s17, 1
          %s321 = scalar_lea.sflag [#allocation3], %s320
          %s322 = sand.u32 %s158, 1
          %s323 = smul.addr %s322, 4
          %s324 = scalar_lea.vmem [#allocation10], %s323
          %s325 = smul.u32 4, %s17
          %s327 = ssub.s32 64, 64
          %328 = vsyncadd %s321, %s327
          %s329 = smul.addr %s325, 16
          %s330 = scalar_lea.hbm %s6, %s329
          %s332 = sshll.u32 %s324, 4
          %s333 = int_to_ptr.vmem [resolvable:$true] %s332
          %335 = dma.hbm_to_vmem [thread:$0]  %s330, 64, %s333, %s321
        $region44: #{dqn_forward.1} parent=35 // pred_fallthru
          _
        // Predicated region
        $region45: #{dqn_forward.1} parent=35 // pred_check
          %p336 = pneg %p194
        $region46: #{dqn_forward.1} parent=35 // pred_check_branch
          %338 = sbr.rel (%p336) target = $region48
        $region47: #{dqn_forward.1} parent=35 // pred_region
          %s339 = sand.u32 %s17, 1
          %s340 = scalar_lea.sflag [#allocation3], %s339
          %s341 = sand.u32 %s184, 1
          %s342 = smul.addr %s341, 512
          %s343 = scalar_lea.vmem [#allocation11], %s342
          %s344 = smul.u32 64, %s17
          %s346 = ssub.s32 8192, 8192
          %347 = vsyncadd %s340, %s346
          %s348 = smul.addr %s344, 2
          %s349 = smul.addr %s348, 64
          %s350 = scalar_lea.hbm %s7, %s349
          %s351 = sshll.u32 %s343, 4
          %s352 = int_to_ptr.vmem [resolvable:$true] %s351
          %357 = dma.hbm_to_vmem [thread:$0]  %s350, 8192, %s352, %s340, 128, 128, 8
        $region48: #{dqn_forward.1} parent=35 // pred_fallthru
          _
      $region36: #{dqn_forward.1} parent=5 // pred_fallthru
        _
      %p358 = scmp.le.s32.totalorder 1, %s17
      %p359 = scmp.lt.s32.totalorder %s17, 3
      %p360 = pnand %p358, %p359
      %p361 = pneg %p360
      // Predicated region
      $region49: #{dqn_forward.1} parent=5 // pred_check
        _
      $region50: #{dqn_forward.1} parent=5 // pred_check_branch
        %363 = sbr.rel (%p360) target = $region52
      $region51: #{dqn_forward.1} parent=5 // pred_region
        %s364 = ssub.s32 %s17, 1
        // Predicated region
        $region53: #{dqn_forward.1} parent=51 // pred_check
          %p365 = pneg %p59
        $region54: #{dqn_forward.1} parent=51 // pred_check_branch
          %367 = sbr.rel (%p365) target = $region56
        $region55: #{dqn_forward.1} parent=51 // pred_region
          %368 = dma.done [#allocation3], 2688
        $region56: #{dqn_forward.1} parent=51 // pred_fallthru
          _
        // Predicated region
        $region57: #{dqn_forward.1} parent=51 // pred_check
          %p369 = pneg %p80
        $region58: #{dqn_forward.1} parent=51 // pred_check_branch
          %371 = sbr.rel (%p369) target = $region60
        $region59: #{dqn_forward.1} parent=51 // pred_region
          %372 = dma.done [#allocation5], 16
        $region60: #{dqn_forward.1} parent=51 // pred_fallthru
          _
        // Predicated region
        $region61: #{dqn_forward.1} parent=51 // pred_check
          %p373 = pneg %p101
        $region62: #{dqn_forward.1} parent=51 // pred_check_branch
          %375 = sbr.rel (%p373) target = $region64
        $region63: #{dqn_forward.1} parent=51 // pred_region
          %376 = dma.done [#allocation5], 16384
        $region64: #{dqn_forward.1} parent=51 // pred_fallthru
          _
        // Predicated region
        $region65: #{dqn_forward.1} parent=51 // pred_check
          %p377 = pneg %p122
        $region66: #{dqn_forward.1} parent=51 // pred_check_branch
          %379 = sbr.rel (%p377) target = $region68
        $region67: #{dqn_forward.1} parent=51 // pred_region
          %380 = dma.done [#allocation8], 64
        $region68: #{dqn_forward.1} parent=51 // pred_fallthru
          _
        %s381 = sand.u32 %s22, 1
        %s382 = scalar_lea.sflag [#allocation3], %s381
        %s383 = sand.u32 %s135, 1
        %s384 = smul.addr %s383, 3888
        %s385 = scalar_lea.vmem [#allocation9], %s384
        // Predicated region
        $region69: #{dqn_forward.1} parent=51 // pred_check
          %p386 = pneg %p148
        $region70: #{dqn_forward.1} parent=51 // pred_check_branch
          %388 = sbr.rel (%p386) target = $region72
        $region71: #{dqn_forward.1} parent=51 // pred_region
          %389 = dma.done %s382, 62208
        $region72: #{dqn_forward.1} parent=51 // pred_fallthru
          _
        %s390 = sand.u32 %s22, 1
        %s391 = scalar_lea.sflag [#allocation3], %s390
        %s392 = sand.u32 %s161, 1
        %s393 = smul.addr %s392, 4
        %s394 = scalar_lea.vmem [#allocation10], %s393
        // Predicated region
        $region73: #{dqn_forward.1} parent=51 // pred_check
          %p395 = pneg %p174
        $region74: #{dqn_forward.1} parent=51 // pred_check_branch
          %397 = sbr.rel (%p395) target = $region76
        $region75: #{dqn_forward.1} parent=51 // pred_region
          %398 = dma.done %s391, 64
        $region76: #{dqn_forward.1} parent=51 // pred_fallthru
          _
        %s399 = sand.u32 %s22, 1
        %s400 = scalar_lea.sflag [#allocation3], %s399
        %s401 = sand.u32 %s187, 1
        %s402 = smul.addr %s401, 512
        %s403 = scalar_lea.vmem [#allocation11], %s402
        // Predicated region
        $region77: #{dqn_forward.1} parent=51 // pred_check
          %p404 = pneg %p200
        $region78: #{dqn_forward.1} parent=51 // pred_check_branch
          %406 = sbr.rel (%p404) target = $region80
        $region79: #{dqn_forward.1} parent=51 // pred_region
          %407 = dma.done %s400, 8192
        $region80: #{dqn_forward.1} parent=51 // pred_fallthru
          _
        %p408 = pneg %p38
        %p409 = pneg %p35
        %p410 = pneg %p59
        %p411 = pneg %p56
        %p412 = pneg %p80
        %p413 = pneg %p77
        %p414 = pneg %p101
        %p415 = pneg %p98
        %p416 = pneg %p122
        %p417 = pneg %p119
        %s418 = sand.u32 %s22, 1
        %s419 = scalar_lea.sflag [#allocation3], %s418
        %s420 = sand.u32 %s135, 1
        %s421 = smul.addr %s420, 3888
        %s422 = scalar_lea.vmem [#allocation9], %s421
        %p423 = pneg %p148
        %p424 = pneg %p145
        %s425 = sand.u32 %s22, 1
        %s426 = scalar_lea.sflag [#allocation3], %s425
        %s427 = sand.u32 %s161, 1
        %s428 = smul.addr %s427, 4
        %s429 = scalar_lea.vmem [#allocation10], %s428
        %p430 = pneg %p174
        %p431 = pneg %p171
        %s432 = sand.u32 %s22, 1
        %s433 = scalar_lea.sflag [#allocation3], %s432
        %s434 = sand.u32 %s187, 1
        %s435 = smul.addr %s434, 512
        %s436 = scalar_lea.vmem [#allocation11], %s435
        %p437 = pneg %p200
        %p438 = pneg %p197
        %p439 = pneg %p226
        %p440 = pneg %p223
        %p441 = scmp.lt.s32.totalorder %s22, 1
        %s442 = scalar_select %p441, %s22, 1
        %s443 = smul.addr %s442, 2
        %s444 = scalar_lea.vmem %s8, %s443
        %s445 = smul.u32 4, %s22
        %s446 = smul.u32 64, %s22
        %p447 = scmp.lt.s32.totalorder %s22, 1
        %s448 = scalar_select %p447, %s22, 1
        %s449 = smul.addr %s448, 2
        %s450 = scalar_lea.vmem %s8, %s449
        %v452 = vld [vmem:[%s0] sm:$0xff]
        %v453 = vld [vmem:[%s0 + $0x8] sm:$0xff]
        %v454 = vld [vmem:[%s0 + $0x10] sm:$0xff]
        %v455 = vld [vmem:[%s0 + $0x18] sm:$0xff]
        %v456 = vld [vmem:[%s0 + $0x20] sm:$0xff]
        %v457 = vld [vmem:[%s0 + $0x28] sm:$0xff]
        %v458 = vld [vmem:[%s0 + $0x30] sm:$0xff]
        %v459 = vld [vmem:[%s0 + $0x38] sm:$0xff]
        %v460 = vld [vmem:[%s0 + $0x40] sm:$0xff]
        %v461 = vpack.c.bf16 %v455, %v452
        %v462 = vpack.c.bf16 %v456, %v453
        %v463 = vpack.c.bf16 %v457, %v454
        %v464 = vpack.c.bf16 %v458, %v458
        %v465 = vpack.c.bf16 %v459, %v459
        %v466 = vpack.c.bf16 %v460, %v460
        %v467 = vld [vmem:[#allocation2] sm:$0xf]
        %v468 = vld [vmem:[#allocation2 + $0x4] sm:$0xf]
        %v469 = vld [vmem:[#allocation2 + $0x8] sm:$0xf]
        %v470 = vld [vmem:[#allocation2 + $0xc] sm:$0xf]
        %v471 = vld [vmem:[#allocation2 + $0x10] sm:$0xf]
        %v472 = vld [vmem:[#allocation2 + $0x14] sm:$0xf]
        %v473 = vld [vmem:[#allocation2 + $0x18] sm:$0xf]
        %v474 = vld [vmem:[#allocation2 + $0x1c] sm:$0xf]
        %v475 = vld [vmem:[#allocation2 + $0x20] sm:$0xf]
        %v476 = vld [vmem:[#allocation2 + $0x24] sm:$0xf]
        %v477 = vld [vmem:[#allocation2 + $0x28] sm:$0xf]
        %v478 = vld [vmem:[#allocation2 + $0x2c] sm:$0xf]
        %v479 = vld [vmem:[#allocation2 + $0x30] sm:$0xf]
        %v480 = vld [vmem:[#allocation2 + $0x34] sm:$0xf]
        %v481 = vld [vmem:[#allocation2 + $0x38] sm:$0xf]
        %v482 = vld [vmem:[#allocation2 + $0x3c] sm:$0xf]
        %v483 = vld [vmem:[#allocation2 + $0x40] sm:$0xf]
        %v484 = vld [vmem:[#allocation2 + $0x44] sm:$0xf]
        %v485 = vld [vmem:[#allocation2 + $0x48] sm:$0xf]
        %v486 = vld [vmem:[#allocation2 + $0x4c] sm:$0xf]
        %v487 = vld [vmem:[#allocation2 + $0x50] sm:$0xf]
        %v488 = vld [vmem:[#allocation2 + $0x54] sm:$0xf]
        %v489 = vld [vmem:[#allocation2 + $0x58] sm:$0xf]
        %v490 = vld [vmem:[#allocation2 + $0x5c] sm:$0xf]
        %v491 = vld [vmem:[#allocation2 + $0x60] sm:$0xf]
        %v492 = vld [vmem:[#allocation2 + $0x64] sm:$0xf]
        %v493 = vld [vmem:[#allocation2 + $0x68] sm:$0xf]
        %v494 = vld [vmem:[#allocation2 + $0x6c] sm:$0xf]
        %v495 = vld [vmem:[#allocation2 + $0x70] sm:$0xf]
        %v496 = vld [vmem:[#allocation2 + $0x74] sm:$0xf]
        %v497 = vld [vmem:[#allocation2 + $0x78] sm:$0xf]
        %v498 = vld [vmem:[#allocation2 + $0x7c] sm:$0xf]
        %v499 = vld [vmem:[#allocation2 + $0x80] sm:$0xf]
        %v500 = vld [vmem:[#allocation2 + $0x84] sm:$0xf]
        %v501 = vld [vmem:[#allocation2 + $0x88] sm:$0xf]
        %v502 = vld [vmem:[#allocation2 + $0x8c] sm:$0xf]
        %v503 = vld [vmem:[#allocation2 + $0x90] sm:$0xf]
        %v504 = vld [vmem:[#allocation2 + $0x94] sm:$0xf]
        %v505 = vld [vmem:[#allocation2 + $0x98] sm:$0xf]
        %v506 = vld [vmem:[#allocation2 + $0x9c] sm:$0xf]
        %v507 = vld [vmem:[#allocation2 + $0xa0] sm:$0xf]
        %v508 = vld [vmem:[#allocation2 + $0xa4] sm:$0xf]
        %v509 = vld [vmem:[#allocation4] sm:$0x1]
        %v511 = vlaneseq
        %v512 = vshrl.u32 %v511, 7
        %v513 = vsub.s32 0, %v512
        %v514 = vrot.slane %v509, %v513
        %v558 = vunpack.c.l.b16 %v467
        %v559 = vunpack.c.l.b16 %v468
        %v560 = vunpack.c.l.b16 %v469
        %v561 = vunpack.c.l.b16 %v470
        %v562 = vunpack.c.l.b16 %v471
        %v563 = vunpack.c.l.b16 %v472
        %v564 = vunpack.c.l.b16 %v473
        %v565 = vunpack.c.l.b16 %v474
        %v566 = vunpack.c.l.b16 %v475
        %v567 = vunpack.c.l.b16 %v476
        %v568 = vunpack.c.l.b16 %v477
        %v569 = vunpack.c.l.b16 %v478
        %v570 = vunpack.c.l.b16 %v479
        %v571 = vunpack.c.l.b16 %v480
        %v572 = vunpack.c.l.b16 %v481
        %v573 = vunpack.c.l.b16 %v482
        %v574 = vunpack.c.l.b16 %v483
        %v575 = vunpack.c.l.b16 %v484
        %v576 = vunpack.c.l.b16 %v485
        %v577 = vunpack.c.l.b16 %v486
        %v578 = vunpack.c.l.b16 %v487
        %v579 = vunpack.c.l.b16 %v488
        %v580 = vunpack.c.l.b16 %v489
        %v581 = vunpack.c.l.b16 %v490
        %v582 = vunpack.c.l.b16 %v491
        %v583 = vunpack.c.l.b16 %v492
        %v584 = vunpack.c.l.b16 %v493
        %v585 = vunpack.c.l.b16 %v494
        %v586 = vunpack.c.l.b16 %v495
        %v587 = vunpack.c.l.b16 %v496
        %v588 = vunpack.c.l.b16 %v497
        %v589 = vunpack.c.l.b16 %v498
        %v590 = vunpack.c.l.b16 %v499
        %v591 = vunpack.c.l.b16 %v500
        %v592 = vunpack.c.l.b16 %v501
        %v593 = vunpack.c.l.b16 %v502
        %v594 = vunpack.c.l.b16 %v503
        %v595 = vunpack.c.l.b16 %v504
        %v596 = vunpack.c.l.b16 %v505
        %v597 = vunpack.c.l.b16 %v506
        %v598 = vunpack.c.l.b16 %v507
        %v599 = vunpack.c.l.b16 %v508
        %v600 = vpack.c.b16 %v559, %v558
        %v601 = vpack.c.b16 %v561, %v560
        %v602 = vpack.c.b16 %v563, %v562
        %v603 = vpack.c.b16 %v565, %v564
        %v604 = vpack.c.b16 %v567, %v566
        %v605 = vpack.c.b16 %v569, %v568
        %v606 = vpack.c.b16 %v571, %v570
        %v607 = vpack.c.b16 %v573, %v572
        %v608 = vpack.c.b16 %v575, %v574
        %v609 = vpack.c.b16 %v577, %v576
        %v610 = vpack.c.b16 %v579, %v578
        %v611 = vpack.c.b16 %v581, %v580
        %v612 = vpack.c.b16 %v583, %v582
        %v613 = vpack.c.b16 %v585, %v584
        %v614 = vpack.c.b16 %v587, %v586
        %v615 = vpack.c.b16 %v589, %v588
        %v616 = vpack.c.b16 %v591, %v590
        %v617 = vpack.c.b16 %v593, %v592
        %v618 = vpack.c.b16 %v595, %v594
        %v619 = vpack.c.b16 %v597, %v596
        %v620 = vpack.c.b16 %v599, %v598
        %vm642 = vcmask 654336
        %v644 = vsel %vm642, %v463, 0
        %v647 = vsel %vm642, %v466, 0
        %649 = vmatprep.subr.bf16.mxu0 0
        %650 = vmatpush1.bf16.msra.mxu0 %v600
        %651 = vmatprep.subr.bf16.mxu0 0
        %652 = vmatpush1.bf16.msra.mxu0 %v601
        %653 = vmatprep.subr.bf16.mxu0 0
        %654 = vmatpush1.bf16.msra.mxu0 %v602
        %655 = vmatprep.subr.bf16.mxu0 0
        %656 = vmatpush1.bf16.msra.mxu0 %v603
        %657 = vmatprep.subr.bf16.mxu0 0
        %658 = vmatpush1.bf16.msra.mxu0 %v604
        %659 = vmatprep.subr.bf16.mxu0 0
        %660 = vmatpush1.bf16.msra.mxu0 %v605
        %661 = vmatprep.subr.bf16.mxu0 0
        %662 = vmatpush1.bf16.msra.mxu0 %v606
        %663 = vmatprep.subr.bf16.mxu0 0
        %664 = vmatpush1.bf16.msra.mxu0 %v607
        %665 = vmatprep.subr.bf16.mxu0 0
        %666 = vmatpush1.bf16.msra.mxu0 %v608
        %667 = vmatprep.subr.bf16.mxu0 0
        %668 = vmatpush1.bf16.msra.mxu0 %v609
        %669 = vmatprep.subr.bf16.mxu0 0
        %670 = vmatpush1.bf16.msra.mxu0 %v610
        %671 = vmatprep.subr.bf16.mxu0 0
        %672 = vmatpush1.bf16.msra.mxu0 %v611
        %673 = vmatprep.subr.bf16.mxu0 0
        %674 = vmatpush1.bf16.msra.mxu0 %v612
        %675 = vmatprep.subr.bf16.mxu0 0
        %676 = vmatpush1.bf16.msra.mxu0 %v613
        %677 = vmatprep.subr.bf16.mxu0 0
        %678 = vmatpush1.bf16.msra.mxu0 %v614
        %679 = vmatprep.subr.bf16.mxu0 0
        %680 = vmatpush1.bf16.msra.mxu0 %v615
        %681 = vmatprep.mubr.bf16.mxu0 %v462
        %682 = vmatmul.mubr.bf16.gmra.mrb[0].mxu0 %v461
        %v683 = vpop.f32.mrb[0].mxu0
        %v684 = vadd.f32 %v514, %v683
        %v685 = vpop.f32.mrb[0].mxu0
        %v686 = vpop.f32.mrb[0].mxu0
        %v687 = vadd.f32 %v514, %v686
        %v688 = vpop.f32.mrb[0].mxu0
        %689 = vmatprep.mubr.bf16.mxu0 %v465
        %690 = vmatmul.mubr.bf16.gmra.mrb[0].mxu0 %v464
        %v691 = vpop.f32.mrb[0].mxu0
        %v692 = vadd.f32 %v514, %v691
        %v693 = vpop.f32.mrb[0].mxu0
        %v694 = vpop.f32.mrb[0].mxu0
        %v695 = vpop.f32.mrb[0].mxu0
        %696 = vdwg.mxu0
        %697 = vmatprep.subr.bf16.mxu0 0
        %698 = vmatpush1.bf16.msra.mxu0 %v616
        %699 = vmatprep.subr.bf16.mxu0 0
        %700 = vmatpush1.bf16.msra.mxu0 %v617
        %701 = vmatprep.subr.bf16.mxu0 0
        %702 = vmatpush1.bf16.msra.mxu0 %v618
        %703 = vmatprep.subr.bf16.mxu0 0
        %704 = vmatpush1.bf16.msra.mxu0 %v619
        %705 = vmatprep.subr.bf16.mxu0 0
        %706 = vmatpush1.bf16.msra.mxu0 %v620
        %707 = vmatprep.subr.bf16.mxu0 0
        %708 = vmatpush1.bf16.msra.mxu0 0
        %709 = vmatprep.subr.bf16.mxu0 0
        %710 = vmatpush1.bf16.msra.mxu0 0
        %711 = vmatprep.subr.bf16.mxu0 0
        %712 = vmatpush1.bf16.msra.mxu0 0
        %713 = vmatprep.subr.bf16.mxu0 0
        %714 = vmatpush1.bf16.msra.mxu0 0
        %715 = vmatprep.subr.bf16.mxu0 0
        %716 = vmatpush1.bf16.msra.mxu0 0
        %717 = vmatprep.subr.bf16.mxu0 0
        %718 = vmatpush1.bf16.msra.mxu0 0
        %719 = vmatprep.subr.bf16.mxu0 0
        %720 = vmatpush1.bf16.msra.mxu0 0
        %721 = vmatprep.subr.bf16.mxu0 0
        %722 = vmatpush1.bf16.msra.mxu0 0
        %723 = vmatprep.subr.bf16.mxu0 0
        %724 = vmatpush1.bf16.msra.mxu0 0
        %725 = vmatprep.subr.bf16.mxu0 0
        %726 = vmatpush1.bf16.msra.mxu0 0
        %727 = vmatprep.subr.bf16.mxu0 0
        %728 = vmatpush1.bf16.msra.mxu0 0
        %729 = vmatprep.mubr.bf16.mxu0 0
        %730 = vmatmul.mubr.bf16.gmra.mrb[0].mxu0 %v644
        %v731 = vpop.f32.mrb[0].mxu0
        %v732 = vadd.f32 %v684, %v731
        %v733 = vpop.f32.mrb[0].mxu0
        %v734 = vpop.f32.mrb[0].mxu0
        %v735 = vadd.f32 %v687, %v734
        %v736 = vpop.f32.mrb[0].mxu0
        %737 = vmatprep.mubr.bf16.mxu0 0
        %738 = vmatmul.mubr.bf16.gmra.mrb[0].mxu0 %v647
        %v739 = vpop.f32.mrb[0].mxu0
        %v740 = vadd.f32 %v692, %v739
        %v741 = vpop.f32.mrb[0].mxu0
        %v742 = vpop.f32.mrb[0].mxu0
        %v743 = vpop.f32.mrb[0].mxu0
        %744 = vdwg.mxu0
        %v745 = vmax.f32 %v732, 0.0
        %v746 = vmax.f32 %v735, 0.0
        %v747 = vmax.f32 %v740, 0.0
        %v748 = vpack.c.bf16 %v746, %v745
        %v749 = vpack.c.bf16 %v747, %v747
        %v750 = vld [vmem:[#allocation6] sm:$0xff]
        %v751 = vld [vmem:[#allocation6 + $0x8] sm:$0xff]
        %v752 = vld [vmem:[#allocation6 + $0x10] sm:$0xff]
        %v753 = vld [vmem:[#allocation6 + $0x18] sm:$0xff]
        %v754 = vld [vmem:[#allocation6 + $0x20] sm:$0xff]
        %v755 = vld [vmem:[#allocation6 + $0x28] sm:$0xff]
        %v756 = vld [vmem:[#allocation6 + $0x30] sm:$0xff]
        %v757 = vld [vmem:[#allocation6 + $0x38] sm:$0xff]
        %v758 = vld [vmem:[#allocation6 + $0x40] sm:$0xff]
        %v759 = vld [vmem:[#allocation6 + $0x48] sm:$0xff]
        %v760 = vld [vmem:[#allocation6 + $0x50] sm:$0xff]
        %v761 = vld [vmem:[#allocation6 + $0x58] sm:$0xff]
        %v762 = vld [vmem:[#allocation6 + $0x60] sm:$0xff]
        %v763 = vld [vmem:[#allocation6 + $0x68] sm:$0xff]
        %v764 = vld [vmem:[#allocation6 + $0x70] sm:$0xff]
        %v765 = vld [vmem:[#allocation6 + $0x78] sm:$0xff]
        %v766 = vld [vmem:[#allocation6 + $0x80] sm:$0xff]
        %v767 = vld [vmem:[#allocation6 + $0x88] sm:$0xff]
        %v768 = vld [vmem:[#allocation6 + $0x90] sm:$0xff]
        %v769 = vld [vmem:[#allocation6 + $0x98] sm:$0xff]
        %v770 = vld [vmem:[#allocation6 + $0xa0] sm:$0xff]
        %v771 = vld [vmem:[#allocation6 + $0xa8] sm:$0xff]
        %v772 = vld [vmem:[#allocation6 + $0xb0] sm:$0xff]
        %v773 = vld [vmem:[#allocation6 + $0xb8] sm:$0xff]
        %v774 = vld [vmem:[#allocation6 + $0xc0] sm:$0xff]
        %v775 = vld [vmem:[#allocation6 + $0xc8] sm:$0xff]
        %v776 = vld [vmem:[#allocation6 + $0xd0] sm:$0xff]
        %v777 = vld [vmem:[#allocation6 + $0xd8] sm:$0xff]
        %v778 = vld [vmem:[#allocation6 + $0xe0] sm:$0xff]
        %v779 = vld [vmem:[#allocation6 + $0xe8] sm:$0xff]
        %v780 = vld [vmem:[#allocation6 + $0xf0] sm:$0xff]
        %v781 = vld [vmem:[#allocation6 + $0xf8] sm:$0xff]
        %s782 = scalar_lea.vmem [#allocation6], 256
        %v783 = vld [vmem:[%s782] sm:$0xff]
        %v784 = vld [vmem:[%s782 + $0x8] sm:$0xff]
        %v785 = vld [vmem:[%s782 + $0x10] sm:$0xff]
        %v786 = vld [vmem:[%s782 + $0x18] sm:$0xff]
        %v787 = vld [vmem:[%s782 + $0x20] sm:$0xff]
        %v788 = vld [vmem:[%s782 + $0x28] sm:$0xff]
        %v789 = vld [vmem:[%s782 + $0x30] sm:$0xff]
        %v790 = vld [vmem:[%s782 + $0x38] sm:$0xff]
        %v791 = vld [vmem:[%s782 + $0x40] sm:$0xff]
        %v792 = vld [vmem:[%s782 + $0x48] sm:$0xff]
        %v793 = vld [vmem:[%s782 + $0x50] sm:$0xff]
        %v794 = vld [vmem:[%s782 + $0x58] sm:$0xff]
        %v795 = vld [vmem:[%s782 + $0x60] sm:$0xff]
        %v796 = vld [vmem:[%s782 + $0x68] sm:$0xff]
        %v797 = vld [vmem:[%s782 + $0x70] sm:$0xff]
        %v798 = vld [vmem:[%s782 + $0x78] sm:$0xff]
        %v799 = vld [vmem:[%s782 + $0x80] sm:$0xff]
        %v800 = vld [vmem:[%s782 + $0x88] sm:$0xff]
        %v801 = vld [vmem:[%s782 + $0x90] sm:$0xff]
        %v802 = vld [vmem:[%s782 + $0x98] sm:$0xff]
        %v803 = vld [vmem:[%s782 + $0xa0] sm:$0xff]
        %v804 = vld [vmem:[%s782 + $0xa8] sm:$0xff]
        %v805 = vld [vmem:[%s782 + $0xb0] sm:$0xff]
        %v806 = vld [vmem:[%s782 + $0xb8] sm:$0xff]
        %v807 = vld [vmem:[%s782 + $0xc0] sm:$0xff]
        %v808 = vld [vmem:[%s782 + $0xc8] sm:$0xff]
        %v809 = vld [vmem:[%s782 + $0xd0] sm:$0xff]
        %v810 = vld [vmem:[%s782 + $0xd8] sm:$0xff]
        %v811 = vld [vmem:[%s782 + $0xe0] sm:$0xff]
        %v812 = vld [vmem:[%s782 + $0xe8] sm:$0xff]
        %v813 = vld [vmem:[%s782 + $0xf0] sm:$0xff]
        %v814 = vld [vmem:[%s782 + $0xf8] sm:$0xff]
        %vm815 = vsmask.f32 7424
        %v817 = vshrl.u32 %v748, 16
        %v819 = vshll.u32 %v748, 16
        %v821 = vrot.slane %v819, 1
        %v822 = vor.u32 %v817, %v821
        %v824 = vshll.u32 %v749, 16
        %v826 = vrot.slane %v824, 1
        %v827 = vsel %vm815, %v822, %v826
        %v828 = vshrl.u32 %v749, 16
        %v830 = vor.u32 %v828, %v826
        %v865 = vunpack.c.l.b16 %v783
        %v866 = vunpack.c.h.b16 %v783
        %v867 = vunpack.c.l.b16 %v784
        %v868 = vunpack.c.h.b16 %v784
        %v869 = vunpack.c.l.b16 %v785
        %v870 = vunpack.c.h.b16 %v785
        %v871 = vunpack.c.l.b16 %v786
        %v872 = vunpack.c.h.b16 %v786
        %v873 = vunpack.c.l.b16 %v787
        %v874 = vunpack.c.h.b16 %v787
        %v875 = vunpack.c.l.b16 %v788
        %v876 = vunpack.c.h.b16 %v788
        %v877 = vunpack.c.l.b16 %v789
        %v878 = vunpack.c.h.b16 %v789
        %v879 = vunpack.c.l.b16 %v790
        %v880 = vunpack.c.h.b16 %v790
        %v881 = vunpack.c.l.b16 %v791
        %v882 = vunpack.c.h.b16 %v791
        %v883 = vunpack.c.l.b16 %v792
        %v884 = vunpack.c.h.b16 %v792
        %v885 = vunpack.c.l.b16 %v793
        %v886 = vunpack.c.h.b16 %v793
        %v887 = vunpack.c.l.b16 %v794
        %v888 = vunpack.c.h.b16 %v794
        %v889 = vunpack.c.l.b16 %v795
        %v890 = vunpack.c.h.b16 %v795
        %v891 = vunpack.c.l.b16 %v796
        %v892 = vunpack.c.h.b16 %v796
        %v893 = vunpack.c.l.b16 %v797
        %v894 = vunpack.c.h.b16 %v797
        %v895 = vunpack.c.l.b16 %v798
        %v896 = vunpack.c.h.b16 %v798
        %v897 = vunpack.c.l.b16 %v799
        %v898 = vunpack.c.h.b16 %v799
        %v899 = vunpack.c.l.b16 %v800
        %v900 = vunpack.c.h.b16 %v800
        %v901 = vunpack.c.l.b16 %v801
        %v902 = vunpack.c.h.b16 %v801
        %v903 = vunpack.c.l.b16 %v802
        %v904 = vunpack.c.h.b16 %v802
        %v905 = vunpack.c.l.b16 %v803
        %v906 = vunpack.c.h.b16 %v803
        %v907 = vunpack.c.l.b16 %v804
        %v908 = vunpack.c.h.b16 %v804
        %v909 = vunpack.c.l.b16 %v805
        %v910 = vunpack.c.h.b16 %v805
        %v911 = vunpack.c.l.b16 %v806
        %v912 = vunpack.c.h.b16 %v806
        %v913 = vunpack.c.l.b16 %v807
        %v914 = vunpack.c.h.b16 %v807
        %v915 = vunpack.c.l.b16 %v808
        %v916 = vunpack.c.h.b16 %v808
        %v917 = vunpack.c.l.b16 %v809
        %v918 = vunpack.c.h.b16 %v809
        %v919 = vunpack.c.l.b16 %v810
        %v920 = vunpack.c.h.b16 %v810
        %v921 = vunpack.c.l.b16 %v811
        %v922 = vunpack.c.h.b16 %v811
        %v923 = vunpack.c.l.b16 %v812
        %v924 = vunpack.c.h.b16 %v812
        %v925 = vunpack.c.l.b16 %v813
        %v926 = vunpack.c.h.b16 %v813
        %v927 = vunpack.c.l.b16 %v814
        %v928 = vunpack.c.h.b16 %v814
        %v929 = vpack.c.b16 %v869, %v865
        %v930 = vpack.c.b16 %v870, %v866
        %v931 = vpack.c.b16 %v871, %v867
        %v932 = vpack.c.b16 %v872, %v868
        %v933 = vpack.c.b16 %v877, %v873
        %v934 = vpack.c.b16 %v878, %v874
        %v935 = vpack.c.b16 %v879, %v875
        %v936 = vpack.c.b16 %v880, %v876
        %v937 = vpack.c.b16 %v885, %v881
        %v938 = vpack.c.b16 %v886, %v882
        %v939 = vpack.c.b16 %v887, %v883
        %v940 = vpack.c.b16 %v888, %v884
        %v941 = vpack.c.b16 %v893, %v889
        %v942 = vpack.c.b16 %v894, %v890
        %v943 = vpack.c.b16 %v895, %v891
        %v944 = vpack.c.b16 %v896, %v892
        %v945 = vpack.c.b16 %v901, %v897
        %v946 = vpack.c.b16 %v902, %v898
        %v947 = vpack.c.b16 %v903, %v899
        %v948 = vpack.c.b16 %v904, %v900
        %v949 = vpack.c.b16 %v909, %v905
        %v950 = vpack.c.b16 %v910, %v906
        %v951 = vpack.c.b16 %v911, %v907
        %v952 = vpack.c.b16 %v912, %v908
        %v953 = vpack.c.b16 %v917, %v913
        %v954 = vpack.c.b16 %v918, %v914
        %v955 = vpack.c.b16 %v919, %v915
        %v956 = vpack.c.b16 %v920, %v916
        %v957 = vpack.c.b16 %v925, %v921
        %v958 = vpack.c.b16 %v926, %v922
        %v959 = vpack.c.b16 %v927, %v923
        %v960 = vpack.c.b16 %v928, %v924
        %993 = vmatprep.subr.bf16.mxu0 %v930
        %994 = vmatpush1.bf16.msra.mxu0 %v929
        %995 = vmatprep.subr.bf16.mxu0 %v934
        %996 = vmatpush1.bf16.msra.mxu0 %v933
        %997 = vmatprep.subr.bf16.mxu0 %v938
        %998 = vmatpush1.bf16.msra.mxu0 %v937
        %999 = vmatprep.subr.bf16.mxu0 %v942
        %1000 = vmatpush1.bf16.msra.mxu0 %v941
        %1001 = vmatprep.subr.bf16.mxu0 %v946
        %1002 = vmatpush1.bf16.msra.mxu0 %v945
        %1003 = vmatprep.subr.bf16.mxu0 %v950
        %1004 = vmatpush1.bf16.msra.mxu0 %v949
        %1005 = vmatprep.subr.bf16.mxu0 %v954
        %1006 = vmatpush1.bf16.msra.mxu0 %v953
        %1007 = vmatprep.subr.bf16.mxu0 %v958
        %1008 = vmatpush1.bf16.msra.mxu0 %v957
        %1009 = vmatprep.subr.bf16.mxu0 0
        %1010 = vmatpush1.bf16.msra.mxu0 0
        %1011 = vmatprep.subr.bf16.mxu0 0
        %1012 = vmatpush1.bf16.msra.mxu0 0
        %1013 = vmatprep.subr.bf16.mxu0 0
        %1014 = vmatpush1.bf16.msra.mxu0 0
        %1015 = vmatprep.subr.bf16.mxu0 0
        %1016 = vmatpush1.bf16.msra.mxu0 0
        %1017 = vmatprep.subr.bf16.mxu0 0
        %1018 = vmatpush1.bf16.msra.mxu0 0
        %1019 = vmatprep.subr.bf16.mxu0 0
        %1020 = vmatpush1.bf16.msra.mxu0 0
        %1021 = vmatprep.subr.bf16.mxu0 0
        %1022 = vmatpush1.bf16.msra.mxu0 0
        %1023 = vmatprep.subr.bf16.mxu0 0
        %1024 = vmatpush1.bf16.msra.mxu0 0
        %1025 = vmatprep.mubr.bf16.mxu0 0
        %1026 = vmatmul.mubr.bf16.gmra.mrb[0].mxu0 %v827
        %v1027 = vpop.f32.mrb[0].mxu0
        %v1028 = vadd.f32 0.0, %v1027
        %v1029 = vpop.f32.mrb[0].mxu0
        %v1030 = vadd.f32 0.0, %v1029
        %v1031 = vpop.f32.mrb[0].mxu0
        %v1032 = vadd.f32 0.0, %v1031
        %v1033 = vpop.f32.mrb[0].mxu0
        %v1034 = vadd.f32 0.0, %v1033
        %1035 = vmatprep.mubr.bf16.mxu0 0
        %1036 = vmatmul.mubr.bf16.gmra.mrb[0].mxu0 %v830
        %v1037 = vpop.f32.mrb[0].mxu0
        %v1038 = vadd.f32 0.0, %v1037
        %v1039 = vpop.f32.mrb[0].mxu0
        %v1040 = vadd.f32 0.0, %v1039
        %v1041 = vpop.f32.mrb[0].mxu0
        %v1042 = vpop.f32.mrb[0].mxu0
        %1043 = vdwg.mxu0
        %1044 = vmatprep.subr.bf16.mxu0 %v932
        %1045 = vmatpush1.bf16.msra.mxu0 %v931
        %1046 = vmatprep.subr.bf16.mxu0 %v936
        %1047 = vmatpush1.bf16.msra.mxu0 %v935
        %1048 = vmatprep.subr.bf16.mxu0 %v940
        %1049 = vmatpush1.bf16.msra.mxu0 %v939
        %1050 = vmatprep.subr.bf16.mxu0 %v944
        %1051 = vmatpush1.bf16.msra.mxu0 %v943
        %1052 = vmatprep.subr.bf16.mxu0 %v948
        %1053 = vmatpush1.bf16.msra.mxu0 %v947
        %1054 = vmatprep.subr.bf16.mxu0 %v952
        %1055 = vmatpush1.bf16.msra.mxu0 %v951
        %1056 = vmatprep.subr.bf16.mxu0 %v956
        %1057 = vmatpush1.bf16.msra.mxu0 %v955
        %1058 = vmatprep.subr.bf16.mxu0 %v960
        %1059 = vmatpush1.bf16.msra.mxu0 %v959
        %1060 = vmatprep.subr.bf16.mxu0 0
        %1061 = vmatpush1.bf16.msra.mxu0 0
        %1062 = vmatprep.subr.bf16.mxu0 0
        %1063 = vmatpush1.bf16.msra.mxu0 0
        %1064 = vmatprep.subr.bf16.mxu0 0
        %1065 = vmatpush1.bf16.msra.mxu0 0
        %1066 = vmatprep.subr.bf16.mxu0 0
        %1067 = vmatpush1.bf16.msra.mxu0 0
        %1068 = vmatprep.subr.bf16.mxu0 0
        %1069 = vmatpush1.bf16.msra.mxu0 0
        %1070 = vmatprep.subr.bf16.mxu0 0
        %1071 = vmatpush1.bf16.msra.mxu0 0
        %1072 = vmatprep.subr.bf16.mxu0 0
        %1073 = vmatpush1.bf16.msra.mxu0 0
        %1074 = vmatprep.subr.bf16.mxu0 0
        %1075 = vmatpush1.bf16.msra.mxu0 0
        %1076 = vmatprep.mubr.bf16.mxu0 0
        %1077 = vmatmul.mubr.bf16.gmra.mrb[0].mxu0 %v827
        %v1078 = vpop.f32.mrb[0].mxu0
        %v1079 = vadd.f32 0.0, %v1078
        %v1080 = vpop.f32.mrb[0].mxu0
        %v1081 = vadd.f32 0.0, %v1080
        %v1082 = vpop.f32.mrb[0].mxu0
        %v1083 = vadd.f32 0.0, %v1082
        %v1084 = vpop.f32.mrb[0].mxu0
        %v1085 = vadd.f32 0.0, %v1084
        %1086 = vmatprep.mubr.bf16.mxu0 0
        %1087 = vmatmul.mubr.bf16.gmra.mrb[0].mxu0 %v830
        %v1088 = vpop.f32.mrb[0].mxu0
        %v1089 = vadd.f32 0.0, %v1088
        %v1090 = vpop.f32.mrb[0].mxu0
        %v1091 = vadd.f32 0.0, %v1090
        %v1092 = vpop.f32.mrb[0].mxu0
        %v1093 = vpop.f32.mrb[0].mxu0
        %1094 = vdwg.mxu0
        %v1127 = vunpack.c.l.b16 %v750
        %v1128 = vunpack.c.h.b16 %v750
        %v1129 = vunpack.c.l.b16 %v751
        %v1130 = vunpack.c.h.b16 %v751
        %v1131 = vunpack.c.l.b16 %v752
        %v1132 = vunpack.c.h.b16 %v752
        %v1133 = vunpack.c.l.b16 %v753
        %v1134 = vunpack.c.h.b16 %v753
        %v1135 = vunpack.c.l.b16 %v754
        %v1136 = vunpack.c.h.b16 %v754
        %v1137 = vunpack.c.l.b16 %v755
        %v1138 = vunpack.c.h.b16 %v755
        %v1139 = vunpack.c.l.b16 %v756
        %v1140 = vunpack.c.h.b16 %v756
        %v1141 = vunpack.c.l.b16 %v757
        %v1142 = vunpack.c.h.b16 %v757
        %v1143 = vunpack.c.l.b16 %v758
        %v1144 = vunpack.c.h.b16 %v758
        %v1145 = vunpack.c.l.b16 %v759
        %v1146 = vunpack.c.h.b16 %v759
        %v1147 = vunpack.c.l.b16 %v760
        %v1148 = vunpack.c.h.b16 %v760
        %v1149 = vunpack.c.l.b16 %v761
        %v1150 = vunpack.c.h.b16 %v761
        %v1151 = vunpack.c.l.b16 %v762
        %v1152 = vunpack.c.h.b16 %v762
        %v1153 = vunpack.c.l.b16 %v763
        %v1154 = vunpack.c.h.b16 %v763
        %v1155 = vunpack.c.l.b16 %v764
        %v1156 = vunpack.c.h.b16 %v764
        %v1157 = vunpack.c.l.b16 %v765
        %v1158 = vunpack.c.h.b16 %v765
        %v1159 = vunpack.c.l.b16 %v766
        %v1160 = vunpack.c.h.b16 %v766
        %v1161 = vunpack.c.l.b16 %v767
        %v1162 = vunpack.c.h.b16 %v767
        %v1163 = vunpack.c.l.b16 %v768
        %v1164 = vunpack.c.h.b16 %v768
        %v1165 = vunpack.c.l.b16 %v769
        %v1166 = vunpack.c.h.b16 %v769
        %v1167 = vunpack.c.l.b16 %v770
        %v1168 = vunpack.c.h.b16 %v770
        %v1169 = vunpack.c.l.b16 %v771
        %v1170 = vunpack.c.h.b16 %v771
        %v1171 = vunpack.c.l.b16 %v772
        %v1172 = vunpack.c.h.b16 %v772
        %v1173 = vunpack.c.l.b16 %v773
        %v1174 = vunpack.c.h.b16 %v773
        %v1175 = vunpack.c.l.b16 %v774
        %v1176 = vunpack.c.h.b16 %v774
        %v1177 = vunpack.c.l.b16 %v775
        %v1178 = vunpack.c.h.b16 %v775
        %v1179 = vunpack.c.l.b16 %v776
        %v1180 = vunpack.c.h.b16 %v776
        %v1181 = vunpack.c.l.b16 %v777
        %v1182 = vunpack.c.h.b16 %v777
        %v1183 = vunpack.c.l.b16 %v778
        %v1184 = vunpack.c.h.b16 %v778
        %v1185 = vunpack.c.l.b16 %v779
        %v1186 = vunpack.c.h.b16 %v779
        %v1187 = vunpack.c.l.b16 %v780
        %v1188 = vunpack.c.h.b16 %v780
        %v1189 = vunpack.c.l.b16 %v781
        %v1190 = vunpack.c.h.b16 %v781
        %v1191 = vpack.c.b16 %v1131, %v1127
        %v1192 = vpack.c.b16 %v1132, %v1128
        %v1193 = vpack.c.b16 %v1133, %v1129
        %v1194 = vpack.c.b16 %v1134, %v1130
        %v1195 = vpack.c.b16 %v1139, %v1135
        %v1196 = vpack.c.b16 %v1140, %v1136
        %v1197 = vpack.c.b16 %v1141, %v1137
        %v1198 = vpack.c.b16 %v1142, %v1138
        %v1199 = vpack.c.b16 %v1147, %v1143
        %v1200 = vpack.c.b16 %v1148, %v1144
        %v1201 = vpack.c.b16 %v1149, %v1145
        %v1202 = vpack.c.b16 %v1150, %v1146
        %v1203 = vpack.c.b16 %v1155, %v1151
        %v1204 = vpack.c.b16 %v1156, %v1152
        %v1205 = vpack.c.b16 %v1157, %v1153
        %v1206 = vpack.c.b16 %v1158, %v1154
        %v1207 = vpack.c.b16 %v1163, %v1159
        %v1208 = vpack.c.b16 %v1164, %v1160
        %v1209 = vpack.c.b16 %v1165, %v1161
        %v1210 = vpack.c.b16 %v1166, %v1162
        %v1211 = vpack.c.b16 %v1171, %v1167
        %v1212 = vpack.c.b16 %v1172, %v1168
        %v1213 = vpack.c.b16 %v1173, %v1169
        %v1214 = vpack.c.b16 %v1174, %v1170
        %v1215 = vpack.c.b16 %v1179, %v1175
        %v1216 = vpack.c.b16 %v1180, %v1176
        %v1217 = vpack.c.b16 %v1181, %v1177
        %v1218 = vpack.c.b16 %v1182, %v1178
        %v1219 = vpack.c.b16 %v1187, %v1183
        %v1220 = vpack.c.b16 %v1188, %v1184
        %v1221 = vpack.c.b16 %v1189, %v1185
        %v1222 = vpack.c.b16 %v1190, %v1186
        %1255 = vmatprep.subr.bf16.mxu0 %v1192
        %1256 = vmatpush1.bf16.msra.mxu0 %v1191
        %1257 = vmatprep.subr.bf16.mxu0 %v1196
        %1258 = vmatpush1.bf16.msra.mxu0 %v1195
        %1259 = vmatprep.subr.bf16.mxu0 %v1200
        %1260 = vmatpush1.bf16.msra.mxu0 %v1199
        %1261 = vmatprep.subr.bf16.mxu0 %v1204
        %1262 = vmatpush1.bf16.msra.mxu0 %v1203
        %1263 = vmatprep.subr.bf16.mxu0 %v1208
        %1264 = vmatpush1.bf16.msra.mxu0 %v1207
        %1265 = vmatprep.subr.bf16.mxu0 %v1212
        %1266 = vmatpush1.bf16.msra.mxu0 %v1211
        %1267 = vmatprep.subr.bf16.mxu0 %v1216
        %1268 = vmatpush1.bf16.msra.mxu0 %v1215
        %1269 = vmatprep.subr.bf16.mxu0 %v1220
        %1270 = vmatpush1.bf16.msra.mxu0 %v1219
        %1271 = vmatprep.subr.bf16.mxu0 0
        %1272 = vmatpush1.bf16.msra.mxu0 0
        %1273 = vmatprep.subr.bf16.mxu0 0
        %1274 = vmatpush1.bf16.msra.mxu0 0
        %1275 = vmatprep.subr.bf16.mxu0 0
        %1276 = vmatpush1.bf16.msra.mxu0 0
        %1277 = vmatprep.subr.bf16.mxu0 0
        %1278 = vmatpush1.bf16.msra.mxu0 0
        %1279 = vmatprep.subr.bf16.mxu0 0
        %1280 = vmatpush1.bf16.msra.mxu0 0
        %1281 = vmatprep.subr.bf16.mxu0 0
        %1282 = vmatpush1.bf16.msra.mxu0 0
        %1283 = vmatprep.subr.bf16.mxu0 0
        %1284 = vmatpush1.bf16.msra.mxu0 0
        %1285 = vmatprep.subr.bf16.mxu0 0
        %1286 = vmatpush1.bf16.msra.mxu0 0
        %1287 = vmatprep.mubr.bf16.mxu0 0
        %1288 = vmatmul.mubr.bf16.gmra.mrb[0].mxu0 %v748
        %v1289 = vpop.f32.mrb[0].mxu0
        %v1290 = vadd.f32 %v1028, %v1289
        %v1291 = vpop.f32.mrb[0].mxu0
        %v1292 = vadd.f32 %v1030, %v1291
        %v1293 = vpop.f32.mrb[0].mxu0
        %v1294 = vadd.f32 %v1032, %v1293
        %v1295 = vpop.f32.mrb[0].mxu0
        %v1296 = vadd.f32 %v1034, %v1295
        %1297 = vmatprep.mubr.bf16.mxu0 0
        %1298 = vmatmul.mubr.bf16.gmra.mrb[0].mxu0 %v749
        %v1299 = vpop.f32.mrb[0].mxu0
        %v1300 = vadd.f32 %v1038, %v1299
        %v1301 = vpop.f32.mrb[0].mxu0
        %v1302 = vadd.f32 %v1040, %v1301
        %v1303 = vpop.f32.mrb[0].mxu0
        %v1304 = vpop.f32.mrb[0].mxu0
        %1305 = vdwg.mxu0
        %1306 = vmatprep.subr.bf16.mxu0 %v1194
        %1307 = vmatpush1.bf16.msra.mxu0 %v1193
        %1308 = vmatprep.subr.bf16.mxu0 %v1198
        %1309 = vmatpush1.bf16.msra.mxu0 %v1197
        %1310 = vmatprep.subr.bf16.mxu0 %v1202
        %1311 = vmatpush1.bf16.msra.mxu0 %v1201
        %1312 = vmatprep.subr.bf16.mxu0 %v1206
        %1313 = vmatpush1.bf16.msra.mxu0 %v1205
        %1314 = vmatprep.subr.bf16.mxu0 %v1210
        %1315 = vmatpush1.bf16.msra.mxu0 %v1209
        %1316 = vmatprep.subr.bf16.mxu0 %v1214
        %1317 = vmatpush1.bf16.msra.mxu0 %v1213
        %1318 = vmatprep.subr.bf16.mxu0 %v1218
        %1319 = vmatpush1.bf16.msra.mxu0 %v1217
        %1320 = vmatprep.subr.bf16.mxu0 %v1222
        %1321 = vmatpush1.bf16.msra.mxu0 %v1221
        %1322 = vmatprep.subr.bf16.mxu0 0
        %1323 = vmatpush1.bf16.msra.mxu0 0
        %1324 = vmatprep.subr.bf16.mxu0 0
        %1325 = vmatpush1.bf16.msra.mxu0 0
        %1326 = vmatprep.subr.bf16.mxu0 0
        %1327 = vmatpush1.bf16.msra.mxu0 0
        %1328 = vmatprep.subr.bf16.mxu0 0
        %1329 = vmatpush1.bf16.msra.mxu0 0
        %1330 = vmatprep.subr.bf16.mxu0 0
        %1331 = vmatpush1.bf16.msra.mxu0 0
        %1332 = vmatprep.subr.bf16.mxu0 0
        %1333 = vmatpush1.bf16.msra.mxu0 0
        %1334 = vmatprep.subr.bf16.mxu0 0
        %1335 = vmatpush1.bf16.msra.mxu0 0
        %1336 = vmatprep.subr.bf16.mxu0 0
        %1337 = vmatpush1.bf16.msra.mxu0 0
        %1338 = vmatprep.mubr.bf16.mxu0 0
        %1339 = vmatmul.mubr.bf16.gmra.mrb[0].mxu0 %v748
        %v1340 = vpop.f32.mrb[0].mxu0
        %v1341 = vadd.f32 %v1079, %v1340
        %v1342 = vpop.f32.mrb[0].mxu0
        %v1343 = vadd.f32 %v1081, %v1342
        %v1344 = vpop.f32.mrb[0].mxu0
        %v1345 = vadd.f32 %v1083, %v1344
        %v1346 = vpop.f32.mrb[0].mxu0
        %v1347 = vadd.f32 %v1085, %v1346
        %1348 = vmatprep.mubr.bf16.mxu0 0
        %1349 = vmatmul.mubr.bf16.gmra.mrb[0].mxu0 %v749
        %v1350 = vpop.f32.mrb[0].mxu0
        %v1351 = vadd.f32 %v1089, %v1350
        %v1352 = vpop.f32.mrb[0].mxu0
        %v1353 = vadd.f32 %v1091, %v1352
        %v1354 = vpop.f32.mrb[0].mxu0
        %v1355 = vpop.f32.mrb[0].mxu0
        %1356 = vdwg.mxu0
        %s1357 = scalar_lea.vmem [#allocation6], 512
        %v1358 = vld [vmem:[%s1357] sm:$0xff]
        %v1359 = vld [vmem:[%s1357 + $0x8] sm:$0xff]
        %v1360 = vld [vmem:[%s1357 + $0x10] sm:$0xff]
        %v1361 = vld [vmem:[%s1357 + $0x18] sm:$0xff]
        %v1362 = vld [vmem:[%s1357 + $0x20] sm:$0xff]
        %v1363 = vld [vmem:[%s1357 + $0x28] sm:$0xff]
        %v1364 = vld [vmem:[%s1357 + $0x30] sm:$0xff]
        %v1365 = vld [vmem:[%s1357 + $0x38] sm:$0xff]
        %v1366 = vld [vmem:[%s1357 + $0x40] sm:$0xff]
        %v1367 = vld [vmem:[%s1357 + $0x48] sm:$0xff]
        %v1368 = vld [vmem:[%s1357 + $0x50] sm:$0xff]
        %v1369 = vld [vmem:[%s1357 + $0x58] sm:$0xff]
        %v1370 = vld [vmem:[%s1357 + $0x60] sm:$0xff]
        %v1371 = vld [vmem:[%s1357 + $0x68] sm:$0xff]
        %v1372 = vld [vmem:[%s1357 + $0x70] sm:$0xff]
        %v1373 = vld [vmem:[%s1357 + $0x78] sm:$0xff]
        %v1374 = vld [vmem:[%s1357 + $0x80] sm:$0xff]
        %v1375 = vld [vmem:[%s1357 + $0x88] sm:$0xff]
        %v1376 = vld [vmem:[%s1357 + $0x90] sm:$0xff]
        %v1377 = vld [vmem:[%s1357 + $0x98] sm:$0xff]
        %v1378 = vld [vmem:[%s1357 + $0xa0] sm:$0xff]
        %v1379 = vld [vmem:[%s1357 + $0xa8] sm:$0xff]
        %v1380 = vld [vmem:[%s1357 + $0xb0] sm:$0xff]
        %v1381 = vld [vmem:[%s1357 + $0xb8] sm:$0xff]
        %v1382 = vld [vmem:[%s1357 + $0xc0] sm:$0xff]
        %v1383 = vld [vmem:[%s1357 + $0xc8] sm:$0xff]
        %v1384 = vld [vmem:[%s1357 + $0xd0] sm:$0xff]
        %v1385 = vld [vmem:[%s1357 + $0xd8] sm:$0xff]
        %v1386 = vld [vmem:[%s1357 + $0xe0] sm:$0xff]
        %v1387 = vld [vmem:[%s1357 + $0xe8] sm:$0xff]
        %v1388 = vld [vmem:[%s1357 + $0xf0] sm:$0xff]
        %v1389 = vld [vmem:[%s1357 + $0xf8] sm:$0xff]
        %vm1392 = vcmask 1046528
        %v1393 = vrot.slane %v748, 1
        %v1394 = vrot.slane %v749, 1
        %v1395 = vsel %vm1392, %v1393, %v1394
        %v1430 = vunpack.c.l.b16 %v1358
        %v1431 = vunpack.c.h.b16 %v1358
        %v1432 = vunpack.c.l.b16 %v1359
        %v1433 = vunpack.c.h.b16 %v1359
        %v1434 = vunpack.c.l.b16 %v1360
        %v1435 = vunpack.c.h.b16 %v1360
        %v1436 = vunpack.c.l.b16 %v1361
        %v1437 = vunpack.c.h.b16 %v1361
        %v1438 = vunpack.c.l.b16 %v1362
        %v1439 = vunpack.c.h.b16 %v1362
        %v1440 = vunpack.c.l.b16 %v1363
        %v1441 = vunpack.c.h.b16 %v1363
        %v1442 = vunpack.c.l.b16 %v1364
        %v1443 = vunpack.c.h.b16 %v1364
        %v1444 = vunpack.c.l.b16 %v1365
        %v1445 = vunpack.c.h.b16 %v1365
        %v1446 = vunpack.c.l.b16 %v1366
        %v1447 = vunpack.c.h.b16 %v1366
        %v1448 = vunpack.c.l.b16 %v1367
        %v1449 = vunpack.c.h.b16 %v1367
        %v1450 = vunpack.c.l.b16 %v1368
        %v1451 = vunpack.c.h.b16 %v1368
        %v1452 = vunpack.c.l.b16 %v1369
        %v1453 = vunpack.c.h.b16 %v1369
        %v1454 = vunpack.c.l.b16 %v1370
        %v1455 = vunpack.c.h.b16 %v1370
        %v1456 = vunpack.c.l.b16 %v1371
        %v1457 = vunpack.c.h.b16 %v1371
        %v1458 = vunpack.c.l.b16 %v1372
        %v1459 = vunpack.c.h.b16 %v1372
        %v1460 = vunpack.c.l.b16 %v1373
        %v1461 = vunpack.c.h.b16 %v1373
        %v1462 = vunpack.c.l.b16 %v1374
        %v1463 = vunpack.c.h.b16 %v1374
        %v1464 = vunpack.c.l.b16 %v1375
        %v1465 = vunpack.c.h.b16 %v1375
        %v1466 = vunpack.c.l.b16 %v1376
        %v1467 = vunpack.c.h.b16 %v1376
        %v1468 = vunpack.c.l.b16 %v1377
        %v1469 = vunpack.c.h.b16 %v1377
        %v1470 = vunpack.c.l.b16 %v1378
        %v1471 = vunpack.c.h.b16 %v1378
        %v1472 = vunpack.c.l.b16 %v1379
        %v1473 = vunpack.c.h.b16 %v1379
        %v1474 = vunpack.c.l.b16 %v1380
        %v1475 = vunpack.c.h.b16 %v1380
        %v1476 = vunpack.c.l.b16 %v1381
        %v1477 = vunpack.c.h.b16 %v1381
        %v1478 = vunpack.c.l.b16 %v1382
        %v1479 = vunpack.c.h.b16 %v1382
        %v1480 = vunpack.c.l.b16 %v1383
        %v1481 = vunpack.c.h.b16 %v1383
        %v1482 = vunpack.c.l.b16 %v1384
        %v1483 = vunpack.c.h.b16 %v1384
        %v1484 = vunpack.c.l.b16 %v1385
        %v1485 = vunpack.c.h.b16 %v1385
        %v1486 = vunpack.c.l.b16 %v1386
        %v1487 = vunpack.c.h.b16 %v1386
        %v1488 = vunpack.c.l.b16 %v1387
        %v1489 = vunpack.c.h.b16 %v1387
        %v1490 = vunpack.c.l.b16 %v1388
        %v1491 = vunpack.c.h.b16 %v1388
        %v1492 = vunpack.c.l.b16 %v1389
        %v1493 = vunpack.c.h.b16 %v1389
        %v1494 = vpack.c.b16 %v1434, %v1430
        %v1495 = vpack.c.b16 %v1435, %v1431
        %v1496 = vpack.c.b16 %v1436, %v1432
        %v1497 = vpack.c.b16 %v1437, %v1433
        %v1498 = vpack.c.b16 %v1442, %v1438
        %v1499 = vpack.c.b16 %v1443, %v1439
        %v1500 = vpack.c.b16 %v1444, %v1440
        %v1501 = vpack.c.b16 %v1445, %v1441
        %v1502 = vpack.c.b16 %v1450, %v1446
        %v1503 = vpack.c.b16 %v1451, %v1447
        %v1504 = vpack.c.b16 %v1452, %v1448
        %v1505 = vpack.c.b16 %v1453, %v1449
        %v1506 = vpack.c.b16 %v1458, %v1454
        %v1507 = vpack.c.b16 %v1459, %v1455
        %v1508 = vpack.c.b16 %v1460, %v1456
        %v1509 = vpack.c.b16 %v1461, %v1457
        %v1510 = vpack.c.b16 %v1466, %v1462
        %v1511 = vpack.c.b16 %v1467, %v1463
        %v1512 = vpack.c.b16 %v1468, %v1464
        %v1513 = vpack.c.b16 %v1469, %v1465
        %v1514 = vpack.c.b16 %v1474, %v1470
        %v1515 = vpack.c.b16 %v1475, %v1471
        %v1516 = vpack.c.b16 %v1476, %v1472
        %v1517 = vpack.c.b16 %v1477, %v1473
        %v1518 = vpack.c.b16 %v1482, %v1478
        %v1519 = vpack.c.b16 %v1483, %v1479
        %v1520 = vpack.c.b16 %v1484, %v1480
        %v1521 = vpack.c.b16 %v1485, %v1481
        %v1522 = vpack.c.b16 %v1490, %v1486
        %v1523 = vpack.c.b16 %v1491, %v1487
        %v1524 = vpack.c.b16 %v1492, %v1488
        %v1525 = vpack.c.b16 %v1493, %v1489
        %1558 = vmatprep.subr.bf16.mxu0 %v1495
        %1559 = vmatpush1.bf16.msra.mxu0 %v1494
        %1560 = vmatprep.subr.bf16.mxu0 %v1499
        %1561 = vmatpush1.bf16.msra.mxu0 %v1498
        %1562 = vmatprep.subr.bf16.mxu0 %v1503
        %1563 = vmatpush1.bf16.msra.mxu0 %v1502
        %1564 = vmatprep.subr.bf16.mxu0 %v1507
        %1565 = vmatpush1.bf16.msra.mxu0 %v1506
        %1566 = vmatprep.subr.bf16.mxu0 %v1511
        %1567 = vmatpush1.bf16.msra.mxu0 %v1510
        %1568 = vmatprep.subr.bf16.mxu0 %v1515
        %1569 = vmatpush1.bf16.msra.mxu0 %v1514
        %1570 = vmatprep.subr.bf16.mxu0 %v1519
        %1571 = vmatpush1.bf16.msra.mxu0 %v1518
        %1572 = vmatprep.subr.bf16.mxu0 %v1523
        %1573 = vmatpush1.bf16.msra.mxu0 %v1522
        %1574 = vmatprep.subr.bf16.mxu0 0
        %1575 = vmatpush1.bf16.msra.mxu0 0
        %1576 = vmatprep.subr.bf16.mxu0 0
        %1577 = vmatpush1.bf16.msra.mxu0 0
        %1578 = vmatprep.subr.bf16.mxu0 0
        %1579 = vmatpush1.bf16.msra.mxu0 0
        %1580 = vmatprep.subr.bf16.mxu0 0
        %1581 = vmatpush1.bf16.msra.mxu0 0
        %1582 = vmatprep.subr.bf16.mxu0 0
        %1583 = vmatpush1.bf16.msra.mxu0 0
        %1584 = vmatprep.subr.bf16.mxu0 0
        %1585 = vmatpush1.bf16.msra.mxu0 0
        %1586 = vmatprep.subr.bf16.mxu0 0
        %1587 = vmatpush1.bf16.msra.mxu0 0
        %1588 = vmatprep.subr.bf16.mxu0 0
        %1589 = vmatpush1.bf16.msra.mxu0 0
        %1590 = vmatprep.mubr.bf16.mxu0 0
        %1591 = vmatmul.mubr.bf16.gmra.mrb[0].mxu0 %v1395
        %v1592 = vpop.f32.mrb[0].mxu0
        %v1593 = vadd.f32 0.0, %v1592
        %v1594 = vpop.f32.mrb[0].mxu0
        %v1595 = vadd.f32 0.0, %v1594
        %v1596 = vpop.f32.mrb[0].mxu0
        %v1597 = vadd.f32 0.0, %v1596
        %v1598 = vpop.f32.mrb[0].mxu0
        %v1599 = vadd.f32 0.0, %v1598
        %1600 = vmatprep.mubr.bf16.mxu0 0
        %1601 = vmatmul.mubr.bf16.gmra.mrb[0].mxu0 %v1394
        %v1602 = vpop.f32.mrb[0].mxu0
        %v1603 = vadd.f32 0.0, %v1602
        %v1604 = vpop.f32.mrb[0].mxu0
        %v1605 = vadd.f32 0.0, %v1604
        %v1606 = vpop.f32.mrb[0].mxu0
        %v1607 = vpop.f32.mrb[0].mxu0
        %1608 = vdwg.mxu0
        %1609 = vmatprep.subr.bf16.mxu0 %v1497
        %1610 = vmatpush1.bf16.msra.mxu0 %v1496
        %1611 = vmatprep.subr.bf16.mxu0 %v1501
        %1612 = vmatpush1.bf16.msra.mxu0 %v1500
        %1613 = vmatprep.subr.bf16.mxu0 %v1505
        %1614 = vmatpush1.bf16.msra.mxu0 %v1504
        %1615 = vmatprep.subr.bf16.mxu0 %v1509
        %1616 = vmatpush1.bf16.msra.mxu0 %v1508
        %1617 = vmatprep.subr.bf16.mxu0 %v1513
        %1618 = vmatpush1.bf16.msra.mxu0 %v1512
        %1619 = vmatprep.subr.bf16.mxu0 %v1517
        %1620 = vmatpush1.bf16.msra.mxu0 %v1516
        %1621 = vmatprep.subr.bf16.mxu0 %v1521
        %1622 = vmatpush1.bf16.msra.mxu0 %v1520
        %1623 = vmatprep.subr.bf16.mxu0 %v1525
        %1624 = vmatpush1.bf16.msra.mxu0 %v1524
        %1625 = vmatprep.subr.bf16.mxu0 0
        %1626 = vmatpush1.bf16.msra.mxu0 0
        %1627 = vmatprep.subr.bf16.mxu0 0
        %1628 = vmatpush1.bf16.msra.mxu0 0
        %1629 = vmatprep.subr.bf16.mxu0 0
        %1630 = vmatpush1.bf16.msra.mxu0 0
        %1631 = vmatprep.subr.bf16.mxu0 0
        %1632 = vmatpush1.bf16.msra.mxu0 0
        %1633 = vmatprep.subr.bf16.mxu0 0
        %1634 = vmatpush1.bf16.msra.mxu0 0
        %1635 = vmatprep.subr.bf16.mxu0 0
        %1636 = vmatpush1.bf16.msra.mxu0 0
        %1637 = vmatprep.subr.bf16.mxu0 0
        %1638 = vmatpush1.bf16.msra.mxu0 0
        %1639 = vmatprep.subr.bf16.mxu0 0
        %1640 = vmatpush1.bf16.msra.mxu0 0
        %1641 = vmatprep.mubr.bf16.mxu0 0
        %1642 = vmatmul.mubr.bf16.gmra.mrb[0].mxu0 %v1395
        %v1643 = vpop.f32.mrb[0].mxu0
        %v1644 = vadd.f32 0.0, %v1643
        %v1645 = vpop.f32.mrb[0].mxu0
        %v1646 = vadd.f32 0.0, %v1645
        %v1647 = vpop.f32.mrb[0].mxu0
        %v1648 = vadd.f32 0.0, %v1647
        %v1649 = vpop.f32.mrb[0].mxu0
        %v1650 = vadd.f32 0.0, %v1649
        %1651 = vmatprep.mubr.bf16.mxu0 0
        %1652 = vmatmul.mubr.bf16.gmra.mrb[0].mxu0 %v1394
        %v1653 = vpop.f32.mrb[0].mxu0
        %v1654 = vadd.f32 0.0, %v1653
        %v1655 = vpop.f32.mrb[0].mxu0
        %v1656 = vadd.f32 0.0, %v1655
        %v1657 = vpop.f32.mrb[0].mxu0
        %v1658 = vpop.f32.mrb[0].mxu0
        %1659 = vdwg.mxu0
        %v1660 = vadd.f32 %v1290, %v1593
        %v1661 = vadd.f32 %v1292, %v1595
        %v1662 = vadd.f32 %v1341, %v1644
        %v1663 = vadd.f32 %v1343, %v1646
        %v1664 = vadd.f32 %v1294, %v1597
        %v1665 = vadd.f32 %v1296, %v1599
        %v1666 = vadd.f32 %v1345, %v1648
        %v1667 = vadd.f32 %v1347, %v1650
        %v1668 = vadd.f32 %v1300, %v1603
        %v1669 = vadd.f32 %v1302, %v1605
        %v1670 = vadd.f32 %v1351, %v1654
        %v1671 = vadd.f32 %v1353, %v1656
        %s1672 = scalar_lea.vmem [#allocation6], 768
        %v1673 = vld [vmem:[%s1672] sm:$0xff]
        %v1674 = vld [vmem:[%s1672 + $0x8] sm:$0xff]
        %v1675 = vld [vmem:[%s1672 + $0x10] sm:$0xff]
        %v1676 = vld [vmem:[%s1672 + $0x18] sm:$0xff]
        %v1677 = vld [vmem:[%s1672 + $0x20] sm:$0xff]
        %v1678 = vld [vmem:[%s1672 + $0x28] sm:$0xff]
        %v1679 = vld [vmem:[%s1672 + $0x30] sm:$0xff]
        %v1680 = vld [vmem:[%s1672 + $0x38] sm:$0xff]
        %v1681 = vld [vmem:[%s1672 + $0x40] sm:$0xff]
        %v1682 = vld [vmem:[%s1672 + $0x48] sm:$0xff]
        %v1683 = vld [vmem:[%s1672 + $0x50] sm:$0xff]
        %v1684 = vld [vmem:[%s1672 + $0x58] sm:$0xff]
        %v1685 = vld [vmem:[%s1672 + $0x60] sm:$0xff]
        %v1686 = vld [vmem:[%s1672 + $0x68] sm:$0xff]
        %v1687 = vld [vmem:[%s1672 + $0x70] sm:$0xff]
        %v1688 = vld [vmem:[%s1672 + $0x78] sm:$0xff]
        %v1689 = vld [vmem:[%s1672 + $0x80] sm:$0xff]
        %v1690 = vld [vmem:[%s1672 + $0x88] sm:$0xff]
        %v1691 = vld [vmem:[%s1672 + $0x90] sm:$0xff]
        %v1692 = vld [vmem:[%s1672 + $0x98] sm:$0xff]
        %v1693 = vld [vmem:[%s1672 + $0xa0] sm:$0xff]
        %v1694 = vld [vmem:[%s1672 + $0xa8] sm:$0xff]
        %v1695 = vld [vmem:[%s1672 + $0xb0] sm:$0xff]
        %v1696 = vld [vmem:[%s1672 + $0xb8] sm:$0xff]
        %v1697 = vld [vmem:[%s1672 + $0xc0] sm:$0xff]
        %v1698 = vld [vmem:[%s1672 + $0xc8] sm:$0xff]
        %v1699 = vld [vmem:[%s1672 + $0xd0] sm:$0xff]
        %v1700 = vld [vmem:[%s1672 + $0xd8] sm:$0xff]
        %v1701 = vld [vmem:[%s1672 + $0xe0] sm:$0xff]
        %v1702 = vld [vmem:[%s1672 + $0xe8] sm:$0xff]
        %v1703 = vld [vmem:[%s1672 + $0xf0] sm:$0xff]
        %v1704 = vld [vmem:[%s1672 + $0xf8] sm:$0xff]
        %vm1705 = vsmask.f32 6400
        %v1706 = vrot.slane %v817, 1
        %v1707 = vrot.slane %v819, 2
        %v1708 = vor.u32 %v1706, %v1707
        %v1709 = vrot.slane %v828, 1
        %v1710 = vrot.slane %v824, 2
        %v1711 = vor.u32 %v1709, %v1710
        %v1712 = vsel %vm1705, %v1708, %v1711
        %v1747 = vunpack.c.l.b16 %v1673
        %v1748 = vunpack.c.h.b16 %v1673
        %v1749 = vunpack.c.l.b16 %v1674
        %v1750 = vunpack.c.h.b16 %v1674
        %v1751 = vunpack.c.l.b16 %v1675
        %v1752 = vunpack.c.h.b16 %v1675
        %v1753 = vunpack.c.l.b16 %v1676
        %v1754 = vunpack.c.h.b16 %v1676
        %v1755 = vunpack.c.l.b16 %v1677
        %v1756 = vunpack.c.h.b16 %v1677
        %v1757 = vunpack.c.l.b16 %v1678
        %v1758 = vunpack.c.h.b16 %v1678
        %v1759 = vunpack.c.l.b16 %v1679
        %v1760 = vunpack.c.h.b16 %v1679
        %v1761 = vunpack.c.l.b16 %v1680
        %v1762 = vunpack.c.h.b16 %v1680
        %v1763 = vunpack.c.l.b16 %v1681
        %v1764 = vunpack.c.h.b16 %v1681
        %v1765 = vunpack.c.l.b16 %v1682
        %v1766 = vunpack.c.h.b16 %v1682
        %v1767 = vunpack.c.l.b16 %v1683
        %v1768 = vunpack.c.h.b16 %v1683
        %v1769 = vunpack.c.l.b16 %v1684
        %v1770 = vunpack.c.h.b16 %v1684
        %v1771 = vunpack.c.l.b16 %v1685
        %v1772 = vunpack.c.h.b16 %v1685
        %v1773 = vunpack.c.l.b16 %v1686
        %v1774 = vunpack.c.h.b16 %v1686
        %v1775 = vunpack.c.l.b16 %v1687
        %v1776 = vunpack.c.h.b16 %v1687
        %v1777 = vunpack.c.l.b16 %v1688
        %v1778 = vunpack.c.h.b16 %v1688
        %v1779 = vunpack.c.l.b16 %v1689
        %v1780 = vunpack.c.h.b16 %v1689
        %v1781 = vunpack.c.l.b16 %v1690
        %v1782 = vunpack.c.h.b16 %v1690
        %v1783 = vunpack.c.l.b16 %v1691
        %v1784 = vunpack.c.h.b16 %v1691
        %v1785 = vunpack.c.l.b16 %v1692
        %v1786 = vunpack.c.h.b16 %v1692
        %v1787 = vunpack.c.l.b16 %v1693
        %v1788 = vunpack.c.h.b16 %v1693
        %v1789 = vunpack.c.l.b16 %v1694
        %v1790 = vunpack.c.h.b16 %v1694
        %v1791 = vunpack.c.l.b16 %v1695
        %v1792 = vunpack.c.h.b16 %v1695
        %v1793 = vunpack.c.l.b16 %v1696
        %v1794 = vunpack.c.h.b16 %v1696
        %v1795 = vunpack.c.l.b16 %v1697
        %v1796 = vunpack.c.h.b16 %v1697
        %v1797 = vunpack.c.l.b16 %v1698
        %v1798 = vunpack.c.h.b16 %v1698
        %v1799 = vunpack.c.l.b16 %v1699
        %v1800 = vunpack.c.h.b16 %v1699
        %v1801 = vunpack.c.l.b16 %v1700
        %v1802 = vunpack.c.h.b16 %v1700
        %v1803 = vunpack.c.l.b16 %v1701
        %v1804 = vunpack.c.h.b16 %v1701
        %v1805 = vunpack.c.l.b16 %v1702
        %v1806 = vunpack.c.h.b16 %v1702
        %v1807 = vunpack.c.l.b16 %v1703
        %v1808 = vunpack.c.h.b16 %v1703
        %v1809 = vunpack.c.l.b16 %v1704
        %v1810 = vunpack.c.h.b16 %v1704
        %v1811 = vpack.c.b16 %v1751, %v1747
        %v1812 = vpack.c.b16 %v1752, %v1748
        %v1813 = vpack.c.b16 %v1753, %v1749
        %v1814 = vpack.c.b16 %v1754, %v1750
        %v1815 = vpack.c.b16 %v1759, %v1755
        %v1816 = vpack.c.b16 %v1760, %v1756
        %v1817 = vpack.c.b16 %v1761, %v1757
        %v1818 = vpack.c.b16 %v1762, %v1758
        %v1819 = vpack.c.b16 %v1767, %v1763
        %v1820 = vpack.c.b16 %v1768, %v1764
        %v1821 = vpack.c.b16 %v1769, %v1765
        %v1822 = vpack.c.b16 %v1770, %v1766
        %v1823 = vpack.c.b16 %v1775, %v1771
        %v1824 = vpack.c.b16 %v1776, %v1772
        %v1825 = vpack.c.b16 %v1777, %v1773
        %v1826 = vpack.c.b16 %v1778, %v1774
        %v1827 = vpack.c.b16 %v1783, %v1779
        %v1828 = vpack.c.b16 %v1784, %v1780
        %v1829 = vpack.c.b16 %v1785, %v1781
        %v1830 = vpack.c.b16 %v1786, %v1782
        %v1831 = vpack.c.b16 %v1791, %v1787
        %v1832 = vpack.c.b16 %v1792, %v1788
        %v1833 = vpack.c.b16 %v1793, %v1789
        %v1834 = vpack.c.b16 %v1794, %v1790
        %v1835 = vpack.c.b16 %v1799, %v1795
        %v1836 = vpack.c.b16 %v1800, %v1796
        %v1837 = vpack.c.b16 %v1801, %v1797
        %v1838 = vpack.c.b16 %v1802, %v1798
        %v1839 = vpack.c.b16 %v1807, %v1803
        %v1840 = vpack.c.b16 %v1808, %v1804
        %v1841 = vpack.c.b16 %v1809, %v1805
        %v1842 = vpack.c.b16 %v1810, %v1806
        %1875 = vmatprep.subr.bf16.mxu0 %v1812
        %1876 = vmatpush1.bf16.msra.mxu0 %v1811
        %1877 = vmatprep.subr.bf16.mxu0 %v1816
        %1878 = vmatpush1.bf16.msra.mxu0 %v1815
        %1879 = vmatprep.subr.bf16.mxu0 %v1820
        %1880 = vmatpush1.bf16.msra.mxu0 %v1819
        %1881 = vmatprep.subr.bf16.mxu0 %v1824
        %1882 = vmatpush1.bf16.msra.mxu0 %v1823
        %1883 = vmatprep.subr.bf16.mxu0 %v1828
        %1884 = vmatpush1.bf16.msra.mxu0 %v1827
        %1885 = vmatprep.subr.bf16.mxu0 %v1832
        %1886 = vmatpush1.bf16.msra.mxu0 %v1831
        %1887 = vmatprep.subr.bf16.mxu0 %v1836
        %1888 = vmatpush1.bf16.msra.mxu0 %v1835
        %1889 = vmatprep.subr.bf16.mxu0 %v1840
        %1890 = vmatpush1.bf16.msra.mxu0 %v1839
        %1891 = vmatprep.subr.bf16.mxu0 0
        %1892 = vmatpush1.bf16.msra.mxu0 0
        %1893 = vmatprep.subr.bf16.mxu0 0
        %1894 = vmatpush1.bf16.msra.mxu0 0
        %1895 = vmatprep.subr.bf16.mxu0 0
        %1896 = vmatpush1.bf16.msra.mxu0 0
        %1897 = vmatprep.subr.bf16.mxu0 0
        %1898 = vmatpush1.bf16.msra.mxu0 0
        %1899 = vmatprep.subr.bf16.mxu0 0
        %1900 = vmatpush1.bf16.msra.mxu0 0
        %1901 = vmatprep.subr.bf16.mxu0 0
        %1902 = vmatpush1.bf16.msra.mxu0 0
        %1903 = vmatprep.subr.bf16.mxu0 0
        %1904 = vmatpush1.bf16.msra.mxu0 0
        %1905 = vmatprep.subr.bf16.mxu0 0
        %1906 = vmatpush1.bf16.msra.mxu0 0
        %1907 = vmatprep.mubr.bf16.mxu0 0
        %1908 = vmatmul.mubr.bf16.gmra.mrb[0].mxu0 %v1712
        %v1909 = vpop.f32.mrb[0].mxu0
        %v1910 = vadd.f32 0.0, %v1909
        %v1911 = vpop.f32.mrb[0].mxu0
        %v1912 = vadd.f32 0.0, %v1911
        %v1913 = vpop.f32.mrb[0].mxu0
        %v1914 = vadd.f32 0.0, %v1913
        %v1915 = vpop.f32.mrb[0].mxu0
        %v1916 = vadd.f32 0.0, %v1915
        %1917 = vmatprep.mubr.bf16.mxu0 0
        %1918 = vmatmul.mubr.bf16.gmra.mrb[0].mxu0 %v1711
        %v1919 = vpop.f32.mrb[0].mxu0
        %v1920 = vadd.f32 0.0, %v1919
        %v1921 = vpop.f32.mrb[0].mxu0
        %v1922 = vadd.f32 0.0, %v1921
        %v1923 = vpop.f32.mrb[0].mxu0
        %v1924 = vpop.f32.mrb[0].mxu0
        %1925 = vdwg.mxu0
        %1926 = vmatprep.subr.bf16.mxu0 %v1814
        %1927 = vmatpush1.bf16.msra.mxu0 %v1813
        %1928 = vmatprep.subr.bf16.mxu0 %v1818
        %1929 = vmatpush1.bf16.msra.mxu0 %v1817
        %1930 = vmatprep.subr.bf16.mxu0 %v1822
        %1931 = vmatpush1.bf16.msra.mxu0 %v1821
        %1932 = vmatprep.subr.bf16.mxu0 %v1826
        %1933 = vmatpush1.bf16.msra.mxu0 %v1825
        %1934 = vmatprep.subr.bf16.mxu0 %v1830
        %1935 = vmatpush1.bf16.msra.mxu0 %v1829
        %1936 = vmatprep.subr.bf16.mxu0 %v1834
        %1937 = vmatpush1.bf16.msra.mxu0 %v1833
        %1938 = vmatprep.subr.bf16.mxu0 %v1838
        %1939 = vmatpush1.bf16.msra.mxu0 %v1837
        %1940 = vmatprep.subr.bf16.mxu0 %v1842
        %1941 = vmatpush1.bf16.msra.mxu0 %v1841
        %1942 = vmatprep.subr.bf16.mxu0 0
        %1943 = vmatpush1.bf16.msra.mxu0 0
        %1944 = vmatprep.subr.bf16.mxu0 0
        %1945 = vmatpush1.bf16.msra.mxu0 0
        %1946 = vmatprep.subr.bf16.mxu0 0
        %1947 = vmatpush1.bf16.msra.mxu0 0
        %1948 = vmatprep.subr.bf16.mxu0 0
        %1949 = vmatpush1.bf16.msra.mxu0 0
        %1950 = vmatprep.subr.bf16.mxu0 0
        %1951 = vmatpush1.bf16.msra.mxu0 0
        %1952 = vmatprep.subr.bf16.mxu0 0
        %1953 = vmatpush1.bf16.msra.mxu0 0
        %1954 = vmatprep.subr.bf16.mxu0 0
        %1955 = vmatpush1.bf16.msra.mxu0 0
        %1956 = vmatprep.subr.bf16.mxu0 0
        %1957 = vmatpush1.bf16.msra.mxu0 0
        %1958 = vmatprep.mubr.bf16.mxu0 0
        %1959 = vmatmul.mubr.bf16.gmra.mrb[0].mxu0 %v1712
        %v1960 = vpop.f32.mrb[0].mxu0
        %v1961 = vadd.f32 0.0, %v1960
        %v1962 = vpop.f32.mrb[0].mxu0
        %v1963 = vadd.f32 0.0, %v1962
        %v1964 = vpop.f32.mrb[0].mxu0
        %v1965 = vadd.f32 0.0, %v1964
        %v1966 = vpop.f32.mrb[0].mxu0
        %v1967 = vadd.f32 0.0, %v1966
        %1968 = vmatprep.mubr.bf16.mxu0 0
        %1969 = vmatmul.mubr.bf16.gmra.mrb[0].mxu0 %v1711
        %v1970 = vpop.f32.mrb[0].mxu0
        %v1971 = vadd.f32 0.0, %v1970
        %v1972 = vpop.f32.mrb[0].mxu0
        %v1973 = vadd.f32 0.0, %v1972
        %v1974 = vpop.f32.mrb[0].mxu0
        %v1975 = vpop.f32.mrb[0].mxu0
        %1976 = vdwg.mxu0
        %v1977 = vadd.f32 %v1660, %v1910
        %v1978 = vadd.f32 %v1661, %v1912
        %v1979 = vadd.f32 %v1662, %v1961
        %v1980 = vadd.f32 %v1663, %v1963
        %v1981 = vadd.f32 %v1664, %v1914
        %v1982 = vadd.f32 %v1665, %v1916
        %v1983 = vadd.f32 %v1666, %v1965
        %v1984 = vadd.f32 %v1667, %v1967
        %v1985 = vadd.f32 %v1668, %v1920
        %v1986 = vadd.f32 %v1669, %v1922
        %v1987 = vadd.f32 %v1670, %v1971
        %v1988 = vadd.f32 %v1671, %v1973
        %v1989 = vld [vmem:[#allocation7] sm:$0xf]
        %v1991 = vlaneseq
        %v1992 = vshrl.u32 %v1991, 7
        %v1993 = vsub.s32 0, %v1992
        %v1994 = vrot.slane %v1989, %v1993
        %v1995 = vlaneseq
        %v1996 = vshrl.u32 %v1995, 7
        %v1997 = vsub.s32 1, %v1996
        %v1998 = vrot.slane %v1989, %v1997
        %v1999 = vlaneseq
        %v2000 = vshrl.u32 %v1999, 7
        %v2001 = vsub.s32 2, %v2000
        %v2002 = vrot.slane %v1989, %v2001
        %v2003 = vlaneseq
        %v2004 = vshrl.u32 %v2003, 7
        %v2005 = vsub.s32 3, %v2004
        %v2006 = vrot.slane %v1989, %v2005
        %v2011 = vadd.f32 %v1977, %v1994
        %v2012 = vadd.f32 %v1978, %v1998
        %v2013 = vadd.f32 %v1979, %v2002
        %v2014 = vadd.f32 %v1980, %v2006
        %v2015 = vadd.f32 %v1981, %v1994
        %v2016 = vadd.f32 %v1982, %v1998
        %v2017 = vadd.f32 %v1983, %v2002
        %v2018 = vadd.f32 %v1984, %v2006
        %v2019 = vadd.f32 %v1985, %v1994
        %v2020 = vadd.f32 %v1986, %v1998
        %v2021 = vadd.f32 %v1987, %v2002
        %v2022 = vadd.f32 %v1988, %v2006
        %v2023 = vmax.f32 %v2011, 0.0
        %v2024 = vmax.f32 %v2012, 0.0
        %v2025 = vmax.f32 %v2013, 0.0
        %v2026 = vmax.f32 %v2014, 0.0
        %v2027 = vmax.f32 %v2015, 0.0
        %v2028 = vmax.f32 %v2016, 0.0
        %v2029 = vmax.f32 %v2017, 0.0
        %v2030 = vmax.f32 %v2018, 0.0
        %v2031 = vmax.f32 %v2019, 0.0
        %v2032 = vmax.f32 %v2020, 0.0
        %v2033 = vmax.f32 %v2021, 0.0
        %v2034 = vmax.f32 %v2022, 0.0
        %v2035 = vmax.f32 %v2023, %v2025
        %v2036 = vmax.f32 %v2024, %v2026
        %v2037 = vmax.f32 %v2027, %v2029
        %v2038 = vmax.f32 %v2028, %v2030
        %v2039 = vmax.f32 %v2031, %v2033
        %v2040 = vmax.f32 %v2032, %v2034
        %v2041 = vld [vmem:[%s394] sm:$0xf]
        %v2044 = vrot.slane %v2035, 1
        %v2045 = vrot.slane %v2036, 1
        %v2048 = vmax.f32 %v2035, %v2044
        %v2049 = vmax.f32 %v2036, %v2045
        %v2050 = vpack.c.bf16 %v2048, %v2048
        %v2051 = vpack.c.bf16 %v2049, %v2049
        %v2052 = vld [vmem:[%s385] sm:$0xff]
        %v2053 = vld [vmem:[%s385 + $0x8] sm:$0xff]
        %v2054 = vld [vmem:[%s385 + $0x10] sm:$0xff]
        %v2055 = vld [vmem:[%s385 + $0x18] sm:$0xff]
        %v2056 = vld [vmem:[%s385 + $0x20] sm:$0xff]
        %v2057 = vld [vmem:[%s385 + $0x28] sm:$0xff]
        %v2058 = vld [vmem:[%s385 + $0x30] sm:$0xff]
        %v2059 = vld [vmem:[%s385 + $0x38] sm:$0xff]
        %v2060 = vld [vmem:[%s385 + $0x40] sm:$0xff]
        %v2061 = vld [vmem:[%s385 + $0x48] sm:$0xff]
        %v2062 = vld [vmem:[%s385 + $0x50] sm:$0xff]
        %v2063 = vld [vmem:[%s385 + $0x58] sm:$0xff]
        %v2064 = vld [vmem:[%s385 + $0x60] sm:$0xff]
        %v2065 = vld [vmem:[%s385 + $0x68] sm:$0xff]
        %v2066 = vld [vmem:[%s385 + $0x70] sm:$0xff]
        %v2067 = vld [vmem:[%s385 + $0x78] sm:$0xff]
        %v2068 = vld [vmem:[%s385 + $0x80] sm:$0xff]
        %v2069 = vld [vmem:[%s385 + $0x88] sm:$0xff]
        %v2070 = vld [vmem:[%s385 + $0x90] sm:$0xff]
        %v2071 = vld [vmem:[%s385 + $0x98] sm:$0xff]
        %v2072 = vld [vmem:[%s385 + $0xa0] sm:$0xff]
        %v2073 = vld [vmem:[%s385 + $0xa8] sm:$0xff]
        %v2074 = vld [vmem:[%s385 + $0xb0] sm:$0xff]
        %v2075 = vld [vmem:[%s385 + $0xb8] sm:$0xff]
        %v2076 = vld [vmem:[%s385 + $0xc0] sm:$0xff]
        %v2077 = vld [vmem:[%s385 + $0xc8] sm:$0xff]
        %v2078 = vld [vmem:[%s385 + $0xd0] sm:$0xff]
        %v2079 = vld [vmem:[%s385 + $0xd8] sm:$0xff]
        %v2080 = vld [vmem:[%s385 + $0xe0] sm:$0xff]
        %v2081 = vld [vmem:[%s385 + $0xe8] sm:$0xff]
        %v2082 = vld [vmem:[%s385 + $0xf0] sm:$0xff]
        %v2083 = vld [vmem:[%s385 + $0xf8] sm:$0xff]
        %v2084 = vld [vmem:[%s385 + $0x100] sm:$0xff]
        %v2085 = vld [vmem:[%s385 + $0x108] sm:$0xff]
        %v2086 = vld [vmem:[%s385 + $0x110] sm:$0xff]
        %v2087 = vld [vmem:[%s385 + $0x118] sm:$0xff]
        %v2088 = vld [vmem:[%s385 + $0x120] sm:$0xff]
        %v2089 = vld [vmem:[%s385 + $0x128] sm:$0xff]
        %v2090 = vld [vmem:[%s385 + $0x130] sm:$0xff]
        %v2091 = vld [vmem:[%s385 + $0x138] sm:$0xff]
        %v2092 = vld [vmem:[%s385 + $0x140] sm:$0xff]
        %v2093 = vld [vmem:[%s385 + $0x148] sm:$0xff]
        %v2094 = vld [vmem:[%s385 + $0x150] sm:$0xff]
        %v2095 = vld [vmem:[%s385 + $0x158] sm:$0xff]
        %v2096 = vld [vmem:[%s385 + $0x160] sm:$0xff]
        %v2097 = vld [vmem:[%s385 + $0x168] sm:$0xff]
        %v2098 = vld [vmem:[%s385 + $0x170] sm:$0xff]
        %v2099 = vld [vmem:[%s385 + $0x178] sm:$0xff]
        %v2100 = vld [vmem:[%s385 + $0x180] sm:$0xff]
        %v2101 = vld [vmem:[%s385 + $0x188] sm:$0xff]
        %v2102 = vld [vmem:[%s385 + $0x190] sm:$0xff]
        %v2103 = vld [vmem:[%s385 + $0x198] sm:$0xff]
        %v2104 = vld [vmem:[%s385 + $0x1a0] sm:$0xff]
        %v2105 = vld [vmem:[%s385 + $0x1a8] sm:$0xff]
        %v2160 = vunpack.c.l.b16 %v2052
        %v2161 = vunpack.c.h.b16 %v2052
        %v2162 = vunpack.c.l.b16 %v2053
        %v2163 = vunpack.c.h.b16 %v2053
        %v2164 = vunpack.c.l.b16 %v2054
        %v2165 = vunpack.c.h.b16 %v2054
        %v2166 = vunpack.c.l.b16 %v2055
        %v2167 = vunpack.c.h.b16 %v2055
        %v2168 = vunpack.c.l.b16 %v2056
        %v2169 = vunpack.c.h.b16 %v2056
        %v2170 = vunpack.c.l.b16 %v2057
        %v2171 = vunpack.c.h.b16 %v2057
        %v2172 = vunpack.c.l.b16 %v2058
        %v2173 = vunpack.c.h.b16 %v2058
        %v2174 = vunpack.c.l.b16 %v2059
        %v2175 = vunpack.c.h.b16 %v2059
        %v2176 = vunpack.c.l.b16 %v2060
        %v2177 = vunpack.c.h.b16 %v2060
        %v2178 = vunpack.c.l.b16 %v2061
        %v2179 = vunpack.c.h.b16 %v2061
        %v2180 = vunpack.c.l.b16 %v2062
        %v2181 = vunpack.c.h.b16 %v2062
        %v2182 = vunpack.c.l.b16 %v2063
        %v2183 = vunpack.c.h.b16 %v2063
        %v2184 = vunpack.c.l.b16 %v2064
        %v2185 = vunpack.c.h.b16 %v2064
        %v2186 = vunpack.c.l.b16 %v2065
        %v2187 = vunpack.c.h.b16 %v2065
        %v2188 = vunpack.c.l.b16 %v2066
        %v2189 = vunpack.c.h.b16 %v2066
        %v2190 = vunpack.c.l.b16 %v2067
        %v2191 = vunpack.c.h.b16 %v2067
        %v2192 = vunpack.c.l.b16 %v2068
        %v2193 = vunpack.c.h.b16 %v2068
        %v2194 = vunpack.c.l.b16 %v2069
        %v2195 = vunpack.c.h.b16 %v2069
        %v2196 = vunpack.c.l.b16 %v2070
        %v2197 = vunpack.c.h.b16 %v2070
        %v2198 = vunpack.c.l.b16 %v2071
        %v2199 = vunpack.c.h.b16 %v2071
        %v2200 = vunpack.c.l.b16 %v2072
        %v2201 = vunpack.c.h.b16 %v2072
        %v2202 = vunpack.c.l.b16 %v2073
        %v2203 = vunpack.c.h.b16 %v2073
        %v2204 = vunpack.c.l.b16 %v2074
        %v2205 = vunpack.c.h.b16 %v2074
        %v2206 = vunpack.c.l.b16 %v2075
        %v2207 = vunpack.c.h.b16 %v2075
        %v2208 = vunpack.c.l.b16 %v2076
        %v2209 = vunpack.c.h.b16 %v2076
        %v2210 = vunpack.c.l.b16 %v2077
        %v2211 = vunpack.c.h.b16 %v2077
        %v2212 = vunpack.c.l.b16 %v2078
        %v2213 = vunpack.c.h.b16 %v2078
        %v2214 = vunpack.c.l.b16 %v2079
        %v2215 = vunpack.c.h.b16 %v2079
        %v2216 = vunpack.c.l.b16 %v2080
        %v2217 = vunpack.c.h.b16 %v2080
        %v2218 = vunpack.c.l.b16 %v2081
        %v2219 = vunpack.c.h.b16 %v2081
        %v2220 = vunpack.c.l.b16 %v2082
        %v2221 = vunpack.c.h.b16 %v2082
        %v2222 = vunpack.c.l.b16 %v2083
        %v2223 = vunpack.c.h.b16 %v2083
        %v2224 = vunpack.c.l.b16 %v2084
        %v2225 = vunpack.c.h.b16 %v2084
        %v2226 = vunpack.c.l.b16 %v2085
        %v2227 = vunpack.c.h.b16 %v2085
        %v2228 = vunpack.c.l.b16 %v2086
        %v2229 = vunpack.c.h.b16 %v2086
        %v2230 = vunpack.c.l.b16 %v2087
        %v2231 = vunpack.c.h.b16 %v2087
        %v2232 = vunpack.c.l.b16 %v2088
        %v2233 = vunpack.c.h.b16 %v2088
        %v2234 = vunpack.c.l.b16 %v2089
        %v2235 = vunpack.c.h.b16 %v2089
        %v2236 = vunpack.c.l.b16 %v2090
        %v2237 = vunpack.c.h.b16 %v2090
        %v2238 = vunpack.c.l.b16 %v2091
        %v2239 = vunpack.c.h.b16 %v2091
        %v2240 = vunpack.c.l.b16 %v2092
        %v2241 = vunpack.c.h.b16 %v2092
        %v2242 = vunpack.c.l.b16 %v2093
        %v2243 = vunpack.c.h.b16 %v2093
        %v2244 = vunpack.c.l.b16 %v2094
        %v2245 = vunpack.c.h.b16 %v2094
        %v2246 = vunpack.c.l.b16 %v2095
        %v2247 = vunpack.c.h.b16 %v2095
        %v2248 = vunpack.c.l.b16 %v2096
        %v2249 = vunpack.c.h.b16 %v2096
        %v2250 = vunpack.c.l.b16 %v2097
        %v2251 = vunpack.c.h.b16 %v2097
        %v2252 = vunpack.c.l.b16 %v2098
        %v2253 = vunpack.c.h.b16 %v2098
        %v2254 = vunpack.c.l.b16 %v2099
        %v2255 = vunpack.c.h.b16 %v2099
        %v2256 = vunpack.c.l.b16 %v2100
        %v2257 = vunpack.c.h.b16 %v2100
        %v2258 = vunpack.c.l.b16 %v2101
        %v2259 = vunpack.c.h.b16 %v2101
        %v2260 = vunpack.c.l.b16 %v2102
        %v2261 = vunpack.c.h.b16 %v2102
        %v2262 = vunpack.c.l.b16 %v2103
        %v2263 = vunpack.c.h.b16 %v2103
        %v2264 = vunpack.c.l.b16 %v2104
        %v2265 = vunpack.c.h.b16 %v2104
        %v2266 = vunpack.c.l.b16 %v2105
        %v2267 = vunpack.c.h.b16 %v2105
        %v2268 = vpack.c.b16 %v2164, %v2160
        %v2269 = vpack.c.b16 %v2165, %v2161
        %v2270 = vpack.c.b16 %v2166, %v2162
        %v2271 = vpack.c.b16 %v2167, %v2163
        %v2272 = vpack.c.b16 %v2172, %v2168
        %v2273 = vpack.c.b16 %v2173, %v2169
        %v2274 = vpack.c.b16 %v2174, %v2170
        %v2275 = vpack.c.b16 %v2175, %v2171
        %v2276 = vpack.c.b16 %v2180, %v2176
        %v2277 = vpack.c.b16 %v2181, %v2177
        %v2278 = vpack.c.b16 %v2182, %v2178
        %v2279 = vpack.c.b16 %v2183, %v2179
        %v2280 = vpack.c.b16 %v2188, %v2184
        %v2281 = vpack.c.b16 %v2189, %v2185
        %v2282 = vpack.c.b16 %v2190, %v2186
        %v2283 = vpack.c.b16 %v2191, %v2187
        %v2284 = vpack.c.b16 %v2196, %v2192
        %v2285 = vpack.c.b16 %v2197, %v2193
        %v2286 = vpack.c.b16 %v2198, %v2194
        %v2287 = vpack.c.b16 %v2199, %v2195
        %v2288 = vpack.c.b16 %v2204, %v2200
        %v2289 = vpack.c.b16 %v2205, %v2201
        %v2290 = vpack.c.b16 %v2206, %v2202
        %v2291 = vpack.c.b16 %v2207, %v2203
        %v2292 = vpack.c.b16 %v2212, %v2208
        %v2293 = vpack.c.b16 %v2213, %v2209
        %v2294 = vpack.c.b16 %v2214, %v2210
        %v2295 = vpack.c.b16 %v2215, %v2211
        %v2296 = vpack.c.b16 %v2220, %v2216
        %v2297 = vpack.c.b16 %v2221, %v2217
        %v2298 = vpack.c.b16 %v2222, %v2218
        %v2299 = vpack.c.b16 %v2223, %v2219
        %v2300 = vpack.c.b16 %v2228, %v2224
        %v2301 = vpack.c.b16 %v2229, %v2225
        %v2302 = vpack.c.b16 %v2230, %v2226
        %v2303 = vpack.c.b16 %v2231, %v2227
        %v2304 = vpack.c.b16 %v2236, %v2232
        %v2305 = vpack.c.b16 %v2237, %v2233
        %v2306 = vpack.c.b16 %v2238, %v2234
        %v2307 = vpack.c.b16 %v2239, %v2235
        %v2308 = vpack.c.b16 %v2244, %v2240
        %v2309 = vpack.c.b16 %v2245, %v2241
        %v2310 = vpack.c.b16 %v2246, %v2242
        %v2311 = vpack.c.b16 %v2247, %v2243
        %v2312 = vpack.c.b16 %v2252, %v2248
        %v2313 = vpack.c.b16 %v2253, %v2249
        %v2314 = vpack.c.b16 %v2254, %v2250
        %v2315 = vpack.c.b16 %v2255, %v2251
        %v2316 = vpack.c.b16 %v2260, %v2256
        %v2317 = vpack.c.b16 %v2261, %v2257
        %v2318 = vpack.c.b16 %v2262, %v2258
        %v2319 = vpack.c.b16 %v2263, %v2259
        %v2320 = vpack.c.b16 %v2264, %v2264
        %v2321 = vpack.c.b16 %v2265, %v2265
        %v2322 = vpack.c.b16 %v2266, %v2266
        %v2323 = vpack.c.b16 %v2267, %v2267
        %vm2376 = vcmask 719872
        %v2378 = vsel %vm2376, %v2051, 0
        %vm2380 = vcmask 1043456
        %v2382 = vsel %vm2380, %v2320, 0
        %v2385 = vsel %vm2380, %v2321, 0
        %v2388 = vsel %vm2380, %v2322, 0
        %v2391 = vsel %vm2380, %v2323, 0
        %2393 = vmatprep.subr.bf16.mxu0 %v2269
        %2394 = vmatpush1.bf16.msra.mxu0 %v2268
        %2395 = vmatprep.subr.bf16.mxu0 %v2273
        %2396 = vmatpush1.bf16.msra.mxu0 %v2272
        %2397 = vmatprep.subr.bf16.mxu0 %v2277
        %2398 = vmatpush1.bf16.msra.mxu0 %v2276
        %2399 = vmatprep.subr.bf16.mxu0 %v2281
        %2400 = vmatpush1.bf16.msra.mxu0 %v2280
        %2401 = vmatprep.subr.bf16.mxu0 %v2285
        %2402 = vmatpush1.bf16.msra.mxu0 %v2284
        %2403 = vmatprep.subr.bf16.mxu0 %v2289
        %2404 = vmatpush1.bf16.msra.mxu0 %v2288
        %2405 = vmatprep.subr.bf16.mxu0 %v2293
        %2406 = vmatpush1.bf16.msra.mxu0 %v2292
        %2407 = vmatprep.subr.bf16.mxu0 %v2297
        %2408 = vmatpush1.bf16.msra.mxu0 %v2296
        %2409 = vmatprep.subr.bf16.mxu0 %v2301
        %2410 = vmatpush1.bf16.msra.mxu0 %v2300
        %2411 = vmatprep.subr.bf16.mxu0 %v2305
        %2412 = vmatpush1.bf16.msra.mxu0 %v2304
        %2413 = vmatprep.subr.bf16.mxu0 %v2309
        %2414 = vmatpush1.bf16.msra.mxu0 %v2308
        %2415 = vmatprep.subr.bf16.mxu0 %v2313
        %2416 = vmatpush1.bf16.msra.mxu0 %v2312
        %2417 = vmatprep.subr.bf16.mxu0 %v2317
        %2418 = vmatpush1.bf16.msra.mxu0 %v2316
        %2419 = vmatprep.subr.bf16.mxu0 %v2385
        %2420 = vmatpush1.bf16.msra.mxu0 %v2382
        %2421 = vmatprep.subr.bf16.mxu0 0
        %2422 = vmatpush1.bf16.msra.mxu0 0
        %2423 = vmatprep.subr.bf16.mxu0 0
        %2424 = vmatpush1.bf16.msra.mxu0 0
        %2425 = vmatprep.mubr.bf16.mxu0 %v2378
        %2426 = vmatmul.mubr.bf16.gmra.mrb[0].mxu0 %v2050
        %v2427 = vpop.f32.mrb[0].mxu0
        %v2428 = vadd.f32 0.0, %v2427
        %v2429 = vpop.f32.mrb[0].mxu0
        %v2430 = vadd.f32 0.0, %v2429
        %v2431 = vpop.f32.mrb[0].mxu0
        %v2432 = vpop.f32.mrb[0].mxu0
        %2433 = vdwg.mxu0
        %2434 = vmatprep.subr.bf16.mxu0 %v2271
        %2435 = vmatpush1.bf16.msra.mxu0 %v2270
        %2436 = vmatprep.subr.bf16.mxu0 %v2275
        %2437 = vmatpush1.bf16.msra.mxu0 %v2274
        %2438 = vmatprep.subr.bf16.mxu0 %v2279
        %2439 = vmatpush1.bf16.msra.mxu0 %v2278
        %2440 = vmatprep.subr.bf16.mxu0 %v2283
        %2441 = vmatpush1.bf16.msra.mxu0 %v2282
        %2442 = vmatprep.subr.bf16.mxu0 %v2287
        %2443 = vmatpush1.bf16.msra.mxu0 %v2286
        %2444 = vmatprep.subr.bf16.mxu0 %v2291
        %2445 = vmatpush1.bf16.msra.mxu0 %v2290
        %2446 = vmatprep.subr.bf16.mxu0 %v2295
        %2447 = vmatpush1.bf16.msra.mxu0 %v2294
        %2448 = vmatprep.subr.bf16.mxu0 %v2299
        %2449 = vmatpush1.bf16.msra.mxu0 %v2298
        %2450 = vmatprep.subr.bf16.mxu0 %v2303
        %2451 = vmatpush1.bf16.msra.mxu0 %v2302
        %2452 = vmatprep.subr.bf16.mxu0 %v2307
        %2453 = vmatpush1.bf16.msra.mxu0 %v2306
        %2454 = vmatprep.subr.bf16.mxu0 %v2311
        %2455 = vmatpush1.bf16.msra.mxu0 %v2310
        %2456 = vmatprep.subr.bf16.mxu0 %v2315
        %2457 = vmatpush1.bf16.msra.mxu0 %v2314
        %2458 = vmatprep.subr.bf16.mxu0 %v2319
        %2459 = vmatpush1.bf16.msra.mxu0 %v2318
        %2460 = vmatprep.subr.bf16.mxu0 %v2391
        %2461 = vmatpush1.bf16.msra.mxu0 %v2388
        %2462 = vmatprep.subr.bf16.mxu0 0
        %2463 = vmatpush1.bf16.msra.mxu0 0
        %2464 = vmatprep.subr.bf16.mxu0 0
        %2465 = vmatpush1.bf16.msra.mxu0 0
        %2466 = vmatprep.mubr.bf16.mxu0 %v2378
        %2467 = vmatmul.mubr.bf16.gmra.mrb[0].mxu0 %v2050
        %v2468 = vpop.f32.mrb[0].mxu0
        %v2469 = vadd.f32 0.0, %v2468
        %v2470 = vpop.f32.mrb[0].mxu0
        %v2471 = vadd.f32 0.0, %v2470
        %v2472 = vpop.f32.mrb[0].mxu0
        %v2473 = vpop.f32.mrb[0].mxu0
        %2474 = vdwg.mxu0
        %v2479 = vcombine.low %v2428, %v2430
        %v2480 = vcombine.low %v2469, %v2471
        %v2482 = vunpack.c.l.s4 1966171168
        %v2483 = vunpack.c.0.s8 %v2482
        %v2484 = vlaneseq
        %v2485 = vshrl.u32 %v2484, 7
        %v2486 = vsub.s32 %v2483, %v2485
        %v2487 = vrot.slane %v2479, %v2486
        %v2489 = vunpack.c.l.s4 1966171168
        %v2490 = vunpack.c.0.s8 %v2489
        %v2491 = vlaneseq
        %v2492 = vshrl.u32 %v2491, 7
        %v2493 = vsub.s32 %v2490, %v2492
        %v2494 = vrot.slane %v2480, %v2493
        %v2495 = vcombine.low %v2487, %v2494
        %v2497 = vunpack.c.l.s4 1966171168
        %v2498 = vunpack.c.0.s8 %v2497
        %v2499 = vlaneseq
        %v2500 = vshrl.u32 %v2499, 7
        %v2501 = vsub.s32 %v2498, %v2500
        %v2502 = vrot.slane %v2495, %v2501
        %v2504 = vadd.f32 %v2041, %v2502
        %s2505 = scalar_lea.vmem %s385, 432 [#allocation9]
        %v2506 = vld [vmem:[%s2505] sm:$0xff]
        %v2507 = vld [vmem:[%s2505 + $0x8] sm:$0xff]
        %v2508 = vld [vmem:[%s2505 + $0x10] sm:$0xff]
        %v2509 = vld [vmem:[%s2505 + $0x18] sm:$0xff]
        %v2510 = vld [vmem:[%s2505 + $0x20] sm:$0xff]
        %v2511 = vld [vmem:[%s2505 + $0x28] sm:$0xff]
        %v2512 = vld [vmem:[%s2505 + $0x30] sm:$0xff]
        %v2513 = vld [vmem:[%s2505 + $0x38] sm:$0xff]
        %v2514 = vld [vmem:[%s2505 + $0x40] sm:$0xff]
        %v2515 = vld [vmem:[%s2505 + $0x48] sm:$0xff]
        %v2516 = vld [vmem:[%s2505 + $0x50] sm:$0xff]
        %v2517 = vld [vmem:[%s2505 + $0x58] sm:$0xff]
        %v2518 = vld [vmem:[%s2505 + $0x60] sm:$0xff]
        %v2519 = vld [vmem:[%s2505 + $0x68] sm:$0xff]
        %v2520 = vld [vmem:[%s2505 + $0x70] sm:$0xff]
        %v2521 = vld [vmem:[%s2505 + $0x78] sm:$0xff]
        %v2522 = vld [vmem:[%s2505 + $0x80] sm:$0xff]
        %v2523 = vld [vmem:[%s2505 + $0x88] sm:$0xff]
        %v2524 = vld [vmem:[%s2505 + $0x90] sm:$0xff]
        %v2525 = vld [vmem:[%s2505 + $0x98] sm:$0xff]
        %v2526 = vld [vmem:[%s2505 + $0xa0] sm:$0xff]
        %v2527 = vld [vmem:[%s2505 + $0xa8] sm:$0xff]
        %v2528 = vld [vmem:[%s2505 + $0xb0] sm:$0xff]
        %v2529 = vld [vmem:[%s2505 + $0xb8] sm:$0xff]
        %v2530 = vld [vmem:[%s2505 + $0xc0] sm:$0xff]
        %v2531 = vld [vmem:[%s2505 + $0xc8] sm:$0xff]
        %v2532 = vld [vmem:[%s2505 + $0xd0] sm:$0xff]
        %v2533 = vld [vmem:[%s2505 + $0xd8] sm:$0xff]
        %v2534 = vld [vmem:[%s2505 + $0xe0] sm:$0xff]
        %v2535 = vld [vmem:[%s2505 + $0xe8] sm:$0xff]
        %v2536 = vld [vmem:[%s2505 + $0xf0] sm:$0xff]
        %v2537 = vld [vmem:[%s2505 + $0xf8] sm:$0xff]
        %v2538 = vld [vmem:[%s2505 + $0x100] sm:$0xff]
        %v2539 = vld [vmem:[%s2505 + $0x108] sm:$0xff]
        %v2540 = vld [vmem:[%s2505 + $0x110] sm:$0xff]
        %v2541 = vld [vmem:[%s2505 + $0x118] sm:$0xff]
        %v2542 = vld [vmem:[%s2505 + $0x120] sm:$0xff]
        %v2543 = vld [vmem:[%s2505 + $0x128] sm:$0xff]
        %v2544 = vld [vmem:[%s2505 + $0x130] sm:$0xff]
        %v2545 = vld [vmem:[%s2505 + $0x138] sm:$0xff]
        %v2546 = vld [vmem:[%s2505 + $0x140] sm:$0xff]
        %v2547 = vld [vmem:[%s2505 + $0x148] sm:$0xff]
        %v2548 = vld [vmem:[%s2505 + $0x150] sm:$0xff]
        %v2549 = vld [vmem:[%s2505 + $0x158] sm:$0xff]
        %v2550 = vld [vmem:[%s2505 + $0x160] sm:$0xff]
        %v2551 = vld [vmem:[%s2505 + $0x168] sm:$0xff]
        %v2552 = vld [vmem:[%s2505 + $0x170] sm:$0xff]
        %v2553 = vld [vmem:[%s2505 + $0x178] sm:$0xff]
        %v2554 = vld [vmem:[%s2505 + $0x180] sm:$0xff]
        %v2555 = vld [vmem:[%s2505 + $0x188] sm:$0xff]
        %v2556 = vld [vmem:[%s2505 + $0x190] sm:$0xff]
        %v2557 = vld [vmem:[%s2505 + $0x198] sm:$0xff]
        %v2558 = vld [vmem:[%s2505 + $0x1a0] sm:$0xff]
        %v2559 = vld [vmem:[%s2505 + $0x1a8] sm:$0xff]
        %v2562 = vrot.slane %v2050, 1
        %v2563 = vrot.slane %v2051, 1
        %v2619 = vunpack.c.l.b16 %v2506
        %v2620 = vunpack.c.h.b16 %v2506
        %v2621 = vunpack.c.l.b16 %v2507
        %v2622 = vunpack.c.h.b16 %v2507
        %v2623 = vunpack.c.l.b16 %v2508
        %v2624 = vunpack.c.h.b16 %v2508
        %v2625 = vunpack.c.l.b16 %v2509
        %v2626 = vunpack.c.h.b16 %v2509
        %v2627 = vunpack.c.l.b16 %v2510
        %v2628 = vunpack.c.h.b16 %v2510
        %v2629 = vunpack.c.l.b16 %v2511
        %v2630 = vunpack.c.h.b16 %v2511
        %v2631 = vunpack.c.l.b16 %v2512
        %v2632 = vunpack.c.h.b16 %v2512
        %v2633 = vunpack.c.l.b16 %v2513
        %v2634 = vunpack.c.h.b16 %v2513
        %v2635 = vunpack.c.l.b16 %v2514
        %v2636 = vunpack.c.h.b16 %v2514
        %v2637 = vunpack.c.l.b16 %v2515
        %v2638 = vunpack.c.h.b16 %v2515
        %v2639 = vunpack.c.l.b16 %v2516
        %v2640 = vunpack.c.h.b16 %v2516
        %v2641 = vunpack.c.l.b16 %v2517
        %v2642 = vunpack.c.h.b16 %v2517
        %v2643 = vunpack.c.l.b16 %v2518
        %v2644 = vunpack.c.h.b16 %v2518
        %v2645 = vunpack.c.l.b16 %v2519
        %v2646 = vunpack.c.h.b16 %v2519
        %v2647 = vunpack.c.l.b16 %v2520
        %v2648 = vunpack.c.h.b16 %v2520
        %v2649 = vunpack.c.l.b16 %v2521
        %v2650 = vunpack.c.h.b16 %v2521
        %v2651 = vunpack.c.l.b16 %v2522
        %v2652 = vunpack.c.h.b16 %v2522
        %v2653 = vunpack.c.l.b16 %v2523
        %v2654 = vunpack.c.h.b16 %v2523
        %v2655 = vunpack.c.l.b16 %v2524
        %v2656 = vunpack.c.h.b16 %v2524
        %v2657 = vunpack.c.l.b16 %v2525
        %v2658 = vunpack.c.h.b16 %v2525
        %v2659 = vunpack.c.l.b16 %v2526
        %v2660 = vunpack.c.h.b16 %v2526
        %v2661 = vunpack.c.l.b16 %v2527
        %v2662 = vunpack.c.h.b16 %v2527
        %v2663 = vunpack.c.l.b16 %v2528
        %v2664 = vunpack.c.h.b16 %v2528
        %v2665 = vunpack.c.l.b16 %v2529
        %v2666 = vunpack.c.h.b16 %v2529
        %v2667 = vunpack.c.l.b16 %v2530
        %v2668 = vunpack.c.h.b16 %v2530
        %v2669 = vunpack.c.l.b16 %v2531
        %v2670 = vunpack.c.h.b16 %v2531
        %v2671 = vunpack.c.l.b16 %v2532
        %v2672 = vunpack.c.h.b16 %v2532
        %v2673 = vunpack.c.l.b16 %v2533
        %v2674 = vunpack.c.h.b16 %v2533
        %v2675 = vunpack.c.l.b16 %v2534
        %v2676 = vunpack.c.h.b16 %v2534
        %v2677 = vunpack.c.l.b16 %v2535
        %v2678 = vunpack.c.h.b16 %v2535
        %v2679 = vunpack.c.l.b16 %v2536
        %v2680 = vunpack.c.h.b16 %v2536
        %v2681 = vunpack.c.l.b16 %v2537
        %v2682 = vunpack.c.h.b16 %v2537
        %v2683 = vunpack.c.l.b16 %v2538
        %v2684 = vunpack.c.h.b16 %v2538
        %v2685 = vunpack.c.l.b16 %v2539
        %v2686 = vunpack.c.h.b16 %v2539
        %v2687 = vunpack.c.l.b16 %v2540
        %v2688 = vunpack.c.h.b16 %v2540
        %v2689 = vunpack.c.l.b16 %v2541
        %v2690 = vunpack.c.h.b16 %v2541
        %v2691 = vunpack.c.l.b16 %v2542
        %v2692 = vunpack.c.h.b16 %v2542
        %v2693 = vunpack.c.l.b16 %v2543
        %v2694 = vunpack.c.h.b16 %v2543
        %v2695 = vunpack.c.l.b16 %v2544
        %v2696 = vunpack.c.h.b16 %v2544
        %v2697 = vunpack.c.l.b16 %v2545
        %v2698 = vunpack.c.h.b16 %v2545
        %v2699 = vunpack.c.l.b16 %v2546
        %v2700 = vunpack.c.h.b16 %v2546
        %v2701 = vunpack.c.l.b16 %v2547
        %v2702 = vunpack.c.h.b16 %v2547
        %v2703 = vunpack.c.l.b16 %v2548
        %v2704 = vunpack.c.h.b16 %v2548
        %v2705 = vunpack.c.l.b16 %v2549
        %v2706 = vunpack.c.h.b16 %v2549
        %v2707 = vunpack.c.l.b16 %v2550
        %v2708 = vunpack.c.h.b16 %v2550
        %v2709 = vunpack.c.l.b16 %v2551
        %v2710 = vunpack.c.h.b16 %v2551
        %v2711 = vunpack.c.l.b16 %v2552
        %v2712 = vunpack.c.h.b16 %v2552
        %v2713 = vunpack.c.l.b16 %v2553
        %v2714 = vunpack.c.h.b16 %v2553
        %v2715 = vunpack.c.l.b16 %v2554
        %v2716 = vunpack.c.h.b16 %v2554
        %v2717 = vunpack.c.l.b16 %v2555
        %v2718 = vunpack.c.h.b16 %v2555
        %v2719 = vunpack.c.l.b16 %v2556
        %v2720 = vunpack.c.h.b16 %v2556
        %v2721 = vunpack.c.l.b16 %v2557
        %v2722 = vunpack.c.h.b16 %v2557
        %v2723 = vunpack.c.l.b16 %v2558
        %v2724 = vunpack.c.h.b16 %v2558
        %v2725 = vunpack.c.l.b16 %v2559
        %v2726 = vunpack.c.h.b16 %v2559
        %v2727 = vpack.c.b16 %v2623, %v2619
        %v2728 = vpack.c.b16 %v2624, %v2620
        %v2729 = vpack.c.b16 %v2625, %v2621
        %v2730 = vpack.c.b16 %v2626, %v2622
        %v2731 = vpack.c.b16 %v2631, %v2627
        %v2732 = vpack.c.b16 %v2632, %v2628
        %v2733 = vpack.c.b16 %v2633, %v2629
        %v2734 = vpack.c.b16 %v2634, %v2630
        %v2735 = vpack.c.b16 %v2639, %v2635
        %v2736 = vpack.c.b16 %v2640, %v2636
        %v2737 = vpack.c.b16 %v2641, %v2637
        %v2738 = vpack.c.b16 %v2642, %v2638
        %v2739 = vpack.c.b16 %v2647, %v2643
        %v2740 = vpack.c.b16 %v2648, %v2644
        %v2741 = vpack.c.b16 %v2649, %v2645
        %v2742 = vpack.c.b16 %v2650, %v2646
        %v2743 = vpack.c.b16 %v2655, %v2651
        %v2744 = vpack.c.b16 %v2656, %v2652
        %v2745 = vpack.c.b16 %v2657, %v2653
        %v2746 = vpack.c.b16 %v2658, %v2654
        %v2747 = vpack.c.b16 %v2663, %v2659
        %v2748 = vpack.c.b16 %v2664, %v2660
        %v2749 = vpack.c.b16 %v2665, %v2661
        %v2750 = vpack.c.b16 %v2666, %v2662
        %v2751 = vpack.c.b16 %v2671, %v2667
        %v2752 = vpack.c.b16 %v2672, %v2668
        %v2753 = vpack.c.b16 %v2673, %v2669
        %v2754 = vpack.c.b16 %v2674, %v2670
        %v2755 = vpack.c.b16 %v2679, %v2675
        %v2756 = vpack.c.b16 %v2680, %v2676
        %v2757 = vpack.c.b16 %v2681, %v2677
        %v2758 = vpack.c.b16 %v2682, %v2678
        %v2759 = vpack.c.b16 %v2687, %v2683
        %v2760 = vpack.c.b16 %v2688, %v2684
        %v2761 = vpack.c.b16 %v2689, %v2685
        %v2762 = vpack.c.b16 %v2690, %v2686
        %v2763 = vpack.c.b16 %v2695, %v2691
        %v2764 = vpack.c.b16 %v2696, %v2692
        %v2765 = vpack.c.b16 %v2697, %v2693
        %v2766 = vpack.c.b16 %v2698, %v2694
        %v2767 = vpack.c.b16 %v2703, %v2699
        %v2768 = vpack.c.b16 %v2704, %v2700
        %v2769 = vpack.c.b16 %v2705, %v2701
        %v2770 = vpack.c.b16 %v2706, %v2702
        %v2771 = vpack.c.b16 %v2711, %v2707
        %v2772 = vpack.c.b16 %v2712, %v2708
        %v2773 = vpack.c.b16 %v2713, %v2709
        %v2774 = vpack.c.b16 %v2714, %v2710
        %v2775 = vpack.c.b16 %v2719, %v2715
        %v2776 = vpack.c.b16 %v2720, %v2716
        %v2777 = vpack.c.b16 %v2721, %v2717
        %v2778 = vpack.c.b16 %v2722, %v2718
        %v2779 = vpack.c.b16 %v2723, %v2723
        %v2780 = vpack.c.b16 %v2724, %v2724
        %v2781 = vpack.c.b16 %v2725, %v2725
        %v2782 = vpack.c.b16 %v2726, %v2726
        %v2836 = vsel %vm2376, %v2563, 0
        %v2839 = vsel %vm2380, %v2779, 0
        %v2842 = vsel %vm2380, %v2780, 0
        %v2845 = vsel %vm2380, %v2781, 0
        %v2848 = vsel %vm2380, %v2782, 0
        %2850 = vmatprep.subr.bf16.mxu0 %v2728
        %2851 = vmatpush1.bf16.msra.mxu0 %v2727
        %2852 = vmatprep.subr.bf16.mxu0 %v2732
        %2853 = vmatpush1.bf16.msra.mxu0 %v2731
        %2854 = vmatprep.subr.bf16.mxu0 %v2736
        %2855 = vmatpush1.bf16.msra.mxu0 %v2735
        %2856 = vmatprep.subr.bf16.mxu0 %v2740
        %2857 = vmatpush1.bf16.msra.mxu0 %v2739
        %2858 = vmatprep.subr.bf16.mxu0 %v2744
        %2859 = vmatpush1.bf16.msra.mxu0 %v2743
        %2860 = vmatprep.subr.bf16.mxu0 %v2748
        %2861 = vmatpush1.bf16.msra.mxu0 %v2747
        %2862 = vmatprep.subr.bf16.mxu0 %v2752
        %2863 = vmatpush1.bf16.msra.mxu0 %v2751
        %2864 = vmatprep.subr.bf16.mxu0 %v2756
        %2865 = vmatpush1.bf16.msra.mxu0 %v2755
        %2866 = vmatprep.subr.bf16.mxu0 %v2760
        %2867 = vmatpush1.bf16.msra.mxu0 %v2759
        %2868 = vmatprep.subr.bf16.mxu0 %v2764
        %2869 = vmatpush1.bf16.msra.mxu0 %v2763
        %2870 = vmatprep.subr.bf16.mxu0 %v2768
        %2871 = vmatpush1.bf16.msra.mxu0 %v2767
        %2872 = vmatprep.subr.bf16.mxu0 %v2772
        %2873 = vmatpush1.bf16.msra.mxu0 %v2771
        %2874 = vmatprep.subr.bf16.mxu0 %v2776
        %2875 = vmatpush1.bf16.msra.mxu0 %v2775
        %2876 = vmatprep.subr.bf16.mxu0 %v2842
        %2877 = vmatpush1.bf16.msra.mxu0 %v2839
        %2878 = vmatprep.subr.bf16.mxu0 0
        %2879 = vmatpush1.bf16.msra.mxu0 0
        %2880 = vmatprep.subr.bf16.mxu0 0
        %2881 = vmatpush1.bf16.msra.mxu0 0
        %2882 = vmatprep.mubr.bf16.mxu0 %v2836
        %2883 = vmatmul.mubr.bf16.gmra.mrb[0].mxu0 %v2562
        %v2884 = vpop.f32.mrb[0].mxu0
        %v2885 = vadd.f32 0.0, %v2884
        %v2886 = vpop.f32.mrb[0].mxu0
        %v2887 = vadd.f32 0.0, %v2886
        %v2888 = vpop.f32.mrb[0].mxu0
        %v2889 = vpop.f32.mrb[0].mxu0
        %2890 = vdwg.mxu0
        %2891 = vmatprep.subr.bf16.mxu0 %v2730
        %2892 = vmatpush1.bf16.msra.mxu0 %v2729
        %2893 = vmatprep.subr.bf16.mxu0 %v2734
        %2894 = vmatpush1.bf16.msra.mxu0 %v2733
        %2895 = vmatprep.subr.bf16.mxu0 %v2738
        %2896 = vmatpush1.bf16.msra.mxu0 %v2737
        %2897 = vmatprep.subr.bf16.mxu0 %v2742
        %2898 = vmatpush1.bf16.msra.mxu0 %v2741
        %2899 = vmatprep.subr.bf16.mxu0 %v2746
        %2900 = vmatpush1.bf16.msra.mxu0 %v2745
        %2901 = vmatprep.subr.bf16.mxu0 %v2750
        %2902 = vmatpush1.bf16.msra.mxu0 %v2749
        %2903 = vmatprep.subr.bf16.mxu0 %v2754
        %2904 = vmatpush1.bf16.msra.mxu0 %v2753
        %2905 = vmatprep.subr.bf16.mxu0 %v2758
        %2906 = vmatpush1.bf16.msra.mxu0 %v2757
        %2907 = vmatprep.subr.bf16.mxu0 %v2762
        %2908 = vmatpush1.bf16.msra.mxu0 %v2761
        %2909 = vmatprep.subr.bf16.mxu0 %v2766
        %2910 = vmatpush1.bf16.msra.mxu0 %v2765
        %2911 = vmatprep.subr.bf16.mxu0 %v2770
        %2912 = vmatpush1.bf16.msra.mxu0 %v2769
        %2913 = vmatprep.subr.bf16.mxu0 %v2774
        %2914 = vmatpush1.bf16.msra.mxu0 %v2773
        %2915 = vmatprep.subr.bf16.mxu0 %v2778
        %2916 = vmatpush1.bf16.msra.mxu0 %v2777
        %2917 = vmatprep.subr.bf16.mxu0 %v2848
        %2918 = vmatpush1.bf16.msra.mxu0 %v2845
        %2919 = vmatprep.subr.bf16.mxu0 0
        %2920 = vmatpush1.bf16.msra.mxu0 0
        %2921 = vmatprep.subr.bf16.mxu0 0
        %2922 = vmatpush1.bf16.msra.mxu0 0
        %2923 = vmatprep.mubr.bf16.mxu0 %v2836
        %2924 = vmatmul.mubr.bf16.gmra.mrb[0].mxu0 %v2562
        %v2925 = vpop.f32.mrb[0].mxu0
        %v2926 = vadd.f32 0.0, %v2925
        %v2927 = vpop.f32.mrb[0].mxu0
        %v2928 = vadd.f32 0.0, %v2927
        %v2929 = vpop.f32.mrb[0].mxu0
        %v2930 = vpop.f32.mrb[0].mxu0
        %2931 = vdwg.mxu0
        %v2936 = vcombine.low %v2885, %v2887
        %v2937 = vcombine.low %v2926, %v2928
        %v2939 = vunpack.c.l.s4 1966171168
        %v2940 = vunpack.c.0.s8 %v2939
        %v2941 = vlaneseq
        %v2942 = vshrl.u32 %v2941, 7
        %v2943 = vsub.s32 %v2940, %v2942
        %v2944 = vrot.slane %v2936, %v2943
        %v2946 = vunpack.c.l.s4 1966171168
        %v2947 = vunpack.c.0.s8 %v2946
        %v2948 = vlaneseq
        %v2949 = vshrl.u32 %v2948, 7
        %v2950 = vsub.s32 %v2947, %v2949
        %v2951 = vrot.slane %v2937, %v2950
        %v2952 = vcombine.low %v2944, %v2951
        %v2954 = vunpack.c.l.s4 1966171168
        %v2955 = vunpack.c.0.s8 %v2954
        %v2956 = vlaneseq
        %v2957 = vshrl.u32 %v2956, 7
        %v2958 = vsub.s32 %v2955, %v2957
        %v2959 = vrot.slane %v2952, %v2958
        %v2961 = vadd.f32 %v2504, %v2959
        %s2962 = scalar_lea.vmem %s385, 864 [#allocation9]
        %v2963 = vld [vmem:[%s2962] sm:$0xff]
        %v2964 = vld [vmem:[%s2962 + $0x8] sm:$0xff]
        %v2965 = vld [vmem:[%s2962 + $0x10] sm:$0xff]
        %v2966 = vld [vmem:[%s2962 + $0x18] sm:$0xff]
        %v2967 = vld [vmem:[%s2962 + $0x20] sm:$0xff]
        %v2968 = vld [vmem:[%s2962 + $0x28] sm:$0xff]
        %v2969 = vld [vmem:[%s2962 + $0x30] sm:$0xff]
        %v2970 = vld [vmem:[%s2962 + $0x38] sm:$0xff]
        %v2971 = vld [vmem:[%s2962 + $0x40] sm:$0xff]
        %v2972 = vld [vmem:[%s2962 + $0x48] sm:$0xff]
        %v2973 = vld [vmem:[%s2962 + $0x50] sm:$0xff]
        %v2974 = vld [vmem:[%s2962 + $0x58] sm:$0xff]
        %v2975 = vld [vmem:[%s2962 + $0x60] sm:$0xff]
        %v2976 = vld [vmem:[%s2962 + $0x68] sm:$0xff]
        %v2977 = vld [vmem:[%s2962 + $0x70] sm:$0xff]
        %v2978 = vld [vmem:[%s2962 + $0x78] sm:$0xff]
        %v2979 = vld [vmem:[%s2962 + $0x80] sm:$0xff]
        %v2980 = vld [vmem:[%s2962 + $0x88] sm:$0xff]
        %v2981 = vld [vmem:[%s2962 + $0x90] sm:$0xff]
        %v2982 = vld [vmem:[%s2962 + $0x98] sm:$0xff]
        %v2983 = vld [vmem:[%s2962 + $0xa0] sm:$0xff]
        %v2984 = vld [vmem:[%s2962 + $0xa8] sm:$0xff]
        %v2985 = vld [vmem:[%s2962 + $0xb0] sm:$0xff]
        %v2986 = vld [vmem:[%s2962 + $0xb8] sm:$0xff]
        %v2987 = vld [vmem:[%s2962 + $0xc0] sm:$0xff]
        %v2988 = vld [vmem:[%s2962 + $0xc8] sm:$0xff]
        %v2989 = vld [vmem:[%s2962 + $0xd0] sm:$0xff]
        %v2990 = vld [vmem:[%s2962 + $0xd8] sm:$0xff]
        %v2991 = vld [vmem:[%s2962 + $0xe0] sm:$0xff]
        %v2992 = vld [vmem:[%s2962 + $0xe8] sm:$0xff]
        %v2993 = vld [vmem:[%s2962 + $0xf0] sm:$0xff]
        %v2994 = vld [vmem:[%s2962 + $0xf8] sm:$0xff]
        %v2995 = vld [vmem:[%s2962 + $0x100] sm:$0xff]
        %v2996 = vld [vmem:[%s2962 + $0x108] sm:$0xff]
        %v2997 = vld [vmem:[%s2962 + $0x110] sm:$0xff]
        %v2998 = vld [vmem:[%s2962 + $0x118] sm:$0xff]
        %v2999 = vld [vmem:[%s2962 + $0x120] sm:$0xff]
        %v3000 = vld [vmem:[%s2962 + $0x128] sm:$0xff]
        %v3001 = vld [vmem:[%s2962 + $0x130] sm:$0xff]
        %v3002 = vld [vmem:[%s2962 + $0x138] sm:$0xff]
        %v3003 = vld [vmem:[%s2962 + $0x140] sm:$0xff]
        %v3004 = vld [vmem:[%s2962 + $0x148] sm:$0xff]
        %v3005 = vld [vmem:[%s2962 + $0x150] sm:$0xff]
        %v3006 = vld [vmem:[%s2962 + $0x158] sm:$0xff]
        %v3007 = vld [vmem:[%s2962 + $0x160] sm:$0xff]
        %v3008 = vld [vmem:[%s2962 + $0x168] sm:$0xff]
        %v3009 = vld [vmem:[%s2962 + $0x170] sm:$0xff]
        %v3010 = vld [vmem:[%s2962 + $0x178] sm:$0xff]
        %v3011 = vld [vmem:[%s2962 + $0x180] sm:$0xff]
        %v3012 = vld [vmem:[%s2962 + $0x188] sm:$0xff]
        %v3013 = vld [vmem:[%s2962 + $0x190] sm:$0xff]
        %v3014 = vld [vmem:[%s2962 + $0x198] sm:$0xff]
        %v3015 = vld [vmem:[%s2962 + $0x1a0] sm:$0xff]
        %v3016 = vld [vmem:[%s2962 + $0x1a8] sm:$0xff]
        %v3017 = vrot.slane %v2050, 2
        %v3018 = vrot.slane %v2051, 2
        %v3074 = vunpack.c.l.b16 %v2963
        %v3075 = vunpack.c.h.b16 %v2963
        %v3076 = vunpack.c.l.b16 %v2964
        %v3077 = vunpack.c.h.b16 %v2964
        %v3078 = vunpack.c.l.b16 %v2965
        %v3079 = vunpack.c.h.b16 %v2965
        %v3080 = vunpack.c.l.b16 %v2966
        %v3081 = vunpack.c.h.b16 %v2966
        %v3082 = vunpack.c.l.b16 %v2967
        %v3083 = vunpack.c.h.b16 %v2967
        %v3084 = vunpack.c.l.b16 %v2968
        %v3085 = vunpack.c.h.b16 %v2968
        %v3086 = vunpack.c.l.b16 %v2969
        %v3087 = vunpack.c.h.b16 %v2969
        %v3088 = vunpack.c.l.b16 %v2970
        %v3089 = vunpack.c.h.b16 %v2970
        %v3090 = vunpack.c.l.b16 %v2971
        %v3091 = vunpack.c.h.b16 %v2971
        %v3092 = vunpack.c.l.b16 %v2972
        %v3093 = vunpack.c.h.b16 %v2972
        %v3094 = vunpack.c.l.b16 %v2973
        %v3095 = vunpack.c.h.b16 %v2973
        %v3096 = vunpack.c.l.b16 %v2974
        %v3097 = vunpack.c.h.b16 %v2974
        %v3098 = vunpack.c.l.b16 %v2975
        %v3099 = vunpack.c.h.b16 %v2975
        %v3100 = vunpack.c.l.b16 %v2976
        %v3101 = vunpack.c.h.b16 %v2976
        %v3102 = vunpack.c.l.b16 %v2977
        %v3103 = vunpack.c.h.b16 %v2977
        %v3104 = vunpack.c.l.b16 %v2978
        %v3105 = vunpack.c.h.b16 %v2978
        %v3106 = vunpack.c.l.b16 %v2979
        %v3107 = vunpack.c.h.b16 %v2979
        %v3108 = vunpack.c.l.b16 %v2980
        %v3109 = vunpack.c.h.b16 %v2980
        %v3110 = vunpack.c.l.b16 %v2981
        %v3111 = vunpack.c.h.b16 %v2981
        %v3112 = vunpack.c.l.b16 %v2982
        %v3113 = vunpack.c.h.b16 %v2982
        %v3114 = vunpack.c.l.b16 %v2983
        %v3115 = vunpack.c.h.b16 %v2983
        %v3116 = vunpack.c.l.b16 %v2984
        %v3117 = vunpack.c.h.b16 %v2984
        %v3118 = vunpack.c.l.b16 %v2985
        %v3119 = vunpack.c.h.b16 %v2985
        %v3120 = vunpack.c.l.b16 %v2986
        %v3121 = vunpack.c.h.b16 %v2986
        %v3122 = vunpack.c.l.b16 %v2987
        %v3123 = vunpack.c.h.b16 %v2987
        %v3124 = vunpack.c.l.b16 %v2988
        %v3125 = vunpack.c.h.b16 %v2988
        %v3126 = vunpack.c.l.b16 %v2989
        %v3127 = vunpack.c.h.b16 %v2989
        %v3128 = vunpack.c.l.b16 %v2990
        %v3129 = vunpack.c.h.b16 %v2990
        %v3130 = vunpack.c.l.b16 %v2991
        %v3131 = vunpack.c.h.b16 %v2991
        %v3132 = vunpack.c.l.b16 %v2992
        %v3133 = vunpack.c.h.b16 %v2992
        %v3134 = vunpack.c.l.b16 %v2993
        %v3135 = vunpack.c.h.b16 %v2993
        %v3136 = vunpack.c.l.b16 %v2994
        %v3137 = vunpack.c.h.b16 %v2994
        %v3138 = vunpack.c.l.b16 %v2995
        %v3139 = vunpack.c.h.b16 %v2995
        %v3140 = vunpack.c.l.b16 %v2996
        %v3141 = vunpack.c.h.b16 %v2996
        %v3142 = vunpack.c.l.b16 %v2997
        %v3143 = vunpack.c.h.b16 %v2997
        %v3144 = vunpack.c.l.b16 %v2998
        %v3145 = vunpack.c.h.b16 %v2998
        %v3146 = vunpack.c.l.b16 %v2999
        %v3147 = vunpack.c.h.b16 %v2999
        %v3148 = vunpack.c.l.b16 %v3000
        %v3149 = vunpack.c.h.b16 %v3000
        %v3150 = vunpack.c.l.b16 %v3001
        %v3151 = vunpack.c.h.b16 %v3001
        %v3152 = vunpack.c.l.b16 %v3002
        %v3153 = vunpack.c.h.b16 %v3002
        %v3154 = vunpack.c.l.b16 %v3003
        %v3155 = vunpack.c.h.b16 %v3003
        %v3156 = vunpack.c.l.b16 %v3004
        %v3157 = vunpack.c.h.b16 %v3004
        %v3158 = vunpack.c.l.b16 %v3005
        %v3159 = vunpack.c.h.b16 %v3005
        %v3160 = vunpack.c.l.b16 %v3006
        %v3161 = vunpack.c.h.b16 %v3006
        %v3162 = vunpack.c.l.b16 %v3007
        %v3163 = vunpack.c.h.b16 %v3007
        %v3164 = vunpack.c.l.b16 %v3008
        %v3165 = vunpack.c.h.b16 %v3008
        %v3166 = vunpack.c.l.b16 %v3009
        %v3167 = vunpack.c.h.b16 %v3009
        %v3168 = vunpack.c.l.b16 %v3010
        %v3169 = vunpack.c.h.b16 %v3010
        %v3170 = vunpack.c.l.b16 %v3011
        %v3171 = vunpack.c.h.b16 %v3011
        %v3172 = vunpack.c.l.b16 %v3012
        %v3173 = vunpack.c.h.b16 %v3012
        %v3174 = vunpack.c.l.b16 %v3013
        %v3175 = vunpack.c.h.b16 %v3013
        %v3176 = vunpack.c.l.b16 %v3014
        %v3177 = vunpack.c.h.b16 %v3014
        %v3178 = vunpack.c.l.b16 %v3015
        %v3179 = vunpack.c.h.b16 %v3015
        %v3180 = vunpack.c.l.b16 %v3016
        %v3181 = vunpack.c.h.b16 %v3016
        %v3182 = vpack.c.b16 %v3078, %v3074
        %v3183 = vpack.c.b16 %v3079, %v3075
        %v3184 = vpack.c.b16 %v3080, %v3076
        %v3185 = vpack.c.b16 %v3081, %v3077
        %v3186 = vpack.c.b16 %v3086, %v3082
        %v3187 = vpack.c.b16 %v3087, %v3083
        %v3188 = vpack.c.b16 %v3088, %v3084
        %v3189 = vpack.c.b16 %v3089, %v3085
        %v3190 = vpack.c.b16 %v3094, %v3090
        %v3191 = vpack.c.b16 %v3095, %v3091
        %v3192 = vpack.c.b16 %v3096, %v3092
        %v3193 = vpack.c.b16 %v3097, %v3093
        %v3194 = vpack.c.b16 %v3102, %v3098
        %v3195 = vpack.c.b16 %v3103, %v3099
        %v3196 = vpack.c.b16 %v3104, %v3100
        %v3197 = vpack.c.b16 %v3105, %v3101
        %v3198 = vpack.c.b16 %v3110, %v3106
        %v3199 = vpack.c.b16 %v3111, %v3107
        %v3200 = vpack.c.b16 %v3112, %v3108
        %v3201 = vpack.c.b16 %v3113, %v3109
        %v3202 = vpack.c.b16 %v3118, %v3114
        %v3203 = vpack.c.b16 %v3119, %v3115
        %v3204 = vpack.c.b16 %v3120, %v3116
        %v3205 = vpack.c.b16 %v3121, %v3117
        %v3206 = vpack.c.b16 %v3126, %v3122
        %v3207 = vpack.c.b16 %v3127, %v3123
        %v3208 = vpack.c.b16 %v3128, %v3124
        %v3209 = vpack.c.b16 %v3129, %v3125
        %v3210 = vpack.c.b16 %v3134, %v3130
        %v3211 = vpack.c.b16 %v3135, %v3131
        %v3212 = vpack.c.b16 %v3136, %v3132
        %v3213 = vpack.c.b16 %v3137, %v3133
        %v3214 = vpack.c.b16 %v3142, %v3138
        %v3215 = vpack.c.b16 %v3143, %v3139
        %v3216 = vpack.c.b16 %v3144, %v3140
        %v3217 = vpack.c.b16 %v3145, %v3141
        %v3218 = vpack.c.b16 %v3150, %v3146
        %v3219 = vpack.c.b16 %v3151, %v3147
        %v3220 = vpack.c.b16 %v3152, %v3148
        %v3221 = vpack.c.b16 %v3153, %v3149
        %v3222 = vpack.c.b16 %v3158, %v3154
        %v3223 = vpack.c.b16 %v3159, %v3155
        %v3224 = vpack.c.b16 %v3160, %v3156
        %v3225 = vpack.c.b16 %v3161, %v3157
        %v3226 = vpack.c.b16 %v3166, %v3162
        %v3227 = vpack.c.b16 %v3167, %v3163
        %v3228 = vpack.c.b16 %v3168, %v3164
        %v3229 = vpack.c.b16 %v3169, %v3165
        %v3230 = vpack.c.b16 %v3174, %v3170
        %v3231 = vpack.c.b16 %v3175, %v3171
        %v3232 = vpack.c.b16 %v3176, %v3172
        %v3233 = vpack.c.b16 %v3177, %v3173
        %v3234 = vpack.c.b16 %v3178, %v3178
        %v3235 = vpack.c.b16 %v3179, %v3179
        %v3236 = vpack.c.b16 %v3180, %v3180
        %v3237 = vpack.c.b16 %v3181, %v3181
        %v3291 = vsel %vm2376, %v3018, 0
        %v3294 = vsel %vm2380, %v3234, 0
        %v3297 = vsel %vm2380, %v3235, 0
        %v3300 = vsel %vm2380, %v3236, 0
        %v3303 = vsel %vm2380, %v3237, 0
        %3305 = vmatprep.subr.bf16.mxu0 %v3183
        %3306 = vmatpush1.bf16.msra.mxu0 %v3182
        %3307 = vmatprep.subr.bf16.mxu0 %v3187
        %3308 = vmatpush1.bf16.msra.mxu0 %v3186
        %3309 = vmatprep.subr.bf16.mxu0 %v3191
        %3310 = vmatpush1.bf16.msra.mxu0 %v3190
        %3311 = vmatprep.subr.bf16.mxu0 %v3195
        %3312 = vmatpush1.bf16.msra.mxu0 %v3194
        %3313 = vmatprep.subr.bf16.mxu0 %v3199
        %3314 = vmatpush1.bf16.msra.mxu0 %v3198
        %3315 = vmatprep.subr.bf16.mxu0 %v3203
        %3316 = vmatpush1.bf16.msra.mxu0 %v3202
        %3317 = vmatprep.subr.bf16.mxu0 %v3207
        %3318 = vmatpush1.bf16.msra.mxu0 %v3206
        %3319 = vmatprep.subr.bf16.mxu0 %v3211
        %3320 = vmatpush1.bf16.msra.mxu0 %v3210
        %3321 = vmatprep.subr.bf16.mxu0 %v3215
        %3322 = vmatpush1.bf16.msra.mxu0 %v3214
        %3323 = vmatprep.subr.bf16.mxu0 %v3219
        %3324 = vmatpush1.bf16.msra.mxu0 %v3218
        %3325 = vmatprep.subr.bf16.mxu0 %v3223
        %3326 = vmatpush1.bf16.msra.mxu0 %v3222
        %3327 = vmatprep.subr.bf16.mxu0 %v3227
        %3328 = vmatpush1.bf16.msra.mxu0 %v3226
        %3329 = vmatprep.subr.bf16.mxu0 %v3231
        %3330 = vmatpush1.bf16.msra.mxu0 %v3230
        %3331 = vmatprep.subr.bf16.mxu0 %v3297
        %3332 = vmatpush1.bf16.msra.mxu0 %v3294
        %3333 = vmatprep.subr.bf16.mxu0 0
        %3334 = vmatpush1.bf16.msra.mxu0 0
        %3335 = vmatprep.subr.bf16.mxu0 0
        %3336 = vmatpush1.bf16.msra.mxu0 0
        %3337 = vmatprep.mubr.bf16.mxu0 %v3291
        %3338 = vmatmul.mubr.bf16.gmra.mrb[0].mxu0 %v3017
        %v3339 = vpop.f32.mrb[0].mxu0
        %v3340 = vadd.f32 0.0, %v3339
        %v3341 = vpop.f32.mrb[0].mxu0
        %v3342 = vadd.f32 0.0, %v3341
        %v3343 = vpop.f32.mrb[0].mxu0
        %v3344 = vpop.f32.mrb[0].mxu0
        %3345 = vdwg.mxu0
        %3346 = vmatprep.subr.bf16.mxu0 %v3185
        %3347 = vmatpush1.bf16.msra.mxu0 %v3184
        %3348 = vmatprep.subr.bf16.mxu0 %v3189
        %3349 = vmatpush1.bf16.msra.mxu0 %v3188
        %3350 = vmatprep.subr.bf16.mxu0 %v3193
        %3351 = vmatpush1.bf16.msra.mxu0 %v3192
        %3352 = vmatprep.subr.bf16.mxu0 %v3197
        %3353 = vmatpush1.bf16.msra.mxu0 %v3196
        %3354 = vmatprep.subr.bf16.mxu0 %v3201
        %3355 = vmatpush1.bf16.msra.mxu0 %v3200
        %3356 = vmatprep.subr.bf16.mxu0 %v3205
        %3357 = vmatpush1.bf16.msra.mxu0 %v3204
        %3358 = vmatprep.subr.bf16.mxu0 %v3209
        %3359 = vmatpush1.bf16.msra.mxu0 %v3208
        %3360 = vmatprep.subr.bf16.mxu0 %v3213
        %3361 = vmatpush1.bf16.msra.mxu0 %v3212
        %3362 = vmatprep.subr.bf16.mxu0 %v3217
        %3363 = vmatpush1.bf16.msra.mxu0 %v3216
        %3364 = vmatprep.subr.bf16.mxu0 %v3221
        %3365 = vmatpush1.bf16.msra.mxu0 %v3220
        %3366 = vmatprep.subr.bf16.mxu0 %v3225
        %3367 = vmatpush1.bf16.msra.mxu0 %v3224
        %3368 = vmatprep.subr.bf16.mxu0 %v3229
        %3369 = vmatpush1.bf16.msra.mxu0 %v3228
        %3370 = vmatprep.subr.bf16.mxu0 %v3233
        %3371 = vmatpush1.bf16.msra.mxu0 %v3232
        %3372 = vmatprep.subr.bf16.mxu0 %v3303
        %3373 = vmatpush1.bf16.msra.mxu0 %v3300
        %3374 = vmatprep.subr.bf16.mxu0 0
        %3375 = vmatpush1.bf16.msra.mxu0 0
        %3376 = vmatprep.subr.bf16.mxu0 0
        %3377 = vmatpush1.bf16.msra.mxu0 0
        %3378 = vmatprep.mubr.bf16.mxu0 %v3291
        %3379 = vmatmul.mubr.bf16.gmra.mrb[0].mxu0 %v3017
        %v3380 = vpop.f32.mrb[0].mxu0
        %v3381 = vadd.f32 0.0, %v3380
        %v3382 = vpop.f32.mrb[0].mxu0
        %v3383 = vadd.f32 0.0, %v3382
        %v3384 = vpop.f32.mrb[0].mxu0
        %v3385 = vpop.f32.mrb[0].mxu0
        %3386 = vdwg.mxu0
        %v3391 = vcombine.low %v3340, %v3342
        %v3392 = vcombine.low %v3381, %v3383
        %v3394 = vunpack.c.l.s4 1966171168
        %v3395 = vunpack.c.0.s8 %v3394
        %v3396 = vlaneseq
        %v3397 = vshrl.u32 %v3396, 7
        %v3398 = vsub.s32 %v3395, %v3397
        %v3399 = vrot.slane %v3391, %v3398
        %v3401 = vunpack.c.l.s4 1966171168
        %v3402 = vunpack.c.0.s8 %v3401
        %v3403 = vlaneseq
        %v3404 = vshrl.u32 %v3403, 7
        %v3405 = vsub.s32 %v3402, %v3404
        %v3406 = vrot.slane %v3392, %v3405
        %v3407 = vcombine.low %v3399, %v3406
        %v3409 = vunpack.c.l.s4 1966171168
        %v3410 = vunpack.c.0.s8 %v3409
        %v3411 = vlaneseq
        %v3412 = vshrl.u32 %v3411, 7
        %v3413 = vsub.s32 %v3410, %v3412
        %v3414 = vrot.slane %v3407, %v3413
        %v3416 = vadd.f32 %v2961, %v3414
        %s3417 = scalar_lea.vmem %s385, 1296 [#allocation9]
        %v3418 = vld [vmem:[%s3417] sm:$0xff]
        %v3419 = vld [vmem:[%s3417 + $0x8] sm:$0xff]
        %v3420 = vld [vmem:[%s3417 + $0x10] sm:$0xff]
        %v3421 = vld [vmem:[%s3417 + $0x18] sm:$0xff]
        %v3422 = vld [vmem:[%s3417 + $0x20] sm:$0xff]
        %v3423 = vld [vmem:[%s3417 + $0x28] sm:$0xff]
        %v3424 = vld [vmem:[%s3417 + $0x30] sm:$0xff]
        %v3425 = vld [vmem:[%s3417 + $0x38] sm:$0xff]
        %v3426 = vld [vmem:[%s3417 + $0x40] sm:$0xff]
        %v3427 = vld [vmem:[%s3417 + $0x48] sm:$0xff]
        %v3428 = vld [vmem:[%s3417 + $0x50] sm:$0xff]
        %v3429 = vld [vmem:[%s3417 + $0x58] sm:$0xff]
        %v3430 = vld [vmem:[%s3417 + $0x60] sm:$0xff]
        %v3431 = vld [vmem:[%s3417 + $0x68] sm:$0xff]
        %v3432 = vld [vmem:[%s3417 + $0x70] sm:$0xff]
        %v3433 = vld [vmem:[%s3417 + $0x78] sm:$0xff]
        %v3434 = vld [vmem:[%s3417 + $0x80] sm:$0xff]
        %v3435 = vld [vmem:[%s3417 + $0x88] sm:$0xff]
        %v3436 = vld [vmem:[%s3417 + $0x90] sm:$0xff]
        %v3437 = vld [vmem:[%s3417 + $0x98] sm:$0xff]
        %v3438 = vld [vmem:[%s3417 + $0xa0] sm:$0xff]
        %v3439 = vld [vmem:[%s3417 + $0xa8] sm:$0xff]
        %v3440 = vld [vmem:[%s3417 + $0xb0] sm:$0xff]
        %v3441 = vld [vmem:[%s3417 + $0xb8] sm:$0xff]
        %v3442 = vld [vmem:[%s3417 + $0xc0] sm:$0xff]
        %v3443 = vld [vmem:[%s3417 + $0xc8] sm:$0xff]
        %v3444 = vld [vmem:[%s3417 + $0xd0] sm:$0xff]
        %v3445 = vld [vmem:[%s3417 + $0xd8] sm:$0xff]
        %v3446 = vld [vmem:[%s3417 + $0xe0] sm:$0xff]
        %v3447 = vld [vmem:[%s3417 + $0xe8] sm:$0xff]
        %v3448 = vld [vmem:[%s3417 + $0xf0] sm:$0xff]
        %v3449 = vld [vmem:[%s3417 + $0xf8] sm:$0xff]
        %v3450 = vld [vmem:[%s3417 + $0x100] sm:$0xff]
        %v3451 = vld [vmem:[%s3417 + $0x108] sm:$0xff]
        %v3452 = vld [vmem:[%s3417 + $0x110] sm:$0xff]
        %v3453 = vld [vmem:[%s3417 + $0x118] sm:$0xff]
        %v3454 = vld [vmem:[%s3417 + $0x120] sm:$0xff]
        %v3455 = vld [vmem:[%s3417 + $0x128] sm:$0xff]
        %v3456 = vld [vmem:[%s3417 + $0x130] sm:$0xff]
        %v3457 = vld [vmem:[%s3417 + $0x138] sm:$0xff]
        %v3458 = vld [vmem:[%s3417 + $0x140] sm:$0xff]
        %v3459 = vld [vmem:[%s3417 + $0x148] sm:$0xff]
        %v3460 = vld [vmem:[%s3417 + $0x150] sm:$0xff]
        %v3461 = vld [vmem:[%s3417 + $0x158] sm:$0xff]
        %v3462 = vld [vmem:[%s3417 + $0x160] sm:$0xff]
        %v3463 = vld [vmem:[%s3417 + $0x168] sm:$0xff]
        %v3464 = vld [vmem:[%s3417 + $0x170] sm:$0xff]
        %v3465 = vld [vmem:[%s3417 + $0x178] sm:$0xff]
        %v3466 = vld [vmem:[%s3417 + $0x180] sm:$0xff]
        %v3467 = vld [vmem:[%s3417 + $0x188] sm:$0xff]
        %v3468 = vld [vmem:[%s3417 + $0x190] sm:$0xff]
        %v3469 = vld [vmem:[%s3417 + $0x198] sm:$0xff]
        %v3470 = vld [vmem:[%s3417 + $0x1a0] sm:$0xff]
        %v3471 = vld [vmem:[%s3417 + $0x1a8] sm:$0xff]
        %v3472 = vrot.slane %v2050, 3
        %v3473 = vrot.slane %v2051, 3
        %v3529 = vunpack.c.l.b16 %v3418
        %v3530 = vunpack.c.h.b16 %v3418
        %v3531 = vunpack.c.l.b16 %v3419
        %v3532 = vunpack.c.h.b16 %v3419
        %v3533 = vunpack.c.l.b16 %v3420
        %v3534 = vunpack.c.h.b16 %v3420
        %v3535 = vunpack.c.l.b16 %v3421
        %v3536 = vunpack.c.h.b16 %v3421
        %v3537 = vunpack.c.l.b16 %v3422
        %v3538 = vunpack.c.h.b16 %v3422
        %v3539 = vunpack.c.l.b16 %v3423
        %v3540 = vunpack.c.h.b16 %v3423
        %v3541 = vunpack.c.l.b16 %v3424
        %v3542 = vunpack.c.h.b16 %v3424
        %v3543 = vunpack.c.l.b16 %v3425
        %v3544 = vunpack.c.h.b16 %v3425
        %v3545 = vunpack.c.l.b16 %v3426
        %v3546 = vunpack.c.h.b16 %v3426
        %v3547 = vunpack.c.l.b16 %v3427
        %v3548 = vunpack.c.h.b16 %v3427
        %v3549 = vunpack.c.l.b16 %v3428
        %v3550 = vunpack.c.h.b16 %v3428
        %v3551 = vunpack.c.l.b16 %v3429
        %v3552 = vunpack.c.h.b16 %v3429
        %v3553 = vunpack.c.l.b16 %v3430
        %v3554 = vunpack.c.h.b16 %v3430
        %v3555 = vunpack.c.l.b16 %v3431
        %v3556 = vunpack.c.h.b16 %v3431
        %v3557 = vunpack.c.l.b16 %v3432
        %v3558 = vunpack.c.h.b16 %v3432
        %v3559 = vunpack.c.l.b16 %v3433
        %v3560 = vunpack.c.h.b16 %v3433
        %v3561 = vunpack.c.l.b16 %v3434
        %v3562 = vunpack.c.h.b16 %v3434
        %v3563 = vunpack.c.l.b16 %v3435
        %v3564 = vunpack.c.h.b16 %v3435
        %v3565 = vunpack.c.l.b16 %v3436
        %v3566 = vunpack.c.h.b16 %v3436
        %v3567 = vunpack.c.l.b16 %v3437
        %v3568 = vunpack.c.h.b16 %v3437
        %v3569 = vunpack.c.l.b16 %v3438
        %v3570 = vunpack.c.h.b16 %v3438
        %v3571 = vunpack.c.l.b16 %v3439
        %v3572 = vunpack.c.h.b16 %v3439
        %v3573 = vunpack.c.l.b16 %v3440
        %v3574 = vunpack.c.h.b16 %v3440
        %v3575 = vunpack.c.l.b16 %v3441
        %v3576 = vunpack.c.h.b16 %v3441
        %v3577 = vunpack.c.l.b16 %v3442
        %v3578 = vunpack.c.h.b16 %v3442
        %v3579 = vunpack.c.l.b16 %v3443
        %v3580 = vunpack.c.h.b16 %v3443
        %v3581 = vunpack.c.l.b16 %v3444
        %v3582 = vunpack.c.h.b16 %v3444
        %v3583 = vunpack.c.l.b16 %v3445
        %v3584 = vunpack.c.h.b16 %v3445
        %v3585 = vunpack.c.l.b16 %v3446
        %v3586 = vunpack.c.h.b16 %v3446
        %v3587 = vunpack.c.l.b16 %v3447
        %v3588 = vunpack.c.h.b16 %v3447
        %v3589 = vunpack.c.l.b16 %v3448
        %v3590 = vunpack.c.h.b16 %v3448
        %v3591 = vunpack.c.l.b16 %v3449
        %v3592 = vunpack.c.h.b16 %v3449
        %v3593 = vunpack.c.l.b16 %v3450
        %v3594 = vunpack.c.h.b16 %v3450
        %v3595 = vunpack.c.l.b16 %v3451
        %v3596 = vunpack.c.h.b16 %v3451
        %v3597 = vunpack.c.l.b16 %v3452
        %v3598 = vunpack.c.h.b16 %v3452
        %v3599 = vunpack.c.l.b16 %v3453
        %v3600 = vunpack.c.h.b16 %v3453
        %v3601 = vunpack.c.l.b16 %v3454
        %v3602 = vunpack.c.h.b16 %v3454
        %v3603 = vunpack.c.l.b16 %v3455
        %v3604 = vunpack.c.h.b16 %v3455
        %v3605 = vunpack.c.l.b16 %v3456
        %v3606 = vunpack.c.h.b16 %v3456
        %v3607 = vunpack.c.l.b16 %v3457
        %v3608 = vunpack.c.h.b16 %v3457
        %v3609 = vunpack.c.l.b16 %v3458
        %v3610 = vunpack.c.h.b16 %v3458
        %v3611 = vunpack.c.l.b16 %v3459
        %v3612 = vunpack.c.h.b16 %v3459
        %v3613 = vunpack.c.l.b16 %v3460
        %v3614 = vunpack.c.h.b16 %v3460
        %v3615 = vunpack.c.l.b16 %v3461
        %v3616 = vunpack.c.h.b16 %v3461
        %v3617 = vunpack.c.l.b16 %v3462
        %v3618 = vunpack.c.h.b16 %v3462
        %v3619 = vunpack.c.l.b16 %v3463
        %v3620 = vunpack.c.h.b16 %v3463
        %v3621 = vunpack.c.l.b16 %v3464
        %v3622 = vunpack.c.h.b16 %v3464
        %v3623 = vunpack.c.l.b16 %v3465
        %v3624 = vunpack.c.h.b16 %v3465
        %v3625 = vunpack.c.l.b16 %v3466
        %v3626 = vunpack.c.h.b16 %v3466
        %v3627 = vunpack.c.l.b16 %v3467
        %v3628 = vunpack.c.h.b16 %v3467
        %v3629 = vunpack.c.l.b16 %v3468
        %v3630 = vunpack.c.h.b16 %v3468
        %v3631 = vunpack.c.l.b16 %v3469
        %v3632 = vunpack.c.h.b16 %v3469
        %v3633 = vunpack.c.l.b16 %v3470
        %v3634 = vunpack.c.h.b16 %v3470
        %v3635 = vunpack.c.l.b16 %v3471
        %v3636 = vunpack.c.h.b16 %v3471
        %v3637 = vpack.c.b16 %v3533, %v3529
        %v3638 = vpack.c.b16 %v3534, %v3530
        %v3639 = vpack.c.b16 %v3535, %v3531
        %v3640 = vpack.c.b16 %v3536, %v3532
        %v3641 = vpack.c.b16 %v3541, %v3537
        %v3642 = vpack.c.b16 %v3542, %v3538
        %v3643 = vpack.c.b16 %v3543, %v3539
        %v3644 = vpack.c.b16 %v3544, %v3540
        %v3645 = vpack.c.b16 %v3549, %v3545
        %v3646 = vpack.c.b16 %v3550, %v3546
        %v3647 = vpack.c.b16 %v3551, %v3547
        %v3648 = vpack.c.b16 %v3552, %v3548
        %v3649 = vpack.c.b16 %v3557, %v3553
        %v3650 = vpack.c.b16 %v3558, %v3554
        %v3651 = vpack.c.b16 %v3559, %v3555
        %v3652 = vpack.c.b16 %v3560, %v3556
        %v3653 = vpack.c.b16 %v3565, %v3561
        %v3654 = vpack.c.b16 %v3566, %v3562
        %v3655 = vpack.c.b16 %v3567, %v3563
        %v3656 = vpack.c.b16 %v3568, %v3564
        %v3657 = vpack.c.b16 %v3573, %v3569
        %v3658 = vpack.c.b16 %v3574, %v3570
        %v3659 = vpack.c.b16 %v3575, %v3571
        %v3660 = vpack.c.b16 %v3576, %v3572
        %v3661 = vpack.c.b16 %v3581, %v3577
        %v3662 = vpack.c.b16 %v3582, %v3578
        %v3663 = vpack.c.b16 %v3583, %v3579
        %v3664 = vpack.c.b16 %v3584, %v3580
        %v3665 = vpack.c.b16 %v3589, %v3585
        %v3666 = vpack.c.b16 %v3590, %v3586
        %v3667 = vpack.c.b16 %v3591, %v3587
        %v3668 = vpack.c.b16 %v3592, %v3588
        %v3669 = vpack.c.b16 %v3597, %v3593
        %v3670 = vpack.c.b16 %v3598, %v3594
        %v3671 = vpack.c.b16 %v3599, %v3595
        %v3672 = vpack.c.b16 %v3600, %v3596
        %v3673 = vpack.c.b16 %v3605, %v3601
        %v3674 = vpack.c.b16 %v3606, %v3602
        %v3675 = vpack.c.b16 %v3607, %v3603
        %v3676 = vpack.c.b16 %v3608, %v3604
        %v3677 = vpack.c.b16 %v3613, %v3609
        %v3678 = vpack.c.b16 %v3614, %v3610
        %v3679 = vpack.c.b16 %v3615, %v3611
        %v3680 = vpack.c.b16 %v3616, %v3612
        %v3681 = vpack.c.b16 %v3621, %v3617
        %v3682 = vpack.c.b16 %v3622, %v3618
        %v3683 = vpack.c.b16 %v3623, %v3619
        %v3684 = vpack.c.b16 %v3624, %v3620
        %v3685 = vpack.c.b16 %v3629, %v3625
        %v3686 = vpack.c.b16 %v3630, %v3626
        %v3687 = vpack.c.b16 %v3631, %v3627
        %v3688 = vpack.c.b16 %v3632, %v3628
        %v3689 = vpack.c.b16 %v3633, %v3633
        %v3690 = vpack.c.b16 %v3634, %v3634
        %v3691 = vpack.c.b16 %v3635, %v3635
        %v3692 = vpack.c.b16 %v3636, %v3636
        %v3746 = vsel %vm2376, %v3473, 0
        %v3749 = vsel %vm2380, %v3689, 0
        %v3752 = vsel %vm2380, %v3690, 0
        %v3755 = vsel %vm2380, %v3691, 0
        %v3758 = vsel %vm2380, %v3692, 0
        %3760 = vmatprep.subr.bf16.mxu0 %v3638
        %3761 = vmatpush1.bf16.msra.mxu0 %v3637
        %3762 = vmatprep.subr.bf16.mxu0 %v3642
        %3763 = vmatpush1.bf16.msra.mxu0 %v3641
        %3764 = vmatprep.subr.bf16.mxu0 %v3646
        %3765 = vmatpush1.bf16.msra.mxu0 %v3645
        %3766 = vmatprep.subr.bf16.mxu0 %v3650
        %3767 = vmatpush1.bf16.msra.mxu0 %v3649
        %3768 = vmatprep.subr.bf16.mxu0 %v3654
        %3769 = vmatpush1.bf16.msra.mxu0 %v3653
        %3770 = vmatprep.subr.bf16.mxu0 %v3658
        %3771 = vmatpush1.bf16.msra.mxu0 %v3657
        %3772 = vmatprep.subr.bf16.mxu0 %v3662
        %3773 = vmatpush1.bf16.msra.mxu0 %v3661
        %3774 = vmatprep.subr.bf16.mxu0 %v3666
        %3775 = vmatpush1.bf16.msra.mxu0 %v3665
        %3776 = vmatprep.subr.bf16.mxu0 %v3670
        %3777 = vmatpush1.bf16.msra.mxu0 %v3669
        %3778 = vmatprep.subr.bf16.mxu0 %v3674
        %3779 = vmatpush1.bf16.msra.mxu0 %v3673
        %3780 = vmatprep.subr.bf16.mxu0 %v3678
        %3781 = vmatpush1.bf16.msra.mxu0 %v3677
        %3782 = vmatprep.subr.bf16.mxu0 %v3682
        %3783 = vmatpush1.bf16.msra.mxu0 %v3681
        %3784 = vmatprep.subr.bf16.mxu0 %v3686
        %3785 = vmatpush1.bf16.msra.mxu0 %v3685
        %3786 = vmatprep.subr.bf16.mxu0 %v3752
        %3787 = vmatpush1.bf16.msra.mxu0 %v3749
        %3788 = vmatprep.subr.bf16.mxu0 0
        %3789 = vmatpush1.bf16.msra.mxu0 0
        %3790 = vmatprep.subr.bf16.mxu0 0
        %3791 = vmatpush1.bf16.msra.mxu0 0
        %3792 = vmatprep.mubr.bf16.mxu0 %v3746
        %3793 = vmatmul.mubr.bf16.gmra.mrb[0].mxu0 %v3472
        %v3794 = vpop.f32.mrb[0].mxu0
        %v3795 = vadd.f32 0.0, %v3794
        %v3796 = vpop.f32.mrb[0].mxu0
        %v3797 = vadd.f32 0.0, %v3796
        %v3798 = vpop.f32.mrb[0].mxu0
        %v3799 = vpop.f32.mrb[0].mxu0
        %3800 = vdwg.mxu0
        %3801 = vmatprep.subr.bf16.mxu0 %v3640
        %3802 = vmatpush1.bf16.msra.mxu0 %v3639
        %3803 = vmatprep.subr.bf16.mxu0 %v3644
        %3804 = vmatpush1.bf16.msra.mxu0 %v3643
        %3805 = vmatprep.subr.bf16.mxu0 %v3648
        %3806 = vmatpush1.bf16.msra.mxu0 %v3647
        %3807 = vmatprep.subr.bf16.mxu0 %v3652
        %3808 = vmatpush1.bf16.msra.mxu0 %v3651
        %3809 = vmatprep.subr.bf16.mxu0 %v3656
        %3810 = vmatpush1.bf16.msra.mxu0 %v3655
        %3811 = vmatprep.subr.bf16.mxu0 %v3660
        %3812 = vmatpush1.bf16.msra.mxu0 %v3659
        %3813 = vmatprep.subr.bf16.mxu0 %v3664
        %3814 = vmatpush1.bf16.msra.mxu0 %v3663
        %3815 = vmatprep.subr.bf16.mxu0 %v3668
        %3816 = vmatpush1.bf16.msra.mxu0 %v3667
        %3817 = vmatprep.subr.bf16.mxu0 %v3672
        %3818 = vmatpush1.bf16.msra.mxu0 %v3671
        %3819 = vmatprep.subr.bf16.mxu0 %v3676
        %3820 = vmatpush1.bf16.msra.mxu0 %v3675
        %3821 = vmatprep.subr.bf16.mxu0 %v3680
        %3822 = vmatpush1.bf16.msra.mxu0 %v3679
        %3823 = vmatprep.subr.bf16.mxu0 %v3684
        %3824 = vmatpush1.bf16.msra.mxu0 %v3683
        %3825 = vmatprep.subr.bf16.mxu0 %v3688
        %3826 = vmatpush1.bf16.msra.mxu0 %v3687
        %3827 = vmatprep.subr.bf16.mxu0 %v3758
        %3828 = vmatpush1.bf16.msra.mxu0 %v3755
        %3829 = vmatprep.subr.bf16.mxu0 0
        %3830 = vmatpush1.bf16.msra.mxu0 0
        %3831 = vmatprep.subr.bf16.mxu0 0
        %3832 = vmatpush1.bf16.msra.mxu0 0
        %3833 = vmatprep.mubr.bf16.mxu0 %v3746
        %3834 = vmatmul.mubr.bf16.gmra.mrb[0].mxu0 %v3472
        %v3835 = vpop.f32.mrb[0].mxu0
        %v3836 = vadd.f32 0.0, %v3835
        %v3837 = vpop.f32.mrb[0].mxu0
        %v3838 = vadd.f32 0.0, %v3837
        %v3839 = vpop.f32.mrb[0].mxu0
        %v3840 = vpop.f32.mrb[0].mxu0
        %3841 = vdwg.mxu0
        %v3846 = vcombine.low %v3795, %v3797
        %v3847 = vcombine.low %v3836, %v3838
        %v3849 = vunpack.c.l.s4 1966171168
        %v3850 = vunpack.c.0.s8 %v3849
        %v3851 = vlaneseq
        %v3852 = vshrl.u32 %v3851, 7
        %v3853 = vsub.s32 %v3850, %v3852
        %v3854 = vrot.slane %v3846, %v3853
        %v3856 = vunpack.c.l.s4 1966171168
        %v3857 = vunpack.c.0.s8 %v3856
        %v3858 = vlaneseq
        %v3859 = vshrl.u32 %v3858, 7
        %v3860 = vsub.s32 %v3857, %v3859
        %v3861 = vrot.slane %v3847, %v3860
        %v3862 = vcombine.low %v3854, %v3861
        %v3864 = vunpack.c.l.s4 1966171168
        %v3865 = vunpack.c.0.s8 %v3864
        %v3866 = vlaneseq
        %v3867 = vshrl.u32 %v3866, 7
        %v3868 = vsub.s32 %v3865, %v3867
        %v3869 = vrot.slane %v3862, %v3868
        %v3871 = vadd.f32 %v3416, %v3869
        %v3874 = vrot.slane %v2037, 1
        %v3875 = vrot.slane %v2038, 1
        %v3878 = vmax.f32 %v2037, %v3874
        %v3879 = vmax.f32 %v2038, %v3875
        %v3880 = vpack.c.bf16 %v3878, %v3878
        %v3881 = vpack.c.bf16 %v3879, %v3879
        %s3882 = scalar_lea.vmem %s385, 1728 [#allocation9]
        %v3883 = vld [vmem:[%s3882] sm:$0xff]
        %v3884 = vld [vmem:[%s3882 + $0x8] sm:$0xff]
        %v3885 = vld [vmem:[%s3882 + $0x10] sm:$0xff]
        %v3886 = vld [vmem:[%s3882 + $0x18] sm:$0xff]
        %v3887 = vld [vmem:[%s3882 + $0x20] sm:$0xff]
        %v3888 = vld [vmem:[%s3882 + $0x28] sm:$0xff]
        %v3889 = vld [vmem:[%s3882 + $0x30] sm:$0xff]
        %v3890 = vld [vmem:[%s3882 + $0x38] sm:$0xff]
        %v3891 = vld [vmem:[%s3882 + $0x40] sm:$0xff]
        %v3892 = vld [vmem:[%s3882 + $0x48] sm:$0xff]
        %v3893 = vld [vmem:[%s3882 + $0x50] sm:$0xff]
        %v3894 = vld [vmem:[%s3882 + $0x58] sm:$0xff]
        %v3895 = vld [vmem:[%s3882 + $0x60] sm:$0xff]
        %v3896 = vld [vmem:[%s3882 + $0x68] sm:$0xff]
        %v3897 = vld [vmem:[%s3882 + $0x70] sm:$0xff]
        %v3898 = vld [vmem:[%s3882 + $0x78] sm:$0xff]
        %v3899 = vld [vmem:[%s3882 + $0x80] sm:$0xff]
        %v3900 = vld [vmem:[%s3882 + $0x88] sm:$0xff]
        %v3901 = vld [vmem:[%s3882 + $0x90] sm:$0xff]
        %v3902 = vld [vmem:[%s3882 + $0x98] sm:$0xff]
        %v3903 = vld [vmem:[%s3882 + $0xa0] sm:$0xff]
        %v3904 = vld [vmem:[%s3882 + $0xa8] sm:$0xff]
        %v3905 = vld [vmem:[%s3882 + $0xb0] sm:$0xff]
        %v3906 = vld [vmem:[%s3882 + $0xb8] sm:$0xff]
        %v3907 = vld [vmem:[%s3882 + $0xc0] sm:$0xff]
        %v3908 = vld [vmem:[%s3882 + $0xc8] sm:$0xff]
        %v3909 = vld [vmem:[%s3882 + $0xd0] sm:$0xff]
        %v3910 = vld [vmem:[%s3882 + $0xd8] sm:$0xff]
        %v3911 = vld [vmem:[%s3882 + $0xe0] sm:$0xff]
        %v3912 = vld [vmem:[%s3882 + $0xe8] sm:$0xff]
        %v3913 = vld [vmem:[%s3882 + $0xf0] sm:$0xff]
        %v3914 = vld [vmem:[%s3882 + $0xf8] sm:$0xff]
        %v3915 = vld [vmem:[%s3882 + $0x100] sm:$0xff]
        %v3916 = vld [vmem:[%s3882 + $0x108] sm:$0xff]
        %v3917 = vld [vmem:[%s3882 + $0x110] sm:$0xff]
        %v3918 = vld [vmem:[%s3882 + $0x118] sm:$0xff]
        %v3919 = vld [vmem:[%s3882 + $0x120] sm:$0xff]
        %v3920 = vld [vmem:[%s3882 + $0x128] sm:$0xff]
        %v3921 = vld [vmem:[%s3882 + $0x130] sm:$0xff]
        %v3922 = vld [vmem:[%s3882 + $0x138] sm:$0xff]
        %v3923 = vld [vmem:[%s3882 + $0x140] sm:$0xff]
        %v3924 = vld [vmem:[%s3882 + $0x148] sm:$0xff]
        %v3925 = vld [vmem:[%s3882 + $0x150] sm:$0xff]
        %v3926 = vld [vmem:[%s3882 + $0x158] sm:$0xff]
        %v3927 = vld [vmem:[%s3882 + $0x160] sm:$0xff]
        %v3928 = vld [vmem:[%s3882 + $0x168] sm:$0xff]
        %v3929 = vld [vmem:[%s3882 + $0x170] sm:$0xff]
        %v3930 = vld [vmem:[%s3882 + $0x178] sm:$0xff]
        %v3931 = vld [vmem:[%s3882 + $0x180] sm:$0xff]
        %v3932 = vld [vmem:[%s3882 + $0x188] sm:$0xff]
        %v3933 = vld [vmem:[%s3882 + $0x190] sm:$0xff]
        %v3934 = vld [vmem:[%s3882 + $0x198] sm:$0xff]
        %v3935 = vld [vmem:[%s3882 + $0x1a0] sm:$0xff]
        %v3936 = vld [vmem:[%s3882 + $0x1a8] sm:$0xff]
        %v3991 = vunpack.c.l.b16 %v3883
        %v3992 = vunpack.c.h.b16 %v3883
        %v3993 = vunpack.c.l.b16 %v3884
        %v3994 = vunpack.c.h.b16 %v3884
        %v3995 = vunpack.c.l.b16 %v3885
        %v3996 = vunpack.c.h.b16 %v3885
        %v3997 = vunpack.c.l.b16 %v3886
        %v3998 = vunpack.c.h.b16 %v3886
        %v3999 = vunpack.c.l.b16 %v3887
        %v4000 = vunpack.c.h.b16 %v3887
        %v4001 = vunpack.c.l.b16 %v3888
        %v4002 = vunpack.c.h.b16 %v3888
        %v4003 = vunpack.c.l.b16 %v3889
        %v4004 = vunpack.c.h.b16 %v3889
        %v4005 = vunpack.c.l.b16 %v3890
        %v4006 = vunpack.c.h.b16 %v3890
        %v4007 = vunpack.c.l.b16 %v3891
        %v4008 = vunpack.c.h.b16 %v3891
        %v4009 = vunpack.c.l.b16 %v3892
        %v4010 = vunpack.c.h.b16 %v3892
        %v4011 = vunpack.c.l.b16 %v3893
        %v4012 = vunpack.c.h.b16 %v3893
        %v4013 = vunpack.c.l.b16 %v3894
        %v4014 = vunpack.c.h.b16 %v3894
        %v4015 = vunpack.c.l.b16 %v3895
        %v4016 = vunpack.c.h.b16 %v3895
        %v4017 = vunpack.c.l.b16 %v3896
        %v4018 = vunpack.c.h.b16 %v3896
        %v4019 = vunpack.c.l.b16 %v3897
        %v4020 = vunpack.c.h.b16 %v3897
        %v4021 = vunpack.c.l.b16 %v3898
        %v4022 = vunpack.c.h.b16 %v3898
        %v4023 = vunpack.c.l.b16 %v3899
        %v4024 = vunpack.c.h.b16 %v3899
        %v4025 = vunpack.c.l.b16 %v3900
        %v4026 = vunpack.c.h.b16 %v3900
        %v4027 = vunpack.c.l.b16 %v3901
        %v4028 = vunpack.c.h.b16 %v3901
        %v4029 = vunpack.c.l.b16 %v3902
        %v4030 = vunpack.c.h.b16 %v3902
        %v4031 = vunpack.c.l.b16 %v3903
        %v4032 = vunpack.c.h.b16 %v3903
        %v4033 = vunpack.c.l.b16 %v3904
        %v4034 = vunpack.c.h.b16 %v3904
        %v4035 = vunpack.c.l.b16 %v3905
        %v4036 = vunpack.c.h.b16 %v3905
        %v4037 = vunpack.c.l.b16 %v3906
        %v4038 = vunpack.c.h.b16 %v3906
        %v4039 = vunpack.c.l.b16 %v3907
        %v4040 = vunpack.c.h.b16 %v3907
        %v4041 = vunpack.c.l.b16 %v3908
        %v4042 = vunpack.c.h.b16 %v3908
        %v4043 = vunpack.c.l.b16 %v3909
        %v4044 = vunpack.c.h.b16 %v3909
        %v4045 = vunpack.c.l.b16 %v3910
        %v4046 = vunpack.c.h.b16 %v3910
        %v4047 = vunpack.c.l.b16 %v3911
        %v4048 = vunpack.c.h.b16 %v3911
        %v4049 = vunpack.c.l.b16 %v3912
        %v4050 = vunpack.c.h.b16 %v3912
        %v4051 = vunpack.c.l.b16 %v3913
        %v4052 = vunpack.c.h.b16 %v3913
        %v4053 = vunpack.c.l.b16 %v3914
        %v4054 = vunpack.c.h.b16 %v3914
        %v4055 = vunpack.c.l.b16 %v3915
        %v4056 = vunpack.c.h.b16 %v3915
        %v4057 = vunpack.c.l.b16 %v3916
        %v4058 = vunpack.c.h.b16 %v3916
        %v4059 = vunpack.c.l.b16 %v3917
        %v4060 = vunpack.c.h.b16 %v3917
        %v4061 = vunpack.c.l.b16 %v3918
        %v4062 = vunpack.c.h.b16 %v3918
        %v4063 = vunpack.c.l.b16 %v3919
        %v4064 = vunpack.c.h.b16 %v3919
        %v4065 = vunpack.c.l.b16 %v3920
        %v4066 = vunpack.c.h.b16 %v3920
        %v4067 = vunpack.c.l.b16 %v3921
        %v4068 = vunpack.c.h.b16 %v3921
        %v4069 = vunpack.c.l.b16 %v3922
        %v4070 = vunpack.c.h.b16 %v3922
        %v4071 = vunpack.c.l.b16 %v3923
        %v4072 = vunpack.c.h.b16 %v3923
        %v4073 = vunpack.c.l.b16 %v3924
        %v4074 = vunpack.c.h.b16 %v3924
        %v4075 = vunpack.c.l.b16 %v3925
        %v4076 = vunpack.c.h.b16 %v3925
        %v4077 = vunpack.c.l.b16 %v3926
        %v4078 = vunpack.c.h.b16 %v3926
        %v4079 = vunpack.c.l.b16 %v3927
        %v4080 = vunpack.c.h.b16 %v3927
        %v4081 = vunpack.c.l.b16 %v3928
        %v4082 = vunpack.c.h.b16 %v3928
        %v4083 = vunpack.c.l.b16 %v3929
        %v4084 = vunpack.c.h.b16 %v3929
        %v4085 = vunpack.c.l.b16 %v3930
        %v4086 = vunpack.c.h.b16 %v3930
        %v4087 = vunpack.c.l.b16 %v3931
        %v4088 = vunpack.c.h.b16 %v3931
        %v4089 = vunpack.c.l.b16 %v3932
        %v4090 = vunpack.c.h.b16 %v3932
        %v4091 = vunpack.c.l.b16 %v3933
        %v4092 = vunpack.c.h.b16 %v3933
        %v4093 = vunpack.c.l.b16 %v3934
        %v4094 = vunpack.c.h.b16 %v3934
        %v4095 = vunpack.c.l.b16 %v3935
        %v4096 = vunpack.c.h.b16 %v3935
        %v4097 = vunpack.c.l.b16 %v3936
        %v4098 = vunpack.c.h.b16 %v3936
        %v4099 = vpack.c.b16 %v3995, %v3991
        %v4100 = vpack.c.b16 %v3996, %v3992
        %v4101 = vpack.c.b16 %v3997, %v3993
        %v4102 = vpack.c.b16 %v3998, %v3994
        %v4103 = vpack.c.b16 %v4003, %v3999
        %v4104 = vpack.c.b16 %v4004, %v4000
        %v4105 = vpack.c.b16 %v4005, %v4001
        %v4106 = vpack.c.b16 %v4006, %v4002
        %v4107 = vpack.c.b16 %v4011, %v4007
        %v4108 = vpack.c.b16 %v4012, %v4008
        %v4109 = vpack.c.b16 %v4013, %v4009
        %v4110 = vpack.c.b16 %v4014, %v4010
        %v4111 = vpack.c.b16 %v4019, %v4015
        %v4112 = vpack.c.b16 %v4020, %v4016
        %v4113 = vpack.c.b16 %v4021, %v4017
        %v4114 = vpack.c.b16 %v4022, %v4018
        %v4115 = vpack.c.b16 %v4027, %v4023
        %v4116 = vpack.c.b16 %v4028, %v4024
        %v4117 = vpack.c.b16 %v4029, %v4025
        %v4118 = vpack.c.b16 %v4030, %v4026
        %v4119 = vpack.c.b16 %v4035, %v4031
        %v4120 = vpack.c.b16 %v4036, %v4032
        %v4121 = vpack.c.b16 %v4037, %v4033
        %v4122 = vpack.c.b16 %v4038, %v4034
        %v4123 = vpack.c.b16 %v4043, %v4039
        %v4124 = vpack.c.b16 %v4044, %v4040
        %v4125 = vpack.c.b16 %v4045, %v4041
        %v4126 = vpack.c.b16 %v4046, %v4042
        %v4127 = vpack.c.b16 %v4051, %v4047
        %v4128 = vpack.c.b16 %v4052, %v4048
        %v4129 = vpack.c.b16 %v4053, %v4049
        %v4130 = vpack.c.b16 %v4054, %v4050
        %v4131 = vpack.c.b16 %v4059, %v4055
        %v4132 = vpack.c.b16 %v4060, %v4056
        %v4133 = vpack.c.b16 %v4061, %v4057
        %v4134 = vpack.c.b16 %v4062, %v4058
        %v4135 = vpack.c.b16 %v4067, %v4063
        %v4136 = vpack.c.b16 %v4068, %v4064
        %v4137 = vpack.c.b16 %v4069, %v4065
        %v4138 = vpack.c.b16 %v4070, %v4066
        %v4139 = vpack.c.b16 %v4075, %v4071
        %v4140 = vpack.c.b16 %v4076, %v4072
        %v4141 = vpack.c.b16 %v4077, %v4073
        %v4142 = vpack.c.b16 %v4078, %v4074
        %v4143 = vpack.c.b16 %v4083, %v4079
        %v4144 = vpack.c.b16 %v4084, %v4080
        %v4145 = vpack.c.b16 %v4085, %v4081
        %v4146 = vpack.c.b16 %v4086, %v4082
        %v4147 = vpack.c.b16 %v4091, %v4087
        %v4148 = vpack.c.b16 %v4092, %v4088
        %v4149 = vpack.c.b16 %v4093, %v4089
        %v4150 = vpack.c.b16 %v4094, %v4090
        %v4151 = vpack.c.b16 %v4095, %v4095
        %v4152 = vpack.c.b16 %v4096, %v4096
        %v4153 = vpack.c.b16 %v4097, %v4097
        %v4154 = vpack.c.b16 %v4098, %v4098
        %v4208 = vsel %vm2376, %v3881, 0
        %v4211 = vsel %vm2380, %v4151, 0
        %v4214 = vsel %vm2380, %v4152, 0
        %v4217 = vsel %vm2380, %v4153, 0
        %v4220 = vsel %vm2380, %v4154, 0
        %4222 = vmatprep.subr.bf16.mxu0 %v4100
        %4223 = vmatpush1.bf16.msra.mxu0 %v4099
        %4224 = vmatprep.subr.bf16.mxu0 %v4104
        %4225 = vmatpush1.bf16.msra.mxu0 %v4103
        %4226 = vmatprep.subr.bf16.mxu0 %v4108
        %4227 = vmatpush1.bf16.msra.mxu0 %v4107
        %4228 = vmatprep.subr.bf16.mxu0 %v4112
        %4229 = vmatpush1.bf16.msra.mxu0 %v4111
        %4230 = vmatprep.subr.bf16.mxu0 %v4116
        %4231 = vmatpush1.bf16.msra.mxu0 %v4115
        %4232 = vmatprep.subr.bf16.mxu0 %v4120
        %4233 = vmatpush1.bf16.msra.mxu0 %v4119
        %4234 = vmatprep.subr.bf16.mxu0 %v4124
        %4235 = vmatpush1.bf16.msra.mxu0 %v4123
        %4236 = vmatprep.subr.bf16.mxu0 %v4128
        %4237 = vmatpush1.bf16.msra.mxu0 %v4127
        %4238 = vmatprep.subr.bf16.mxu0 %v4132
        %4239 = vmatpush1.bf16.msra.mxu0 %v4131
        %4240 = vmatprep.subr.bf16.mxu0 %v4136
        %4241 = vmatpush1.bf16.msra.mxu0 %v4135
        %4242 = vmatprep.subr.bf16.mxu0 %v4140
        %4243 = vmatpush1.bf16.msra.mxu0 %v4139
        %4244 = vmatprep.subr.bf16.mxu0 %v4144
        %4245 = vmatpush1.bf16.msra.mxu0 %v4143
        %4246 = vmatprep.subr.bf16.mxu0 %v4148
        %4247 = vmatpush1.bf16.msra.mxu0 %v4147
        %4248 = vmatprep.subr.bf16.mxu0 %v4214
        %4249 = vmatpush1.bf16.msra.mxu0 %v4211
        %4250 = vmatprep.subr.bf16.mxu0 0
        %4251 = vmatpush1.bf16.msra.mxu0 0
        %4252 = vmatprep.subr.bf16.mxu0 0
        %4253 = vmatpush1.bf16.msra.mxu0 0
        %4254 = vmatprep.mubr.bf16.mxu0 %v4208
        %4255 = vmatmul.mubr.bf16.gmra.mrb[0].mxu0 %v3880
        %v4256 = vpop.f32.mrb[0].mxu0
        %v4257 = vadd.f32 0.0, %v4256
        %v4258 = vpop.f32.mrb[0].mxu0
        %v4259 = vadd.f32 0.0, %v4258
        %v4260 = vpop.f32.mrb[0].mxu0
        %v4261 = vpop.f32.mrb[0].mxu0
        %4262 = vdwg.mxu0
        %4263 = vmatprep.subr.bf16.mxu0 %v4102
        %4264 = vmatpush1.bf16.msra.mxu0 %v4101
        %4265 = vmatprep.subr.bf16.mxu0 %v4106
        %4266 = vmatpush1.bf16.msra.mxu0 %v4105
        %4267 = vmatprep.subr.bf16.mxu0 %v4110
        %4268 = vmatpush1.bf16.msra.mxu0 %v4109
        %4269 = vmatprep.subr.bf16.mxu0 %v4114
        %4270 = vmatpush1.bf16.msra.mxu0 %v4113
        %4271 = vmatprep.subr.bf16.mxu0 %v4118
        %4272 = vmatpush1.bf16.msra.mxu0 %v4117
        %4273 = vmatprep.subr.bf16.mxu0 %v4122
        %4274 = vmatpush1.bf16.msra.mxu0 %v4121
        %4275 = vmatprep.subr.bf16.mxu0 %v4126
        %4276 = vmatpush1.bf16.msra.mxu0 %v4125
        %4277 = vmatprep.subr.bf16.mxu0 %v4130
        %4278 = vmatpush1.bf16.msra.mxu0 %v4129
        %4279 = vmatprep.subr.bf16.mxu0 %v4134
        %4280 = vmatpush1.bf16.msra.mxu0 %v4133
        %4281 = vmatprep.subr.bf16.mxu0 %v4138
        %4282 = vmatpush1.bf16.msra.mxu0 %v4137
        %4283 = vmatprep.subr.bf16.mxu0 %v4142
        %4284 = vmatpush1.bf16.msra.mxu0 %v4141
        %4285 = vmatprep.subr.bf16.mxu0 %v4146
        %4286 = vmatpush1.bf16.msra.mxu0 %v4145
        %4287 = vmatprep.subr.bf16.mxu0 %v4150
        %4288 = vmatpush1.bf16.msra.mxu0 %v4149
        %4289 = vmatprep.subr.bf16.mxu0 %v4220
        %4290 = vmatpush1.bf16.msra.mxu0 %v4217
        %4291 = vmatprep.subr.bf16.mxu0 0
        %4292 = vmatpush1.bf16.msra.mxu0 0
        %4293 = vmatprep.subr.bf16.mxu0 0
        %4294 = vmatpush1.bf16.msra.mxu0 0
        %4295 = vmatprep.mubr.bf16.mxu0 %v4208
        %4296 = vmatmul.mubr.bf16.gmra.mrb[0].mxu0 %v3880
        %v4297 = vpop.f32.mrb[0].mxu0
        %v4298 = vadd.f32 0.0, %v4297
        %v4299 = vpop.f32.mrb[0].mxu0
        %v4300 = vadd.f32 0.0, %v4299
        %v4301 = vpop.f32.mrb[0].mxu0
        %v4302 = vpop.f32.mrb[0].mxu0
        %4303 = vdwg.mxu0
        %v4308 = vcombine.low %v4257, %v4259
        %v4309 = vcombine.low %v4298, %v4300
        %v4311 = vunpack.c.l.s4 1966171168
        %v4312 = vunpack.c.0.s8 %v4311
        %v4313 = vlaneseq
        %v4314 = vshrl.u32 %v4313, 7
        %v4315 = vsub.s32 %v4312, %v4314
        %v4316 = vrot.slane %v4308, %v4315
        %v4318 = vunpack.c.l.s4 1966171168
        %v4319 = vunpack.c.0.s8 %v4318
        %v4320 = vlaneseq
        %v4321 = vshrl.u32 %v4320, 7
        %v4322 = vsub.s32 %v4319, %v4321
        %v4323 = vrot.slane %v4309, %v4322
        %v4324 = vcombine.low %v4316, %v4323
        %v4326 = vunpack.c.l.s4 1966171168
        %v4327 = vunpack.c.0.s8 %v4326
        %v4328 = vlaneseq
        %v4329 = vshrl.u32 %v4328, 7
        %v4330 = vsub.s32 %v4327, %v4329
        %v4331 = vrot.slane %v4324, %v4330
        %v4333 = vadd.f32 %v3871, %v4331
        %s4334 = scalar_lea.vmem %s385, 2160 [#allocation9]
        %v4335 = vld [vmem:[%s4334] sm:$0xff]
        %v4336 = vld [vmem:[%s4334 + $0x8] sm:$0xff]
        %v4337 = vld [vmem:[%s4334 + $0x10] sm:$0xff]
        %v4338 = vld [vmem:[%s4334 + $0x18] sm:$0xff]
        %v4339 = vld [vmem:[%s4334 + $0x20] sm:$0xff]
        %v4340 = vld [vmem:[%s4334 + $0x28] sm:$0xff]
        %v4341 = vld [vmem:[%s4334 + $0x30] sm:$0xff]
        %v4342 = vld [vmem:[%s4334 + $0x38] sm:$0xff]
        %v4343 = vld [vmem:[%s4334 + $0x40] sm:$0xff]
        %v4344 = vld [vmem:[%s4334 + $0x48] sm:$0xff]
        %v4345 = vld [vmem:[%s4334 + $0x50] sm:$0xff]
        %v4346 = vld [vmem:[%s4334 + $0x58] sm:$0xff]
        %v4347 = vld [vmem:[%s4334 + $0x60] sm:$0xff]
        %v4348 = vld [vmem:[%s4334 + $0x68] sm:$0xff]
        %v4349 = vld [vmem:[%s4334 + $0x70] sm:$0xff]
        %v4350 = vld [vmem:[%s4334 + $0x78] sm:$0xff]
        %v4351 = vld [vmem:[%s4334 + $0x80] sm:$0xff]
        %v4352 = vld [vmem:[%s4334 + $0x88] sm:$0xff]
        %v4353 = vld [vmem:[%s4334 + $0x90] sm:$0xff]
        %v4354 = vld [vmem:[%s4334 + $0x98] sm:$0xff]
        %v4355 = vld [vmem:[%s4334 + $0xa0] sm:$0xff]
        %v4356 = vld [vmem:[%s4334 + $0xa8] sm:$0xff]
        %v4357 = vld [vmem:[%s4334 + $0xb0] sm:$0xff]
        %v4358 = vld [vmem:[%s4334 + $0xb8] sm:$0xff]
        %v4359 = vld [vmem:[%s4334 + $0xc0] sm:$0xff]
        %v4360 = vld [vmem:[%s4334 + $0xc8] sm:$0xff]
        %v4361 = vld [vmem:[%s4334 + $0xd0] sm:$0xff]
        %v4362 = vld [vmem:[%s4334 + $0xd8] sm:$0xff]
        %v4363 = vld [vmem:[%s4334 + $0xe0] sm:$0xff]
        %v4364 = vld [vmem:[%s4334 + $0xe8] sm:$0xff]
        %v4365 = vld [vmem:[%s4334 + $0xf0] sm:$0xff]
        %v4366 = vld [vmem:[%s4334 + $0xf8] sm:$0xff]
        %v4367 = vld [vmem:[%s4334 + $0x100] sm:$0xff]
        %v4368 = vld [vmem:[%s4334 + $0x108] sm:$0xff]
        %v4369 = vld [vmem:[%s4334 + $0x110] sm:$0xff]
        %v4370 = vld [vmem:[%s4334 + $0x118] sm:$0xff]
        %v4371 = vld [vmem:[%s4334 + $0x120] sm:$0xff]
        %v4372 = vld [vmem:[%s4334 + $0x128] sm:$0xff]
        %v4373 = vld [vmem:[%s4334 + $0x130] sm:$0xff]
        %v4374 = vld [vmem:[%s4334 + $0x138] sm:$0xff]
        %v4375 = vld [vmem:[%s4334 + $0x140] sm:$0xff]
        %v4376 = vld [vmem:[%s4334 + $0x148] sm:$0xff]
        %v4377 = vld [vmem:[%s4334 + $0x150] sm:$0xff]
        %v4378 = vld [vmem:[%s4334 + $0x158] sm:$0xff]
        %v4379 = vld [vmem:[%s4334 + $0x160] sm:$0xff]
        %v4380 = vld [vmem:[%s4334 + $0x168] sm:$0xff]
        %v4381 = vld [vmem:[%s4334 + $0x170] sm:$0xff]
        %v4382 = vld [vmem:[%s4334 + $0x178] sm:$0xff]
        %v4383 = vld [vmem:[%s4334 + $0x180] sm:$0xff]
        %v4384 = vld [vmem:[%s4334 + $0x188] sm:$0xff]
        %v4385 = vld [vmem:[%s4334 + $0x190] sm:$0xff]
        %v4386 = vld [vmem:[%s4334 + $0x198] sm:$0xff]
        %v4387 = vld [vmem:[%s4334 + $0x1a0] sm:$0xff]
        %v4388 = vld [vmem:[%s4334 + $0x1a8] sm:$0xff]
        %v4391 = vrot.slane %v3880, 1
        %v4392 = vrot.slane %v3881, 1
        %v4448 = vunpack.c.l.b16 %v4335
        %v4449 = vunpack.c.h.b16 %v4335
        %v4450 = vunpack.c.l.b16 %v4336
        %v4451 = vunpack.c.h.b16 %v4336
        %v4452 = vunpack.c.l.b16 %v4337
        %v4453 = vunpack.c.h.b16 %v4337
        %v4454 = vunpack.c.l.b16 %v4338
        %v4455 = vunpack.c.h.b16 %v4338
        %v4456 = vunpack.c.l.b16 %v4339
        %v4457 = vunpack.c.h.b16 %v4339
        %v4458 = vunpack.c.l.b16 %v4340
        %v4459 = vunpack.c.h.b16 %v4340
        %v4460 = vunpack.c.l.b16 %v4341
        %v4461 = vunpack.c.h.b16 %v4341
        %v4462 = vunpack.c.l.b16 %v4342
        %v4463 = vunpack.c.h.b16 %v4342
        %v4464 = vunpack.c.l.b16 %v4343
        %v4465 = vunpack.c.h.b16 %v4343
        %v4466 = vunpack.c.l.b16 %v4344
        %v4467 = vunpack.c.h.b16 %v4344
        %v4468 = vunpack.c.l.b16 %v4345
        %v4469 = vunpack.c.h.b16 %v4345
        %v4470 = vunpack.c.l.b16 %v4346
        %v4471 = vunpack.c.h.b16 %v4346
        %v4472 = vunpack.c.l.b16 %v4347
        %v4473 = vunpack.c.h.b16 %v4347
        %v4474 = vunpack.c.l.b16 %v4348
        %v4475 = vunpack.c.h.b16 %v4348
        %v4476 = vunpack.c.l.b16 %v4349
        %v4477 = vunpack.c.h.b16 %v4349
        %v4478 = vunpack.c.l.b16 %v4350
        %v4479 = vunpack.c.h.b16 %v4350
        %v4480 = vunpack.c.l.b16 %v4351
        %v4481 = vunpack.c.h.b16 %v4351
        %v4482 = vunpack.c.l.b16 %v4352
        %v4483 = vunpack.c.h.b16 %v4352
        %v4484 = vunpack.c.l.b16 %v4353
        %v4485 = vunpack.c.h.b16 %v4353
        %v4486 = vunpack.c.l.b16 %v4354
        %v4487 = vunpack.c.h.b16 %v4354
        %v4488 = vunpack.c.l.b16 %v4355
        %v4489 = vunpack.c.h.b16 %v4355
        %v4490 = vunpack.c.l.b16 %v4356
        %v4491 = vunpack.c.h.b16 %v4356
        %v4492 = vunpack.c.l.b16 %v4357
        %v4493 = vunpack.c.h.b16 %v4357
        %v4494 = vunpack.c.l.b16 %v4358
        %v4495 = vunpack.c.h.b16 %v4358
        %v4496 = vunpack.c.l.b16 %v4359
        %v4497 = vunpack.c.h.b16 %v4359
        %v4498 = vunpack.c.l.b16 %v4360
        %v4499 = vunpack.c.h.b16 %v4360
        %v4500 = vunpack.c.l.b16 %v4361
        %v4501 = vunpack.c.h.b16 %v4361
        %v4502 = vunpack.c.l.b16 %v4362
        %v4503 = vunpack.c.h.b16 %v4362
        %v4504 = vunpack.c.l.b16 %v4363
        %v4505 = vunpack.c.h.b16 %v4363
        %v4506 = vunpack.c.l.b16 %v4364
        %v4507 = vunpack.c.h.b16 %v4364
        %v4508 = vunpack.c.l.b16 %v4365
        %v4509 = vunpack.c.h.b16 %v4365
        %v4510 = vunpack.c.l.b16 %v4366
        %v4511 = vunpack.c.h.b16 %v4366
        %v4512 = vunpack.c.l.b16 %v4367
        %v4513 = vunpack.c.h.b16 %v4367
        %v4514 = vunpack.c.l.b16 %v4368
        %v4515 = vunpack.c.h.b16 %v4368
        %v4516 = vunpack.c.l.b16 %v4369
        %v4517 = vunpack.c.h.b16 %v4369
        %v4518 = vunpack.c.l.b16 %v4370
        %v4519 = vunpack.c.h.b16 %v4370
        %v4520 = vunpack.c.l.b16 %v4371
        %v4521 = vunpack.c.h.b16 %v4371
        %v4522 = vunpack.c.l.b16 %v4372
        %v4523 = vunpack.c.h.b16 %v4372
        %v4524 = vunpack.c.l.b16 %v4373
        %v4525 = vunpack.c.h.b16 %v4373
        %v4526 = vunpack.c.l.b16 %v4374
        %v4527 = vunpack.c.h.b16 %v4374
        %v4528 = vunpack.c.l.b16 %v4375
        %v4529 = vunpack.c.h.b16 %v4375
        %v4530 = vunpack.c.l.b16 %v4376
        %v4531 = vunpack.c.h.b16 %v4376
        %v4532 = vunpack.c.l.b16 %v4377
        %v4533 = vunpack.c.h.b16 %v4377
        %v4534 = vunpack.c.l.b16 %v4378
        %v4535 = vunpack.c.h.b16 %v4378
        %v4536 = vunpack.c.l.b16 %v4379
        %v4537 = vunpack.c.h.b16 %v4379
        %v4538 = vunpack.c.l.b16 %v4380
        %v4539 = vunpack.c.h.b16 %v4380
        %v4540 = vunpack.c.l.b16 %v4381
        %v4541 = vunpack.c.h.b16 %v4381
        %v4542 = vunpack.c.l.b16 %v4382
        %v4543 = vunpack.c.h.b16 %v4382
        %v4544 = vunpack.c.l.b16 %v4383
        %v4545 = vunpack.c.h.b16 %v4383
        %v4546 = vunpack.c.l.b16 %v4384
        %v4547 = vunpack.c.h.b16 %v4384
        %v4548 = vunpack.c.l.b16 %v4385
        %v4549 = vunpack.c.h.b16 %v4385
        %v4550 = vunpack.c.l.b16 %v4386
        %v4551 = vunpack.c.h.b16 %v4386
        %v4552 = vunpack.c.l.b16 %v4387
        %v4553 = vunpack.c.h.b16 %v4387
        %v4554 = vunpack.c.l.b16 %v4388
        %v4555 = vunpack.c.h.b16 %v4388
        %v4556 = vpack.c.b16 %v4452, %v4448
        %v4557 = vpack.c.b16 %v4453, %v4449
        %v4558 = vpack.c.b16 %v4454, %v4450
        %v4559 = vpack.c.b16 %v4455, %v4451
        %v4560 = vpack.c.b16 %v4460, %v4456
        %v4561 = vpack.c.b16 %v4461, %v4457
        %v4562 = vpack.c.b16 %v4462, %v4458
        %v4563 = vpack.c.b16 %v4463, %v4459
        %v4564 = vpack.c.b16 %v4468, %v4464
        %v4565 = vpack.c.b16 %v4469, %v4465
        %v4566 = vpack.c.b16 %v4470, %v4466
        %v4567 = vpack.c.b16 %v4471, %v4467
        %v4568 = vpack.c.b16 %v4476, %v4472
        %v4569 = vpack.c.b16 %v4477, %v4473
        %v4570 = vpack.c.b16 %v4478, %v4474
        %v4571 = vpack.c.b16 %v4479, %v4475
        %v4572 = vpack.c.b16 %v4484, %v4480
        %v4573 = vpack.c.b16 %v4485, %v4481
        %v4574 = vpack.c.b16 %v4486, %v4482
        %v4575 = vpack.c.b16 %v4487, %v4483
        %v4576 = vpack.c.b16 %v4492, %v4488
        %v4577 = vpack.c.b16 %v4493, %v4489
        %v4578 = vpack.c.b16 %v4494, %v4490
        %v4579 = vpack.c.b16 %v4495, %v4491
        %v4580 = vpack.c.b16 %v4500, %v4496
        %v4581 = vpack.c.b16 %v4501, %v4497
        %v4582 = vpack.c.b16 %v4502, %v4498
        %v4583 = vpack.c.b16 %v4503, %v4499
        %v4584 = vpack.c.b16 %v4508, %v4504
        %v4585 = vpack.c.b16 %v4509, %v4505
        %v4586 = vpack.c.b16 %v4510, %v4506
        %v4587 = vpack.c.b16 %v4511, %v4507
        %v4588 = vpack.c.b16 %v4516, %v4512
        %v4589 = vpack.c.b16 %v4517, %v4513
        %v4590 = vpack.c.b16 %v4518, %v4514
        %v4591 = vpack.c.b16 %v4519, %v4515
        %v4592 = vpack.c.b16 %v4524, %v4520
        %v4593 = vpack.c.b16 %v4525, %v4521
        %v4594 = vpack.c.b16 %v4526, %v4522
        %v4595 = vpack.c.b16 %v4527, %v4523
        %v4596 = vpack.c.b16 %v4532, %v4528
        %v4597 = vpack.c.b16 %v4533, %v4529
        %v4598 = vpack.c.b16 %v4534, %v4530
        %v4599 = vpack.c.b16 %v4535, %v4531
        %v4600 = vpack.c.b16 %v4540, %v4536
        %v4601 = vpack.c.b16 %v4541, %v4537
        %v4602 = vpack.c.b16 %v4542, %v4538
        %v4603 = vpack.c.b16 %v4543, %v4539
        %v4604 = vpack.c.b16 %v4548, %v4544
        %v4605 = vpack.c.b16 %v4549, %v4545
        %v4606 = vpack.c.b16 %v4550, %v4546
        %v4607 = vpack.c.b16 %v4551, %v4547
        %v4608 = vpack.c.b16 %v4552, %v4552
        %v4609 = vpack.c.b16 %v4553, %v4553
        %v4610 = vpack.c.b16 %v4554, %v4554
        %v4611 = vpack.c.b16 %v4555, %v4555
        %v4665 = vsel %vm2376, %v4392, 0
        %v4668 = vsel %vm2380, %v4608, 0
        %v4671 = vsel %vm2380, %v4609, 0
        %v4674 = vsel %vm2380, %v4610, 0
        %v4677 = vsel %vm2380, %v4611, 0
        %4679 = vmatprep.subr.bf16.mxu0 %v4557
        %4680 = vmatpush1.bf16.msra.mxu0 %v4556
        %4681 = vmatprep.subr.bf16.mxu0 %v4561
        %4682 = vmatpush1.bf16.msra.mxu0 %v4560
        %4683 = vmatprep.subr.bf16.mxu0 %v4565
        %4684 = vmatpush1.bf16.msra.mxu0 %v4564
        %4685 = vmatprep.subr.bf16.mxu0 %v4569
        %4686 = vmatpush1.bf16.msra.mxu0 %v4568
        %4687 = vmatprep.subr.bf16.mxu0 %v4573
        %4688 = vmatpush1.bf16.msra.mxu0 %v4572
        %4689 = vmatprep.subr.bf16.mxu0 %v4577
        %4690 = vmatpush1.bf16.msra.mxu0 %v4576
        %4691 = vmatprep.subr.bf16.mxu0 %v4581
        %4692 = vmatpush1.bf16.msra.mxu0 %v4580
        %4693 = vmatprep.subr.bf16.mxu0 %v4585
        %4694 = vmatpush1.bf16.msra.mxu0 %v4584
        %4695 = vmatprep.subr.bf16.mxu0 %v4589
        %4696 = vmatpush1.bf16.msra.mxu0 %v4588
        %4697 = vmatprep.subr.bf16.mxu0 %v4593
        %4698 = vmatpush1.bf16.msra.mxu0 %v4592
        %4699 = vmatprep.subr.bf16.mxu0 %v4597
        %4700 = vmatpush1.bf16.msra.mxu0 %v4596
        %4701 = vmatprep.subr.bf16.mxu0 %v4601
        %4702 = vmatpush1.bf16.msra.mxu0 %v4600
        %4703 = vmatprep.subr.bf16.mxu0 %v4605
        %4704 = vmatpush1.bf16.msra.mxu0 %v4604
        %4705 = vmatprep.subr.bf16.mxu0 %v4671
        %4706 = vmatpush1.bf16.msra.mxu0 %v4668
        %4707 = vmatprep.subr.bf16.mxu0 0
        %4708 = vmatpush1.bf16.msra.mxu0 0
        %4709 = vmatprep.subr.bf16.mxu0 0
        %4710 = vmatpush1.bf16.msra.mxu0 0
        %4711 = vmatprep.mubr.bf16.mxu0 %v4665
        %4712 = vmatmul.mubr.bf16.gmra.mrb[0].mxu0 %v4391
        %v4713 = vpop.f32.mrb[0].mxu0
        %v4714 = vadd.f32 0.0, %v4713
        %v4715 = vpop.f32.mrb[0].mxu0
        %v4716 = vadd.f32 0.0, %v4715
        %v4717 = vpop.f32.mrb[0].mxu0
        %v4718 = vpop.f32.mrb[0].mxu0
        %4719 = vdwg.mxu0
        %4720 = vmatprep.subr.bf16.mxu0 %v4559
        %4721 = vmatpush1.bf16.msra.mxu0 %v4558
        %4722 = vmatprep.subr.bf16.mxu0 %v4563
        %4723 = vmatpush1.bf16.msra.mxu0 %v4562
        %4724 = vmatprep.subr.bf16.mxu0 %v4567
        %4725 = vmatpush1.bf16.msra.mxu0 %v4566
        %4726 = vmatprep.subr.bf16.mxu0 %v4571
        %4727 = vmatpush1.bf16.msra.mxu0 %v4570
        %4728 = vmatprep.subr.bf16.mxu0 %v4575
        %4729 = vmatpush1.bf16.msra.mxu0 %v4574
        %4730 = vmatprep.subr.bf16.mxu0 %v4579
        %4731 = vmatpush1.bf16.msra.mxu0 %v4578
        %4732 = vmatprep.subr.bf16.mxu0 %v4583
        %4733 = vmatpush1.bf16.msra.mxu0 %v4582
        %4734 = vmatprep.subr.bf16.mxu0 %v4587
        %4735 = vmatpush1.bf16.msra.mxu0 %v4586
        %4736 = vmatprep.subr.bf16.mxu0 %v4591
        %4737 = vmatpush1.bf16.msra.mxu0 %v4590
        %4738 = vmatprep.subr.bf16.mxu0 %v4595
        %4739 = vmatpush1.bf16.msra.mxu0 %v4594
        %4740 = vmatprep.subr.bf16.mxu0 %v4599
        %4741 = vmatpush1.bf16.msra.mxu0 %v4598
        %4742 = vmatprep.subr.bf16.mxu0 %v4603
        %4743 = vmatpush1.bf16.msra.mxu0 %v4602
        %4744 = vmatprep.subr.bf16.mxu0 %v4607
        %4745 = vmatpush1.bf16.msra.mxu0 %v4606
        %4746 = vmatprep.subr.bf16.mxu0 %v4677
        %4747 = vmatpush1.bf16.msra.mxu0 %v4674
        %4748 = vmatprep.subr.bf16.mxu0 0
        %4749 = vmatpush1.bf16.msra.mxu0 0
        %4750 = vmatprep.subr.bf16.mxu0 0
        %4751 = vmatpush1.bf16.msra.mxu0 0
        %4752 = vmatprep.mubr.bf16.mxu0 %v4665
        %4753 = vmatmul.mubr.bf16.gmra.mrb[0].mxu0 %v4391
        %v4754 = vpop.f32.mrb[0].mxu0
        %v4755 = vadd.f32 0.0, %v4754
        %v4756 = vpop.f32.mrb[0].mxu0
        %v4757 = vadd.f32 0.0, %v4756
        %v4758 = vpop.f32.mrb[0].mxu0
        %v4759 = vpop.f32.mrb[0].mxu0
        %4760 = vdwg.mxu0
        %v4765 = vcombine.low %v4714, %v4716
        %v4766 = vcombine.low %v4755, %v4757
        %v4768 = vunpack.c.l.s4 1966171168
        %v4769 = vunpack.c.0.s8 %v4768
        %v4770 = vlaneseq
        %v4771 = vshrl.u32 %v4770, 7
        %v4772 = vsub.s32 %v4769, %v4771
        %v4773 = vrot.slane %v4765, %v4772
        %v4775 = vunpack.c.l.s4 1966171168
        %v4776 = vunpack.c.0.s8 %v4775
        %v4777 = vlaneseq
        %v4778 = vshrl.u32 %v4777, 7
        %v4779 = vsub.s32 %v4776, %v4778
        %v4780 = vrot.slane %v4766, %v4779
        %v4781 = vcombine.low %v4773, %v4780
        %v4783 = vunpack.c.l.s4 1966171168
        %v4784 = vunpack.c.0.s8 %v4783
        %v4785 = vlaneseq
        %v4786 = vshrl.u32 %v4785, 7
        %v4787 = vsub.s32 %v4784, %v4786
        %v4788 = vrot.slane %v4781, %v4787
        %v4790 = vadd.f32 %v4333, %v4788
        %s4791 = scalar_lea.vmem %s385, 2592 [#allocation9]
        %v4792 = vld [vmem:[%s4791] sm:$0xff]
        %v4793 = vld [vmem:[%s4791 + $0x8] sm:$0xff]
        %v4794 = vld [vmem:[%s4791 + $0x10] sm:$0xff]
        %v4795 = vld [vmem:[%s4791 + $0x18] sm:$0xff]
        %v4796 = vld [vmem:[%s4791 + $0x20] sm:$0xff]
        %v4797 = vld [vmem:[%s4791 + $0x28] sm:$0xff]
        %v4798 = vld [vmem:[%s4791 + $0x30] sm:$0xff]
        %v4799 = vld [vmem:[%s4791 + $0x38] sm:$0xff]
        %v4800 = vld [vmem:[%s4791 + $0x40] sm:$0xff]
        %v4801 = vld [vmem:[%s4791 + $0x48] sm:$0xff]
        %v4802 = vld [vmem:[%s4791 + $0x50] sm:$0xff]
        %v4803 = vld [vmem:[%s4791 + $0x58] sm:$0xff]
        %v4804 = vld [vmem:[%s4791 + $0x60] sm:$0xff]
        %v4805 = vld [vmem:[%s4791 + $0x68] sm:$0xff]
        %v4806 = vld [vmem:[%s4791 + $0x70] sm:$0xff]
        %v4807 = vld [vmem:[%s4791 + $0x78] sm:$0xff]
        %v4808 = vld [vmem:[%s4791 + $0x80] sm:$0xff]
        %v4809 = vld [vmem:[%s4791 + $0x88] sm:$0xff]
        %v4810 = vld [vmem:[%s4791 + $0x90] sm:$0xff]
        %v4811 = vld [vmem:[%s4791 + $0x98] sm:$0xff]
        %v4812 = vld [vmem:[%s4791 + $0xa0] sm:$0xff]
        %v4813 = vld [vmem:[%s4791 + $0xa8] sm:$0xff]
        %v4814 = vld [vmem:[%s4791 + $0xb0] sm:$0xff]
        %v4815 = vld [vmem:[%s4791 + $0xb8] sm:$0xff]
        %v4816 = vld [vmem:[%s4791 + $0xc0] sm:$0xff]
        %v4817 = vld [vmem:[%s4791 + $0xc8] sm:$0xff]
        %v4818 = vld [vmem:[%s4791 + $0xd0] sm:$0xff]
        %v4819 = vld [vmem:[%s4791 + $0xd8] sm:$0xff]
        %v4820 = vld [vmem:[%s4791 + $0xe0] sm:$0xff]
        %v4821 = vld [vmem:[%s4791 + $0xe8] sm:$0xff]
        %v4822 = vld [vmem:[%s4791 + $0xf0] sm:$0xff]
        %v4823 = vld [vmem:[%s4791 + $0xf8] sm:$0xff]
        %v4824 = vld [vmem:[%s4791 + $0x100] sm:$0xff]
        %v4825 = vld [vmem:[%s4791 + $0x108] sm:$0xff]
        %v4826 = vld [vmem:[%s4791 + $0x110] sm:$0xff]
        %v4827 = vld [vmem:[%s4791 + $0x118] sm:$0xff]
        %v4828 = vld [vmem:[%s4791 + $0x120] sm:$0xff]
        %v4829 = vld [vmem:[%s4791 + $0x128] sm:$0xff]
        %v4830 = vld [vmem:[%s4791 + $0x130] sm:$0xff]
        %v4831 = vld [vmem:[%s4791 + $0x138] sm:$0xff]
        %v4832 = vld [vmem:[%s4791 + $0x140] sm:$0xff]
        %v4833 = vld [vmem:[%s4791 + $0x148] sm:$0xff]
        %v4834 = vld [vmem:[%s4791 + $0x150] sm:$0xff]
        %v4835 = vld [vmem:[%s4791 + $0x158] sm:$0xff]
        %v4836 = vld [vmem:[%s4791 + $0x160] sm:$0xff]
        %v4837 = vld [vmem:[%s4791 + $0x168] sm:$0xff]
        %v4838 = vld [vmem:[%s4791 + $0x170] sm:$0xff]
        %v4839 = vld [vmem:[%s4791 + $0x178] sm:$0xff]
        %v4840 = vld [vmem:[%s4791 + $0x180] sm:$0xff]
        %v4841 = vld [vmem:[%s4791 + $0x188] sm:$0xff]
        %v4842 = vld [vmem:[%s4791 + $0x190] sm:$0xff]
        %v4843 = vld [vmem:[%s4791 + $0x198] sm:$0xff]
        %v4844 = vld [vmem:[%s4791 + $0x1a0] sm:$0xff]
        %v4845 = vld [vmem:[%s4791 + $0x1a8] sm:$0xff]
        %v4846 = vrot.slane %v3880, 2
        %v4847 = vrot.slane %v3881, 2
        %v4903 = vunpack.c.l.b16 %v4792
        %v4904 = vunpack.c.h.b16 %v4792
        %v4905 = vunpack.c.l.b16 %v4793
        %v4906 = vunpack.c.h.b16 %v4793
        %v4907 = vunpack.c.l.b16 %v4794
        %v4908 = vunpack.c.h.b16 %v4794
        %v4909 = vunpack.c.l.b16 %v4795
        %v4910 = vunpack.c.h.b16 %v4795
        %v4911 = vunpack.c.l.b16 %v4796
        %v4912 = vunpack.c.h.b16 %v4796
        %v4913 = vunpack.c.l.b16 %v4797
        %v4914 = vunpack.c.h.b16 %v4797
        %v4915 = vunpack.c.l.b16 %v4798
        %v4916 = vunpack.c.h.b16 %v4798
        %v4917 = vunpack.c.l.b16 %v4799
        %v4918 = vunpack.c.h.b16 %v4799
        %v4919 = vunpack.c.l.b16 %v4800
        %v4920 = vunpack.c.h.b16 %v4800
        %v4921 = vunpack.c.l.b16 %v4801
        %v4922 = vunpack.c.h.b16 %v4801
        %v4923 = vunpack.c.l.b16 %v4802
        %v4924 = vunpack.c.h.b16 %v4802
        %v4925 = vunpack.c.l.b16 %v4803
        %v4926 = vunpack.c.h.b16 %v4803
        %v4927 = vunpack.c.l.b16 %v4804
        %v4928 = vunpack.c.h.b16 %v4804
        %v4929 = vunpack.c.l.b16 %v4805
        %v4930 = vunpack.c.h.b16 %v4805
        %v4931 = vunpack.c.l.b16 %v4806
        %v4932 = vunpack.c.h.b16 %v4806
        %v4933 = vunpack.c.l.b16 %v4807
        %v4934 = vunpack.c.h.b16 %v4807
        %v4935 = vunpack.c.l.b16 %v4808
        %v4936 = vunpack.c.h.b16 %v4808
        %v4937 = vunpack.c.l.b16 %v4809
        %v4938 = vunpack.c.h.b16 %v4809
        %v4939 = vunpack.c.l.b16 %v4810
        %v4940 = vunpack.c.h.b16 %v4810
        %v4941 = vunpack.c.l.b16 %v4811
        %v4942 = vunpack.c.h.b16 %v4811
        %v4943 = vunpack.c.l.b16 %v4812
        %v4944 = vunpack.c.h.b16 %v4812
        %v4945 = vunpack.c.l.b16 %v4813
        %v4946 = vunpack.c.h.b16 %v4813
        %v4947 = vunpack.c.l.b16 %v4814
        %v4948 = vunpack.c.h.b16 %v4814
        %v4949 = vunpack.c.l.b16 %v4815
        %v4950 = vunpack.c.h.b16 %v4815
        %v4951 = vunpack.c.l.b16 %v4816
        %v4952 = vunpack.c.h.b16 %v4816
        %v4953 = vunpack.c.l.b16 %v4817
        %v4954 = vunpack.c.h.b16 %v4817
        %v4955 = vunpack.c.l.b16 %v4818
        %v4956 = vunpack.c.h.b16 %v4818
        %v4957 = vunpack.c.l.b16 %v4819
        %v4958 = vunpack.c.h.b16 %v4819
        %v4959 = vunpack.c.l.b16 %v4820
        %v4960 = vunpack.c.h.b16 %v4820
        %v4961 = vunpack.c.l.b16 %v4821
        %v4962 = vunpack.c.h.b16 %v4821
        %v4963 = vunpack.c.l.b16 %v4822
        %v4964 = vunpack.c.h.b16 %v4822
        %v4965 = vunpack.c.l.b16 %v4823
        %v4966 = vunpack.c.h.b16 %v4823
        %v4967 = vunpack.c.l.b16 %v4824
        %v4968 = vunpack.c.h.b16 %v4824
        %v4969 = vunpack.c.l.b16 %v4825
        %v4970 = vunpack.c.h.b16 %v4825
        %v4971 = vunpack.c.l.b16 %v4826
        %v4972 = vunpack.c.h.b16 %v4826
        %v4973 = vunpack.c.l.b16 %v4827
        %v4974 = vunpack.c.h.b16 %v4827
        %v4975 = vunpack.c.l.b16 %v4828
        %v4976 = vunpack.c.h.b16 %v4828
        %v4977 = vunpack.c.l.b16 %v4829
        %v4978 = vunpack.c.h.b16 %v4829
        %v4979 = vunpack.c.l.b16 %v4830
        %v4980 = vunpack.c.h.b16 %v4830
        %v4981 = vunpack.c.l.b16 %v4831
        %v4982 = vunpack.c.h.b16 %v4831
        %v4983 = vunpack.c.l.b16 %v4832
        %v4984 = vunpack.c.h.b16 %v4832
        %v4985 = vunpack.c.l.b16 %v4833
        %v4986 = vunpack.c.h.b16 %v4833
        %v4987 = vunpack.c.l.b16 %v4834
        %v4988 = vunpack.c.h.b16 %v4834
        %v4989 = vunpack.c.l.b16 %v4835
        %v4990 = vunpack.c.h.b16 %v4835
        %v4991 = vunpack.c.l.b16 %v4836
        %v4992 = vunpack.c.h.b16 %v4836
        %v4993 = vunpack.c.l.b16 %v4837
        %v4994 = vunpack.c.h.b16 %v4837
        %v4995 = vunpack.c.l.b16 %v4838
        %v4996 = vunpack.c.h.b16 %v4838
        %v4997 = vunpack.c.l.b16 %v4839
        %v4998 = vunpack.c.h.b16 %v4839
        %v4999 = vunpack.c.l.b16 %v4840
        %v5000 = vunpack.c.h.b16 %v4840
        %v5001 = vunpack.c.l.b16 %v4841
        %v5002 = vunpack.c.h.b16 %v4841
        %v5003 = vunpack.c.l.b16 %v4842
        %v5004 = vunpack.c.h.b16 %v4842
        %v5005 = vunpack.c.l.b16 %v4843
        %v5006 = vunpack.c.h.b16 %v4843
        %v5007 = vunpack.c.l.b16 %v4844
        %v5008 = vunpack.c.h.b16 %v4844
        %v5009 = vunpack.c.l.b16 %v4845
        %v5010 = vunpack.c.h.b16 %v4845
        %v5011 = vpack.c.b16 %v4907, %v4903
        %v5012 = vpack.c.b16 %v4908, %v4904
        %v5013 = vpack.c.b16 %v4909, %v4905
        %v5014 = vpack.c.b16 %v4910, %v4906
        %v5015 = vpack.c.b16 %v4915, %v4911
        %v5016 = vpack.c.b16 %v4916, %v4912
        %v5017 = vpack.c.b16 %v4917, %v4913
        %v5018 = vpack.c.b16 %v4918, %v4914
        %v5019 = vpack.c.b16 %v4923, %v4919
        %v5020 = vpack.c.b16 %v4924, %v4920
        %v5021 = vpack.c.b16 %v4925, %v4921
        %v5022 = vpack.c.b16 %v4926, %v4922
        %v5023 = vpack.c.b16 %v4931, %v4927
        %v5024 = vpack.c.b16 %v4932, %v4928
        %v5025 = vpack.c.b16 %v4933, %v4929
        %v5026 = vpack.c.b16 %v4934, %v4930
        %v5027 = vpack.c.b16 %v4939, %v4935
        %v5028 = vpack.c.b16 %v4940, %v4936
        %v5029 = vpack.c.b16 %v4941, %v4937
        %v5030 = vpack.c.b16 %v4942, %v4938
        %v5031 = vpack.c.b16 %v4947, %v4943
        %v5032 = vpack.c.b16 %v4948, %v4944
        %v5033 = vpack.c.b16 %v4949, %v4945
        %v5034 = vpack.c.b16 %v4950, %v4946
        %v5035 = vpack.c.b16 %v4955, %v4951
        %v5036 = vpack.c.b16 %v4956, %v4952
        %v5037 = vpack.c.b16 %v4957, %v4953
        %v5038 = vpack.c.b16 %v4958, %v4954
        %v5039 = vpack.c.b16 %v4963, %v4959
        %v5040 = vpack.c.b16 %v4964, %v4960
        %v5041 = vpack.c.b16 %v4965, %v4961
        %v5042 = vpack.c.b16 %v4966, %v4962
        %v5043 = vpack.c.b16 %v4971, %v4967
        %v5044 = vpack.c.b16 %v4972, %v4968
        %v5045 = vpack.c.b16 %v4973, %v4969
        %v5046 = vpack.c.b16 %v4974, %v4970
        %v5047 = vpack.c.b16 %v4979, %v4975
        %v5048 = vpack.c.b16 %v4980, %v4976
        %v5049 = vpack.c.b16 %v4981, %v4977
        %v5050 = vpack.c.b16 %v4982, %v4978
        %v5051 = vpack.c.b16 %v4987, %v4983
        %v5052 = vpack.c.b16 %v4988, %v4984
        %v5053 = vpack.c.b16 %v4989, %v4985
        %v5054 = vpack.c.b16 %v4990, %v4986
        %v5055 = vpack.c.b16 %v4995, %v4991
        %v5056 = vpack.c.b16 %v4996, %v4992
        %v5057 = vpack.c.b16 %v4997, %v4993
        %v5058 = vpack.c.b16 %v4998, %v4994
        %v5059 = vpack.c.b16 %v5003, %v4999
        %v5060 = vpack.c.b16 %v5004, %v5000
        %v5061 = vpack.c.b16 %v5005, %v5001
        %v5062 = vpack.c.b16 %v5006, %v5002
        %v5063 = vpack.c.b16 %v5007, %v5007
        %v5064 = vpack.c.b16 %v5008, %v5008
        %v5065 = vpack.c.b16 %v5009, %v5009
        %v5066 = vpack.c.b16 %v5010, %v5010
        %v5120 = vsel %vm2376, %v4847, 0
        %v5123 = vsel %vm2380, %v5063, 0
        %v5126 = vsel %vm2380, %v5064, 0
        %v5129 = vsel %vm2380, %v5065, 0
        %v5132 = vsel %vm2380, %v5066, 0
        %5134 = vmatprep.subr.bf16.mxu0 %v5012
        %5135 = vmatpush1.bf16.msra.mxu0 %v5011
        %5136 = vmatprep.subr.bf16.mxu0 %v5016
        %5137 = vmatpush1.bf16.msra.mxu0 %v5015
        %5138 = vmatprep.subr.bf16.mxu0 %v5020
        %5139 = vmatpush1.bf16.msra.mxu0 %v5019
        %5140 = vmatprep.subr.bf16.mxu0 %v5024
        %5141 = vmatpush1.bf16.msra.mxu0 %v5023
        %5142 = vmatprep.subr.bf16.mxu0 %v5028
        %5143 = vmatpush1.bf16.msra.mxu0 %v5027
        %5144 = vmatprep.subr.bf16.mxu0 %v5032
        %5145 = vmatpush1.bf16.msra.mxu0 %v5031
        %5146 = vmatprep.subr.bf16.mxu0 %v5036
        %5147 = vmatpush1.bf16.msra.mxu0 %v5035
        %5148 = vmatprep.subr.bf16.mxu0 %v5040
        %5149 = vmatpush1.bf16.msra.mxu0 %v5039
        %5150 = vmatprep.subr.bf16.mxu0 %v5044
        %5151 = vmatpush1.bf16.msra.mxu0 %v5043
        %5152 = vmatprep.subr.bf16.mxu0 %v5048
        %5153 = vmatpush1.bf16.msra.mxu0 %v5047
        %5154 = vmatprep.subr.bf16.mxu0 %v5052
        %5155 = vmatpush1.bf16.msra.mxu0 %v5051
        %5156 = vmatprep.subr.bf16.mxu0 %v5056
        %5157 = vmatpush1.bf16.msra.mxu0 %v5055
        %5158 = vmatprep.subr.bf16.mxu0 %v5060
        %5159 = vmatpush1.bf16.msra.mxu0 %v5059
        %5160 = vmatprep.subr.bf16.mxu0 %v5126
        %5161 = vmatpush1.bf16.msra.mxu0 %v5123
        %5162 = vmatprep.subr.bf16.mxu0 0
        %5163 = vmatpush1.bf16.msra.mxu0 0
        %5164 = vmatprep.subr.bf16.mxu0 0
        %5165 = vmatpush1.bf16.msra.mxu0 0
        %5166 = vmatprep.mubr.bf16.mxu0 %v5120
        %5167 = vmatmul.mubr.bf16.gmra.mrb[0].mxu0 %v4846
        %v5168 = vpop.f32.mrb[0].mxu0
        %v5169 = vadd.f32 0.0, %v5168
        %v5170 = vpop.f32.mrb[0].mxu0
        %v5171 = vadd.f32 0.0, %v5170
        %v5172 = vpop.f32.mrb[0].mxu0
        %v5173 = vpop.f32.mrb[0].mxu0
        %5174 = vdwg.mxu0
        %5175 = vmatprep.subr.bf16.mxu0 %v5014
        %5176 = vmatpush1.bf16.msra.mxu0 %v5013
        %5177 = vmatprep.subr.bf16.mxu0 %v5018
        %5178 = vmatpush1.bf16.msra.mxu0 %v5017
        %5179 = vmatprep.subr.bf16.mxu0 %v5022
        %5180 = vmatpush1.bf16.msra.mxu0 %v5021
        %5181 = vmatprep.subr.bf16.mxu0 %v5026
        %5182 = vmatpush1.bf16.msra.mxu0 %v5025
        %5183 = vmatprep.subr.bf16.mxu0 %v5030
        %5184 = vmatpush1.bf16.msra.mxu0 %v5029
        %5185 = vmatprep.subr.bf16.mxu0 %v5034
        %5186 = vmatpush1.bf16.msra.mxu0 %v5033
        %5187 = vmatprep.subr.bf16.mxu0 %v5038
        %5188 = vmatpush1.bf16.msra.mxu0 %v5037
        %5189 = vmatprep.subr.bf16.mxu0 %v5042
        %5190 = vmatpush1.bf16.msra.mxu0 %v5041
        %5191 = vmatprep.subr.bf16.mxu0 %v5046
        %5192 = vmatpush1.bf16.msra.mxu0 %v5045
        %5193 = vmatprep.subr.bf16.mxu0 %v5050
        %5194 = vmatpush1.bf16.msra.mxu0 %v5049
        %5195 = vmatprep.subr.bf16.mxu0 %v5054
        %5196 = vmatpush1.bf16.msra.mxu0 %v5053
        %5197 = vmatprep.subr.bf16.mxu0 %v5058
        %5198 = vmatpush1.bf16.msra.mxu0 %v5057
        %5199 = vmatprep.subr.bf16.mxu0 %v5062
        %5200 = vmatpush1.bf16.msra.mxu0 %v5061
        %5201 = vmatprep.subr.bf16.mxu0 %v5132
        %5202 = vmatpush1.bf16.msra.mxu0 %v5129
        %5203 = vmatprep.subr.bf16.mxu0 0
        %5204 = vmatpush1.bf16.msra.mxu0 0
        %5205 = vmatprep.subr.bf16.mxu0 0
        %5206 = vmatpush1.bf16.msra.mxu0 0
        %5207 = vmatprep.mubr.bf16.mxu0 %v5120
        %5208 = vmatmul.mubr.bf16.gmra.mrb[0].mxu0 %v4846
        %v5209 = vpop.f32.mrb[0].mxu0
        %v5210 = vadd.f32 0.0, %v5209
        %v5211 = vpop.f32.mrb[0].mxu0
        %v5212 = vadd.f32 0.0, %v5211
        %v5213 = vpop.f32.mrb[0].mxu0
        %v5214 = vpop.f32.mrb[0].mxu0
        %5215 = vdwg.mxu0
        %v5220 = vcombine.low %v5169, %v5171
        %v5221 = vcombine.low %v5210, %v5212
        %v5223 = vunpack.c.l.s4 1966171168
        %v5224 = vunpack.c.0.s8 %v5223
        %v5225 = vlaneseq
        %v5226 = vshrl.u32 %v5225, 7
        %v5227 = vsub.s32 %v5224, %v5226
        %v5228 = vrot.slane %v5220, %v5227
        %v5230 = vunpack.c.l.s4 1966171168
        %v5231 = vunpack.c.0.s8 %v5230
        %v5232 = vlaneseq
        %v5233 = vshrl.u32 %v5232, 7
        %v5234 = vsub.s32 %v5231, %v5233
        %v5235 = vrot.slane %v5221, %v5234
        %v5236 = vcombine.low %v5228, %v5235
        %v5238 = vunpack.c.l.s4 1966171168
        %v5239 = vunpack.c.0.s8 %v5238
        %v5240 = vlaneseq
        %v5241 = vshrl.u32 %v5240, 7
        %v5242 = vsub.s32 %v5239, %v5241
        %v5243 = vrot.slane %v5236, %v5242
        %v5245 = vadd.f32 %v4790, %v5243
        %s5246 = scalar_lea.vmem %s385, 3024 [#allocation9]
        %v5247 = vld [vmem:[%s5246] sm:$0xff]
        %v5248 = vld [vmem:[%s5246 + $0x8] sm:$0xff]
        %v5249 = vld [vmem:[%s5246 + $0x10] sm:$0xff]
        %v5250 = vld [vmem:[%s5246 + $0x18] sm:$0xff]
        %v5251 = vld [vmem:[%s5246 + $0x20] sm:$0xff]
        %v5252 = vld [vmem:[%s5246 + $0x28] sm:$0xff]
        %v5253 = vld [vmem:[%s5246 + $0x30] sm:$0xff]
        %v5254 = vld [vmem:[%s5246 + $0x38] sm:$0xff]
        %v5255 = vld [vmem:[%s5246 + $0x40] sm:$0xff]
        %v5256 = vld [vmem:[%s5246 + $0x48] sm:$0xff]
        %v5257 = vld [vmem:[%s5246 + $0x50] sm:$0xff]
        %v5258 = vld [vmem:[%s5246 + $0x58] sm:$0xff]
        %v5259 = vld [vmem:[%s5246 + $0x60] sm:$0xff]
        %v5260 = vld [vmem:[%s5246 + $0x68] sm:$0xff]
        %v5261 = vld [vmem:[%s5246 + $0x70] sm:$0xff]
        %v5262 = vld [vmem:[%s5246 + $0x78] sm:$0xff]
        %v5263 = vld [vmem:[%s5246 + $0x80] sm:$0xff]
        %v5264 = vld [vmem:[%s5246 + $0x88] sm:$0xff]
        %v5265 = vld [vmem:[%s5246 + $0x90] sm:$0xff]
        %v5266 = vld [vmem:[%s5246 + $0x98] sm:$0xff]
        %v5267 = vld [vmem:[%s5246 + $0xa0] sm:$0xff]
        %v5268 = vld [vmem:[%s5246 + $0xa8] sm:$0xff]
        %v5269 = vld [vmem:[%s5246 + $0xb0] sm:$0xff]
        %v5270 = vld [vmem:[%s5246 + $0xb8] sm:$0xff]
        %v5271 = vld [vmem:[%s5246 + $0xc0] sm:$0xff]
        %v5272 = vld [vmem:[%s5246 + $0xc8] sm:$0xff]
        %v5273 = vld [vmem:[%s5246 + $0xd0] sm:$0xff]
        %v5274 = vld [vmem:[%s5246 + $0xd8] sm:$0xff]
        %v5275 = vld [vmem:[%s5246 + $0xe0] sm:$0xff]
        %v5276 = vld [vmem:[%s5246 + $0xe8] sm:$0xff]
        %v5277 = vld [vmem:[%s5246 + $0xf0] sm:$0xff]
        %v5278 = vld [vmem:[%s5246 + $0xf8] sm:$0xff]
        %v5279 = vld [vmem:[%s5246 + $0x100] sm:$0xff]
        %v5280 = vld [vmem:[%s5246 + $0x108] sm:$0xff]
        %v5281 = vld [vmem:[%s5246 + $0x110] sm:$0xff]
        %v5282 = vld [vmem:[%s5246 + $0x118] sm:$0xff]
        %v5283 = vld [vmem:[%s5246 + $0x120] sm:$0xff]
        %v5284 = vld [vmem:[%s5246 + $0x128] sm:$0xff]
        %v5285 = vld [vmem:[%s5246 + $0x130] sm:$0xff]
        %v5286 = vld [vmem:[%s5246 + $0x138] sm:$0xff]
        %v5287 = vld [vmem:[%s5246 + $0x140] sm:$0xff]
        %v5288 = vld [vmem:[%s5246 + $0x148] sm:$0xff]
        %v5289 = vld [vmem:[%s5246 + $0x150] sm:$0xff]
        %v5290 = vld [vmem:[%s5246 + $0x158] sm:$0xff]
        %v5291 = vld [vmem:[%s5246 + $0x160] sm:$0xff]
        %v5292 = vld [vmem:[%s5246 + $0x168] sm:$0xff]
        %v5293 = vld [vmem:[%s5246 + $0x170] sm:$0xff]
        %v5294 = vld [vmem:[%s5246 + $0x178] sm:$0xff]
        %v5295 = vld [vmem:[%s5246 + $0x180] sm:$0xff]
        %v5296 = vld [vmem:[%s5246 + $0x188] sm:$0xff]
        %v5297 = vld [vmem:[%s5246 + $0x190] sm:$0xff]
        %v5298 = vld [vmem:[%s5246 + $0x198] sm:$0xff]
        %v5299 = vld [vmem:[%s5246 + $0x1a0] sm:$0xff]
        %v5300 = vld [vmem:[%s5246 + $0x1a8] sm:$0xff]
        %v5301 = vrot.slane %v3880, 3
        %v5302 = vrot.slane %v3881, 3
        %v5358 = vunpack.c.l.b16 %v5247
        %v5359 = vunpack.c.h.b16 %v5247
        %v5360 = vunpack.c.l.b16 %v5248
        %v5361 = vunpack.c.h.b16 %v5248
        %v5362 = vunpack.c.l.b16 %v5249
        %v5363 = vunpack.c.h.b16 %v5249
        %v5364 = vunpack.c.l.b16 %v5250
        %v5365 = vunpack.c.h.b16 %v5250
        %v5366 = vunpack.c.l.b16 %v5251
        %v5367 = vunpack.c.h.b16 %v5251
        %v5368 = vunpack.c.l.b16 %v5252
        %v5369 = vunpack.c.h.b16 %v5252
        %v5370 = vunpack.c.l.b16 %v5253
        %v5371 = vunpack.c.h.b16 %v5253
        %v5372 = vunpack.c.l.b16 %v5254
        %v5373 = vunpack.c.h.b16 %v5254
        %v5374 = vunpack.c.l.b16 %v5255
        %v5375 = vunpack.c.h.b16 %v5255
        %v5376 = vunpack.c.l.b16 %v5256
        %v5377 = vunpack.c.h.b16 %v5256
        %v5378 = vunpack.c.l.b16 %v5257
        %v5379 = vunpack.c.h.b16 %v5257
        %v5380 = vunpack.c.l.b16 %v5258
        %v5381 = vunpack.c.h.b16 %v5258
        %v5382 = vunpack.c.l.b16 %v5259
        %v5383 = vunpack.c.h.b16 %v5259
        %v5384 = vunpack.c.l.b16 %v5260
        %v5385 = vunpack.c.h.b16 %v5260
        %v5386 = vunpack.c.l.b16 %v5261
        %v5387 = vunpack.c.h.b16 %v5261
        %v5388 = vunpack.c.l.b16 %v5262
        %v5389 = vunpack.c.h.b16 %v5262
        %v5390 = vunpack.c.l.b16 %v5263
        %v5391 = vunpack.c.h.b16 %v5263
        %v5392 = vunpack.c.l.b16 %v5264
        %v5393 = vunpack.c.h.b16 %v5264
        %v5394 = vunpack.c.l.b16 %v5265
        %v5395 = vunpack.c.h.b16 %v5265
        %v5396 = vunpack.c.l.b16 %v5266
        %v5397 = vunpack.c.h.b16 %v5266
        %v5398 = vunpack.c.l.b16 %v5267
        %v5399 = vunpack.c.h.b16 %v5267
        %v5400 = vunpack.c.l.b16 %v5268
        %v5401 = vunpack.c.h.b16 %v5268
        %v5402 = vunpack.c.l.b16 %v5269
        %v5403 = vunpack.c.h.b16 %v5269
        %v5404 = vunpack.c.l.b16 %v5270
        %v5405 = vunpack.c.h.b16 %v5270
        %v5406 = vunpack.c.l.b16 %v5271
        %v5407 = vunpack.c.h.b16 %v5271
        %v5408 = vunpack.c.l.b16 %v5272
        %v5409 = vunpack.c.h.b16 %v5272
        %v5410 = vunpack.c.l.b16 %v5273
        %v5411 = vunpack.c.h.b16 %v5273
        %v5412 = vunpack.c.l.b16 %v5274
        %v5413 = vunpack.c.h.b16 %v5274
        %v5414 = vunpack.c.l.b16 %v5275
        %v5415 = vunpack.c.h.b16 %v5275
        %v5416 = vunpack.c.l.b16 %v5276
        %v5417 = vunpack.c.h.b16 %v5276
        %v5418 = vunpack.c.l.b16 %v5277
        %v5419 = vunpack.c.h.b16 %v5277
        %v5420 = vunpack.c.l.b16 %v5278
        %v5421 = vunpack.c.h.b16 %v5278
        %v5422 = vunpack.c.l.b16 %v5279
        %v5423 = vunpack.c.h.b16 %v5279
        %v5424 = vunpack.c.l.b16 %v5280
        %v5425 = vunpack.c.h.b16 %v5280
        %v5426 = vunpack.c.l.b16 %v5281
        %v5427 = vunpack.c.h.b16 %v5281
        %v5428 = vunpack.c.l.b16 %v5282
        %v5429 = vunpack.c.h.b16 %v5282
        %v5430 = vunpack.c.l.b16 %v5283
        %v5431 = vunpack.c.h.b16 %v5283
        %v5432 = vunpack.c.l.b16 %v5284
        %v5433 = vunpack.c.h.b16 %v5284
        %v5434 = vunpack.c.l.b16 %v5285
        %v5435 = vunpack.c.h.b16 %v5285
        %v5436 = vunpack.c.l.b16 %v5286
        %v5437 = vunpack.c.h.b16 %v5286
        %v5438 = vunpack.c.l.b16 %v5287
        %v5439 = vunpack.c.h.b16 %v5287
        %v5440 = vunpack.c.l.b16 %v5288
        %v5441 = vunpack.c.h.b16 %v5288
        %v5442 = vunpack.c.l.b16 %v5289
        %v5443 = vunpack.c.h.b16 %v5289
        %v5444 = vunpack.c.l.b16 %v5290
        %v5445 = vunpack.c.h.b16 %v5290
        %v5446 = vunpack.c.l.b16 %v5291
        %v5447 = vunpack.c.h.b16 %v5291
        %v5448 = vunpack.c.l.b16 %v5292
        %v5449 = vunpack.c.h.b16 %v5292
        %v5450 = vunpack.c.l.b16 %v5293
        %v5451 = vunpack.c.h.b16 %v5293
        %v5452 = vunpack.c.l.b16 %v5294
        %v5453 = vunpack.c.h.b16 %v5294
        %v5454 = vunpack.c.l.b16 %v5295
        %v5455 = vunpack.c.h.b16 %v5295
        %v5456 = vunpack.c.l.b16 %v5296
        %v5457 = vunpack.c.h.b16 %v5296
        %v5458 = vunpack.c.l.b16 %v5297
        %v5459 = vunpack.c.h.b16 %v5297
        %v5460 = vunpack.c.l.b16 %v5298
        %v5461 = vunpack.c.h.b16 %v5298
        %v5462 = vunpack.c.l.b16 %v5299
        %v5463 = vunpack.c.h.b16 %v5299
        %v5464 = vunpack.c.l.b16 %v5300
        %v5465 = vunpack.c.h.b16 %v5300
        %v5466 = vpack.c.b16 %v5362, %v5358
        %v5467 = vpack.c.b16 %v5363, %v5359
        %v5468 = vpack.c.b16 %v5364, %v5360
        %v5469 = vpack.c.b16 %v5365, %v5361
        %v5470 = vpack.c.b16 %v5370, %v5366
        %v5471 = vpack.c.b16 %v5371, %v5367
        %v5472 = vpack.c.b16 %v5372, %v5368
        %v5473 = vpack.c.b16 %v5373, %v5369
        %v5474 = vpack.c.b16 %v5378, %v5374
        %v5475 = vpack.c.b16 %v5379, %v5375
        %v5476 = vpack.c.b16 %v5380, %v5376
        %v5477 = vpack.c.b16 %v5381, %v5377
        %v5478 = vpack.c.b16 %v5386, %v5382
        %v5479 = vpack.c.b16 %v5387, %v5383
        %v5480 = vpack.c.b16 %v5388, %v5384
        %v5481 = vpack.c.b16 %v5389, %v5385
        %v5482 = vpack.c.b16 %v5394, %v5390
        %v5483 = vpack.c.b16 %v5395, %v5391
        %v5484 = vpack.c.b16 %v5396, %v5392
        %v5485 = vpack.c.b16 %v5397, %v5393
        %v5486 = vpack.c.b16 %v5402, %v5398
        %v5487 = vpack.c.b16 %v5403, %v5399
        %v5488 = vpack.c.b16 %v5404, %v5400
        %v5489 = vpack.c.b16 %v5405, %v5401
        %v5490 = vpack.c.b16 %v5410, %v5406
        %v5491 = vpack.c.b16 %v5411, %v5407
        %v5492 = vpack.c.b16 %v5412, %v5408
        %v5493 = vpack.c.b16 %v5413, %v5409
        %v5494 = vpack.c.b16 %v5418, %v5414
        %v5495 = vpack.c.b16 %v5419, %v5415
        %v5496 = vpack.c.b16 %v5420, %v5416
        %v5497 = vpack.c.b16 %v5421, %v5417
        %v5498 = vpack.c.b16 %v5426, %v5422
        %v5499 = vpack.c.b16 %v5427, %v5423
        %v5500 = vpack.c.b16 %v5428, %v5424
        %v5501 = vpack.c.b16 %v5429, %v5425
        %v5502 = vpack.c.b16 %v5434, %v5430
        %v5503 = vpack.c.b16 %v5435, %v5431
        %v5504 = vpack.c.b16 %v5436, %v5432
        %v5505 = vpack.c.b16 %v5437, %v5433
        %v5506 = vpack.c.b16 %v5442, %v5438
        %v5507 = vpack.c.b16 %v5443, %v5439
        %v5508 = vpack.c.b16 %v5444, %v5440
        %v5509 = vpack.c.b16 %v5445, %v5441
        %v5510 = vpack.c.b16 %v5450, %v5446
        %v5511 = vpack.c.b16 %v5451, %v5447
        %v5512 = vpack.c.b16 %v5452, %v5448
        %v5513 = vpack.c.b16 %v5453, %v5449
        %v5514 = vpack.c.b16 %v5458, %v5454
        %v5515 = vpack.c.b16 %v5459, %v5455
        %v5516 = vpack.c.b16 %v5460, %v5456
        %v5517 = vpack.c.b16 %v5461, %v5457
        %v5518 = vpack.c.b16 %v5462, %v5462
        %v5519 = vpack.c.b16 %v5463, %v5463
        %v5520 = vpack.c.b16 %v5464, %v5464
        %v5521 = vpack.c.b16 %v5465, %v5465
        %v5575 = vsel %vm2376, %v5302, 0
        %v5578 = vsel %vm2380, %v5518, 0
        %v5581 = vsel %vm2380, %v5519, 0
        %v5584 = vsel %vm2380, %v5520, 0
        %v5587 = vsel %vm2380, %v5521, 0
        %5589 = vmatprep.subr.bf16.mxu0 %v5467
        %5590 = vmatpush1.bf16.msra.mxu0 %v5466
        %5591 = vmatprep.subr.bf16.mxu0 %v5471
        %5592 = vmatpush1.bf16.msra.mxu0 %v5470
        %5593 = vmatprep.subr.bf16.mxu0 %v5475
        %5594 = vmatpush1.bf16.msra.mxu0 %v5474
        %5595 = vmatprep.subr.bf16.mxu0 %v5479
        %5596 = vmatpush1.bf16.msra.mxu0 %v5478
        %5597 = vmatprep.subr.bf16.mxu0 %v5483
        %5598 = vmatpush1.bf16.msra.mxu0 %v5482
        %5599 = vmatprep.subr.bf16.mxu0 %v5487
        %5600 = vmatpush1.bf16.msra.mxu0 %v5486
        %5601 = vmatprep.subr.bf16.mxu0 %v5491
        %5602 = vmatpush1.bf16.msra.mxu0 %v5490
        %5603 = vmatprep.subr.bf16.mxu0 %v5495
        %5604 = vmatpush1.bf16.msra.mxu0 %v5494
        %5605 = vmatprep.subr.bf16.mxu0 %v5499
        %5606 = vmatpush1.bf16.msra.mxu0 %v5498
        %5607 = vmatprep.subr.bf16.mxu0 %v5503
        %5608 = vmatpush1.bf16.msra.mxu0 %v5502
        %5609 = vmatprep.subr.bf16.mxu0 %v5507
        %5610 = vmatpush1.bf16.msra.mxu0 %v5506
        %5611 = vmatprep.subr.bf16.mxu0 %v5511
        %5612 = vmatpush1.bf16.msra.mxu0 %v5510
        %5613 = vmatprep.subr.bf16.mxu0 %v5515
        %5614 = vmatpush1.bf16.msra.mxu0 %v5514
        %5615 = vmatprep.subr.bf16.mxu0 %v5581
        %5616 = vmatpush1.bf16.msra.mxu0 %v5578
        %5617 = vmatprep.subr.bf16.mxu0 0
        %5618 = vmatpush1.bf16.msra.mxu0 0
        %5619 = vmatprep.subr.bf16.mxu0 0
        %5620 = vmatpush1.bf16.msra.mxu0 0
        %5621 = vmatprep.mubr.bf16.mxu0 %v5575
        %5622 = vmatmul.mubr.bf16.gmra.mrb[0].mxu0 %v5301
        %v5623 = vpop.f32.mrb[0].mxu0
        %v5624 = vadd.f32 0.0, %v5623
        %v5625 = vpop.f32.mrb[0].mxu0
        %v5626 = vadd.f32 0.0, %v5625
        %v5627 = vpop.f32.mrb[0].mxu0
        %v5628 = vpop.f32.mrb[0].mxu0
        %5629 = vdwg.mxu0
        %5630 = vmatprep.subr.bf16.mxu0 %v5469
        %5631 = vmatpush1.bf16.msra.mxu0 %v5468
        %5632 = vmatprep.subr.bf16.mxu0 %v5473
        %5633 = vmatpush1.bf16.msra.mxu0 %v5472
        %5634 = vmatprep.subr.bf16.mxu0 %v5477
        %5635 = vmatpush1.bf16.msra.mxu0 %v5476
        %5636 = vmatprep.subr.bf16.mxu0 %v5481
        %5637 = vmatpush1.bf16.msra.mxu0 %v5480
        %5638 = vmatprep.subr.bf16.mxu0 %v5485
        %5639 = vmatpush1.bf16.msra.mxu0 %v5484
        %5640 = vmatprep.subr.bf16.mxu0 %v5489
        %5641 = vmatpush1.bf16.msra.mxu0 %v5488
        %5642 = vmatprep.subr.bf16.mxu0 %v5493
        %5643 = vmatpush1.bf16.msra.mxu0 %v5492
        %5644 = vmatprep.subr.bf16.mxu0 %v5497
        %5645 = vmatpush1.bf16.msra.mxu0 %v5496
        %5646 = vmatprep.subr.bf16.mxu0 %v5501
        %5647 = vmatpush1.bf16.msra.mxu0 %v5500
        %5648 = vmatprep.subr.bf16.mxu0 %v5505
        %5649 = vmatpush1.bf16.msra.mxu0 %v5504
        %5650 = vmatprep.subr.bf16.mxu0 %v5509
        %5651 = vmatpush1.bf16.msra.mxu0 %v5508
        %5652 = vmatprep.subr.bf16.mxu0 %v5513
        %5653 = vmatpush1.bf16.msra.mxu0 %v5512
        %5654 = vmatprep.subr.bf16.mxu0 %v5517
        %5655 = vmatpush1.bf16.msra.mxu0 %v5516
        %5656 = vmatprep.subr.bf16.mxu0 %v5587
        %5657 = vmatpush1.bf16.msra.mxu0 %v5584
        %5658 = vmatprep.subr.bf16.mxu0 0
        %5659 = vmatpush1.bf16.msra.mxu0 0
        %5660 = vmatprep.subr.bf16.mxu0 0
        %5661 = vmatpush1.bf16.msra.mxu0 0
        %5662 = vmatprep.mubr.bf16.mxu0 %v5575
        %5663 = vmatmul.mubr.bf16.gmra.mrb[0].mxu0 %v5301
        %v5664 = vpop.f32.mrb[0].mxu0
        %v5665 = vadd.f32 0.0, %v5664
        %v5666 = vpop.f32.mrb[0].mxu0
        %v5667 = vadd.f32 0.0, %v5666
        %v5668 = vpop.f32.mrb[0].mxu0
        %v5669 = vpop.f32.mrb[0].mxu0
        %5670 = vdwg.mxu0
        %v5675 = vcombine.low %v5624, %v5626
        %v5676 = vcombine.low %v5665, %v5667
        %v5678 = vunpack.c.l.s4 1966171168
        %v5679 = vunpack.c.0.s8 %v5678
        %v5680 = vlaneseq
        %v5681 = vshrl.u32 %v5680, 7
        %v5682 = vsub.s32 %v5679, %v5681
        %v5683 = vrot.slane %v5675, %v5682
        %v5685 = vunpack.c.l.s4 1966171168
        %v5686 = vunpack.c.0.s8 %v5685
        %v5687 = vlaneseq
        %v5688 = vshrl.u32 %v5687, 7
        %v5689 = vsub.s32 %v5686, %v5688
        %v5690 = vrot.slane %v5676, %v5689
        %v5691 = vcombine.low %v5683, %v5690
        %v5693 = vunpack.c.l.s4 1966171168
        %v5694 = vunpack.c.0.s8 %v5693
        %v5695 = vlaneseq
        %v5696 = vshrl.u32 %v5695, 7
        %v5697 = vsub.s32 %v5694, %v5696
        %v5698 = vrot.slane %v5691, %v5697
        %v5700 = vadd.f32 %v5245, %v5698
        %v5703 = vrot.slane %v2039, 1
        %v5704 = vrot.slane %v2040, 1
        %v5707 = vmax.f32 %v2039, %v5703
        %v5708 = vmax.f32 %v2040, %v5704
        %v5709 = vpack.c.bf16 %v5707, %v5707
        %v5710 = vpack.c.bf16 %v5708, %v5708
        %s5711 = scalar_lea.vmem %s385, 3456 [#allocation9]
        %v5712 = vld [vmem:[%s5711] sm:$0xff]
        %v5713 = vld [vmem:[%s5711 + $0x8] sm:$0xff]
        %v5714 = vld [vmem:[%s5711 + $0x10] sm:$0xff]
        %v5715 = vld [vmem:[%s5711 + $0x18] sm:$0xff]
        %v5716 = vld [vmem:[%s5711 + $0x20] sm:$0xff]
        %v5717 = vld [vmem:[%s5711 + $0x28] sm:$0xff]
        %v5718 = vld [vmem:[%s5711 + $0x30] sm:$0xff]
        %v5719 = vld [vmem:[%s5711 + $0x38] sm:$0xff]
        %v5720 = vld [vmem:[%s5711 + $0x40] sm:$0xff]
        %v5721 = vld [vmem:[%s5711 + $0x48] sm:$0xff]
        %v5722 = vld [vmem:[%s5711 + $0x50] sm:$0xff]
        %v5723 = vld [vmem:[%s5711 + $0x58] sm:$0xff]
        %v5724 = vld [vmem:[%s5711 + $0x60] sm:$0xff]
        %v5725 = vld [vmem:[%s5711 + $0x68] sm:$0xff]
        %v5726 = vld [vmem:[%s5711 + $0x70] sm:$0xff]
        %v5727 = vld [vmem:[%s5711 + $0x78] sm:$0xff]
        %v5728 = vld [vmem:[%s5711 + $0x80] sm:$0xff]
        %v5729 = vld [vmem:[%s5711 + $0x88] sm:$0xff]
        %v5730 = vld [vmem:[%s5711 + $0x90] sm:$0xff]
        %v5731 = vld [vmem:[%s5711 + $0x98] sm:$0xff]
        %v5732 = vld [vmem:[%s5711 + $0xa0] sm:$0xff]
        %v5733 = vld [vmem:[%s5711 + $0xa8] sm:$0xff]
        %v5734 = vld [vmem:[%s5711 + $0xb0] sm:$0xff]
        %v5735 = vld [vmem:[%s5711 + $0xb8] sm:$0xff]
        %v5736 = vld [vmem:[%s5711 + $0xc0] sm:$0xff]
        %v5737 = vld [vmem:[%s5711 + $0xc8] sm:$0xff]
        %v5738 = vld [vmem:[%s5711 + $0xd0] sm:$0xff]
        %v5739 = vld [vmem:[%s5711 + $0xd8] sm:$0xff]
        %v5740 = vld [vmem:[%s5711 + $0xe0] sm:$0xff]
        %v5741 = vld [vmem:[%s5711 + $0xe8] sm:$0xff]
        %v5742 = vld [vmem:[%s5711 + $0xf0] sm:$0xff]
        %v5743 = vld [vmem:[%s5711 + $0xf8] sm:$0xff]
        %v5744 = vld [vmem:[%s5711 + $0x100] sm:$0xff]
        %v5745 = vld [vmem:[%s5711 + $0x108] sm:$0xff]
        %v5746 = vld [vmem:[%s5711 + $0x110] sm:$0xff]
        %v5747 = vld [vmem:[%s5711 + $0x118] sm:$0xff]
        %v5748 = vld [vmem:[%s5711 + $0x120] sm:$0xff]
        %v5749 = vld [vmem:[%s5711 + $0x128] sm:$0xff]
        %v5750 = vld [vmem:[%s5711 + $0x130] sm:$0xff]
        %v5751 = vld [vmem:[%s5711 + $0x138] sm:$0xff]
        %v5752 = vld [vmem:[%s5711 + $0x140] sm:$0xff]
        %v5753 = vld [vmem:[%s5711 + $0x148] sm:$0xff]
        %v5754 = vld [vmem:[%s5711 + $0x150] sm:$0xff]
        %v5755 = vld [vmem:[%s5711 + $0x158] sm:$0xff]
        %v5756 = vld [vmem:[%s5711 + $0x160] sm:$0xff]
        %v5757 = vld [vmem:[%s5711 + $0x168] sm:$0xff]
        %v5758 = vld [vmem:[%s5711 + $0x170] sm:$0xff]
        %v5759 = vld [vmem:[%s5711 + $0x178] sm:$0xff]
        %v5760 = vld [vmem:[%s5711 + $0x180] sm:$0xff]
        %v5761 = vld [vmem:[%s5711 + $0x188] sm:$0xff]
        %v5762 = vld [vmem:[%s5711 + $0x190] sm:$0xff]
        %v5763 = vld [vmem:[%s5711 + $0x198] sm:$0xff]
        %v5764 = vld [vmem:[%s5711 + $0x1a0] sm:$0xff]
        %v5765 = vld [vmem:[%s5711 + $0x1a8] sm:$0xff]
        %v5820 = vunpack.c.l.b16 %v5712
        %v5821 = vunpack.c.h.b16 %v5712
        %v5822 = vunpack.c.l.b16 %v5713
        %v5823 = vunpack.c.h.b16 %v5713
        %v5824 = vunpack.c.l.b16 %v5714
        %v5825 = vunpack.c.h.b16 %v5714
        %v5826 = vunpack.c.l.b16 %v5715
        %v5827 = vunpack.c.h.b16 %v5715
        %v5828 = vunpack.c.l.b16 %v5716
        %v5829 = vunpack.c.h.b16 %v5716
        %v5830 = vunpack.c.l.b16 %v5717
        %v5831 = vunpack.c.h.b16 %v5717
        %v5832 = vunpack.c.l.b16 %v5718
        %v5833 = vunpack.c.h.b16 %v5718
        %v5834 = vunpack.c.l.b16 %v5719
        %v5835 = vunpack.c.h.b16 %v5719
        %v5836 = vunpack.c.l.b16 %v5720
        %v5837 = vunpack.c.h.b16 %v5720
        %v5838 = vunpack.c.l.b16 %v5721
        %v5839 = vunpack.c.h.b16 %v5721
        %v5840 = vunpack.c.l.b16 %v5722
        %v5841 = vunpack.c.h.b16 %v5722
        %v5842 = vunpack.c.l.b16 %v5723
        %v5843 = vunpack.c.h.b16 %v5723
        %v5844 = vunpack.c.l.b16 %v5724
        %v5845 = vunpack.c.h.b16 %v5724
        %v5846 = vunpack.c.l.b16 %v5725
        %v5847 = vunpack.c.h.b16 %v5725
        %v5848 = vunpack.c.l.b16 %v5726
        %v5849 = vunpack.c.h.b16 %v5726
        %v5850 = vunpack.c.l.b16 %v5727
        %v5851 = vunpack.c.h.b16 %v5727
        %v5852 = vunpack.c.l.b16 %v5728
        %v5853 = vunpack.c.h.b16 %v5728
        %v5854 = vunpack.c.l.b16 %v5729
        %v5855 = vunpack.c.h.b16 %v5729
        %v5856 = vunpack.c.l.b16 %v5730
        %v5857 = vunpack.c.h.b16 %v5730
        %v5858 = vunpack.c.l.b16 %v5731
        %v5859 = vunpack.c.h.b16 %v5731
        %v5860 = vunpack.c.l.b16 %v5732
        %v5861 = vunpack.c.h.b16 %v5732
        %v5862 = vunpack.c.l.b16 %v5733
        %v5863 = vunpack.c.h.b16 %v5733
        %v5864 = vunpack.c.l.b16 %v5734
        %v5865 = vunpack.c.h.b16 %v5734
        %v5866 = vunpack.c.l.b16 %v5735
        %v5867 = vunpack.c.h.b16 %v5735
        %v5868 = vunpack.c.l.b16 %v5736
        %v5869 = vunpack.c.h.b16 %v5736
        %v5870 = vunpack.c.l.b16 %v5737
        %v5871 = vunpack.c.h.b16 %v5737
        %v5872 = vunpack.c.l.b16 %v5738
        %v5873 = vunpack.c.h.b16 %v5738
        %v5874 = vunpack.c.l.b16 %v5739
        %v5875 = vunpack.c.h.b16 %v5739
        %v5876 = vunpack.c.l.b16 %v5740
        %v5877 = vunpack.c.h.b16 %v5740
        %v5878 = vunpack.c.l.b16 %v5741
        %v5879 = vunpack.c.h.b16 %v5741
        %v5880 = vunpack.c.l.b16 %v5742
        %v5881 = vunpack.c.h.b16 %v5742
        %v5882 = vunpack.c.l.b16 %v5743
        %v5883 = vunpack.c.h.b16 %v5743
        %v5884 = vunpack.c.l.b16 %v5744
        %v5885 = vunpack.c.h.b16 %v5744
        %v5886 = vunpack.c.l.b16 %v5745
        %v5887 = vunpack.c.h.b16 %v5745
        %v5888 = vunpack.c.l.b16 %v5746
        %v5889 = vunpack.c.h.b16 %v5746
        %v5890 = vunpack.c.l.b16 %v5747
        %v5891 = vunpack.c.h.b16 %v5747
        %v5892 = vunpack.c.l.b16 %v5748
        %v5893 = vunpack.c.h.b16 %v5748
        %v5894 = vunpack.c.l.b16 %v5749
        %v5895 = vunpack.c.h.b16 %v5749
        %v5896 = vunpack.c.l.b16 %v5750
        %v5897 = vunpack.c.h.b16 %v5750
        %v5898 = vunpack.c.l.b16 %v5751
        %v5899 = vunpack.c.h.b16 %v5751
        %v5900 = vunpack.c.l.b16 %v5752
        %v5901 = vunpack.c.h.b16 %v5752
        %v5902 = vunpack.c.l.b16 %v5753
        %v5903 = vunpack.c.h.b16 %v5753
        %v5904 = vunpack.c.l.b16 %v5754
        %v5905 = vunpack.c.h.b16 %v5754
        %v5906 = vunpack.c.l.b16 %v5755
        %v5907 = vunpack.c.h.b16 %v5755
        %v5908 = vunpack.c.l.b16 %v5756
        %v5909 = vunpack.c.h.b16 %v5756
        %v5910 = vunpack.c.l.b16 %v5757
        %v5911 = vunpack.c.h.b16 %v5757
        %v5912 = vunpack.c.l.b16 %v5758
        %v5913 = vunpack.c.h.b16 %v5758
        %v5914 = vunpack.c.l.b16 %v5759
        %v5915 = vunpack.c.h.b16 %v5759
        %v5916 = vunpack.c.l.b16 %v5760
        %v5917 = vunpack.c.h.b16 %v5760
        %v5918 = vunpack.c.l.b16 %v5761
        %v5919 = vunpack.c.h.b16 %v5761
        %v5920 = vunpack.c.l.b16 %v5762
        %v5921 = vunpack.c.h.b16 %v5762
        %v5922 = vunpack.c.l.b16 %v5763
        %v5923 = vunpack.c.h.b16 %v5763
        %v5924 = vunpack.c.l.b16 %v5764
        %v5925 = vunpack.c.h.b16 %v5764
        %v5926 = vunpack.c.l.b16 %v5765
        %v5927 = vunpack.c.h.b16 %v5765
        %v5928 = vpack.c.b16 %v5824, %v5820
        %v5929 = vpack.c.b16 %v5825, %v5821
        %v5930 = vpack.c.b16 %v5826, %v5822
        %v5931 = vpack.c.b16 %v5827, %v5823
        %v5932 = vpack.c.b16 %v5832, %v5828
        %v5933 = vpack.c.b16 %v5833, %v5829
        %v5934 = vpack.c.b16 %v5834, %v5830
        %v5935 = vpack.c.b16 %v5835, %v5831
        %v5936 = vpack.c.b16 %v5840, %v5836
        %v5937 = vpack.c.b16 %v5841, %v5837
        %v5938 = vpack.c.b16 %v5842, %v5838
        %v5939 = vpack.c.b16 %v5843, %v5839
        %v5940 = vpack.c.b16 %v5848, %v5844
        %v5941 = vpack.c.b16 %v5849, %v5845
        %v5942 = vpack.c.b16 %v5850, %v5846
        %v5943 = vpack.c.b16 %v5851, %v5847
        %v5944 = vpack.c.b16 %v5856, %v5852
        %v5945 = vpack.c.b16 %v5857, %v5853
        %v5946 = vpack.c.b16 %v5858, %v5854
        %v5947 = vpack.c.b16 %v5859, %v5855
        %v5948 = vpack.c.b16 %v5864, %v5860
        %v5949 = vpack.c.b16 %v5865, %v5861
        %v5950 = vpack.c.b16 %v5866, %v5862
        %v5951 = vpack.c.b16 %v5867, %v5863
        %v5952 = vpack.c.b16 %v5872, %v5868
        %v5953 = vpack.c.b16 %v5873, %v5869
        %v5954 = vpack.c.b16 %v5874, %v5870
        %v5955 = vpack.c.b16 %v5875, %v5871
        %v5956 = vpack.c.b16 %v5880, %v5876
        %v5957 = vpack.c.b16 %v5881, %v5877
        %v5958 = vpack.c.b16 %v5882, %v5878
        %v5959 = vpack.c.b16 %v5883, %v5879
        %v5960 = vpack.c.b16 %v5888, %v5884
        %v5961 = vpack.c.b16 %v5889, %v5885
        %v5962 = vpack.c.b16 %v5890, %v5886
        %v5963 = vpack.c.b16 %v5891, %v5887
        %v5964 = vpack.c.b16 %v5896, %v5892
        %v5965 = vpack.c.b16 %v5897, %v5893
        %v5966 = vpack.c.b16 %v5898, %v5894
        %v5967 = vpack.c.b16 %v5899, %v5895
        %v5968 = vpack.c.b16 %v5904, %v5900
        %v5969 = vpack.c.b16 %v5905, %v5901
        %v5970 = vpack.c.b16 %v5906, %v5902
        %v5971 = vpack.c.b16 %v5907, %v5903
        %v5972 = vpack.c.b16 %v5912, %v5908
        %v5973 = vpack.c.b16 %v5913, %v5909
        %v5974 = vpack.c.b16 %v5914, %v5910
        %v5975 = vpack.c.b16 %v5915, %v5911
        %v5976 = vpack.c.b16 %v5920, %v5916
        %v5977 = vpack.c.b16 %v5921, %v5917
        %v5978 = vpack.c.b16 %v5922, %v5918
        %v5979 = vpack.c.b16 %v5923, %v5919
        %v5980 = vpack.c.b16 %v5924, %v5924
        %v5981 = vpack.c.b16 %v5925, %v5925
        %v5982 = vpack.c.b16 %v5926, %v5926
        %v5983 = vpack.c.b16 %v5927, %v5927
        %v6037 = vsel %vm2376, %v5710, 0
        %v6040 = vsel %vm2380, %v5980, 0
        %v6043 = vsel %vm2380, %v5981, 0
        %v6046 = vsel %vm2380, %v5982, 0
        %v6049 = vsel %vm2380, %v5983, 0
        %6051 = vmatprep.subr.bf16.mxu0 %v5929
        %6052 = vmatpush1.bf16.msra.mxu0 %v5928
        %6053 = vmatprep.subr.bf16.mxu0 %v5933
        %6054 = vmatpush1.bf16.msra.mxu0 %v5932
        %6055 = vmatprep.subr.bf16.mxu0 %v5937
        %6056 = vmatpush1.bf16.msra.mxu0 %v5936
        %6057 = vmatprep.subr.bf16.mxu0 %v5941
        %6058 = vmatpush1.bf16.msra.mxu0 %v5940
        %6059 = vmatprep.subr.bf16.mxu0 %v5945
        %6060 = vmatpush1.bf16.msra.mxu0 %v5944
        %6061 = vmatprep.subr.bf16.mxu0 %v5949
        %6062 = vmatpush1.bf16.msra.mxu0 %v5948
        %6063 = vmatprep.subr.bf16.mxu0 %v5953
        %6064 = vmatpush1.bf16.msra.mxu0 %v5952
        %6065 = vmatprep.subr.bf16.mxu0 %v5957
        %6066 = vmatpush1.bf16.msra.mxu0 %v5956
        %6067 = vmatprep.subr.bf16.mxu0 %v5961
        %6068 = vmatpush1.bf16.msra.mxu0 %v5960
        %6069 = vmatprep.subr.bf16.mxu0 %v5965
        %6070 = vmatpush1.bf16.msra.mxu0 %v5964
        %6071 = vmatprep.subr.bf16.mxu0 %v5969
        %6072 = vmatpush1.bf16.msra.mxu0 %v5968
        %6073 = vmatprep.subr.bf16.mxu0 %v5973
        %6074 = vmatpush1.bf16.msra.mxu0 %v5972
        %6075 = vmatprep.subr.bf16.mxu0 %v5977
        %6076 = vmatpush1.bf16.msra.mxu0 %v5976
        %6077 = vmatprep.subr.bf16.mxu0 %v6043
        %6078 = vmatpush1.bf16.msra.mxu0 %v6040
        %6079 = vmatprep.subr.bf16.mxu0 0
        %6080 = vmatpush1.bf16.msra.mxu0 0
        %6081 = vmatprep.subr.bf16.mxu0 0
        %6082 = vmatpush1.bf16.msra.mxu0 0
        %6083 = vmatprep.mubr.bf16.mxu0 %v6037
        %6084 = vmatmul.mubr.bf16.gmra.mrb[0].mxu0 %v5709
        %v6085 = vpop.f32.mrb[0].mxu0
        %v6086 = vadd.f32 0.0, %v6085
        %v6087 = vpop.f32.mrb[0].mxu0
        %v6088 = vadd.f32 0.0, %v6087
        %v6089 = vpop.f32.mrb[0].mxu0
        %v6090 = vpop.f32.mrb[0].mxu0
        %6091 = vdwg.mxu0
        %6092 = vmatprep.subr.bf16.mxu0 %v5931
        %6093 = vmatpush1.bf16.msra.mxu0 %v5930
        %6094 = vmatprep.subr.bf16.mxu0 %v5935
        %6095 = vmatpush1.bf16.msra.mxu0 %v5934
        %6096 = vmatprep.subr.bf16.mxu0 %v5939
        %6097 = vmatpush1.bf16.msra.mxu0 %v5938
        %6098 = vmatprep.subr.bf16.mxu0 %v5943
        %6099 = vmatpush1.bf16.msra.mxu0 %v5942
        %6100 = vmatprep.subr.bf16.mxu0 %v5947
        %6101 = vmatpush1.bf16.msra.mxu0 %v5946
        %6102 = vmatprep.subr.bf16.mxu0 %v5951
        %6103 = vmatpush1.bf16.msra.mxu0 %v5950
        %6104 = vmatprep.subr.bf16.mxu0 %v5955
        %6105 = vmatpush1.bf16.msra.mxu0 %v5954
        %6106 = vmatprep.subr.bf16.mxu0 %v5959
        %6107 = vmatpush1.bf16.msra.mxu0 %v5958
        %6108 = vmatprep.subr.bf16.mxu0 %v5963
        %6109 = vmatpush1.bf16.msra.mxu0 %v5962
        %6110 = vmatprep.subr.bf16.mxu0 %v5967
        %6111 = vmatpush1.bf16.msra.mxu0 %v5966
        %6112 = vmatprep.subr.bf16.mxu0 %v5971
        %6113 = vmatpush1.bf16.msra.mxu0 %v5970
        %6114 = vmatprep.subr.bf16.mxu0 %v5975
        %6115 = vmatpush1.bf16.msra.mxu0 %v5974
        %6116 = vmatprep.subr.bf16.mxu0 %v5979
        %6117 = vmatpush1.bf16.msra.mxu0 %v5978
        %6118 = vmatprep.subr.bf16.mxu0 %v6049
        %6119 = vmatpush1.bf16.msra.mxu0 %v6046
        %6120 = vmatprep.subr.bf16.mxu0 0
        %6121 = vmatpush1.bf16.msra.mxu0 0
        %6122 = vmatprep.subr.bf16.mxu0 0
        %6123 = vmatpush1.bf16.msra.mxu0 0
        %6124 = vmatprep.mubr.bf16.mxu0 %v6037
        %6125 = vmatmul.mubr.bf16.gmra.mrb[0].mxu0 %v5709
        %v6126 = vpop.f32.mrb[0].mxu0
        %v6127 = vadd.f32 0.0, %v6126
        %v6128 = vpop.f32.mrb[0].mxu0
        %v6129 = vadd.f32 0.0, %v6128
        %v6130 = vpop.f32.mrb[0].mxu0
        %v6131 = vpop.f32.mrb[0].mxu0
        %6132 = vdwg.mxu0
        %v6137 = vcombine.low %v6086, %v6088
        %v6138 = vcombine.low %v6127, %v6129
        %v6140 = vunpack.c.l.s4 1966171168
        %v6141 = vunpack.c.0.s8 %v6140
        %v6142 = vlaneseq
        %v6143 = vshrl.u32 %v6142, 7
        %v6144 = vsub.s32 %v6141, %v6143
        %v6145 = vrot.slane %v6137, %v6144
        %v6147 = vunpack.c.l.s4 1966171168
        %v6148 = vunpack.c.0.s8 %v6147
        %v6149 = vlaneseq
        %v6150 = vshrl.u32 %v6149, 7
        %v6151 = vsub.s32 %v6148, %v6150
        %v6152 = vrot.slane %v6138, %v6151
        %v6153 = vcombine.low %v6145, %v6152
        %v6155 = vunpack.c.l.s4 1966171168
        %v6156 = vunpack.c.0.s8 %v6155
        %v6157 = vlaneseq
        %v6158 = vshrl.u32 %v6157, 7
        %v6159 = vsub.s32 %v6156, %v6158
        %v6160 = vrot.slane %v6153, %v6159
        %v6162 = vadd.f32 %v5700, %v6160
        %v6163 = vmax.f32 %v6162, 0.0
        %v6165 = vlaneseq
        %v6166 = vshrl.u32 %v6165, 7
        %v6167 = vsub.s32 0, %v6166
        %v6168 = vrot.slane %v6163, %v6167
        %v6169 = vlaneseq
        %v6170 = vshrl.u32 %v6169, 7
        %v6171 = vsub.s32 1, %v6170
        %v6172 = vrot.slane %v6163, %v6171
        %v6173 = vlaneseq
        %v6174 = vshrl.u32 %v6173, 7
        %v6175 = vsub.s32 2, %v6174
        %v6176 = vrot.slane %v6163, %v6175
        %v6177 = vlaneseq
        %v6178 = vshrl.u32 %v6177, 7
        %v6179 = vsub.s32 3, %v6178
        %v6180 = vrot.slane %v6163, %v6179
        %v6185 = vpack.c.bf16 %v6168, %v6168
        %v6186 = vpack.c.bf16 %v6172, %v6172
        %v6187 = vpack.c.bf16 %v6176, %v6176
        %v6188 = vpack.c.bf16 %v6180, %v6180
        %v6189 = vld [vmem:[%s403] sm:$0xff]
        %v6190 = vld [vmem:[%s403 + $0x8] sm:$0xff]
        %v6191 = vld [vmem:[%s403 + $0x10] sm:$0xff]
        %v6192 = vld [vmem:[%s403 + $0x18] sm:$0xff]
        %v6193 = vld [vmem:[%s403 + $0x20] sm:$0xff]
        %v6194 = vld [vmem:[%s403 + $0x28] sm:$0xff]
        %v6195 = vld [vmem:[%s403 + $0x30] sm:$0xff]
        %v6196 = vld [vmem:[%s403 + $0x38] sm:$0xff]
        %v6197 = vld [vmem:[%s403 + $0x40] sm:$0xff]
        %v6198 = vld [vmem:[%s403 + $0x48] sm:$0xff]
        %v6199 = vld [vmem:[%s403 + $0x50] sm:$0xff]
        %v6200 = vld [vmem:[%s403 + $0x58] sm:$0xff]
        %v6201 = vld [vmem:[%s403 + $0x60] sm:$0xff]
        %v6202 = vld [vmem:[%s403 + $0x68] sm:$0xff]
        %v6203 = vld [vmem:[%s403 + $0x70] sm:$0xff]
        %v6204 = vld [vmem:[%s403 + $0x78] sm:$0xff]
        %v6205 = vld [vmem:[%s403 + $0x80] sm:$0xff]
        %v6206 = vld [vmem:[%s403 + $0x88] sm:$0xff]
        %v6207 = vld [vmem:[%s403 + $0x90] sm:$0xff]
        %v6208 = vld [vmem:[%s403 + $0x98] sm:$0xff]
        %v6209 = vld [vmem:[%s403 + $0xa0] sm:$0xff]
        %v6210 = vld [vmem:[%s403 + $0xa8] sm:$0xff]
        %v6211 = vld [vmem:[%s403 + $0xb0] sm:$0xff]
        %v6212 = vld [vmem:[%s403 + $0xb8] sm:$0xff]
        %v6213 = vld [vmem:[%s403 + $0xc0] sm:$0xff]
        %v6214 = vld [vmem:[%s403 + $0xc8] sm:$0xff]
        %v6215 = vld [vmem:[%s403 + $0xd0] sm:$0xff]
        %v6216 = vld [vmem:[%s403 + $0xd8] sm:$0xff]
        %v6217 = vld [vmem:[%s403 + $0xe0] sm:$0xff]
        %v6218 = vld [vmem:[%s403 + $0xe8] sm:$0xff]
        %v6219 = vld [vmem:[%s403 + $0xf0] sm:$0xff]
        %v6220 = vld [vmem:[%s403 + $0xf8] sm:$0xff]
        %v6221 = vld [vmem:[%s403 + $0x100] sm:$0xff]
        %v6222 = vld [vmem:[%s403 + $0x108] sm:$0xff]
        %v6223 = vld [vmem:[%s403 + $0x110] sm:$0xff]
        %v6224 = vld [vmem:[%s403 + $0x118] sm:$0xff]
        %v6225 = vld [vmem:[%s403 + $0x120] sm:$0xff]
        %v6226 = vld [vmem:[%s403 + $0x128] sm:$0xff]
        %v6227 = vld [vmem:[%s403 + $0x130] sm:$0xff]
        %v6228 = vld [vmem:[%s403 + $0x138] sm:$0xff]
        %v6229 = vld [vmem:[%s403 + $0x140] sm:$0xff]
        %v6230 = vld [vmem:[%s403 + $0x148] sm:$0xff]
        %v6231 = vld [vmem:[%s403 + $0x150] sm:$0xff]
        %v6232 = vld [vmem:[%s403 + $0x158] sm:$0xff]
        %v6233 = vld [vmem:[%s403 + $0x160] sm:$0xff]
        %v6234 = vld [vmem:[%s403 + $0x168] sm:$0xff]
        %v6235 = vld [vmem:[%s403 + $0x170] sm:$0xff]
        %v6236 = vld [vmem:[%s403 + $0x178] sm:$0xff]
        %v6237 = vld [vmem:[%s403 + $0x180] sm:$0xff]
        %v6238 = vld [vmem:[%s403 + $0x188] sm:$0xff]
        %v6239 = vld [vmem:[%s403 + $0x190] sm:$0xff]
        %v6240 = vld [vmem:[%s403 + $0x198] sm:$0xff]
        %v6241 = vld [vmem:[%s403 + $0x1a0] sm:$0xff]
        %v6242 = vld [vmem:[%s403 + $0x1a8] sm:$0xff]
        %v6243 = vld [vmem:[%s403 + $0x1b0] sm:$0xff]
        %v6244 = vld [vmem:[%s403 + $0x1b8] sm:$0xff]
        %v6245 = vld [vmem:[%s403 + $0x1c0] sm:$0xff]
        %v6246 = vld [vmem:[%s403 + $0x1c8] sm:$0xff]
        %v6247 = vld [vmem:[%s403 + $0x1d0] sm:$0xff]
        %v6248 = vld [vmem:[%s403 + $0x1d8] sm:$0xff]
        %v6249 = vld [vmem:[%s403 + $0x1e0] sm:$0xff]
        %v6250 = vld [vmem:[%s403 + $0x1e8] sm:$0xff]
        %v6251 = vld [vmem:[%s403 + $0x1f0] sm:$0xff]
        %v6252 = vld [vmem:[%s403 + $0x1f8] sm:$0xff]
        %v6317 = vunpack.c.l.b16 %v6189
        %v6318 = vunpack.c.h.b16 %v6189
        %v6319 = vunpack.c.l.b16 %v6190
        %v6320 = vunpack.c.h.b16 %v6190
        %v6321 = vunpack.c.l.b16 %v6191
        %v6322 = vunpack.c.h.b16 %v6191
        %v6323 = vunpack.c.l.b16 %v6192
        %v6324 = vunpack.c.h.b16 %v6192
        %v6325 = vunpack.c.l.b16 %v6193
        %v6326 = vunpack.c.h.b16 %v6193
        %v6327 = vunpack.c.l.b16 %v6194
        %v6328 = vunpack.c.h.b16 %v6194
        %v6329 = vunpack.c.l.b16 %v6195
        %v6330 = vunpack.c.h.b16 %v6195
        %v6331 = vunpack.c.l.b16 %v6196
        %v6332 = vunpack.c.h.b16 %v6196
        %v6333 = vunpack.c.l.b16 %v6197
        %v6334 = vunpack.c.h.b16 %v6197
        %v6335 = vunpack.c.l.b16 %v6198
        %v6336 = vunpack.c.h.b16 %v6198
        %v6337 = vunpack.c.l.b16 %v6199
        %v6338 = vunpack.c.h.b16 %v6199
        %v6339 = vunpack.c.l.b16 %v6200
        %v6340 = vunpack.c.h.b16 %v6200
        %v6341 = vunpack.c.l.b16 %v6201
        %v6342 = vunpack.c.h.b16 %v6201
        %v6343 = vunpack.c.l.b16 %v6202
        %v6344 = vunpack.c.h.b16 %v6202
        %v6345 = vunpack.c.l.b16 %v6203
        %v6346 = vunpack.c.h.b16 %v6203
        %v6347 = vunpack.c.l.b16 %v6204
        %v6348 = vunpack.c.h.b16 %v6204
        %v6349 = vunpack.c.l.b16 %v6205
        %v6350 = vunpack.c.h.b16 %v6205
        %v6351 = vunpack.c.l.b16 %v6206
        %v6352 = vunpack.c.h.b16 %v6206
        %v6353 = vunpack.c.l.b16 %v6207
        %v6354 = vunpack.c.h.b16 %v6207
        %v6355 = vunpack.c.l.b16 %v6208
        %v6356 = vunpack.c.h.b16 %v6208
        %v6357 = vunpack.c.l.b16 %v6209
        %v6358 = vunpack.c.h.b16 %v6209
        %v6359 = vunpack.c.l.b16 %v6210
        %v6360 = vunpack.c.h.b16 %v6210
        %v6361 = vunpack.c.l.b16 %v6211
        %v6362 = vunpack.c.h.b16 %v6211
        %v6363 = vunpack.c.l.b16 %v6212
        %v6364 = vunpack.c.h.b16 %v6212
        %v6365 = vunpack.c.l.b16 %v6213
        %v6366 = vunpack.c.h.b16 %v6213
        %v6367 = vunpack.c.l.b16 %v6214
        %v6368 = vunpack.c.h.b16 %v6214
        %v6369 = vunpack.c.l.b16 %v6215
        %v6370 = vunpack.c.h.b16 %v6215
        %v6371 = vunpack.c.l.b16 %v6216
        %v6372 = vunpack.c.h.b16 %v6216
        %v6373 = vunpack.c.l.b16 %v6217
        %v6374 = vunpack.c.h.b16 %v6217
        %v6375 = vunpack.c.l.b16 %v6218
        %v6376 = vunpack.c.h.b16 %v6218
        %v6377 = vunpack.c.l.b16 %v6219
        %v6378 = vunpack.c.h.b16 %v6219
        %v6379 = vunpack.c.l.b16 %v6220
        %v6380 = vunpack.c.h.b16 %v6220
        %v6381 = vunpack.c.l.b16 %v6221
        %v6382 = vunpack.c.h.b16 %v6221
        %v6383 = vunpack.c.l.b16 %v6222
        %v6384 = vunpack.c.h.b16 %v6222
        %v6385 = vunpack.c.l.b16 %v6223
        %v6386 = vunpack.c.h.b16 %v6223
        %v6387 = vunpack.c.l.b16 %v6224
        %v6388 = vunpack.c.h.b16 %v6224
        %v6389 = vunpack.c.l.b16 %v6225
        %v6390 = vunpack.c.h.b16 %v6225
        %v6391 = vunpack.c.l.b16 %v6226
        %v6392 = vunpack.c.h.b16 %v6226
        %v6393 = vunpack.c.l.b16 %v6227
        %v6394 = vunpack.c.h.b16 %v6227
        %v6395 = vunpack.c.l.b16 %v6228
        %v6396 = vunpack.c.h.b16 %v6228
        %v6397 = vunpack.c.l.b16 %v6229
        %v6398 = vunpack.c.h.b16 %v6229
        %v6399 = vunpack.c.l.b16 %v6230
        %v6400 = vunpack.c.h.b16 %v6230
        %v6401 = vunpack.c.l.b16 %v6231
        %v6402 = vunpack.c.h.b16 %v6231
        %v6403 = vunpack.c.l.b16 %v6232
        %v6404 = vunpack.c.h.b16 %v6232
        %v6405 = vunpack.c.l.b16 %v6233
        %v6406 = vunpack.c.h.b16 %v6233
        %v6407 = vunpack.c.l.b16 %v6234
        %v6408 = vunpack.c.h.b16 %v6234
        %v6409 = vunpack.c.l.b16 %v6235
        %v6410 = vunpack.c.h.b16 %v6235
        %v6411 = vunpack.c.l.b16 %v6236
        %v6412 = vunpack.c.h.b16 %v6236
        %v6413 = vunpack.c.l.b16 %v6237
        %v6414 = vunpack.c.h.b16 %v6237
        %v6415 = vunpack.c.l.b16 %v6238
        %v6416 = vunpack.c.h.b16 %v6238
        %v6417 = vunpack.c.l.b16 %v6239
        %v6418 = vunpack.c.h.b16 %v6239
        %v6419 = vunpack.c.l.b16 %v6240
        %v6420 = vunpack.c.h.b16 %v6240
        %v6421 = vunpack.c.l.b16 %v6241
        %v6422 = vunpack.c.h.b16 %v6241
        %v6423 = vunpack.c.l.b16 %v6242
        %v6424 = vunpack.c.h.b16 %v6242
        %v6425 = vunpack.c.l.b16 %v6243
        %v6426 = vunpack.c.h.b16 %v6243
        %v6427 = vunpack.c.l.b16 %v6244
        %v6428 = vunpack.c.h.b16 %v6244
        %v6429 = vunpack.c.l.b16 %v6245
        %v6430 = vunpack.c.h.b16 %v6245
        %v6431 = vunpack.c.l.b16 %v6246
        %v6432 = vunpack.c.h.b16 %v6246
        %v6433 = vunpack.c.l.b16 %v6247
        %v6434 = vunpack.c.h.b16 %v6247
        %v6435 = vunpack.c.l.b16 %v6248
        %v6436 = vunpack.c.h.b16 %v6248
        %v6437 = vunpack.c.l.b16 %v6249
        %v6438 = vunpack.c.h.b16 %v6249
        %v6439 = vunpack.c.l.b16 %v6250
        %v6440 = vunpack.c.h.b16 %v6250
        %v6441 = vunpack.c.l.b16 %v6251
        %v6442 = vunpack.c.h.b16 %v6251
        %v6443 = vunpack.c.l.b16 %v6252
        %v6444 = vunpack.c.h.b16 %v6252
        %v6445 = vpack.c.b16 %v6319, %v6317
        %v6446 = vpack.c.b16 %v6320, %v6318
        %v6447 = vpack.c.b16 %v6323, %v6321
        %v6448 = vpack.c.b16 %v6324, %v6322
        %v6449 = vpack.c.b16 %v6327, %v6325
        %v6450 = vpack.c.b16 %v6328, %v6326
        %v6451 = vpack.c.b16 %v6331, %v6329
        %v6452 = vpack.c.b16 %v6332, %v6330
        %v6453 = vpack.c.b16 %v6335, %v6333
        %v6454 = vpack.c.b16 %v6336, %v6334
        %v6455 = vpack.c.b16 %v6339, %v6337
        %v6456 = vpack.c.b16 %v6340, %v6338
        %v6457 = vpack.c.b16 %v6343, %v6341
        %v6458 = vpack.c.b16 %v6344, %v6342
        %v6459 = vpack.c.b16 %v6347, %v6345
        %v6460 = vpack.c.b16 %v6348, %v6346
        %v6461 = vpack.c.b16 %v6351, %v6349
        %v6462 = vpack.c.b16 %v6352, %v6350
        %v6463 = vpack.c.b16 %v6355, %v6353
        %v6464 = vpack.c.b16 %v6356, %v6354
        %v6465 = vpack.c.b16 %v6359, %v6357
        %v6466 = vpack.c.b16 %v6360, %v6358
        %v6467 = vpack.c.b16 %v6363, %v6361
        %v6468 = vpack.c.b16 %v6364, %v6362
        %v6469 = vpack.c.b16 %v6367, %v6365
        %v6470 = vpack.c.b16 %v6368, %v6366
        %v6471 = vpack.c.b16 %v6371, %v6369
        %v6472 = vpack.c.b16 %v6372, %v6370
        %v6473 = vpack.c.b16 %v6375, %v6373
        %v6474 = vpack.c.b16 %v6376, %v6374
        %v6475 = vpack.c.b16 %v6379, %v6377
        %v6476 = vpack.c.b16 %v6380, %v6378
        %v6477 = vpack.c.b16 %v6383, %v6381
        %v6478 = vpack.c.b16 %v6384, %v6382
        %v6479 = vpack.c.b16 %v6387, %v6385
        %v6480 = vpack.c.b16 %v6388, %v6386
        %v6481 = vpack.c.b16 %v6391, %v6389
        %v6482 = vpack.c.b16 %v6392, %v6390
        %v6483 = vpack.c.b16 %v6395, %v6393
        %v6484 = vpack.c.b16 %v6396, %v6394
        %v6485 = vpack.c.b16 %v6399, %v6397
        %v6486 = vpack.c.b16 %v6400, %v6398
        %v6487 = vpack.c.b16 %v6403, %v6401
        %v6488 = vpack.c.b16 %v6404, %v6402
        %v6489 = vpack.c.b16 %v6407, %v6405
        %v6490 = vpack.c.b16 %v6408, %v6406
        %v6491 = vpack.c.b16 %v6411, %v6409
        %v6492 = vpack.c.b16 %v6412, %v6410
        %v6493 = vpack.c.b16 %v6415, %v6413
        %v6494 = vpack.c.b16 %v6416, %v6414
        %v6495 = vpack.c.b16 %v6419, %v6417
        %v6496 = vpack.c.b16 %v6420, %v6418
        %v6497 = vpack.c.b16 %v6423, %v6421
        %v6498 = vpack.c.b16 %v6424, %v6422
        %v6499 = vpack.c.b16 %v6427, %v6425
        %v6500 = vpack.c.b16 %v6428, %v6426
        %v6501 = vpack.c.b16 %v6431, %v6429
        %v6502 = vpack.c.b16 %v6432, %v6430
        %v6503 = vpack.c.b16 %v6435, %v6433
        %v6504 = vpack.c.b16 %v6436, %v6434
        %v6505 = vpack.c.b16 %v6439, %v6437
        %v6506 = vpack.c.b16 %v6440, %v6438
        %v6507 = vpack.c.b16 %v6443, %v6441
        %v6508 = vpack.c.b16 %v6444, %v6442
        %6573 = vmatprep.subr.bf16.mxu0 %v6446
        %6574 = vmatpush1.bf16.msra.mxu0 %v6445
        %6575 = vmatprep.subr.bf16.mxu0 %v6448
        %6576 = vmatpush1.bf16.msra.mxu0 %v6447
        %6577 = vmatprep.subr.bf16.mxu0 %v6450
        %6578 = vmatpush1.bf16.msra.mxu0 %v6449
        %6579 = vmatprep.subr.bf16.mxu0 %v6452
        %6580 = vmatpush1.bf16.msra.mxu0 %v6451
        %6581 = vmatprep.subr.bf16.mxu0 %v6454
        %6582 = vmatpush1.bf16.msra.mxu0 %v6453
        %6583 = vmatprep.subr.bf16.mxu0 %v6456
        %6584 = vmatpush1.bf16.msra.mxu0 %v6455
        %6585 = vmatprep.subr.bf16.mxu0 %v6458
        %6586 = vmatpush1.bf16.msra.mxu0 %v6457
        %6587 = vmatprep.subr.bf16.mxu0 %v6460
        %6588 = vmatpush1.bf16.msra.mxu0 %v6459
        %6589 = vmatprep.subr.bf16.mxu0 %v6462
        %6590 = vmatpush1.bf16.msra.mxu0 %v6461
        %6591 = vmatprep.subr.bf16.mxu0 %v6464
        %6592 = vmatpush1.bf16.msra.mxu0 %v6463
        %6593 = vmatprep.subr.bf16.mxu0 %v6466
        %6594 = vmatpush1.bf16.msra.mxu0 %v6465
        %6595 = vmatprep.subr.bf16.mxu0 %v6468
        %6596 = vmatpush1.bf16.msra.mxu0 %v6467
        %6597 = vmatprep.subr.bf16.mxu0 %v6470
        %6598 = vmatpush1.bf16.msra.mxu0 %v6469
        %6599 = vmatprep.subr.bf16.mxu0 %v6472
        %6600 = vmatpush1.bf16.msra.mxu0 %v6471
        %6601 = vmatprep.subr.bf16.mxu0 %v6474
        %6602 = vmatpush1.bf16.msra.mxu0 %v6473
        %6603 = vmatprep.subr.bf16.mxu0 %v6476
        %6604 = vmatpush1.bf16.msra.mxu0 %v6475
        %6605 = vmatprep.mubr.bf16.mxu0 %v6186
        %6606 = vmatmul.mubr.bf16.gmra.mrb[0].mxu0 %v6185
        %v6607 = vpop.f32.mrb[0].mxu0
        %v6608 = vadd.f32 0.0, %v6607
        %v6609 = vpop.f32.mrb[0].mxu0
        %v6610 = vadd.f32 0.0, %v6609
        %v6611 = vpop.f32.mrb[0].mxu0
        %v6612 = vpop.f32.mrb[0].mxu0
        %6613 = vdwg.mxu0
        %6614 = vmatprep.subr.bf16.mxu0 %v6478
        %6615 = vmatpush1.bf16.msra.mxu0 %v6477
        %6616 = vmatprep.subr.bf16.mxu0 %v6480
        %6617 = vmatpush1.bf16.msra.mxu0 %v6479
        %6618 = vmatprep.subr.bf16.mxu0 %v6482
        %6619 = vmatpush1.bf16.msra.mxu0 %v6481
        %6620 = vmatprep.subr.bf16.mxu0 %v6484
        %6621 = vmatpush1.bf16.msra.mxu0 %v6483
        %6622 = vmatprep.subr.bf16.mxu0 %v6486
        %6623 = vmatpush1.bf16.msra.mxu0 %v6485
        %6624 = vmatprep.subr.bf16.mxu0 %v6488
        %6625 = vmatpush1.bf16.msra.mxu0 %v6487
        %6626 = vmatprep.subr.bf16.mxu0 %v6490
        %6627 = vmatpush1.bf16.msra.mxu0 %v6489
        %6628 = vmatprep.subr.bf16.mxu0 %v6492
        %6629 = vmatpush1.bf16.msra.mxu0 %v6491
        %6630 = vmatprep.subr.bf16.mxu0 %v6494
        %6631 = vmatpush1.bf16.msra.mxu0 %v6493
        %6632 = vmatprep.subr.bf16.mxu0 %v6496
        %6633 = vmatpush1.bf16.msra.mxu0 %v6495
        %6634 = vmatprep.subr.bf16.mxu0 %v6498
        %6635 = vmatpush1.bf16.msra.mxu0 %v6497
        %6636 = vmatprep.subr.bf16.mxu0 %v6500
        %6637 = vmatpush1.bf16.msra.mxu0 %v6499
        %6638 = vmatprep.subr.bf16.mxu0 %v6502
        %6639 = vmatpush1.bf16.msra.mxu0 %v6501
        %6640 = vmatprep.subr.bf16.mxu0 %v6504
        %6641 = vmatpush1.bf16.msra.mxu0 %v6503
        %6642 = vmatprep.subr.bf16.mxu0 %v6506
        %6643 = vmatpush1.bf16.msra.mxu0 %v6505
        %6644 = vmatprep.subr.bf16.mxu0 %v6508
        %6645 = vmatpush1.bf16.msra.mxu0 %v6507
        %6646 = vmatprep.mubr.bf16.mxu0 %v6188
        %6647 = vmatmul.mubr.bf16.gmra.mrb[0].mxu0 %v6187
        %v6648 = vpop.f32.mrb[0].mxu0
        %v6649 = vadd.f32 %v6608, %v6648
        %v6650 = vpop.f32.mrb[0].mxu0
        %v6651 = vadd.f32 %v6610, %v6650
        %v6652 = vpop.f32.mrb[0].mxu0
        %v6653 = vpop.f32.mrb[0].mxu0
        %6654 = vdwg.mxu0
        %v6657 = vcombine.low %v6649, %v6651
        %v6659 = vunpack.c.l.s4 1966171168
        %v6660 = vunpack.c.0.s8 %v6659
        %v6661 = vlaneseq
        %v6662 = vshrl.u32 %v6661, 7
        %v6663 = vsub.s32 %v6660, %v6662
        %v6664 = vrot.slane %v6657, %v6663
        %v6666 = vunpack.c.l.s4 1966171168
        %v6667 = vunpack.c.0.s8 %v6666
        %v6668 = vlaneseq
        %v6669 = vshrl.u32 %v6668, 7
        %v6670 = vsub.s32 %v6667, %v6669
        %v6671 = vrot.slane %v6664, %v6670
        %v6673 = vlaneseq
        %vm6674 = vcmp.ge.s32.totalorder %v6673, 0
        %vm6675 = vcmp.lt.s32.totalorder %v6673, 256
        %vm6676 = vmand %vm6674, %vm6675
        %6677 = vst.msk [vmem:[%s450] sm:$0x3] %vm6676, %v6671
        %p6678 = scmp.lt.s32.totalorder %s22, 1
        %s6679 = scalar_select %p6678, %s22, 1
        %s6680 = smul.addr %s6679, 2
        %s6681 = scalar_lea.vmem %s8, %s6680
        // Predicated region
        $region81: #{dqn_forward.1} parent=51 // pred_check
          %p6682 = pneg %p223
        $region82: #{dqn_forward.1} parent=51 // pred_check_branch
          %6684 = sbr.rel (%p6682) target = $region84
        $region83: #{dqn_forward.1} parent=51 // pred_region
          _
        $region84: #{dqn_forward.1} parent=51 // pred_fallthru
          _
      $region52: #{dqn_forward.1} parent=5 // pred_fallthru
        _
      %p6685 = scmp.le.s32.totalorder 2, %s17
      // Predicated region
      $region85: #{dqn_forward.1} parent=5 // pred_check
        %p6686 = pneg %p6685
      $region86: #{dqn_forward.1} parent=5 // pred_check_branch
        %6688 = sbr.rel (%p6686) target = $region88
      $region87: #{dqn_forward.1} parent=5 // pred_region
        %s6689 = ssub.s32 %s17, 2
        // Predicated region
        $region89: #{dqn_forward.1} parent=87 // pred_check
          %p6690 = pneg %p229
        $region90: #{dqn_forward.1} parent=87 // pred_check_branch
          %6692 = sbr.rel (%p6690) target = $region92
        $region91: #{dqn_forward.1} parent=87 // pred_region
          %p6693 = scmp.lt.s32.totalorder %s23, 1
          %s6694 = scalar_select %p6693, %s23, 1
          %s6695 = smul.addr %s6694, 2
          %s6696 = scalar_lea.vmem %s8, %s6695
        $region92: #{dqn_forward.1} parent=87 // pred_fallthru
          _
      $region88: #{dqn_forward.1} parent=5 // pred_fallthru
        _
    $region6: #{dqn_forward.1} parent=1 // loop_footer
      %s21 = sadd.s32 1, %s17
    $region7: #{dqn_forward.1} parent=1 // loop_footer_branch
      %16 = sbr.rel target = $region3
    $region8: #{dqn_forward.1} parent=1 // loop_exit
      _
    %6697 = vsyncpa [#allocation3], 1
    %s6698 = scalar_lea.sflag [#allocation3], 1
    %6699 = vsyncpa %s6698, 1
    %6700 = vsyncpa [#allocation5], 1
    %6701 = vsyncpa [#allocation8], 1

</llo_original>
